<compile_context>
chip_gen: v5e
topology: v5e:2x2
jax: 0.10.0
libtpu: 0.0.40
codegen_flags: <defaults>
</compile_context>

<pallas_src>
import functools
import numpy as np

import jax
import jax.numpy as jnp
from jax.experimental import pallas as pl
from jax.experimental.pallas import tpu as pltpu


# ----------------------------- Pallas kernel ---------------------------------

def _wsw_attn_kernel(e_ref, wqkv_ref, bqkv_ref, bias_ref, wlin_ref, blin_ref,
                     out_ref, *, n_heads, head_dim, n_win, n_tok, compute_dtype):
    C = n_heads * head_dim
    D = head_dim
    cdt = compute_dtype

    # --- Fused QKV projection for BOTH streams (block-diagonal weight):
    #     (K*NP, 2C) @ (2C, 6C) -> columns [qkv1 (3C) | qkv2 (3C)].
    #     (q attention scale already folded into the q-columns on the host.)
    qkv = jnp.dot(e_ref[...], wqkv_ref[...],
                  preferred_element_type=jnp.float32) + bqkv_ref[...]
    # Free reshape: split rows (K*NP) -> (K, NP); minor (lane) dim untouched.
    qkv = qkv.reshape(n_win, n_tok, 6 * C)

    o1_heads = []
    o2_heads = []
    for h in range(n_heads):  # static unroll; every iteration is batched over K windows
        q1 = qkv[:, :, 0 * C + h * D: 0 * C + (h + 1) * D].astype(cdt)
        k1 = qkv[:, :, 1 * C + h * D: 1 * C + (h + 1) * D].astype(cdt)
        v1 = qkv[:, :, 2 * C + h * D: 2 * C + (h + 1) * D].astype(cdt)
        q2 = qkv[:, :, 3 * C + h * D: 3 * C + (h + 1) * D].astype(cdt)
        k2 = qkv[:, :, 4 * C + h * D: 4 * C + (h + 1) * D].astype(cdt)
        v2 = qkv[:, :, 5 * C + h * D: 5 * C + (h + 1) * D].astype(cdt)

        # Cross attention: q1 attends over k2/v2, q2 over k1/v1.
        # bias = relative-position bias + (-1e9 on masked pairs), fused host-side.
        sim1 = jnp.einsum('wpd,wqd->wpq', q1, k2,
                          preferred_element_type=jnp.float32) + bias_ref[h]
        sim2 = jnp.einsum('wpd,wqd->wpq', q2, k1,
                          preferred_element_type=jnp.float32) + bias_ref[n_heads + h]

        # Softmax along the key axis; divide replaced by EUP approximate reciprocal.
        m1 = jnp.max(sim1, axis=-1, keepdims=True)
        p1 = jnp.exp(sim1 - m1)
        p1 = p1 * pl.reciprocal(jnp.sum(p1, axis=-1, keepdims=True), approx=True)
        m2 = jnp.max(sim2, axis=-1, keepdims=True)
        p2 = jnp.exp(sim2 - m2)
        p2 = p2 * pl.reciprocal(jnp.sum(p2, axis=-1, keepdims=True), approx=True)

        o1_heads.append(jnp.einsum('wpq,wqd->wpd', p1.astype(cdt), v2,
                                   preferred_element_type=jnp.float32))
        o2_heads.append(jnp.einsum('wpq,wqd->wpd', p2.astype(cdt), v1,
                                   preferred_element_type=jnp.float32))

    # Head-major concat '(h c)', free collapse back to rows, lane-concat both streams.
    o1 = jnp.concatenate(o1_heads, axis=-1).reshape(n_win * n_tok, C)
    o2 = jnp.concatenate(o2_heads, axis=-1).reshape(n_win * n_tok, C)
    o = jnp.concatenate([o1, o2], axis=-1)                      # (K*NP, 2C)

    # Fused output linear (block-diagonal (2C, 2*out)) -> single 2*out-lane store.
    out = jnp.dot(o.astype(cdt), wlin_ref[...],
                  preferred_element_type=jnp.float32) + blin_ref[...]
    out_ref[...] = out.astype(out_ref.dtype)


# ----------------------------- host-side helpers ------------------------------

def _window_partition(x, p):
    B, H, W, C = x.shape
    w1, w2 = H // p, W // p
    x = x.reshape(B, w1, p, w2, p, C).transpose(0, 1, 3, 2, 4, 5)
    return x.reshape(B, w1 * w2, p * p, C), w1, w2


def _window_reverse(x, p, w1, w2):
    B, NW, NP, C = x.shape
    x = x.reshape(B, w1, w2, p, p, C).transpose(0, 1, 3, 2, 4, 5)
    return x.reshape(B, w1 * p, w2 * p, C)


def _generate_mask(w, p, shift, attn_type):
    """Exactly mirrors W_SW_Attention.generate_mask (returns (w*w, p*p, p*p) bool)."""
    m = np.zeros((w, w, p, p, p, p), dtype=bool)
    if attn_type != 'W':
        s = p - shift
        m[-1, :, :s, :, s:, :] = True
        m[-1, :, s:, :, :s, :] = True
        m[:, -1, :, :s, :, s:] = True
        m[:, -1, :, s:, :, :s] = True
    return m.reshape(w * w, p * p, p * p)


def _relative_embedding(rel_params, p):
    """rel_params: jnp (n_heads, 2p-1, 2p-1) -> jnp (n_heads, p*p, p*p).

    Indices are static numpy; the gather itself is JAX, so the wrapper stays jit-able.
    """
    cord = np.array([[i, j] for i in range(p) for j in range(p)])
    relation = cord[:, None, :] - cord[None, :, :] + p - 1
    return rel_params[:, relation[:, :, 0], relation[:, :, 1]]


def _pick_windows_per_block(total_windows, n_tok, max_rows=512):
    """Largest divisor K of total_windows with K*n_tok <= max_rows rows per grid step."""
    k = 1
    for cand in range(1, total_windows + 1):
        if total_windows % cand == 0 and cand * n_tok <= max_rows:
            k = cand
    return k


def init_params(key, input_dim, output_dim, head_dim, window_size):
    n_heads = input_dim // head_dim
    ks = jax.random.split(key, 8)
    f32 = jnp.float32
    params = {
        "w_qkv1": (jax.random.normal(ks[0], (input_dim, 3 * input_dim)) * 0.05).astype(f32),
        "b_qkv1": (jax.random.normal(ks[1], (1, 3 * input_dim)) * 0.05).astype(f32),
        "w_qkv2": (jax.random.normal(ks[2], (input_dim, 3 * input_dim)) * 0.05).astype(f32),
        "b_qkv2": (jax.random.normal(ks[3], (1, 3 * input_dim)) * 0.05).astype(f32),
        "w_lin1": (jax.random.normal(ks[4], (input_dim, output_dim)) * 0.05).astype(f32),
        "b_lin1": jnp.zeros((1, output_dim), f32),
        "w_lin2": (jax.random.normal(ks[5], (input_dim, output_dim)) * 0.05).astype(f32),
        "b_lin2": jnp.zeros((1, output_dim), f32),
        # trunc_normal_(std=0.02) -> deterministic synthetic normal*0.02
        "rel1": (jax.random.normal(ks[6], (n_heads, 2 * window_size - 1, 2 * window_size - 1)) * 0.02).astype(f32),
        "rel2": (jax.random.normal(ks[7], (n_heads, 2 * window_size - 1, 2 * window_size - 1)) * 0.02).astype(f32),
    }
    return params


# ----------------------------- wrapper ----------------------------------------

def w_sw_attention(emb1, emb2, params, *, input_dim, output_dim, head_dim,
                   window_size, attn_type, compute_dtype=jnp.float32):
    p = window_size
    shift = p // 2
    n_heads = input_dim // head_dim
    scale = float(head_dim) ** (-0.5)
    f32 = jnp.float32

    if attn_type != 'W':
        emb1 = jnp.roll(emb1, -shift, axis=1)
        emb2 = jnp.roll(emb2, -shift, axis=1)

    e1w, w1, w1b = _window_partition(emb1, p)
    e2w, w2, w2b = _window_partition(emb2, p)
    assert w1 == w1b and w2 == w2b

    B, NW, NP, C = e1w.shape
    assert C == input_dim
    total_windows = B * NW
    K = _pick_windows_per_block(total_windows, NP)       # windows per grid step
    num_blocks = total_windows // K
    rows_per_block = K * NP
    assert rows_per_block % 8 == 0 or num_blocks == 1

    # Row-flattened activations, both streams lane-concatenated: (rows, 2C).
    e1_flat = e1w.reshape(total_windows * NP, C)
    e2_flat = e2w.reshape(total_windows * NP, C)
    e_both = jnp.concatenate([e1_flat, e2_flat], axis=-1).astype(compute_dtype)

    # Fold the q attention scale into the q-columns of the QKV projection (host side),
    # then build the block-diagonal fused weights (2C, 6C) / (2C, 2*out).
    col_scale = jnp.concatenate([jnp.full((C,), scale, f32), jnp.ones((2 * C,), f32)])
    w_qkv1 = params["w_qkv1"] * col_scale[None, :]
    w_qkv2 = params["w_qkv2"] * col_scale[None, :]
    zero3 = jnp.zeros((C, 3 * C), f32)
    w_qkv = jnp.concatenate(
        [jnp.concatenate([w_qkv1, zero3], axis=1),
         jnp.concatenate([zero3, w_qkv2], axis=1)], axis=0).astype(compute_dtype)
    b_qkv = jnp.concatenate([params["b_qkv1"] * col_scale[None, :],
                             params["b_qkv2"] * col_scale[None, :]], axis=1).astype(f32)

    zero_o = jnp.zeros((C, output_dim), f32)
    w_lin = jnp.concatenate(
        [jnp.concatenate([params["w_lin1"], zero_o], axis=1),
         jnp.concatenate([zero_o, params["w_lin2"]], axis=1)], axis=0).astype(compute_dtype)
    b_lin = jnp.concatenate([params["b_lin1"], params["b_lin2"]], axis=1).astype(f32)

    # Fused bias = relative-position bias + (-1e9 where shifted-window masked),
    # head-major, both streams stacked: (2*n_heads, B*NW, NP, NP).
    rel1 = _relative_embedding(params["rel1"].astype(f32), p)           # (h, NP, NP)
    rel2 = _relative_embedding(params["rel2"].astype(f32), p)
    mask = jnp.asarray(_generate_mask(w1, p, shift, attn_type))          # (NW, NP, NP) bool
    mask_add = jnp.where(mask, jnp.float32(-1e9), jnp.float32(0.0))
    bias1 = jnp.tile(rel1[:, None, :, :] + mask_add[None], (1, B, 1, 1))  # flat idx = b*NW + w
    bias2 = jnp.tile(rel2[:, None, :, :] + mask_add[None], (1, B, 1, 1))
    bias_all = jnp.concatenate([bias1, bias2], axis=0)                    # (2h, B*NW, NP, NP)

    kernel = functools.partial(
        _wsw_attn_kernel, n_heads=n_heads, head_dim=head_dim,
        n_win=K, n_tok=NP, compute_dtype=compute_dtype)

    # NOTE (v7x VMEM): weights are tiny at C=32; if C/output_dim scale up, cap their
    # double-buffering (pipeline_mode=pl.Buffered(1)) and set vmem_limit_bytes.
    out_flat = pl.pallas_call(
        kernel,
        out_shape=jax.ShapeDtypeStruct((total_windows * NP, 2 * output_dim), f32),
        grid_spec=pltpu.PrefetchScalarGridSpec(
            num_scalar_prefetch=0,
            grid=(num_blocks,),
            in_specs=[
                pl.BlockSpec((rows_per_block, 2 * C), lambda i: (i, 0)),        # emb rows
                pl.BlockSpec((2 * C, 6 * C), lambda i: (0, 0)),                 # w_qkv (fused)
                pl.BlockSpec((1, 6 * C), lambda i: (0, 0)),                     # b_qkv (fused)
                pl.BlockSpec((2 * n_heads, K, NP, NP), lambda i: (0, i, 0, 0)), # fused bias
                pl.BlockSpec((2 * C, 2 * output_dim), lambda i: (0, 0)),        # w_lin (fused)
                pl.BlockSpec((1, 2 * output_dim), lambda i: (0, 0)),            # b_lin (fused)
            ],
            out_specs=pl.BlockSpec((rows_per_block, 2 * output_dim), lambda i: (i, 0)),
        ),
        compiler_params=pltpu.CompilerParams(
            dimension_semantics=("parallel",)),   # independent window blocks -> megacore
    )(e_both, w_qkv, b_qkv, bias_all, w_lin, b_lin)

    out1_flat = out_flat[:, :output_dim]
    out2_flat = out_flat[:, output_dim:]
    out1 = _window_reverse(out1_flat.reshape(B, NW, NP, output_dim), p, w1, w1)
    out2 = _window_reverse(out2_flat.reshape(B, NW, NP, output_dim), p, w2, w2)

    if attn_type != 'W':
        out1 = jnp.roll(out1, shift, axis=1)
        out2 = jnp.roll(out2, shift, axis=1)
    return out1, out2


# ----------------------------- pure-JAX reference ----------------------------

def w_sw_attention_ref(emb1, emb2, params, *, input_dim, output_dim, head_dim,
                       window_size, attn_type):
    p = window_size
    shift = p // 2
    n_heads = input_dim // head_dim
    scale = float(head_dim) ** (-0.5)

    if attn_type != 'W':
        emb1 = jnp.roll(emb1, -shift, axis=1)
        emb2 = jnp.roll(emb2, -shift, axis=1)
    e1w, w1, _ = _window_partition(emb1, p)
    e2w, _, _ = _window_partition(emb2, p)
    B, NW, NP, C = e1w.shape

    def qkv_split(x, W, b):
        qkv = x @ W + b                                    # (B, NW, NP, 3C)
        qkv = qkv.reshape(B, NW, NP, 3 * n_heads, head_dim)
        qkv = jnp.transpose(qkv, (3, 0, 1, 2, 4))          # (3h, B, NW, NP, hd)
        return qkv[:n_heads], qkv[n_heads:2 * n_heads], qkv[2 * n_heads:]

    q1, k1, v1 = qkv_split(e1w, params["w_qkv1"], params["b_qkv1"][0])
    q2, k2, v2 = qkv_split(e2w, params["w_qkv2"], params["b_qkv2"][0])

    rel1 = _relative_embedding(params["rel1"], p)
    rel2 = _relative_embedding(params["rel2"], p)
    sim1 = jnp.einsum('hbwpc,hbwqc->hbwpq', q1, k2) * scale + rel1[:, None, None]
    sim2 = jnp.einsum('hbwpc,hbwqc->hbwpq', q2, k1) * scale + rel2[:, None, None]

    mask = jnp.asarray(_generate_mask(w1, p, shift, attn_type))[None, None]
    if attn_type != 'W':
        sim1 = jnp.where(mask, -jnp.inf, sim1)
        sim2 = jnp.where(mask, -jnp.inf, sim2)

    pr1 = jax.nn.softmax(sim1, axis=-1)
    pr2 = jax.nn.softmax(sim2, axis=-1)
    o1 = jnp.einsum('hbwij,hbwjc->hbwic', pr1, v2)
    o2 = jnp.einsum('hbwij,hbwjc->hbwic', pr2, v1)
    o1 = jnp.transpose(o1, (1, 2, 3, 0, 4)).reshape(B, NW, NP, C)
    o2 = jnp.transpose(o2, (1, 2, 3, 0, 4)).reshape(B, NW, NP, C)
    o1 = o1 @ params["w_lin1"] + params["b_lin1"][0]
    o2 = o2 @ params["w_lin2"] + params["b_lin2"][0]
    o1 = _window_reverse(o1, p, w1, w1)
    o2 = _window_reverse(o2, p, w1, w1)
    if attn_type != 'W':
        o1 = jnp.roll(o1, shift, axis=1)
        o2 = jnp.roll(o2, shift, axis=1)
    return o1, o2


# ----------------------------- main -------------------------------------------

if __name__ == "__main__":
    input_dim = 32
    output_dim = 32
    head_dim = 8
    window_size = 4
    B, H, W = 2, 8, 8

    key = jax.random.PRNGKey(0)
    kp, k1, k2 = jax.random.split(key, 3)
    params = init_params(kp, input_dim, output_dim, head_dim, window_size)
    emb1 = jax.random.normal(k1, (B, H, W, input_dim), jnp.float32)
    emb2 = jax.random.normal(k2, (B, H, W, input_dim), jnp.float32)

    cfg = dict(input_dim=input_dim, output_dim=output_dim,
               head_dim=head_dim, window_size=window_size)

    for attn_type in ("W", "SW"):
        ref1, ref2 = w_sw_attention_ref(emb1, emb2, params, **cfg, attn_type=attn_type)

        # f32 operand path (v5e-friendly).  Tolerance is set by the approximate
        # EUP reciprocal in the softmax normalization (~1e-4-level), not the matmuls.
        fwd_f32 = jax.jit(functools.partial(
            w_sw_attention, **cfg, attn_type=attn_type, compute_dtype=jnp.float32))
        out1, out2 = fwd_f32(emb1, emb2, params)
        jax.block_until_ready((out1, out2))
        np.testing.assert_allclose(np.asarray(out1), np.asarray(ref1), rtol=5e-3, atol=1e-3)
        np.testing.assert_allclose(np.asarray(out2), np.asarray(ref2), rtol=5e-3, atol=1e-3)

        # bf16 operand path (v6e/v7x MXU-friendly), f32 accumulation.
        fwd_bf16 = jax.jit(functools.partial(
            w_sw_attention, **cfg, attn_type=attn_type, compute_dtype=jnp.bfloat16))
        o1b, o2b = fwd_bf16(emb1, emb2, params)
        jax.block_until_ready((o1b, o2b))
        np.testing.assert_allclose(np.asarray(o1b), np.asarray(ref1), rtol=5e-2, atol=2e-2)
        np.testing.assert_allclose(np.asarray(o2b), np.asarray(ref2), rtol=5e-2, atol=2e-2)

    print("KERNEL_OK")
</pallas_src>

<mosaic_0001>
module attributes {stable_mosaic.version = 11 : i64} {
  func.func @_wsw_attn_kernel(%arg0: i32, %arg1: memref<128x64xf32, #tpu.memory_space<vmem>>, %arg2: memref<64x192xf32, #tpu.memory_space<vmem>>, %arg3: memref<1x192xf32, #tpu.memory_space<vmem>>, %arg4: memref<8x8x16x16xf32, #tpu.memory_space<vmem>>, %arg5: memref<64x64xf32, #tpu.memory_space<vmem>>, %arg6: memref<1x64xf32, #tpu.memory_space<vmem>>, %arg7: memref<128x64xf32, #tpu.memory_space<vmem>>) attributes {dimension_semantics = [#tpu.dimension_semantics<parallel>], iteration_bounds = array<i64: 1>, scalar_prefetch = 0 : i64, scratch_operands = 0 : i64, tpu.core_type = #tpu.core_type<tc>, window_params = [{transform_indices = @transform_0, window_bounds = array<i64: 128, 64>}, {pipeline_mode = #tpu.pipeline_mode<synchronous>, transform_indices = @transform_1, window_bounds = array<i64: 64, 192>}, {pipeline_mode = #tpu.pipeline_mode<synchronous>, transform_indices = @transform_2, window_bounds = array<i64: 1, 192>}, {transform_indices = @transform_3, window_bounds = array<i64: 8, 8, 16, 16>}, {pipeline_mode = #tpu.pipeline_mode<synchronous>, transform_indices = @transform_4, window_bounds = array<i64: 64, 64>}, {pipeline_mode = #tpu.pipeline_mode<synchronous>, transform_indices = @transform_5, window_bounds = array<i64: 1, 64>}, {transform_indices = @transform_6, window_bounds = array<i64: 128, 64>}]} {
    %c0 = arith.constant 0 : index
    %c0_0 = arith.constant 0 : index
    %0 = vector.load %arg1[%c0, %c0_0] : memref<128x64xf32, #tpu.memory_space<vmem>>, vector<128x64xf32>
    %c0_1 = arith.constant 0 : index
    %c0_2 = arith.constant 0 : index
    %1 = vector.load %arg2[%c0_1, %c0_2] : memref<64x192xf32, #tpu.memory_space<vmem>>, vector<64x192xf32>
    %cst = arith.constant dense<0.000000e+00> : vector<128x192xf32>
    %2 = tpu.matmul %0, %1, %cst {dimension_numbers = #tpu.dot_dimension_numbers<[1], [0], [0], [1], [0, 0, 1, 1], [], []>} : vector<128x64xf32>, vector<64x192xf32>, vector<128x192xf32> -> vector<128x192xf32>
    %c0_3 = arith.constant 0 : index
    %c0_4 = arith.constant 0 : index
    %3 = vector.load %arg3[%c0_3, %c0_4] : memref<1x192xf32, #tpu.memory_space<vmem>>, vector<1x192xf32>
    %4 = vector.broadcast %3 : vector<1x192xf32> to vector<128x192xf32>
    %5 = arith.addf %2, %4 : vector<128x192xf32>
    %6 = vector.shape_cast %5 : vector<128x192xf32> to vector<8x16x192xf32>
    %7 = vector.extract_strided_slice %6 {offsets = [0, 0, 0], sizes = [8, 16, 8], strides = [1, 1, 1]} : vector<8x16x192xf32> to vector<8x16x8xf32>
    %8 = vector.extract_strided_slice %6 {offsets = [0, 0, 32], sizes = [8, 16, 8], strides = [1, 1, 1]} : vector<8x16x192xf32> to vector<8x16x8xf32>
    %9 = vector.extract_strided_slice %6 {offsets = [0, 0, 64], sizes = [8, 16, 8], strides = [1, 1, 1]} : vector<8x16x192xf32> to vector<8x16x8xf32>
    %10 = vector.extract_strided_slice %6 {offsets = [0, 0, 96], sizes = [8, 16, 8], strides = [1, 1, 1]} : vector<8x16x192xf32> to vector<8x16x8xf32>
    %11 = vector.extract_strided_slice %6 {offsets = [0, 0, 128], sizes = [8, 16, 8], strides = [1, 1, 1]} : vector<8x16x192xf32> to vector<8x16x8xf32>
    %12 = vector.extract_strided_slice %6 {offsets = [0, 0, 160], sizes = [8, 16, 8], strides = [1, 1, 1]} : vector<8x16x192xf32> to vector<8x16x8xf32>
    "tpu.trace_start"() <{level = 10 : i32, message = "wpd,wqd->wpq"}> : () -> ()
    %cst_5 = arith.constant dense<0.000000e+00> : vector<8x16x16xf32>
    %13 = tpu.matmul %7, %11, %cst_5 {dimension_numbers = #tpu.dot_dimension_numbers<[2], [2], [1], [1], [0, 0, 0, 1, 1, 1], [0], [0]>} : vector<8x16x8xf32>, vector<8x16x8xf32>, vector<8x16x16xf32> -> vector<8x16x16xf32>
    "tpu.trace_stop"() : () -> ()
    %c0_6 = arith.constant 0 : index
    %c0_7 = arith.constant 0 : index
    %c0_8 = arith.constant 0 : index
    %c0_9 = arith.constant 0 : index
    %14 = vector.load %arg4[%c0_6, %c0_7, %c0_8, %c0_9] : memref<8x8x16x16xf32, #tpu.memory_space<vmem>>, vector<1x8x16x16xf32>
    %15 = vector.shape_cast %14 : vector<1x8x16x16xf32> to vector<8x16x16xf32>
    %16 = arith.addf %13, %15 : vector<8x16x16xf32>
    "tpu.trace_start"() <{level = 10 : i32, message = "wpd,wqd->wpq"}> : () -> ()
    %cst_10 = arith.constant dense<0.000000e+00> : vector<8x16x16xf32>
    %17 = tpu.matmul %10, %8, %cst_10 {dimension_numbers = #tpu.dot_dimension_numbers<[2], [2], [1], [1], [0, 0, 0, 1, 1, 1], [0], [0]>} : vector<8x16x8xf32>, vector<8x16x8xf32>, vector<8x16x16xf32> -> vector<8x16x16xf32>
    "tpu.trace_stop"() : () -> ()
    %c4 = arith.constant 4 : index
    %c0_11 = arith.constant 0 : index
    %c0_12 = arith.constant 0 : index
    %c0_13 = arith.constant 0 : index
    %18 = vector.load %arg4[%c4, %c0_11, %c0_12, %c0_13] : memref<8x8x16x16xf32, #tpu.memory_space<vmem>>, vector<1x8x16x16xf32>
    %19 = vector.shape_cast %18 : vector<1x8x16x16xf32> to vector<8x16x16xf32>
    %20 = arith.addf %17, %19 : vector<8x16x16xf32>
    %cst_14 = arith.constant dense<0xFF800000> : vector<8x16xf32>
    %21 = vector.multi_reduction <maximumf>, %16, %cst_14 [2] : vector<8x16x16xf32> to vector<8x16xf32>
    %22 = vector.shape_cast %21 : vector<8x16xf32> to vector<8x16x1xf32>
    %23 = vector.broadcast %22 : vector<8x16x1xf32> to vector<8x16x16xf32>
    %24 = arith.subf %16, %23 : vector<8x16x16xf32>
    %25 = math.exp %24 : vector<8x16x16xf32>
    %cst_15 = arith.constant dense<0.000000e+00> : vector<8x16xf32>
    %26 = vector.multi_reduction <add>, %25, %cst_15 [2] : vector<8x16x16xf32> to vector<8x16xf32>
    %27 = vector.shape_cast %26 : vector<8x16xf32> to vector<8x16x1xf32>
    %28 = tpu.reciprocal %27 {approx = true} : vector<8x16x1xf32> -> vector<8x16x1xf32>
    %29 = vector.broadcast %28 : vector<8x16x1xf32> to vector<8x16x16xf32>
    %30 = arith.mulf %25, %29 : vector<8x16x16xf32>
    %cst_16 = arith.constant dense<0xFF800000> : vector<8x16xf32>
    %31 = vector.multi_reduction <maximumf>, %20, %cst_16 [2] : vector<8x16x16xf32> to vector<8x16xf32>
    %32 = vector.shape_cast %31 : vector<8x16xf32> to vector<8x16x1xf32>
    %33 = vector.broadcast %32 : vector<8x16x1xf32> to vector<8x16x16xf32>
    %34 = arith.subf %20, %33 : vector<8x16x16xf32>
    %35 = math.exp %34 : vector<8x16x16xf32>
    %cst_17 = arith.constant dense<0.000000e+00> : vector<8x16xf32>
    %36 = vector.multi_reduction <add>, %35, %cst_17 [2] : vector<8x16x16xf32> to vector<8x16xf32>
    %37 = vector.shape_cast %36 : vector<8x16xf32> to vector<8x16x1xf32>
    %38 = tpu.reciprocal %37 {approx = true} : vector<8x16x1xf32> -> vector<8x16x1xf32>
    %39 = vector.broadcast %38 : vector<8x16x1xf32> to vector<8x16x16xf32>
    %40 = arith.mulf %35, %39 : vector<8x16x16xf32>
    "tpu.trace_start"() <{level = 10 : i32, message = "wpq,wqd->wpd"}> : () -> ()
    %cst_18 = arith.constant dense<0.000000e+00> : vector<8x16x8xf32>
    %41 = tpu.matmul %30, %12, %cst_18 {dimension_numbers = #tpu.dot_dimension_numbers<[2], [1], [1], [2], [0, 0, 0, 1, 1, 2], [0], [0]>} : vector<8x16x16xf32>, vector<8x16x8xf32>, vector<8x16x8xf32> -> vector<8x16x8xf32>
    %cst_19 = arith.constant dense<0.000000e+00> : vector<8x16x8xf32>
    %42 = tpu.matmul %40, %9, %cst_19 {dimension_numbers = #tpu.dot_dimension_numbers<[2], [1], [1], [2], [0, 0, 0, 1, 1, 2], [0], [0]>} : vector<8x16x16xf32>, vector<8x16x8xf32>, vector<8x16x8xf32> -> vector<8x16x8xf32>
    "tpu.trace_stop"() : () -> ()
    %43 = vector.extract_strided_slice %6 {offsets = [0, 0, 8], sizes = [8, 16, 8], strides = [1, 1, 1]} : vector<8x16x192xf32> to vector<8x16x8xf32>
    %44 = vector.extract_strided_slice %6 {offsets = [0, 0, 40], sizes = [8, 16, 8], strides = [1, 1, 1]} : vector<8x16x192xf32> to vector<8x16x8xf32>
    %45 = vector.extract_strided_slice %6 {offsets = [0, 0, 72], sizes = [8, 16, 8], strides = [1, 1, 1]} : vector<8x16x192xf32> to vector<8x16x8xf32>
    %46 = vector.extract_strided_slice %6 {offsets = [0, 0, 104], sizes = [8, 16, 8], strides = [1, 1, 1]} : vector<8x16x192xf32> to vector<8x16x8xf32>
    %47 = vector.extract_strided_slice %6 {offsets = [0, 0, 136], sizes = [8, 16, 8], strides = [1, 1, 1]} : vector<8x16x192xf32> to vector<8x16x8xf32>
    %48 = vector.extract_strided_slice %6 {offsets = [0, 0, 168], sizes = [8, 16, 8], strides = [1, 1, 1]} : vector<8x16x192xf32> to vector<8x16x8xf32>
    "tpu.trace_start"() <{level = 10 : i32, message = "wpd,wqd->wpq"}> : () -> ()
    %cst_20 = arith.constant dense<0.000000e+00> : vector<8x16x16xf32>
    %49 = tpu.matmul %43, %47, %cst_20 {dimension_numbers = #tpu.dot_dimension_numbers<[2], [2], [1], [1], [0, 0, 0, 1, 1, 1], [0], [0]>} : vector<8x16x8xf32>, vector<8x16x8xf32>, vector<8x16x16xf32> -> vector<8x16x16xf32>
    "tpu.trace_stop"() : () -> ()
    %c1 = arith.constant 1 : index
    %c0_21 = arith.constant 0 : index
    %c0_22 = arith.constant 0 : index
    %c0_23 = arith.constant 0 : index
    %50 = vector.load %arg4[%c1, %c0_21, %c0_22, %c0_23] : memref<8x8x16x16xf32, #tpu.memory_space<vmem>>, vector<1x8x16x16xf32>
    %51 = vector.shape_cast %50 : vector<1x8x16x16xf32> to vector<8x16x16xf32>
    %52 = arith.addf %49, %51 : vector<8x16x16xf32>
    "tpu.trace_start"() <{level = 10 : i32, message = "wpd,wqd->wpq"}> : () -> ()
    %cst_24 = arith.constant dense<0.000000e+00> : vector<8x16x16xf32>
    %53 = tpu.matmul %46, %44, %cst_24 {dimension_numbers = #tpu.dot_dimension_numbers<[2], [2], [1], [1], [0, 0, 0, 1, 1, 1], [0], [0]>} : vector<8x16x8xf32>, vector<8x16x8xf32>, vector<8x16x16xf32> -> vector<8x16x16xf32>
    "tpu.trace_stop"() : () -> ()
    %c5 = arith.constant 5 : index
    %c0_25 = arith.constant 0 : index
    %c0_26 = arith.constant 0 : index
    %c0_27 = arith.constant 0 : index
    %54 = vector.load %arg4[%c5, %c0_25, %c0_26, %c0_27] : memref<8x8x16x16xf32, #tpu.memory_space<vmem>>, vector<1x8x16x16xf32>
    %55 = vector.shape_cast %54 : vector<1x8x16x16xf32> to vector<8x16x16xf32>
    %56 = arith.addf %53, %55 : vector<8x16x16xf32>
    %cst_28 = arith.constant dense<0xFF800000> : vector<8x16xf32>
    %57 = vector.multi_reduction <maximumf>, %52, %cst_28 [2] : vector<8x16x16xf32> to vector<8x16xf32>
    %58 = vector.shape_cast %57 : vector<8x16xf32> to vector<8x16x1xf32>
    %59 = vector.broadcast %58 : vector<8x16x1xf32> to vector<8x16x16xf32>
    %60 = arith.subf %52, %59 : vector<8x16x16xf32>
    %61 = math.exp %60 : vector<8x16x16xf32>
    %cst_29 = arith.constant dense<0.000000e+00> : vector<8x16xf32>
    %62 = vector.multi_reduction <add>, %61, %cst_29 [2] : vector<8x16x16xf32> to vector<8x16xf32>
    %63 = vector.shape_cast %62 : vector<8x16xf32> to vector<8x16x1xf32>
    %64 = tpu.reciprocal %63 {approx = true} : vector<8x16x1xf32> -> vector<8x16x1xf32>
    %65 = vector.broadcast %64 : vector<8x16x1xf32> to vector<8x16x16xf32>
    %66 = arith.mulf %61, %65 : vector<8x16x16xf32>
    %cst_30 = arith.constant dense<0xFF800000> : vector<8x16xf32>
    %67 = vector.multi_reduction <maximumf>, %56, %cst_30 [2] : vector<8x16x16xf32> to vector<8x16xf32>
    %68 = vector.shape_cast %67 : vector<8x16xf32> to vector<8x16x1xf32>
    %69 = vector.broadcast %68 : vector<8x16x1xf32> to vector<8x16x16xf32>
    %70 = arith.subf %56, %69 : vector<8x16x16xf32>
    %71 = math.exp %70 : vector<8x16x16xf32>
    %cst_31 = arith.constant dense<0.000000e+00> : vector<8x16xf32>
    %72 = vector.multi_reduction <add>, %71, %cst_31 [2] : vector<8x16x16xf32> to vector<8x16xf32>
    %73 = vector.shape_cast %72 : vector<8x16xf32> to vector<8x16x1xf32>
    %74 = tpu.reciprocal %73 {approx = true} : vector<8x16x1xf32> -> vector<8x16x1xf32>
    %75 = vector.broadcast %74 : vector<8x16x1xf32> to vector<8x16x16xf32>
    %76 = arith.mulf %71, %75 : vector<8x16x16xf32>
    "tpu.trace_start"() <{level = 10 : i32, message = "wpq,wqd->wpd"}> : () -> ()
    %cst_32 = arith.constant dense<0.000000e+00> : vector<8x16x8xf32>
    %77 = tpu.matmul %66, %48, %cst_32 {dimension_numbers = #tpu.dot_dimension_numbers<[2], [1], [1], [2], [0, 0, 0, 1, 1, 2], [0], [0]>} : vector<8x16x16xf32>, vector<8x16x8xf32>, vector<8x16x8xf32> -> vector<8x16x8xf32>
    %cst_33 = arith.constant dense<0.000000e+00> : vector<8x16x8xf32>
    %78 = tpu.matmul %76, %45, %cst_33 {dimension_numbers = #tpu.dot_dimension_numbers<[2], [1], [1], [2], [0, 0, 0, 1, 1, 2], [0], [0]>} : vector<8x16x16xf32>, vector<8x16x8xf32>, vector<8x16x8xf32> -> vector<8x16x8xf32>
    "tpu.trace_stop"() : () -> ()
    %79 = vector.extract_strided_slice %6 {offsets = [0, 0, 16], sizes = [8, 16, 8], strides = [1, 1, 1]} : vector<8x16x192xf32> to vector<8x16x8xf32>
    %80 = vector.extract_strided_slice %6 {offsets = [0, 0, 48], sizes = [8, 16, 8], strides = [1, 1, 1]} : vector<8x16x192xf32> to vector<8x16x8xf32>
    %81 = vector.extract_strided_slice %6 {offsets = [0, 0, 80], sizes = [8, 16, 8], strides = [1, 1, 1]} : vector<8x16x192xf32> to vector<8x16x8xf32>
    %82 = vector.extract_strided_slice %6 {offsets = [0, 0, 112], sizes = [8, 16, 8], strides = [1, 1, 1]} : vector<8x16x192xf32> to vector<8x16x8xf32>
    %83 = vector.extract_strided_slice %6 {offsets = [0, 0, 144], sizes = [8, 16, 8], strides = [1, 1, 1]} : vector<8x16x192xf32> to vector<8x16x8xf32>
    %84 = vector.extract_strided_slice %6 {offsets = [0, 0, 176], sizes = [8, 16, 8], strides = [1, 1, 1]} : vector<8x16x192xf32> to vector<8x16x8xf32>
    "tpu.trace_start"() <{level = 10 : i32, message = "wpd,wqd->wpq"}> : () -> ()
    %cst_34 = arith.constant dense<0.000000e+00> : vector<8x16x16xf32>
    %85 = tpu.matmul %79, %83, %cst_34 {dimension_numbers = #tpu.dot_dimension_numbers<[2], [2], [1], [1], [0, 0, 0, 1, 1, 1], [0], [0]>} : vector<8x16x8xf32>, vector<8x16x8xf32>, vector<8x16x16xf32> -> vector<8x16x16xf32>
    "tpu.trace_stop"() : () -> ()
    %c2 = arith.constant 2 : index
    %c0_35 = arith.constant 0 : index
    %c0_36 = arith.constant 0 : index
    %c0_37 = arith.constant 0 : index
    %86 = vector.load %arg4[%c2, %c0_35, %c0_36, %c0_37] : memref<8x8x16x16xf32, #tpu.memory_space<vmem>>, vector<1x8x16x16xf32>
    %87 = vector.shape_cast %86 : vector<1x8x16x16xf32> to vector<8x16x16xf32>
    %88 = arith.addf %85, %87 : vector<8x16x16xf32>
    "tpu.trace_start"() <{level = 10 : i32, message = "wpd,wqd->wpq"}> : () -> ()
    %cst_38 = arith.constant dense<0.000000e+00> : vector<8x16x16xf32>
    %89 = tpu.matmul %82, %80, %cst_38 {dimension_numbers = #tpu.dot_dimension_numbers<[2], [2], [1], [1], [0, 0, 0, 1, 1, 1], [0], [0]>} : vector<8x16x8xf32>, vector<8x16x8xf32>, vector<8x16x16xf32> -> vector<8x16x16xf32>
    "tpu.trace_stop"() : () -> ()
    %c6 = arith.constant 6 : index
    %c0_39 = arith.constant 0 : index
    %c0_40 = arith.constant 0 : index
    %c0_41 = arith.constant 0 : index
    %90 = vector.load %arg4[%c6, %c0_39, %c0_40, %c0_41] : memref<8x8x16x16xf32, #tpu.memory_space<vmem>>, vector<1x8x16x16xf32>
    %91 = vector.shape_cast %90 : vector<1x8x16x16xf32> to vector<8x16x16xf32>
    %92 = arith.addf %89, %91 : vector<8x16x16xf32>
    %cst_42 = arith.constant dense<0xFF800000> : vector<8x16xf32>
    %93 = vector.multi_reduction <maximumf>, %88, %cst_42 [2] : vector<8x16x16xf32> to vector<8x16xf32>
    %94 = vector.shape_cast %93 : vector<8x16xf32> to vector<8x16x1xf32>
    %95 = vector.broadcast %94 : vector<8x16x1xf32> to vector<8x16x16xf32>
    %96 = arith.subf %88, %95 : vector<8x16x16xf32>
    %97 = math.exp %96 : vector<8x16x16xf32>
    %cst_43 = arith.constant dense<0.000000e+00> : vector<8x16xf32>
    %98 = vector.multi_reduction <add>, %97, %cst_43 [2] : vector<8x16x16xf32> to vector<8x16xf32>
    %99 = vector.shape_cast %98 : vector<8x16xf32> to vector<8x16x1xf32>
    %100 = tpu.reciprocal %99 {approx = true} : vector<8x16x1xf32> -> vector<8x16x1xf32>
    %101 = vector.broadcast %100 : vector<8x16x1xf32> to vector<8x16x16xf32>
    %102 = arith.mulf %97, %101 : vector<8x16x16xf32>
    %cst_44 = arith.constant dense<0xFF800000> : vector<8x16xf32>
    %103 = vector.multi_reduction <maximumf>, %92, %cst_44 [2] : vector<8x16x16xf32> to vector<8x16xf32>
    %104 = vector.shape_cast %103 : vector<8x16xf32> to vector<8x16x1xf32>
    %105 = vector.broadcast %104 : vector<8x16x1xf32> to vector<8x16x16xf32>
    %106 = arith.subf %92, %105 : vector<8x16x16xf32>
    %107 = math.exp %106 : vector<8x16x16xf32>
    %cst_45 = arith.constant dense<0.000000e+00> : vector<8x16xf32>
    %108 = vector.multi_reduction <add>, %107, %cst_45 [2] : vector<8x16x16xf32> to vector<8x16xf32>
    %109 = vector.shape_cast %108 : vector<8x16xf32> to vector<8x16x1xf32>
    %110 = tpu.reciprocal %109 {approx = true} : vector<8x16x1xf32> -> vector<8x16x1xf32>
    %111 = vector.broadcast %110 : vector<8x16x1xf32> to vector<8x16x16xf32>
    %112 = arith.mulf %107, %111 : vector<8x16x16xf32>
    "tpu.trace_start"() <{level = 10 : i32, message = "wpq,wqd->wpd"}> : () -> ()
    %cst_46 = arith.constant dense<0.000000e+00> : vector<8x16x8xf32>
    %113 = tpu.matmul %102, %84, %cst_46 {dimension_numbers = #tpu.dot_dimension_numbers<[2], [1], [1], [2], [0, 0, 0, 1, 1, 2], [0], [0]>} : vector<8x16x16xf32>, vector<8x16x8xf32>, vector<8x16x8xf32> -> vector<8x16x8xf32>
    %cst_47 = arith.constant dense<0.000000e+00> : vector<8x16x8xf32>
    %114 = tpu.matmul %112, %81, %cst_47 {dimension_numbers = #tpu.dot_dimension_numbers<[2], [1], [1], [2], [0, 0, 0, 1, 1, 2], [0], [0]>} : vector<8x16x16xf32>, vector<8x16x8xf32>, vector<8x16x8xf32> -> vector<8x16x8xf32>
    "tpu.trace_stop"() : () -> ()
    %115 = vector.extract_strided_slice %6 {offsets = [0, 0, 24], sizes = [8, 16, 8], strides = [1, 1, 1]} : vector<8x16x192xf32> to vector<8x16x8xf32>
    %116 = vector.extract_strided_slice %6 {offsets = [0, 0, 56], sizes = [8, 16, 8], strides = [1, 1, 1]} : vector<8x16x192xf32> to vector<8x16x8xf32>
    %117 = vector.extract_strided_slice %6 {offsets = [0, 0, 88], sizes = [8, 16, 8], strides = [1, 1, 1]} : vector<8x16x192xf32> to vector<8x16x8xf32>
    %118 = vector.extract_strided_slice %6 {offsets = [0, 0, 120], sizes = [8, 16, 8], strides = [1, 1, 1]} : vector<8x16x192xf32> to vector<8x16x8xf32>
    %119 = vector.extract_strided_slice %6 {offsets = [0, 0, 152], sizes = [8, 16, 8], strides = [1, 1, 1]} : vector<8x16x192xf32> to vector<8x16x8xf32>
    %120 = vector.extract_strided_slice %6 {offsets = [0, 0, 184], sizes = [8, 16, 8], strides = [1, 1, 1]} : vector<8x16x192xf32> to vector<8x16x8xf32>
    "tpu.trace_start"() <{level = 10 : i32, message = "wpd,wqd->wpq"}> : () -> ()
    %cst_48 = arith.constant dense<0.000000e+00> : vector<8x16x16xf32>
    %121 = tpu.matmul %115, %119, %cst_48 {dimension_numbers = #tpu.dot_dimension_numbers<[2], [2], [1], [1], [0, 0, 0, 1, 1, 1], [0], [0]>} : vector<8x16x8xf32>, vector<8x16x8xf32>, vector<8x16x16xf32> -> vector<8x16x16xf32>
    "tpu.trace_stop"() : () -> ()
    %c3 = arith.constant 3 : index
    %c0_49 = arith.constant 0 : index
    %c0_50 = arith.constant 0 : index
    %c0_51 = arith.constant 0 : index
    %122 = vector.load %arg4[%c3, %c0_49, %c0_50, %c0_51] : memref<8x8x16x16xf32, #tpu.memory_space<vmem>>, vector<1x8x16x16xf32>
    %123 = vector.shape_cast %122 : vector<1x8x16x16xf32> to vector<8x16x16xf32>
    %124 = arith.addf %121, %123 : vector<8x16x16xf32>
    "tpu.trace_start"() <{level = 10 : i32, message = "wpd,wqd->wpq"}> : () -> ()
    %cst_52 = arith.constant dense<0.000000e+00> : vector<8x16x16xf32>
    %125 = tpu.matmul %118, %116, %cst_52 {dimension_numbers = #tpu.dot_dimension_numbers<[2], [2], [1], [1], [0, 0, 0, 1, 1, 1], [0], [0]>} : vector<8x16x8xf32>, vector<8x16x8xf32>, vector<8x16x16xf32> -> vector<8x16x16xf32>
    "tpu.trace_stop"() : () -> ()
    %c7 = arith.constant 7 : index
    %c0_53 = arith.constant 0 : index
    %c0_54 = arith.constant 0 : index
    %c0_55 = arith.constant 0 : index
    %126 = vector.load %arg4[%c7, %c0_53, %c0_54, %c0_55] : memref<8x8x16x16xf32, #tpu.memory_space<vmem>>, vector<1x8x16x16xf32>
    %127 = vector.shape_cast %126 : vector<1x8x16x16xf32> to vector<8x16x16xf32>
    %128 = arith.addf %125, %127 : vector<8x16x16xf32>
    %cst_56 = arith.constant dense<0xFF800000> : vector<8x16xf32>
    %129 = vector.multi_reduction <maximumf>, %124, %cst_56 [2] : vector<8x16x16xf32> to vector<8x16xf32>
    %130 = vector.shape_cast %129 : vector<8x16xf32> to vector<8x16x1xf32>
    %131 = vector.broadcast %130 : vector<8x16x1xf32> to vector<8x16x16xf32>
    %132 = arith.subf %124, %131 : vector<8x16x16xf32>
    %133 = math.exp %132 : vector<8x16x16xf32>
    %cst_57 = arith.constant dense<0.000000e+00> : vector<8x16xf32>
    %134 = vector.multi_reduction <add>, %133, %cst_57 [2] : vector<8x16x16xf32> to vector<8x16xf32>
    %135 = vector.shape_cast %134 : vector<8x16xf32> to vector<8x16x1xf32>
    %136 = tpu.reciprocal %135 {approx = true} : vector<8x16x1xf32> -> vector<8x16x1xf32>
    %137 = vector.broadcast %136 : vector<8x16x1xf32> to vector<8x16x16xf32>
    %138 = arith.mulf %133, %137 : vector<8x16x16xf32>
    %cst_58 = arith.constant dense<0xFF800000> : vector<8x16xf32>
    %139 = vector.multi_reduction <maximumf>, %128, %cst_58 [2] : vector<8x16x16xf32> to vector<8x16xf32>
    %140 = vector.shape_cast %139 : vector<8x16xf32> to vector<8x16x1xf32>
    %141 = vector.broadcast %140 : vector<8x16x1xf32> to vector<8x16x16xf32>
    %142 = arith.subf %128, %141 : vector<8x16x16xf32>
    %143 = math.exp %142 : vector<8x16x16xf32>
    %cst_59 = arith.constant dense<0.000000e+00> : vector<8x16xf32>
    %144 = vector.multi_reduction <add>, %143, %cst_59 [2] : vector<8x16x16xf32> to vector<8x16xf32>
    %145 = vector.shape_cast %144 : vector<8x16xf32> to vector<8x16x1xf32>
    %146 = tpu.reciprocal %145 {approx = true} : vector<8x16x1xf32> -> vector<8x16x1xf32>
    %147 = vector.broadcast %146 : vector<8x16x1xf32> to vector<8x16x16xf32>
    %148 = arith.mulf %143, %147 : vector<8x16x16xf32>
    "tpu.trace_start"() <{level = 10 : i32, message = "wpq,wqd->wpd"}> : () -> ()
    %cst_60 = arith.constant dense<0.000000e+00> : vector<8x16x8xf32>
    %149 = tpu.matmul %138, %120, %cst_60 {dimension_numbers = #tpu.dot_dimension_numbers<[2], [1], [1], [2], [0, 0, 0, 1, 1, 2], [0], [0]>} : vector<8x16x16xf32>, vector<8x16x8xf32>, vector<8x16x8xf32> -> vector<8x16x8xf32>
    %cst_61 = arith.constant dense<0.000000e+00> : vector<8x16x8xf32>
    %150 = tpu.matmul %148, %117, %cst_61 {dimension_numbers = #tpu.dot_dimension_numbers<[2], [1], [1], [2], [0, 0, 0, 1, 1, 2], [0], [0]>} : vector<8x16x16xf32>, vector<8x16x8xf32>, vector<8x16x8xf32> -> vector<8x16x8xf32>
    "tpu.trace_stop"() : () -> ()
    %151 = tpu.concatenate %41, %77, %113, %149 in 2 : vector<8x16x8xf32>, vector<8x16x8xf32>, vector<8x16x8xf32>, vector<8x16x8xf32> -> vector<8x16x32xf32>
    %152 = vector.shape_cast %151 : vector<8x16x32xf32> to vector<128x32xf32>
    %153 = tpu.concatenate %42, %78, %114, %150 in 2 : vector<8x16x8xf32>, vector<8x16x8xf32>, vector<8x16x8xf32>, vector<8x16x8xf32> -> vector<8x16x32xf32>
    %154 = vector.shape_cast %153 : vector<8x16x32xf32> to vector<128x32xf32>
    %155 = tpu.concatenate %152, %154 in 1 : vector<128x32xf32>, vector<128x32xf32> -> vector<128x64xf32>
    %c0_62 = arith.constant 0 : index
    %c0_63 = arith.constant 0 : index
    %156 = vector.load %arg5[%c0_62, %c0_63] : memref<64x64xf32, #tpu.memory_space<vmem>>, vector<64x64xf32>
    %cst_64 = arith.constant dense<0.000000e+00> : vector<128x64xf32>
    %157 = tpu.matmul %155, %156, %cst_64 {dimension_numbers = #tpu.dot_dimension_numbers<[1], [0], [0], [1], [0, 0, 1, 1], [], []>} : vector<128x64xf32>, vector<64x64xf32>, vector<128x64xf32> -> vector<128x64xf32>
    %c0_65 = arith.constant 0 : index
    %c0_66 = arith.constant 0 : index
    %158 = vector.load %arg6[%c0_65, %c0_66] : memref<1x64xf32, #tpu.memory_space<vmem>>, vector<1x64xf32>
    %159 = vector.broadcast %158 : vector<1x64xf32> to vector<128x64xf32>
    %160 = arith.addf %157, %159 : vector<128x64xf32>
    %c0_67 = arith.constant 0 : index
    %c0_68 = arith.constant 0 : index
    %161 = vector.load %arg7[%c0_67, %c0_68] : memref<128x64xf32, #tpu.memory_space<vmem>>, vector<128x64xf32>
    tpu.vector_store %arg7[%c0_67, %c0_68], %160 {strides = array<i32>} : memref<128x64xf32, #tpu.memory_space<vmem>>, vector<128x64xf32>,
    return
  }
  func.func @transform_0(%arg0: i32) -> (i32, i32) {
    %c0_i32 = arith.constant 0 : i32
    %c0_i32_0 = arith.constant 0 : i32
    return %arg0, %c0_i32 : i32, i32
  }
  func.func @transform_1(%arg0: i32) -> (i32, i32) {
    %c0_i32 = arith.constant 0 : i32
    %c0_i32_0 = arith.constant 0 : i32
    %c0_i32_1 = arith.constant 0 : i32
    return %c0_i32, %c0_i32_0 : i32, i32
  }
  func.func @transform_2(%arg0: i32) -> (i32, i32) {
    %c0_i32 = arith.constant 0 : i32
    %c0_i32_0 = arith.constant 0 : i32
    %c0_i32_1 = arith.constant 0 : i32
    return %c0_i32, %c0_i32_0 : i32, i32
  }
  func.func @transform_3(%arg0: i32) -> (i32, i32, i32, i32) {
    %c0_i32 = arith.constant 0 : i32
    %c0_i32_0 = arith.constant 0 : i32
    %c0_i32_1 = arith.constant 0 : i32
    %c0_i32_2 = arith.constant 0 : i32
    return %c0_i32, %arg0, %c0_i32_0, %c0_i32_1 : i32, i32, i32, i32
  }
  func.func @transform_4(%arg0: i32) -> (i32, i32) {
    %c0_i32 = arith.constant 0 : i32
    %c0_i32_0 = arith.constant 0 : i32
    %c0_i32_1 = arith.constant 0 : i32
    return %c0_i32, %c0_i32_0 : i32, i32
  }
  func.func @transform_5(%arg0: i32) -> (i32, i32) {
    %c0_i32 = arith.constant 0 : i32
    %c0_i32_0 = arith.constant 0 : i32
    %c0_i32_1 = arith.constant 0 : i32
    return %c0_i32, %c0_i32_0 : i32, i32
  }
  func.func @transform_6(%arg0: i32) -> (i32, i32) {
    %c0_i32 = arith.constant 0 : i32
    %c0_i32_0 = arith.constant 0 : i32
    return %arg0, %c0_i32 : i32, i32
  }
}

</mosaic_0001>

<llo_original>
// kernel: w_sw_attention.1
$region0: #{w_sw_attention.1}
  #allocation0 [shape = 'u32[]', space=smem, size = 0x4, offset = 0x4, fixed_abs, tag = 'smem constant byte address 0x4 - core index']
  #allocation1 [shape = 'u32[72,128]{1,0:T(1,128)}', space=vmem, size = 0x9000, scoped, tag = 'internal scratch']
  %s0 = inlined_call_operand.vmem [shape: f32[128,64], index: 0, kind: input, shape index: {}]
  %s1 = inlined_call_operand.vmem [shape: f32[64,192], index: 1, kind: input, shape index: {}]
  %s2 = inlined_call_operand.vmem [shape: f32[1,192], index: 2, kind: input, shape index: {}]
  %s3 = inlined_call_operand.vmem [shape: f32[8,8,16,16], index: 3, kind: input, shape index: {}]
  %s4 = inlined_call_operand.vmem [shape: f32[64,64], index: 4, kind: input, shape index: {}]
  %s5 = inlined_call_operand.vmem [shape: f32[1,64], index: 5, kind: input, shape index: {}]
  %s6 = inlined_call_operand.vmem [shape: f32[128,64], index: 6, kind: output, shape index: {}]
  %s7 = sld [smem:[#allocation0]]
  $region34: #{w_sw_attention.1} parent=0
    _
  %s9 = ssub.s32 1, %s7
  %s10 = scalar_select 0, %s9, %s7
  // Predicated region
  $region2: #{w_sw_attention.1} parent=0 // pred_check
    _
  $region3: #{w_sw_attention.1} parent=0 // pred_check_branch
    %12 = sbr.rel (0) target = $region5
  $region4: #{w_sw_attention.1} parent=0 // pred_region
    _
  $region5: #{w_sw_attention.1} parent=0 // pred_fallthru
    _
  // Predicated region
  $region6: #{w_sw_attention.1} parent=0 // pred_check
    _
  $region7: #{w_sw_attention.1} parent=0 // pred_check_branch
    %14 = sbr.rel (0) target = $region9
  $region8: #{w_sw_attention.1} parent=0 // pred_region
    _
  $region9: #{w_sw_attention.1} parent=0 // pred_fallthru
    _
  // Predicated region
  $region10: #{w_sw_attention.1} parent=0 // pred_check
    _
  $region11: #{w_sw_attention.1} parent=0 // pred_check_branch
    %16 = sbr.rel (0) target = $region13
  $region12: #{w_sw_attention.1} parent=0 // pred_region
    _
  $region13: #{w_sw_attention.1} parent=0 // pred_fallthru
    _
  // Predicated region
  $region14: #{w_sw_attention.1} parent=0 // pred_check
    _
  $region15: #{w_sw_attention.1} parent=0 // pred_check_branch
    %18 = sbr.rel (0) target = $region17
  $region16: #{w_sw_attention.1} parent=0 // pred_region
    _
  $region17: #{w_sw_attention.1} parent=0 // pred_fallthru
    _
  // Predicated region
  $region18: #{w_sw_attention.1} parent=0 // pred_check
    _
  $region19: #{w_sw_attention.1} parent=0 // pred_check_branch
    %20 = sbr.rel (0) target = $region21
  $region20: #{w_sw_attention.1} parent=0 // pred_region
    _
  $region21: #{w_sw_attention.1} parent=0 // pred_fallthru
    _
  // Predicated region
  $region22: #{w_sw_attention.1} parent=0 // pred_check
    _
  $region23: #{w_sw_attention.1} parent=0 // pred_check_branch
    %22 = sbr.rel (0) target = $region25
  $region24: #{w_sw_attention.1} parent=0 // pred_region
    _
  $region25: #{w_sw_attention.1} parent=0 // pred_fallthru
    _
  %v23 = vld [vmem:[%s0] sm:$0xff]
  %v24 = vld [vmem:[%s0 + $0x8] sm:$0xff]
  %v25 = vld [vmem:[%s0 + $0x10] sm:$0xff]
  %v26 = vld [vmem:[%s0 + $0x18] sm:$0xff]
  %v27 = vld [vmem:[%s0 + $0x20] sm:$0xff]
  %v28 = vld [vmem:[%s0 + $0x28] sm:$0xff]
  %v29 = vld [vmem:[%s0 + $0x30] sm:$0xff]
  %v30 = vld [vmem:[%s0 + $0x38] sm:$0xff]
  %v31 = vld [vmem:[%s0 + $0x40] sm:$0xff]
  %v32 = vld [vmem:[%s0 + $0x48] sm:$0xff]
  %v33 = vld [vmem:[%s0 + $0x50] sm:$0xff]
  %v34 = vld [vmem:[%s0 + $0x58] sm:$0xff]
  %v35 = vld [vmem:[%s0 + $0x60] sm:$0xff]
  %v36 = vld [vmem:[%s0 + $0x68] sm:$0xff]
  %v37 = vld [vmem:[%s0 + $0x70] sm:$0xff]
  %v38 = vld [vmem:[%s0 + $0x78] sm:$0xff]
  %v39 = vld [vmem:[%s1] sm:$0xff]
  %v40 = vld [vmem:[%s1 + $0x8] sm:$0xff]
  %v41 = vld [vmem:[%s1 + $0x10] sm:$0xff]
  %v42 = vld [vmem:[%s1 + $0x18] sm:$0xff]
  %v43 = vld [vmem:[%s1 + $0x20] sm:$0xff]
  %v44 = vld [vmem:[%s1 + $0x28] sm:$0xff]
  %v45 = vld [vmem:[%s1 + $0x30] sm:$0xff]
  %v46 = vld [vmem:[%s1 + $0x38] sm:$0xff]
  %v47 = vld [vmem:[%s1 + $0x40] sm:$0xff]
  %v48 = vld [vmem:[%s1 + $0x48] sm:$0xff]
  %v49 = vld [vmem:[%s1 + $0x50] sm:$0xff]
  %v50 = vld [vmem:[%s1 + $0x58] sm:$0xff]
  %v51 = vld [vmem:[%s1 + $0x60] sm:$0xff]
  %v52 = vld [vmem:[%s1 + $0x68] sm:$0xff]
  %v53 = vld [vmem:[%s1 + $0x70] sm:$0xff]
  %v54 = vld [vmem:[%s1 + $0x78] sm:$0xff]
  %v55 = vld [vmem:[%s2] sm:$0x3]
  %v57 = vperm.slane %v55, 0
  %v58 = vperm.slane %v55, 1
  %vm61 = vcmask 523264
  %v63 = vsel %vm61, %v23, 0
  %v66 = vsel %vm61, %v24, 0
  %v69 = vsel %vm61, %v25, 0
  %v72 = vsel %vm61, %v26, 0
  %v75 = vsel %vm61, %v27, 0
  %v78 = vsel %vm61, %v28, 0
  %v81 = vsel %vm61, %v29, 0
  %v84 = vsel %vm61, %v30, 0
  %v87 = vsel %vm61, %v31, 0
  %v90 = vsel %vm61, %v32, 0
  %v93 = vsel %vm61, %v33, 0
  %v96 = vsel %vm61, %v34, 0
  %v99 = vsel %vm61, %v35, 0
  %v102 = vsel %vm61, %v36, 0
  %v105 = vsel %vm61, %v37, 0
  %v108 = vsel %vm61, %v38, 0
  %110 = vmatpush.msra.mxu0 0.0
  %111 = vmatpush.msra.mxu0 0.0
  %112 = vmatpush.msra.mxu0 0.0
  %113 = vmatpush.msra.mxu0 0.0
  %114 = vmatpush.msra.mxu0 0.0
  %115 = vmatpush.msra.mxu0 0.0
  %116 = vmatpush.msra.mxu0 0.0
  %117 = vmatpush.msra.mxu0 0.0
  %118 = vmatpush.msra.mxu0 %v53
  %119 = vmatpush.msra.mxu0 %v51
  %120 = vmatpush.msra.mxu0 %v49
  %121 = vmatpush.msra.mxu0 %v47
  %122 = vmatpush.msra.mxu0 %v45
  %123 = vmatpush.msra.mxu0 %v43
  %124 = vmatpush.msra.mxu0 %v41
  %125 = vmatpush.msra.mxu0 %v39
  %126 = vmatmul.f32.gmra.mxu0 %v63
  %v127 = vpop.f32.mrf.mxu0
  %v128 = vadd.f32 %v57, %v127
  %129 = vmatmul.f32.gmra.mxu0 %v66
  %v130 = vpop.f32.mrf.mxu0
  %v131 = vadd.f32 %v57, %v130
  %132 = vmatmul.f32.gmra.mxu0 %v69
  %v133 = vpop.f32.mrf.mxu0
  %v134 = vadd.f32 %v57, %v133
  %135 = vmatmul.f32.gmra.mxu0 %v72
  %v136 = vpop.f32.mrf.mxu0
  %v137 = vadd.f32 %v57, %v136
  %138 = vmatmul.f32.gmra.mxu0 %v75
  %v139 = vpop.f32.mrf.mxu0
  %v140 = vadd.f32 %v57, %v139
  %141 = vmatmul.f32.gmra.mxu0 %v78
  %v142 = vpop.f32.mrf.mxu0
  %v143 = vadd.f32 %v57, %v142
  %144 = vmatmul.f32.gmra.mxu0 %v81
  %v145 = vpop.f32.mrf.mxu0
  %v146 = vadd.f32 %v57, %v145
  %147 = vmatmul.f32.gmra.mxu0 %v84
  %v148 = vpop.f32.mrf.mxu0
  %v149 = vadd.f32 %v57, %v148
  %150 = vmatmul.f32.gmra.mxu0 %v87
  %v151 = vpop.f32.mrf.mxu0
  %v152 = vadd.f32 %v57, %v151
  %153 = vmatmul.f32.gmra.mxu0 %v90
  %v154 = vpop.f32.mrf.mxu0
  %v155 = vadd.f32 %v57, %v154
  %156 = vmatmul.f32.gmra.mxu0 %v93
  %v157 = vpop.f32.mrf.mxu0
  %v158 = vadd.f32 %v57, %v157
  %159 = vmatmul.f32.gmra.mxu0 %v96
  %v160 = vpop.f32.mrf.mxu0
  %v161 = vadd.f32 %v57, %v160
  %162 = vmatmul.f32.gmra.mxu0 %v99
  %v163 = vpop.f32.mrf.mxu0
  %v164 = vadd.f32 %v57, %v163
  %165 = vmatmul.f32.gmra.mxu0 %v102
  %v166 = vpop.f32.mrf.mxu0
  %v167 = vadd.f32 %v57, %v166
  %168 = vmatmul.f32.gmra.mxu0 %v105
  %v169 = vpop.f32.mrf.mxu0
  %v170 = vadd.f32 %v57, %v169
  %171 = vmatmul.f32.gmra.mxu0 %v108
  %v172 = vpop.f32.mrf.mxu0
  %v173 = vadd.f32 %v57, %v172
  %174 = vdwg.mxu0
  %175 = vmatpush.msra.mxu0 0.0
  %176 = vmatpush.msra.mxu0 0.0
  %177 = vmatpush.msra.mxu0 0.0
  %178 = vmatpush.msra.mxu0 0.0
  %179 = vmatpush.msra.mxu0 0.0
  %180 = vmatpush.msra.mxu0 0.0
  %181 = vmatpush.msra.mxu0 0.0
  %182 = vmatpush.msra.mxu0 0.0
  %183 = vmatpush.msra.mxu0 %v54
  %184 = vmatpush.msra.mxu0 %v52
  %185 = vmatpush.msra.mxu0 %v50
  %186 = vmatpush.msra.mxu0 %v48
  %187 = vmatpush.msra.mxu0 %v46
  %188 = vmatpush.msra.mxu0 %v44
  %189 = vmatpush.msra.mxu0 %v42
  %190 = vmatpush.msra.mxu0 %v40
  %191 = vmatmul.f32.gmra.mxu0 %v63
  %v192 = vpop.f32.mrf.mxu0
  %v193 = vadd.f32 %v58, %v192
  %194 = vmatmul.f32.gmra.mxu0 %v66
  %v195 = vpop.f32.mrf.mxu0
  %v196 = vadd.f32 %v58, %v195
  %197 = vmatmul.f32.gmra.mxu0 %v69
  %v198 = vpop.f32.mrf.mxu0
  %v199 = vadd.f32 %v58, %v198
  %200 = vmatmul.f32.gmra.mxu0 %v72
  %v201 = vpop.f32.mrf.mxu0
  %v202 = vadd.f32 %v58, %v201
  %203 = vmatmul.f32.gmra.mxu0 %v75
  %v204 = vpop.f32.mrf.mxu0
  %v205 = vadd.f32 %v58, %v204
  %206 = vmatmul.f32.gmra.mxu0 %v78
  %v207 = vpop.f32.mrf.mxu0
  %v208 = vadd.f32 %v58, %v207
  %209 = vmatmul.f32.gmra.mxu0 %v81
  %v210 = vpop.f32.mrf.mxu0
  %v211 = vadd.f32 %v58, %v210
  %212 = vmatmul.f32.gmra.mxu0 %v84
  %v213 = vpop.f32.mrf.mxu0
  %v214 = vadd.f32 %v58, %v213
  %215 = vmatmul.f32.gmra.mxu0 %v87
  %v216 = vpop.f32.mrf.mxu0
  %v217 = vadd.f32 %v58, %v216
  %218 = vmatmul.f32.gmra.mxu0 %v90
  %v219 = vpop.f32.mrf.mxu0
  %v220 = vadd.f32 %v58, %v219
  %221 = vmatmul.f32.gmra.mxu0 %v93
  %v222 = vpop.f32.mrf.mxu0
  %v223 = vadd.f32 %v58, %v222
  %224 = vmatmul.f32.gmra.mxu0 %v96
  %v225 = vpop.f32.mrf.mxu0
  %v226 = vadd.f32 %v58, %v225
  %227 = vmatmul.f32.gmra.mxu0 %v99
  %v228 = vpop.f32.mrf.mxu0
  %v229 = vadd.f32 %v58, %v228
  %230 = vmatmul.f32.gmra.mxu0 %v102
  %v231 = vpop.f32.mrf.mxu0
  %v232 = vadd.f32 %v58, %v231
  %233 = vmatmul.f32.gmra.mxu0 %v105
  %v234 = vpop.f32.mrf.mxu0
  %v235 = vadd.f32 %v58, %v234
  %236 = vmatmul.f32.gmra.mxu0 %v108
  %v237 = vpop.f32.mrf.mxu0
  %v238 = vadd.f32 %v58, %v237
  %239 = vdwg.mxu0
  %v240 = vld [vmem:[%s3] sm:$0xff]
  %v241 = vld [vmem:[%s3 + $0x8] sm:$0xff]
  %v242 = vld [vmem:[%s3 + $0x10] sm:$0xff]
  %v243 = vld [vmem:[%s3 + $0x18] sm:$0xff]
  %v244 = vld [vmem:[%s3 + $0x20] sm:$0xff]
  %v245 = vld [vmem:[%s3 + $0x28] sm:$0xff]
  %v246 = vld [vmem:[%s3 + $0x30] sm:$0xff]
  %v247 = vld [vmem:[%s3 + $0x38] sm:$0xff]
  %v248 = vld [vmem:[%s3 + $0x40] sm:$0xff]
  %v249 = vld [vmem:[%s3 + $0x48] sm:$0xff]
  %v250 = vld [vmem:[%s3 + $0x50] sm:$0xff]
  %v251 = vld [vmem:[%s3 + $0x58] sm:$0xff]
  %v252 = vld [vmem:[%s3 + $0x60] sm:$0xff]
  %v253 = vld [vmem:[%s3 + $0x68] sm:$0xff]
  %v254 = vld [vmem:[%s3 + $0x70] sm:$0xff]
  %v255 = vld [vmem:[%s3 + $0x78] sm:$0xff]
  %vm256 = vcmask 64512
  %v258 = vsel %vm256, %v128, 0
  %v261 = vsel %vm256, %v131, 0
  %v264 = vsel %vm256, %v193, 0
  %v267 = vsel %vm256, %v196, 0
  %269 = vmatpush.xpose.msra.mxu0 0.0
  %270 = vmatpush.xpose.msra.mxu0 0.0
  %271 = vmatpush.xpose.msra.mxu0 0.0
  %272 = vmatpush.xpose.msra.mxu0 0.0
  %273 = vmatpush.xpose.msra.mxu0 0.0
  %274 = vmatpush.xpose.msra.mxu0 0.0
  %275 = vmatpush.xpose.msra.mxu0 0.0
  %276 = vmatpush.xpose.msra.mxu0 0.0
  %277 = vmatpush.xpose.msra.mxu0 0.0
  %278 = vmatpush.xpose.msra.mxu0 0.0
  %279 = vmatpush.xpose.msra.mxu0 0.0
  %280 = vmatpush.xpose.msra.mxu0 0.0
  %281 = vmatpush.xpose.msra.mxu0 0.0
  %282 = vmatpush.xpose.msra.mxu0 0.0
  %283 = vmatpush.xpose.msra.mxu0 %v267
  %284 = vmatpush.xpose.msra.mxu0 %v264
  %285 = vmatmul.f32.gmra.mxu0 %v258
  %v286 = vpop.f32.mrf.mxu0
  %v287 = vadd.f32 %v240, %v286
  %288 = vmatmul.f32.gmra.mxu0 %v261
  %v289 = vpop.f32.mrf.mxu0
  %v290 = vadd.f32 %v241, %v289
  %291 = vdwg.mxu0
  %v293 = vsel %vm256, %v134, 0
  %v296 = vsel %vm256, %v137, 0
  %v299 = vsel %vm256, %v199, 0
  %v302 = vsel %vm256, %v202, 0
  %304 = vmatpush.xpose.msra.mxu0 0.0
  %305 = vmatpush.xpose.msra.mxu0 0.0
  %306 = vmatpush.xpose.msra.mxu0 0.0
  %307 = vmatpush.xpose.msra.mxu0 0.0
  %308 = vmatpush.xpose.msra.mxu0 0.0
  %309 = vmatpush.xpose.msra.mxu0 0.0
  %310 = vmatpush.xpose.msra.mxu0 0.0
  %311 = vmatpush.xpose.msra.mxu0 0.0
  %312 = vmatpush.xpose.msra.mxu0 0.0
  %313 = vmatpush.xpose.msra.mxu0 0.0
  %314 = vmatpush.xpose.msra.mxu0 0.0
  %315 = vmatpush.xpose.msra.mxu0 0.0
  %316 = vmatpush.xpose.msra.mxu0 0.0
  %317 = vmatpush.xpose.msra.mxu0 0.0
  %318 = vmatpush.xpose.msra.mxu0 %v302
  %319 = vmatpush.xpose.msra.mxu0 %v299
  %320 = vmatmul.f32.gmra.mxu0 %v293
  %v321 = vpop.f32.mrf.mxu0
  %v322 = vadd.f32 %v242, %v321
  %323 = vmatmul.f32.gmra.mxu0 %v296
  %v324 = vpop.f32.mrf.mxu0
  %v325 = vadd.f32 %v243, %v324
  %326 = vdwg.mxu0
  %v328 = vsel %vm256, %v140, 0
  %v331 = vsel %vm256, %v143, 0
  %v334 = vsel %vm256, %v205, 0
  %v337 = vsel %vm256, %v208, 0
  %339 = vmatpush.xpose.msra.mxu0 0.0
  %340 = vmatpush.xpose.msra.mxu0 0.0
  %341 = vmatpush.xpose.msra.mxu0 0.0
  %342 = vmatpush.xpose.msra.mxu0 0.0
  %343 = vmatpush.xpose.msra.mxu0 0.0
  %344 = vmatpush.xpose.msra.mxu0 0.0
  %345 = vmatpush.xpose.msra.mxu0 0.0
  %346 = vmatpush.xpose.msra.mxu0 0.0
  %347 = vmatpush.xpose.msra.mxu0 0.0
  %348 = vmatpush.xpose.msra.mxu0 0.0
  %349 = vmatpush.xpose.msra.mxu0 0.0
  %350 = vmatpush.xpose.msra.mxu0 0.0
  %351 = vmatpush.xpose.msra.mxu0 0.0
  %352 = vmatpush.xpose.msra.mxu0 0.0
  %353 = vmatpush.xpose.msra.mxu0 %v337
  %354 = vmatpush.xpose.msra.mxu0 %v334
  %355 = vmatmul.f32.gmra.mxu0 %v328
  %v356 = vpop.f32.mrf.mxu0
  %v357 = vadd.f32 %v244, %v356
  %358 = vmatmul.f32.gmra.mxu0 %v331
  %v359 = vpop.f32.mrf.mxu0
  %v360 = vadd.f32 %v245, %v359
  %361 = vdwg.mxu0
  %v363 = vsel %vm256, %v146, 0
  %v366 = vsel %vm256, %v149, 0
  %v369 = vsel %vm256, %v211, 0
  %v372 = vsel %vm256, %v214, 0
  %374 = vmatpush.xpose.msra.mxu0 0.0
  %375 = vmatpush.xpose.msra.mxu0 0.0
  %376 = vmatpush.xpose.msra.mxu0 0.0
  %377 = vmatpush.xpose.msra.mxu0 0.0
  %378 = vmatpush.xpose.msra.mxu0 0.0
  %379 = vmatpush.xpose.msra.mxu0 0.0
  %380 = vmatpush.xpose.msra.mxu0 0.0
  %381 = vmatpush.xpose.msra.mxu0 0.0
  %382 = vmatpush.xpose.msra.mxu0 0.0
  %383 = vmatpush.xpose.msra.mxu0 0.0
  %384 = vmatpush.xpose.msra.mxu0 0.0
  %385 = vmatpush.xpose.msra.mxu0 0.0
  %386 = vmatpush.xpose.msra.mxu0 0.0
  %387 = vmatpush.xpose.msra.mxu0 0.0
  %388 = vmatpush.xpose.msra.mxu0 %v372
  %389 = vmatpush.xpose.msra.mxu0 %v369
  %390 = vmatmul.f32.gmra.mxu0 %v363
  %v391 = vpop.f32.mrf.mxu0
  %v392 = vadd.f32 %v246, %v391
  %393 = vmatmul.f32.gmra.mxu0 %v366
  %v394 = vpop.f32.mrf.mxu0
  %v395 = vadd.f32 %v247, %v394
  %396 = vdwg.mxu0
  %v398 = vsel %vm256, %v152, 0
  %v401 = vsel %vm256, %v155, 0
  %v404 = vsel %vm256, %v217, 0
  %v407 = vsel %vm256, %v220, 0
  %409 = vmatpush.xpose.msra.mxu0 0.0
  %410 = vmatpush.xpose.msra.mxu0 0.0
  %411 = vmatpush.xpose.msra.mxu0 0.0
  %412 = vmatpush.xpose.msra.mxu0 0.0
  %413 = vmatpush.xpose.msra.mxu0 0.0
  %414 = vmatpush.xpose.msra.mxu0 0.0
  %415 = vmatpush.xpose.msra.mxu0 0.0
  %416 = vmatpush.xpose.msra.mxu0 0.0
  %417 = vmatpush.xpose.msra.mxu0 0.0
  %418 = vmatpush.xpose.msra.mxu0 0.0
  %419 = vmatpush.xpose.msra.mxu0 0.0
  %420 = vmatpush.xpose.msra.mxu0 0.0
  %421 = vmatpush.xpose.msra.mxu0 0.0
  %422 = vmatpush.xpose.msra.mxu0 0.0
  %423 = vmatpush.xpose.msra.mxu0 %v407
  %424 = vmatpush.xpose.msra.mxu0 %v404
  %425 = vmatmul.f32.gmra.mxu0 %v398
  %v426 = vpop.f32.mrf.mxu0
  %v427 = vadd.f32 %v248, %v426
  %428 = vmatmul.f32.gmra.mxu0 %v401
  %v429 = vpop.f32.mrf.mxu0
  %v430 = vadd.f32 %v249, %v429
  %431 = vdwg.mxu0
  %v433 = vsel %vm256, %v158, 0
  %v436 = vsel %vm256, %v161, 0
  %v439 = vsel %vm256, %v223, 0
  %v442 = vsel %vm256, %v226, 0
  %444 = vmatpush.xpose.msra.mxu0 0.0
  %445 = vmatpush.xpose.msra.mxu0 0.0
  %446 = vmatpush.xpose.msra.mxu0 0.0
  %447 = vmatpush.xpose.msra.mxu0 0.0
  %448 = vmatpush.xpose.msra.mxu0 0.0
  %449 = vmatpush.xpose.msra.mxu0 0.0
  %450 = vmatpush.xpose.msra.mxu0 0.0
  %451 = vmatpush.xpose.msra.mxu0 0.0
  %452 = vmatpush.xpose.msra.mxu0 0.0
  %453 = vmatpush.xpose.msra.mxu0 0.0
  %454 = vmatpush.xpose.msra.mxu0 0.0
  %455 = vmatpush.xpose.msra.mxu0 0.0
  %456 = vmatpush.xpose.msra.mxu0 0.0
  %457 = vmatpush.xpose.msra.mxu0 0.0
  %458 = vmatpush.xpose.msra.mxu0 %v442
  %459 = vmatpush.xpose.msra.mxu0 %v439
  %460 = vmatmul.f32.gmra.mxu0 %v433
  %v461 = vpop.f32.mrf.mxu0
  %v462 = vadd.f32 %v250, %v461
  %463 = vmatmul.f32.gmra.mxu0 %v436
  %v464 = vpop.f32.mrf.mxu0
  %v465 = vadd.f32 %v251, %v464
  %466 = vdwg.mxu0
  %v468 = vsel %vm256, %v164, 0
  %v471 = vsel %vm256, %v167, 0
  %v474 = vsel %vm256, %v229, 0
  %v477 = vsel %vm256, %v232, 0
  %479 = vmatpush.xpose.msra.mxu0 0.0
  %480 = vmatpush.xpose.msra.mxu0 0.0
  %481 = vmatpush.xpose.msra.mxu0 0.0
  %482 = vmatpush.xpose.msra.mxu0 0.0
  %483 = vmatpush.xpose.msra.mxu0 0.0
  %484 = vmatpush.xpose.msra.mxu0 0.0
  %485 = vmatpush.xpose.msra.mxu0 0.0
  %486 = vmatpush.xpose.msra.mxu0 0.0
  %487 = vmatpush.xpose.msra.mxu0 0.0
  %488 = vmatpush.xpose.msra.mxu0 0.0
  %489 = vmatpush.xpose.msra.mxu0 0.0
  %490 = vmatpush.xpose.msra.mxu0 0.0
  %491 = vmatpush.xpose.msra.mxu0 0.0
  %492 = vmatpush.xpose.msra.mxu0 0.0
  %493 = vmatpush.xpose.msra.mxu0 %v477
  %494 = vmatpush.xpose.msra.mxu0 %v474
  %495 = vmatmul.f32.gmra.mxu0 %v468
  %v496 = vpop.f32.mrf.mxu0
  %v497 = vadd.f32 %v252, %v496
  %498 = vmatmul.f32.gmra.mxu0 %v471
  %v499 = vpop.f32.mrf.mxu0
  %v500 = vadd.f32 %v253, %v499
  %501 = vdwg.mxu0
  %v503 = vsel %vm256, %v170, 0
  %v506 = vsel %vm256, %v173, 0
  %v509 = vsel %vm256, %v235, 0
  %v512 = vsel %vm256, %v238, 0
  %514 = vmatpush.xpose.msra.mxu0 0.0
  %515 = vmatpush.xpose.msra.mxu0 0.0
  %516 = vmatpush.xpose.msra.mxu0 0.0
  %517 = vmatpush.xpose.msra.mxu0 0.0
  %518 = vmatpush.xpose.msra.mxu0 0.0
  %519 = vmatpush.xpose.msra.mxu0 0.0
  %520 = vmatpush.xpose.msra.mxu0 0.0
  %521 = vmatpush.xpose.msra.mxu0 0.0
  %522 = vmatpush.xpose.msra.mxu0 0.0
  %523 = vmatpush.xpose.msra.mxu0 0.0
  %524 = vmatpush.xpose.msra.mxu0 0.0
  %525 = vmatpush.xpose.msra.mxu0 0.0
  %526 = vmatpush.xpose.msra.mxu0 0.0
  %527 = vmatpush.xpose.msra.mxu0 0.0
  %528 = vmatpush.xpose.msra.mxu0 %v512
  %529 = vmatpush.xpose.msra.mxu0 %v509
  %530 = vmatmul.f32.gmra.mxu0 %v503
  %v531 = vpop.f32.mrf.mxu0
  %v532 = vadd.f32 %v254, %v531
  %533 = vmatmul.f32.gmra.mxu0 %v506
  %v534 = vpop.f32.mrf.mxu0
  %v535 = vadd.f32 %v255, %v534
  %536 = vdwg.mxu0
  %s537 = scalar_lea.vmem %s3, 512
  %v538 = vld [vmem:[%s537] sm:$0xff]
  %v539 = vld [vmem:[%s537 + $0x8] sm:$0xff]
  %v540 = vld [vmem:[%s537 + $0x10] sm:$0xff]
  %v541 = vld [vmem:[%s537 + $0x18] sm:$0xff]
  %v542 = vld [vmem:[%s537 + $0x20] sm:$0xff]
  %v543 = vld [vmem:[%s537 + $0x28] sm:$0xff]
  %v544 = vld [vmem:[%s537 + $0x30] sm:$0xff]
  %v545 = vld [vmem:[%s537 + $0x38] sm:$0xff]
  %v546 = vld [vmem:[%s537 + $0x40] sm:$0xff]
  %v547 = vld [vmem:[%s537 + $0x48] sm:$0xff]
  %v548 = vld [vmem:[%s537 + $0x50] sm:$0xff]
  %v549 = vld [vmem:[%s537 + $0x58] sm:$0xff]
  %v550 = vld [vmem:[%s537 + $0x60] sm:$0xff]
  %v551 = vld [vmem:[%s537 + $0x68] sm:$0xff]
  %v552 = vld [vmem:[%s537 + $0x70] sm:$0xff]
  %v553 = vld [vmem:[%s537 + $0x78] sm:$0xff]
  %554 = vrot.lane.b32.xlu0 %v128, 32
  %v555 = vpop.permute.xlu0 %554
  %556 = vrot.lane.b32.xlu0 %v131, 32
  %v557 = vpop.permute.xlu0 %556
  %558 = vrot.lane.b32.xlu0 %v128, 96
  %v559 = vpop.permute.xlu0 %558
  %560 = vrot.lane.b32.xlu0 %v131, 96
  %v561 = vpop.permute.xlu0 %560
  %v562 = vsel %vm256, %v555, 0
  %v564 = vsel %vm256, %v557, 0
  %v566 = vsel %vm256, %v559, 0
  %v568 = vsel %vm256, %v561, 0
  %570 = vmatpush.xpose.msra.mxu0 0.0
  %571 = vmatpush.xpose.msra.mxu0 0.0
  %572 = vmatpush.xpose.msra.mxu0 0.0
  %573 = vmatpush.xpose.msra.mxu0 0.0
  %574 = vmatpush.xpose.msra.mxu0 0.0
  %575 = vmatpush.xpose.msra.mxu0 0.0
  %576 = vmatpush.xpose.msra.mxu0 0.0
  %577 = vmatpush.xpose.msra.mxu0 0.0
  %578 = vmatpush.xpose.msra.mxu0 0.0
  %579 = vmatpush.xpose.msra.mxu0 0.0
  %580 = vmatpush.xpose.msra.mxu0 0.0
  %581 = vmatpush.xpose.msra.mxu0 0.0
  %582 = vmatpush.xpose.msra.mxu0 0.0
  %583 = vmatpush.xpose.msra.mxu0 0.0
  %584 = vmatpush.xpose.msra.mxu0 %v568
  %585 = vmatpush.xpose.msra.mxu0 %v566
  %586 = vmatmul.f32.gmra.mxu0 %v562
  %v587 = vpop.f32.mrf.mxu0
  %v588 = vadd.f32 %v538, %v587
  %589 = vmatmul.f32.gmra.mxu0 %v564
  %v590 = vpop.f32.mrf.mxu0
  %v591 = vadd.f32 %v539, %v590
  %592 = vdwg.mxu0
  %593 = vrot.lane.b32.xlu0 %v134, 32
  %v594 = vpop.permute.xlu0 %593
  %595 = vrot.lane.b32.xlu0 %v137, 32
  %v596 = vpop.permute.xlu0 %595
  %597 = vrot.lane.b32.xlu0 %v134, 96
  %v598 = vpop.permute.xlu0 %597
  %599 = vrot.lane.b32.xlu0 %v137, 96
  %v600 = vpop.permute.xlu0 %599
  %v601 = vsel %vm256, %v594, 0
  %v603 = vsel %vm256, %v596, 0
  %v605 = vsel %vm256, %v598, 0
  %v607 = vsel %vm256, %v600, 0
  %609 = vmatpush.xpose.msra.mxu0 0.0
  %610 = vmatpush.xpose.msra.mxu0 0.0
  %611 = vmatpush.xpose.msra.mxu0 0.0
  %612 = vmatpush.xpose.msra.mxu0 0.0
  %613 = vmatpush.xpose.msra.mxu0 0.0
  %614 = vmatpush.xpose.msra.mxu0 0.0
  %615 = vmatpush.xpose.msra.mxu0 0.0
  %616 = vmatpush.xpose.msra.mxu0 0.0
  %617 = vmatpush.xpose.msra.mxu0 0.0
  %618 = vmatpush.xpose.msra.mxu0 0.0
  %619 = vmatpush.xpose.msra.mxu0 0.0
  %620 = vmatpush.xpose.msra.mxu0 0.0
  %621 = vmatpush.xpose.msra.mxu0 0.0
  %622 = vmatpush.xpose.msra.mxu0 0.0
  %623 = vmatpush.xpose.msra.mxu0 %v607
  %624 = vmatpush.xpose.msra.mxu0 %v605
  %625 = vmatmul.f32.gmra.mxu0 %v601
  %v626 = vpop.f32.mrf.mxu0
  %v627 = vadd.f32 %v540, %v626
  %628 = vmatmul.f32.gmra.mxu0 %v603
  %v629 = vpop.f32.mrf.mxu0
  %v630 = vadd.f32 %v541, %v629
  %631 = vdwg.mxu0
  %632 = vrot.lane.b32.xlu0 %v140, 32
  %v633 = vpop.permute.xlu0 %632
  %634 = vrot.lane.b32.xlu0 %v143, 32
  %v635 = vpop.permute.xlu0 %634
  %636 = vrot.lane.b32.xlu0 %v140, 96
  %v637 = vpop.permute.xlu0 %636
  %638 = vrot.lane.b32.xlu0 %v143, 96
  %v639 = vpop.permute.xlu0 %638
  %v640 = vsel %vm256, %v633, 0
  %v642 = vsel %vm256, %v635, 0
  %v644 = vsel %vm256, %v637, 0
  %v646 = vsel %vm256, %v639, 0
  %648 = vmatpush.xpose.msra.mxu0 0.0
  %649 = vmatpush.xpose.msra.mxu0 0.0
  %650 = vmatpush.xpose.msra.mxu0 0.0
  %651 = vmatpush.xpose.msra.mxu0 0.0
  %652 = vmatpush.xpose.msra.mxu0 0.0
  %653 = vmatpush.xpose.msra.mxu0 0.0
  %654 = vmatpush.xpose.msra.mxu0 0.0
  %655 = vmatpush.xpose.msra.mxu0 0.0
  %656 = vmatpush.xpose.msra.mxu0 0.0
  %657 = vmatpush.xpose.msra.mxu0 0.0
  %658 = vmatpush.xpose.msra.mxu0 0.0
  %659 = vmatpush.xpose.msra.mxu0 0.0
  %660 = vmatpush.xpose.msra.mxu0 0.0
  %661 = vmatpush.xpose.msra.mxu0 0.0
  %662 = vmatpush.xpose.msra.mxu0 %v646
  %663 = vmatpush.xpose.msra.mxu0 %v644
  %664 = vmatmul.f32.gmra.mxu0 %v640
  %v665 = vpop.f32.mrf.mxu0
  %v666 = vadd.f32 %v542, %v665
  %667 = vmatmul.f32.gmra.mxu0 %v642
  %v668 = vpop.f32.mrf.mxu0
  %v669 = vadd.f32 %v543, %v668
  %670 = vdwg.mxu0
  %671 = vrot.lane.b32.xlu0 %v146, 32
  %v672 = vpop.permute.xlu0 %671
  %673 = vrot.lane.b32.xlu0 %v149, 32
  %v674 = vpop.permute.xlu0 %673
  %675 = vrot.lane.b32.xlu0 %v146, 96
  %v676 = vpop.permute.xlu0 %675
  %677 = vrot.lane.b32.xlu0 %v149, 96
  %v678 = vpop.permute.xlu0 %677
  %v679 = vsel %vm256, %v672, 0
  %v681 = vsel %vm256, %v674, 0
  %v683 = vsel %vm256, %v676, 0
  %v685 = vsel %vm256, %v678, 0
  %687 = vmatpush.xpose.msra.mxu0 0.0
  %688 = vmatpush.xpose.msra.mxu0 0.0
  %689 = vmatpush.xpose.msra.mxu0 0.0
  %690 = vmatpush.xpose.msra.mxu0 0.0
  %691 = vmatpush.xpose.msra.mxu0 0.0
  %692 = vmatpush.xpose.msra.mxu0 0.0
  %693 = vmatpush.xpose.msra.mxu0 0.0
  %694 = vmatpush.xpose.msra.mxu0 0.0
  %695 = vmatpush.xpose.msra.mxu0 0.0
  %696 = vmatpush.xpose.msra.mxu0 0.0
  %697 = vmatpush.xpose.msra.mxu0 0.0
  %698 = vmatpush.xpose.msra.mxu0 0.0
  %699 = vmatpush.xpose.msra.mxu0 0.0
  %700 = vmatpush.xpose.msra.mxu0 0.0
  %701 = vmatpush.xpose.msra.mxu0 %v685
  %702 = vmatpush.xpose.msra.mxu0 %v683
  %703 = vmatmul.f32.gmra.mxu0 %v679
  %v704 = vpop.f32.mrf.mxu0
  %v705 = vadd.f32 %v544, %v704
  %706 = vmatmul.f32.gmra.mxu0 %v681
  %v707 = vpop.f32.mrf.mxu0
  %v708 = vadd.f32 %v545, %v707
  %709 = vdwg.mxu0
  %710 = vrot.lane.b32.xlu0 %v152, 32
  %v711 = vpop.permute.xlu0 %710
  %712 = vrot.lane.b32.xlu0 %v155, 32
  %v713 = vpop.permute.xlu0 %712
  %714 = vrot.lane.b32.xlu0 %v152, 96
  %v715 = vpop.permute.xlu0 %714
  %716 = vrot.lane.b32.xlu0 %v155, 96
  %v717 = vpop.permute.xlu0 %716
  %v718 = vsel %vm256, %v711, 0
  %v720 = vsel %vm256, %v713, 0
  %v722 = vsel %vm256, %v715, 0
  %v724 = vsel %vm256, %v717, 0
  %726 = vmatpush.xpose.msra.mxu0 0.0
  %727 = vmatpush.xpose.msra.mxu0 0.0
  %728 = vmatpush.xpose.msra.mxu0 0.0
  %729 = vmatpush.xpose.msra.mxu0 0.0
  %730 = vmatpush.xpose.msra.mxu0 0.0
  %731 = vmatpush.xpose.msra.mxu0 0.0
  %732 = vmatpush.xpose.msra.mxu0 0.0
  %733 = vmatpush.xpose.msra.mxu0 0.0
  %734 = vmatpush.xpose.msra.mxu0 0.0
  %735 = vmatpush.xpose.msra.mxu0 0.0
  %736 = vmatpush.xpose.msra.mxu0 0.0
  %737 = vmatpush.xpose.msra.mxu0 0.0
  %738 = vmatpush.xpose.msra.mxu0 0.0
  %739 = vmatpush.xpose.msra.mxu0 0.0
  %740 = vmatpush.xpose.msra.mxu0 %v724
  %741 = vmatpush.xpose.msra.mxu0 %v722
  %742 = vmatmul.f32.gmra.mxu0 %v718
  %v743 = vpop.f32.mrf.mxu0
  %v744 = vadd.f32 %v546, %v743
  %745 = vmatmul.f32.gmra.mxu0 %v720
  %v746 = vpop.f32.mrf.mxu0
  %v747 = vadd.f32 %v547, %v746
  %748 = vdwg.mxu0
  %749 = vrot.lane.b32.xlu0 %v158, 32
  %v750 = vpop.permute.xlu0 %749
  %751 = vrot.lane.b32.xlu0 %v161, 32
  %v752 = vpop.permute.xlu0 %751
  %753 = vrot.lane.b32.xlu0 %v158, 96
  %v754 = vpop.permute.xlu0 %753
  %755 = vrot.lane.b32.xlu0 %v161, 96
  %v756 = vpop.permute.xlu0 %755
  %v757 = vsel %vm256, %v750, 0
  %v759 = vsel %vm256, %v752, 0
  %v761 = vsel %vm256, %v754, 0
  %v763 = vsel %vm256, %v756, 0
  %765 = vmatpush.xpose.msra.mxu0 0.0
  %766 = vmatpush.xpose.msra.mxu0 0.0
  %767 = vmatpush.xpose.msra.mxu0 0.0
  %768 = vmatpush.xpose.msra.mxu0 0.0
  %769 = vmatpush.xpose.msra.mxu0 0.0
  %770 = vmatpush.xpose.msra.mxu0 0.0
  %771 = vmatpush.xpose.msra.mxu0 0.0
  %772 = vmatpush.xpose.msra.mxu0 0.0
  %773 = vmatpush.xpose.msra.mxu0 0.0
  %774 = vmatpush.xpose.msra.mxu0 0.0
  %775 = vmatpush.xpose.msra.mxu0 0.0
  %776 = vmatpush.xpose.msra.mxu0 0.0
  %777 = vmatpush.xpose.msra.mxu0 0.0
  %778 = vmatpush.xpose.msra.mxu0 0.0
  %779 = vmatpush.xpose.msra.mxu0 %v763
  %780 = vmatpush.xpose.msra.mxu0 %v761
  %781 = vmatmul.f32.gmra.mxu0 %v757
  %v782 = vpop.f32.mrf.mxu0
  %v783 = vadd.f32 %v548, %v782
  %784 = vmatmul.f32.gmra.mxu0 %v759
  %v785 = vpop.f32.mrf.mxu0
  %v786 = vadd.f32 %v549, %v785
  %787 = vdwg.mxu0
  %788 = vrot.lane.b32.xlu0 %v164, 32
  %v789 = vpop.permute.xlu0 %788
  %790 = vrot.lane.b32.xlu0 %v167, 32
  %v791 = vpop.permute.xlu0 %790
  %792 = vrot.lane.b32.xlu0 %v164, 96
  %v793 = vpop.permute.xlu0 %792
  %794 = vrot.lane.b32.xlu0 %v167, 96
  %v795 = vpop.permute.xlu0 %794
  %v796 = vsel %vm256, %v789, 0
  %v798 = vsel %vm256, %v791, 0
  %v800 = vsel %vm256, %v793, 0
  %v802 = vsel %vm256, %v795, 0
  %804 = vmatpush.xpose.msra.mxu0 0.0
  %805 = vmatpush.xpose.msra.mxu0 0.0
  %806 = vmatpush.xpose.msra.mxu0 0.0
  %807 = vmatpush.xpose.msra.mxu0 0.0
  %808 = vmatpush.xpose.msra.mxu0 0.0
  %809 = vmatpush.xpose.msra.mxu0 0.0
  %810 = vmatpush.xpose.msra.mxu0 0.0
  %811 = vmatpush.xpose.msra.mxu0 0.0
  %812 = vmatpush.xpose.msra.mxu0 0.0
  %813 = vmatpush.xpose.msra.mxu0 0.0
  %814 = vmatpush.xpose.msra.mxu0 0.0
  %815 = vmatpush.xpose.msra.mxu0 0.0
  %816 = vmatpush.xpose.msra.mxu0 0.0
  %817 = vmatpush.xpose.msra.mxu0 0.0
  %818 = vmatpush.xpose.msra.mxu0 %v802
  %819 = vmatpush.xpose.msra.mxu0 %v800
  %820 = vmatmul.f32.gmra.mxu0 %v796
  %v821 = vpop.f32.mrf.mxu0
  %v822 = vadd.f32 %v550, %v821
  %823 = vmatmul.f32.gmra.mxu0 %v798
  %v824 = vpop.f32.mrf.mxu0
  %v825 = vadd.f32 %v551, %v824
  %826 = vdwg.mxu0
  %827 = vrot.lane.b32.xlu0 %v170, 32
  %v828 = vpop.permute.xlu0 %827
  %829 = vrot.lane.b32.xlu0 %v173, 32
  %v830 = vpop.permute.xlu0 %829
  %831 = vrot.lane.b32.xlu0 %v170, 96
  %v832 = vpop.permute.xlu0 %831
  %833 = vrot.lane.b32.xlu0 %v173, 96
  %v834 = vpop.permute.xlu0 %833
  %v835 = vsel %vm256, %v828, 0
  %v837 = vsel %vm256, %v830, 0
  %v839 = vsel %vm256, %v832, 0
  %v841 = vsel %vm256, %v834, 0
  %843 = vmatpush.xpose.msra.mxu0 0.0
  %844 = vmatpush.xpose.msra.mxu0 0.0
  %845 = vmatpush.xpose.msra.mxu0 0.0
  %846 = vmatpush.xpose.msra.mxu0 0.0
  %847 = vmatpush.xpose.msra.mxu0 0.0
  %848 = vmatpush.xpose.msra.mxu0 0.0
  %849 = vmatpush.xpose.msra.mxu0 0.0
  %850 = vmatpush.xpose.msra.mxu0 0.0
  %851 = vmatpush.xpose.msra.mxu0 0.0
  %852 = vmatpush.xpose.msra.mxu0 0.0
  %853 = vmatpush.xpose.msra.mxu0 0.0
  %854 = vmatpush.xpose.msra.mxu0 0.0
  %855 = vmatpush.xpose.msra.mxu0 0.0
  %856 = vmatpush.xpose.msra.mxu0 0.0
  %857 = vmatpush.xpose.msra.mxu0 %v841
  %858 = vmatpush.xpose.msra.mxu0 %v839
  %859 = vmatmul.f32.gmra.mxu0 %v835
  %v860 = vpop.f32.mrf.mxu0
  %v861 = vadd.f32 %v552, %v860
  %862 = vmatmul.f32.gmra.mxu0 %v837
  %v863 = vpop.f32.mrf.mxu0
  %v864 = vadd.f32 %v553, %v863
  %865 = vdwg.mxu0
  %vm866 = vcmask 130048
  %v867 = vsel %vm866, %v287, -inf
  %868 = vmax.xlane.f32.xlu0 %v867
  %v869 = vpop.xlane.xlu0 %868
  %v870 = vsel %vm866, %v290, -inf
  %871 = vmax.xlane.f32.xlu0 %v870
  %v872 = vpop.xlane.xlu0 %871
  %v873 = vsel %vm866, %v322, -inf
  %874 = vmax.xlane.f32.xlu0 %v873
  %v875 = vpop.xlane.xlu0 %874
  %v876 = vsel %vm866, %v325, -inf
  %877 = vmax.xlane.f32.xlu0 %v876
  %v878 = vpop.xlane.xlu0 %877
  %v879 = vsel %vm866, %v357, -inf
  %880 = vmax.xlane.f32.xlu0 %v879
  %v881 = vpop.xlane.xlu0 %880
  %v882 = vsel %vm866, %v360, -inf
  %883 = vmax.xlane.f32.xlu0 %v882
  %v884 = vpop.xlane.xlu0 %883
  %v885 = vsel %vm866, %v392, -inf
  %886 = vmax.xlane.f32.xlu0 %v885
  %v887 = vpop.xlane.xlu0 %886
  %v888 = vsel %vm866, %v395, -inf
  %889 = vmax.xlane.f32.xlu0 %v888
  %v890 = vpop.xlane.xlu0 %889
  %v891 = vsel %vm866, %v427, -inf
  %892 = vmax.xlane.f32.xlu0 %v891
  %v893 = vpop.xlane.xlu0 %892
  %v894 = vsel %vm866, %v430, -inf
  %895 = vmax.xlane.f32.xlu0 %v894
  %v896 = vpop.xlane.xlu0 %895
  %v897 = vsel %vm866, %v462, -inf
  %898 = vmax.xlane.f32.xlu0 %v897
  %v899 = vpop.xlane.xlu0 %898
  %v900 = vsel %vm866, %v465, -inf
  %901 = vmax.xlane.f32.xlu0 %v900
  %v902 = vpop.xlane.xlu0 %901
  %v903 = vsel %vm866, %v497, -inf
  %904 = vmax.xlane.f32.xlu0 %v903
  %v905 = vpop.xlane.xlu0 %904
  %v906 = vsel %vm866, %v500, -inf
  %907 = vmax.xlane.f32.xlu0 %v906
  %v908 = vpop.xlane.xlu0 %907
  %v909 = vsel %vm866, %v532, -inf
  %910 = vmax.xlane.f32.xlu0 %v909
  %v911 = vpop.xlane.xlu0 %910
  %v912 = vsel %vm866, %v535, -inf
  %913 = vmax.xlane.f32.xlu0 %v912
  %v914 = vpop.xlane.xlu0 %913
  %v915 = vsub.f32 %v287, %v869
  %v916 = vsub.f32 %v290, %v872
  %v917 = vsub.f32 %v322, %v875
  %v918 = vsub.f32 %v325, %v878
  %v919 = vsub.f32 %v357, %v881
  %v920 = vsub.f32 %v360, %v884
  %v921 = vsub.f32 %v392, %v887
  %v922 = vsub.f32 %v395, %v890
  %v923 = vsub.f32 %v427, %v893
  %v924 = vsub.f32 %v430, %v896
  %v925 = vsub.f32 %v462, %v899
  %v926 = vsub.f32 %v465, %v902
  %v927 = vsub.f32 %v497, %v905
  %v928 = vsub.f32 %v500, %v908
  %v929 = vsub.f32 %v532, %v911
  %v930 = vsub.f32 %v535, %v914
  %v931 = vmul.f32 %v915, 1.442695
  %v932 = vpow.pop %v931
  %v933 = vmul.f32 %v916, 1.442695
  %v934 = vpow.pop %v933
  %v935 = vmul.f32 %v917, 1.442695
  %v936 = vpow.pop %v935
  %v937 = vmul.f32 %v918, 1.442695
  %v938 = vpow.pop %v937
  %v939 = vmul.f32 %v919, 1.442695
  %v940 = vpow.pop %v939
  %v941 = vmul.f32 %v920, 1.442695
  %v942 = vpow.pop %v941
  %v943 = vmul.f32 %v921, 1.442695
  %v944 = vpow.pop %v943
  %v945 = vmul.f32 %v922, 1.442695
  %v946 = vpow.pop %v945
  %v947 = vmul.f32 %v923, 1.442695
  %v948 = vpow.pop %v947
  %v949 = vmul.f32 %v924, 1.442695
  %v950 = vpow.pop %v949
  %v951 = vmul.f32 %v925, 1.442695
  %v952 = vpow.pop %v951
  %v953 = vmul.f32 %v926, 1.442695
  %v954 = vpow.pop %v953
  %v955 = vmul.f32 %v927, 1.442695
  %v956 = vpow.pop %v955
  %v957 = vmul.f32 %v928, 1.442695
  %v958 = vpow.pop %v957
  %v959 = vmul.f32 %v929, 1.442695
  %v960 = vpow.pop %v959
  %v961 = vmul.f32 %v930, 1.442695
  %v962 = vpow.pop %v961
  %v963 = vsel %vm866, %v932, 0.0
  %964 = vadd.xlane.f32.xlu0 %v963
  %v965 = vpop.xlane.xlu0 %964
  %v966 = vsel %vm866, %v934, 0.0
  %967 = vadd.xlane.f32.xlu0 %v966
  %v968 = vpop.xlane.xlu0 %967
  %v969 = vsel %vm866, %v936, 0.0
  %970 = vadd.xlane.f32.xlu0 %v969
  %v971 = vpop.xlane.xlu0 %970
  %v972 = vsel %vm866, %v938, 0.0
  %973 = vadd.xlane.f32.xlu0 %v972
  %v974 = vpop.xlane.xlu0 %973
  %v975 = vsel %vm866, %v940, 0.0
  %976 = vadd.xlane.f32.xlu0 %v975
  %v977 = vpop.xlane.xlu0 %976
  %v978 = vsel %vm866, %v942, 0.0
  %979 = vadd.xlane.f32.xlu0 %v978
  %v980 = vpop.xlane.xlu0 %979
  %v981 = vsel %vm866, %v944, 0.0
  %982 = vadd.xlane.f32.xlu0 %v981
  %v983 = vpop.xlane.xlu0 %982
  %v984 = vsel %vm866, %v946, 0.0
  %985 = vadd.xlane.f32.xlu0 %v984
  %v986 = vpop.xlane.xlu0 %985
  %v987 = vsel %vm866, %v948, 0.0
  %988 = vadd.xlane.f32.xlu0 %v987
  %v989 = vpop.xlane.xlu0 %988
  %v990 = vsel %vm866, %v950, 0.0
  %991 = vadd.xlane.f32.xlu0 %v990
  %v992 = vpop.xlane.xlu0 %991
  %v993 = vsel %vm866, %v952, 0.0
  %994 = vadd.xlane.f32.xlu0 %v993
  %v995 = vpop.xlane.xlu0 %994
  %v996 = vsel %vm866, %v954, 0.0
  %997 = vadd.xlane.f32.xlu0 %v996
  %v998 = vpop.xlane.xlu0 %997
  %v999 = vsel %vm866, %v956, 0.0
  %1000 = vadd.xlane.f32.xlu0 %v999
  %v1001 = vpop.xlane.xlu0 %1000
  %v1002 = vsel %vm866, %v958, 0.0
  %1003 = vadd.xlane.f32.xlu0 %v1002
  %v1004 = vpop.xlane.xlu0 %1003
  %v1005 = vsel %vm866, %v960, 0.0
  %1006 = vadd.xlane.f32.xlu0 %v1005
  %v1007 = vpop.xlane.xlu0 %1006
  %v1008 = vsel %vm866, %v962, 0.0
  %1009 = vadd.xlane.f32.xlu0 %v1008
  %v1010 = vpop.xlane.xlu0 %1009
  %v1011 = vrcp.pop %v965
  %v1012 = vrcp.pop %v968
  %v1013 = vrcp.pop %v971
  %v1014 = vrcp.pop %v974
  %v1015 = vrcp.pop %v977
  %v1016 = vrcp.pop %v980
  %v1017 = vrcp.pop %v983
  %v1018 = vrcp.pop %v986
  %v1019 = vrcp.pop %v989
  %v1020 = vrcp.pop %v992
  %v1021 = vrcp.pop %v995
  %v1022 = vrcp.pop %v998
  %v1023 = vrcp.pop %v1001
  %v1024 = vrcp.pop %v1004
  %v1025 = vrcp.pop %v1007
  %v1026 = vrcp.pop %v1010
  %v1027 = vmul.f32 %v932, %v1011
  %v1028 = vmul.f32 %v934, %v1012
  %v1029 = vmul.f32 %v936, %v1013
  %v1030 = vmul.f32 %v938, %v1014
  %v1031 = vmul.f32 %v940, %v1015
  %v1032 = vmul.f32 %v942, %v1016
  %v1033 = vmul.f32 %v944, %v1017
  %v1034 = vmul.f32 %v946, %v1018
  %v1035 = vmul.f32 %v948, %v1019
  %v1036 = vmul.f32 %v950, %v1020
  %v1037 = vmul.f32 %v952, %v1021
  %v1038 = vmul.f32 %v954, %v1022
  %v1039 = vmul.f32 %v956, %v1023
  %v1040 = vmul.f32 %v958, %v1024
  %v1041 = vmul.f32 %v960, %v1025
  %v1042 = vmul.f32 %v962, %v1026
  %v1043 = vsel %vm866, %v588, -inf
  %1044 = vmax.xlane.f32.xlu0 %v1043
  %v1045 = vpop.xlane.xlu0 %1044
  %v1046 = vsel %vm866, %v591, -inf
  %1047 = vmax.xlane.f32.xlu0 %v1046
  %v1048 = vpop.xlane.xlu0 %1047
  %v1049 = vsel %vm866, %v627, -inf
  %1050 = vmax.xlane.f32.xlu0 %v1049
  %v1051 = vpop.xlane.xlu0 %1050
  %v1052 = vsel %vm866, %v630, -inf
  %1053 = vmax.xlane.f32.xlu0 %v1052
  %v1054 = vpop.xlane.xlu0 %1053
  %v1055 = vsel %vm866, %v666, -inf
  %1056 = vmax.xlane.f32.xlu0 %v1055
  %v1057 = vpop.xlane.xlu0 %1056
  %v1058 = vsel %vm866, %v669, -inf
  %1059 = vmax.xlane.f32.xlu0 %v1058
  %v1060 = vpop.xlane.xlu0 %1059
  %v1061 = vsel %vm866, %v705, -inf
  %1062 = vmax.xlane.f32.xlu0 %v1061
  %v1063 = vpop.xlane.xlu0 %1062
  %v1064 = vsel %vm866, %v708, -inf
  %1065 = vmax.xlane.f32.xlu0 %v1064
  %v1066 = vpop.xlane.xlu0 %1065
  %v1067 = vsel %vm866, %v744, -inf
  %1068 = vmax.xlane.f32.xlu0 %v1067
  %v1069 = vpop.xlane.xlu0 %1068
  %v1070 = vsel %vm866, %v747, -inf
  %1071 = vmax.xlane.f32.xlu0 %v1070
  %v1072 = vpop.xlane.xlu0 %1071
  %v1073 = vsel %vm866, %v783, -inf
  %1074 = vmax.xlane.f32.xlu0 %v1073
  %v1075 = vpop.xlane.xlu0 %1074
  %v1076 = vsel %vm866, %v786, -inf
  %1077 = vmax.xlane.f32.xlu0 %v1076
  %v1078 = vpop.xlane.xlu0 %1077
  %v1079 = vsel %vm866, %v822, -inf
  %1080 = vmax.xlane.f32.xlu0 %v1079
  %v1081 = vpop.xlane.xlu0 %1080
  %v1082 = vsel %vm866, %v825, -inf
  %1083 = vmax.xlane.f32.xlu0 %v1082
  %v1084 = vpop.xlane.xlu0 %1083
  %v1085 = vsel %vm866, %v861, -inf
  %1086 = vmax.xlane.f32.xlu0 %v1085
  %v1087 = vpop.xlane.xlu0 %1086
  %v1088 = vsel %vm866, %v864, -inf
  %1089 = vmax.xlane.f32.xlu0 %v1088
  %v1090 = vpop.xlane.xlu0 %1089
  %v1091 = vsub.f32 %v588, %v1045
  %v1092 = vsub.f32 %v591, %v1048
  %v1093 = vsub.f32 %v627, %v1051
  %v1094 = vsub.f32 %v630, %v1054
  %v1095 = vsub.f32 %v666, %v1057
  %v1096 = vsub.f32 %v669, %v1060
  %v1097 = vsub.f32 %v705, %v1063
  %v1098 = vsub.f32 %v708, %v1066
  %v1099 = vsub.f32 %v744, %v1069
  %v1100 = vsub.f32 %v747, %v1072
  %v1101 = vsub.f32 %v783, %v1075
  %v1102 = vsub.f32 %v786, %v1078
  %v1103 = vsub.f32 %v822, %v1081
  %v1104 = vsub.f32 %v825, %v1084
  %v1105 = vsub.f32 %v861, %v1087
  %v1106 = vsub.f32 %v864, %v1090
  %v1107 = vmul.f32 %v1091, 1.442695
  %v1108 = vpow.pop %v1107
  %v1109 = vmul.f32 %v1092, 1.442695
  %v1110 = vpow.pop %v1109
  %v1111 = vmul.f32 %v1093, 1.442695
  %v1112 = vpow.pop %v1111
  %v1113 = vmul.f32 %v1094, 1.442695
  %v1114 = vpow.pop %v1113
  %v1115 = vmul.f32 %v1095, 1.442695
  %v1116 = vpow.pop %v1115
  %v1117 = vmul.f32 %v1096, 1.442695
  %v1118 = vpow.pop %v1117
  %v1119 = vmul.f32 %v1097, 1.442695
  %v1120 = vpow.pop %v1119
  %v1121 = vmul.f32 %v1098, 1.442695
  %v1122 = vpow.pop %v1121
  %v1123 = vmul.f32 %v1099, 1.442695
  %v1124 = vpow.pop %v1123
  %v1125 = vmul.f32 %v1100, 1.442695
  %v1126 = vpow.pop %v1125
  %v1127 = vmul.f32 %v1101, 1.442695
  %v1128 = vpow.pop %v1127
  %v1129 = vmul.f32 %v1102, 1.442695
  %v1130 = vpow.pop %v1129
  %v1131 = vmul.f32 %v1103, 1.442695
  %v1132 = vpow.pop %v1131
  %v1133 = vmul.f32 %v1104, 1.442695
  %v1134 = vpow.pop %v1133
  %v1135 = vmul.f32 %v1105, 1.442695
  %v1136 = vpow.pop %v1135
  %v1137 = vmul.f32 %v1106, 1.442695
  %v1138 = vpow.pop %v1137
  %v1139 = vsel %vm866, %v1108, 0.0
  %1140 = vadd.xlane.f32.xlu0 %v1139
  %v1141 = vpop.xlane.xlu0 %1140
  %v1142 = vsel %vm866, %v1110, 0.0
  %1143 = vadd.xlane.f32.xlu0 %v1142
  %v1144 = vpop.xlane.xlu0 %1143
  %v1145 = vsel %vm866, %v1112, 0.0
  %1146 = vadd.xlane.f32.xlu0 %v1145
  %v1147 = vpop.xlane.xlu0 %1146
  %v1148 = vsel %vm866, %v1114, 0.0
  %1149 = vadd.xlane.f32.xlu0 %v1148
  %v1150 = vpop.xlane.xlu0 %1149
  %v1151 = vsel %vm866, %v1116, 0.0
  %1152 = vadd.xlane.f32.xlu0 %v1151
  %v1153 = vpop.xlane.xlu0 %1152
  %v1154 = vsel %vm866, %v1118, 0.0
  %1155 = vadd.xlane.f32.xlu0 %v1154
  %v1156 = vpop.xlane.xlu0 %1155
  %v1157 = vsel %vm866, %v1120, 0.0
  %1158 = vadd.xlane.f32.xlu0 %v1157
  %v1159 = vpop.xlane.xlu0 %1158
  %v1160 = vsel %vm866, %v1122, 0.0
  %1161 = vadd.xlane.f32.xlu0 %v1160
  %v1162 = vpop.xlane.xlu0 %1161
  %v1163 = vsel %vm866, %v1124, 0.0
  %1164 = vadd.xlane.f32.xlu0 %v1163
  %v1165 = vpop.xlane.xlu0 %1164
  %v1166 = vsel %vm866, %v1126, 0.0
  %1167 = vadd.xlane.f32.xlu0 %v1166
  %v1168 = vpop.xlane.xlu0 %1167
  %v1169 = vsel %vm866, %v1128, 0.0
  %1170 = vadd.xlane.f32.xlu0 %v1169
  %v1171 = vpop.xlane.xlu0 %1170
  %v1172 = vsel %vm866, %v1130, 0.0
  %1173 = vadd.xlane.f32.xlu0 %v1172
  %v1174 = vpop.xlane.xlu0 %1173
  %v1175 = vsel %vm866, %v1132, 0.0
  %1176 = vadd.xlane.f32.xlu0 %v1175
  %v1177 = vpop.xlane.xlu0 %1176
  %v1178 = vsel %vm866, %v1134, 0.0
  %1179 = vadd.xlane.f32.xlu0 %v1178
  %v1180 = vpop.xlane.xlu0 %1179
  %v1181 = vsel %vm866, %v1136, 0.0
  %1182 = vadd.xlane.f32.xlu0 %v1181
  %v1183 = vpop.xlane.xlu0 %1182
  %v1184 = vsel %vm866, %v1138, 0.0
  %1185 = vadd.xlane.f32.xlu0 %v1184
  %v1186 = vpop.xlane.xlu0 %1185
  %v1187 = vrcp.pop %v1141
  %v1188 = vrcp.pop %v1144
  %v1189 = vrcp.pop %v1147
  %v1190 = vrcp.pop %v1150
  %v1191 = vrcp.pop %v1153
  %v1192 = vrcp.pop %v1156
  %v1193 = vrcp.pop %v1159
  %v1194 = vrcp.pop %v1162
  %v1195 = vrcp.pop %v1165
  %v1196 = vrcp.pop %v1168
  %v1197 = vrcp.pop %v1171
  %v1198 = vrcp.pop %v1174
  %v1199 = vrcp.pop %v1177
  %v1200 = vrcp.pop %v1180
  %v1201 = vrcp.pop %v1183
  %v1202 = vrcp.pop %v1186
  %v1203 = vmul.f32 %v1108, %v1187
  %v1204 = vmul.f32 %v1110, %v1188
  %v1205 = vmul.f32 %v1112, %v1189
  %v1206 = vmul.f32 %v1114, %v1190
  %v1207 = vmul.f32 %v1116, %v1191
  %v1208 = vmul.f32 %v1118, %v1192
  %v1209 = vmul.f32 %v1120, %v1193
  %v1210 = vmul.f32 %v1122, %v1194
  %v1211 = vmul.f32 %v1124, %v1195
  %v1212 = vmul.f32 %v1126, %v1196
  %v1213 = vmul.f32 %v1128, %v1197
  %v1214 = vmul.f32 %v1130, %v1198
  %v1215 = vmul.f32 %v1132, %v1199
  %v1216 = vmul.f32 %v1134, %v1200
  %v1217 = vmul.f32 %v1136, %v1201
  %v1218 = vmul.f32 %v1138, %v1202
  %1219 = vrot.lane.b32.xlu0 %v193, 96
  %v1220 = vpop.permute.xlu0 %1219
  %1221 = vrot.lane.b32.xlu0 %v196, 96
  %v1222 = vpop.permute.xlu0 %1221
  %v1226 = vsel %vm866, %v1027, 0
  %v1229 = vsel %vm866, %v1028, 0
  %1231 = vmatpush.msra.mxu0 0.0
  %1232 = vmatpush.msra.mxu0 0.0
  %1233 = vmatpush.msra.mxu0 0.0
  %1234 = vmatpush.msra.mxu0 0.0
  %1235 = vmatpush.msra.mxu0 0.0
  %1236 = vmatpush.msra.mxu0 0.0
  %1237 = vmatpush.msra.mxu0 0.0
  %1238 = vmatpush.msra.mxu0 0.0
  %1239 = vmatpush.msra.mxu0 0.0
  %1240 = vmatpush.msra.mxu0 0.0
  %1241 = vmatpush.msra.mxu0 0.0
  %1242 = vmatpush.msra.mxu0 0.0
  %1243 = vmatpush.msra.mxu0 0.0
  %1244 = vmatpush.msra.mxu0 0.0
  %1245 = vmatpush.msra.mxu0 %v1222
  %1246 = vmatpush.msra.mxu0 %v1220
  %1247 = vmatmul.f32.gmra.mxu0 %v1226
  %v1248 = vpop.f32.mrf.mxu0
  %v1249 = vadd.f32 0.0, %v1248
  %1250 = vmatmul.f32.gmra.mxu0 %v1229
  %v1251 = vpop.f32.mrf.mxu0
  %v1252 = vadd.f32 0.0, %v1251
  %1253 = vdwg.mxu0
  %1254 = vrot.lane.b32.xlu0 %v199, 96
  %v1255 = vpop.permute.xlu0 %1254
  %1256 = vrot.lane.b32.xlu0 %v202, 96
  %v1257 = vpop.permute.xlu0 %1256
  %v1261 = vsel %vm866, %v1029, 0
  %v1264 = vsel %vm866, %v1030, 0
  %1266 = vmatpush.msra.mxu0 0.0
  %1267 = vmatpush.msra.mxu0 0.0
  %1268 = vmatpush.msra.mxu0 0.0
  %1269 = vmatpush.msra.mxu0 0.0
  %1270 = vmatpush.msra.mxu0 0.0
  %1271 = vmatpush.msra.mxu0 0.0
  %1272 = vmatpush.msra.mxu0 0.0
  %1273 = vmatpush.msra.mxu0 0.0
  %1274 = vmatpush.msra.mxu0 0.0
  %1275 = vmatpush.msra.mxu0 0.0
  %1276 = vmatpush.msra.mxu0 0.0
  %1277 = vmatpush.msra.mxu0 0.0
  %1278 = vmatpush.msra.mxu0 0.0
  %1279 = vmatpush.msra.mxu0 0.0
  %1280 = vmatpush.msra.mxu0 %v1257
  %1281 = vmatpush.msra.mxu0 %v1255
  %1282 = vmatmul.f32.gmra.mxu0 %v1261
  %v1283 = vpop.f32.mrf.mxu0
  %v1284 = vadd.f32 0.0, %v1283
  %1285 = vmatmul.f32.gmra.mxu0 %v1264
  %v1286 = vpop.f32.mrf.mxu0
  %v1287 = vadd.f32 0.0, %v1286
  %1288 = vdwg.mxu0
  %1289 = vrot.lane.b32.xlu0 %v205, 96
  %v1290 = vpop.permute.xlu0 %1289
  %1291 = vrot.lane.b32.xlu0 %v208, 96
  %v1292 = vpop.permute.xlu0 %1291
  %v1296 = vsel %vm866, %v1031, 0
  %v1299 = vsel %vm866, %v1032, 0
  %1301 = vmatpush.msra.mxu0 0.0
  %1302 = vmatpush.msra.mxu0 0.0
  %1303 = vmatpush.msra.mxu0 0.0
  %1304 = vmatpush.msra.mxu0 0.0
  %1305 = vmatpush.msra.mxu0 0.0
  %1306 = vmatpush.msra.mxu0 0.0
  %1307 = vmatpush.msra.mxu0 0.0
  %1308 = vmatpush.msra.mxu0 0.0
  %1309 = vmatpush.msra.mxu0 0.0
  %1310 = vmatpush.msra.mxu0 0.0
  %1311 = vmatpush.msra.mxu0 0.0
  %1312 = vmatpush.msra.mxu0 0.0
  %1313 = vmatpush.msra.mxu0 0.0
  %1314 = vmatpush.msra.mxu0 0.0
  %1315 = vmatpush.msra.mxu0 %v1292
  %1316 = vmatpush.msra.mxu0 %v1290
  %1317 = vmatmul.f32.gmra.mxu0 %v1296
  %v1318 = vpop.f32.mrf.mxu0
  %v1319 = vadd.f32 0.0, %v1318
  %1320 = vmatmul.f32.gmra.mxu0 %v1299
  %v1321 = vpop.f32.mrf.mxu0
  %v1322 = vadd.f32 0.0, %v1321
  %1323 = vdwg.mxu0
  %1324 = vrot.lane.b32.xlu0 %v211, 96
  %v1325 = vpop.permute.xlu0 %1324
  %1326 = vrot.lane.b32.xlu0 %v214, 96
  %v1327 = vpop.permute.xlu0 %1326
  %v1331 = vsel %vm866, %v1033, 0
  %v1334 = vsel %vm866, %v1034, 0
  %1336 = vmatpush.msra.mxu0 0.0
  %1337 = vmatpush.msra.mxu0 0.0
  %1338 = vmatpush.msra.mxu0 0.0
  %1339 = vmatpush.msra.mxu0 0.0
  %1340 = vmatpush.msra.mxu0 0.0
  %1341 = vmatpush.msra.mxu0 0.0
  %1342 = vmatpush.msra.mxu0 0.0
  %1343 = vmatpush.msra.mxu0 0.0
  %1344 = vmatpush.msra.mxu0 0.0
  %1345 = vmatpush.msra.mxu0 0.0
  %1346 = vmatpush.msra.mxu0 0.0
  %1347 = vmatpush.msra.mxu0 0.0
  %1348 = vmatpush.msra.mxu0 0.0
  %1349 = vmatpush.msra.mxu0 0.0
  %1350 = vmatpush.msra.mxu0 %v1327
  %1351 = vmatpush.msra.mxu0 %v1325
  %1352 = vmatmul.f32.gmra.mxu0 %v1331
  %v1353 = vpop.f32.mrf.mxu0
  %v1354 = vadd.f32 0.0, %v1353
  %1355 = vmatmul.f32.gmra.mxu0 %v1334
  %v1356 = vpop.f32.mrf.mxu0
  %v1357 = vadd.f32 0.0, %v1356
  %1358 = vdwg.mxu0
  %1359 = vrot.lane.b32.xlu0 %v217, 96
  %v1360 = vpop.permute.xlu0 %1359
  %1361 = vrot.lane.b32.xlu0 %v220, 96
  %v1362 = vpop.permute.xlu0 %1361
  %v1366 = vsel %vm866, %v1035, 0
  %v1369 = vsel %vm866, %v1036, 0
  %1371 = vmatpush.msra.mxu0 0.0
  %1372 = vmatpush.msra.mxu0 0.0
  %1373 = vmatpush.msra.mxu0 0.0
  %1374 = vmatpush.msra.mxu0 0.0
  %1375 = vmatpush.msra.mxu0 0.0
  %1376 = vmatpush.msra.mxu0 0.0
  %1377 = vmatpush.msra.mxu0 0.0
  %1378 = vmatpush.msra.mxu0 0.0
  %1379 = vmatpush.msra.mxu0 0.0
  %1380 = vmatpush.msra.mxu0 0.0
  %1381 = vmatpush.msra.mxu0 0.0
  %1382 = vmatpush.msra.mxu0 0.0
  %1383 = vmatpush.msra.mxu0 0.0
  %1384 = vmatpush.msra.mxu0 0.0
  %1385 = vmatpush.msra.mxu0 %v1362
  %1386 = vmatpush.msra.mxu0 %v1360
  %1387 = vmatmul.f32.gmra.mxu0 %v1366
  %v1388 = vpop.f32.mrf.mxu0
  %v1389 = vadd.f32 0.0, %v1388
  %1390 = vmatmul.f32.gmra.mxu0 %v1369
  %v1391 = vpop.f32.mrf.mxu0
  %v1392 = vadd.f32 0.0, %v1391
  %1393 = vdwg.mxu0
  %1394 = vrot.lane.b32.xlu0 %v223, 96
  %v1395 = vpop.permute.xlu0 %1394
  %1396 = vrot.lane.b32.xlu0 %v226, 96
  %v1397 = vpop.permute.xlu0 %1396
  %v1401 = vsel %vm866, %v1037, 0
  %v1404 = vsel %vm866, %v1038, 0
  %1406 = vmatpush.msra.mxu0 0.0
  %1407 = vmatpush.msra.mxu0 0.0
  %1408 = vmatpush.msra.mxu0 0.0
  %1409 = vmatpush.msra.mxu0 0.0
  %1410 = vmatpush.msra.mxu0 0.0
  %1411 = vmatpush.msra.mxu0 0.0
  %1412 = vmatpush.msra.mxu0 0.0
  %1413 = vmatpush.msra.mxu0 0.0
  %1414 = vmatpush.msra.mxu0 0.0
  %1415 = vmatpush.msra.mxu0 0.0
  %1416 = vmatpush.msra.mxu0 0.0
  %1417 = vmatpush.msra.mxu0 0.0
  %1418 = vmatpush.msra.mxu0 0.0
  %1419 = vmatpush.msra.mxu0 0.0
  %1420 = vmatpush.msra.mxu0 %v1397
  %1421 = vmatpush.msra.mxu0 %v1395
  %1422 = vmatmul.f32.gmra.mxu0 %v1401
  %v1423 = vpop.f32.mrf.mxu0
  %v1424 = vadd.f32 0.0, %v1423
  %1425 = vmatmul.f32.gmra.mxu0 %v1404
  %v1426 = vpop.f32.mrf.mxu0
  %v1427 = vadd.f32 0.0, %v1426
  %1428 = vdwg.mxu0
  %1429 = vrot.lane.b32.xlu0 %v229, 96
  %v1430 = vpop.permute.xlu0 %1429
  %1431 = vrot.lane.b32.xlu0 %v232, 96
  %v1432 = vpop.permute.xlu0 %1431
  %v1436 = vsel %vm866, %v1039, 0
  %v1439 = vsel %vm866, %v1040, 0
  %1441 = vmatpush.msra.mxu0 0.0
  %1442 = vmatpush.msra.mxu0 0.0
  %1443 = vmatpush.msra.mxu0 0.0
  %1444 = vmatpush.msra.mxu0 0.0
  %1445 = vmatpush.msra.mxu0 0.0
  %1446 = vmatpush.msra.mxu0 0.0
  %1447 = vmatpush.msra.mxu0 0.0
  %1448 = vmatpush.msra.mxu0 0.0
  %1449 = vmatpush.msra.mxu0 0.0
  %1450 = vmatpush.msra.mxu0 0.0
  %1451 = vmatpush.msra.mxu0 0.0
  %1452 = vmatpush.msra.mxu0 0.0
  %1453 = vmatpush.msra.mxu0 0.0
  %1454 = vmatpush.msra.mxu0 0.0
  %1455 = vmatpush.msra.mxu0 %v1432
  %1456 = vmatpush.msra.mxu0 %v1430
  %1457 = vmatmul.f32.gmra.mxu0 %v1436
  %v1458 = vpop.f32.mrf.mxu0
  %v1459 = vadd.f32 0.0, %v1458
  %1460 = vmatmul.f32.gmra.mxu0 %v1439
  %v1461 = vpop.f32.mrf.mxu0
  %v1462 = vadd.f32 0.0, %v1461
  %1463 = vdwg.mxu0
  %1464 = vrot.lane.b32.xlu0 %v235, 96
  %v1465 = vpop.permute.xlu0 %1464
  %1466 = vrot.lane.b32.xlu0 %v238, 96
  %v1467 = vpop.permute.xlu0 %1466
  %v1471 = vsel %vm866, %v1041, 0
  %v1474 = vsel %vm866, %v1042, 0
  %1476 = vmatpush.msra.mxu0 0.0
  %1477 = vmatpush.msra.mxu0 0.0
  %1478 = vmatpush.msra.mxu0 0.0
  %1479 = vmatpush.msra.mxu0 0.0
  %1480 = vmatpush.msra.mxu0 0.0
  %1481 = vmatpush.msra.mxu0 0.0
  %1482 = vmatpush.msra.mxu0 0.0
  %1483 = vmatpush.msra.mxu0 0.0
  %1484 = vmatpush.msra.mxu0 0.0
  %1485 = vmatpush.msra.mxu0 0.0
  %1486 = vmatpush.msra.mxu0 0.0
  %1487 = vmatpush.msra.mxu0 0.0
  %1488 = vmatpush.msra.mxu0 0.0
  %1489 = vmatpush.msra.mxu0 0.0
  %1490 = vmatpush.msra.mxu0 %v1467
  %1491 = vmatpush.msra.mxu0 %v1465
  %1492 = vmatmul.f32.gmra.mxu0 %v1471
  %v1493 = vpop.f32.mrf.mxu0
  %v1494 = vadd.f32 0.0, %v1493
  %1495 = vmatmul.f32.gmra.mxu0 %v1474
  %v1496 = vpop.f32.mrf.mxu0
  %v1497 = vadd.f32 0.0, %v1496
  %1498 = vdwg.mxu0
  %1499 = vrot.lane.b32.xlu0 %v128, 64
  %v1500 = vpop.permute.xlu0 %1499
  %1501 = vrot.lane.b32.xlu0 %v131, 64
  %v1502 = vpop.permute.xlu0 %1501
  %v1506 = vsel %vm866, %v1203, 0
  %v1509 = vsel %vm866, %v1204, 0
  %1511 = vmatpush.msra.mxu0 0.0
  %1512 = vmatpush.msra.mxu0 0.0
  %1513 = vmatpush.msra.mxu0 0.0
  %1514 = vmatpush.msra.mxu0 0.0
  %1515 = vmatpush.msra.mxu0 0.0
  %1516 = vmatpush.msra.mxu0 0.0
  %1517 = vmatpush.msra.mxu0 0.0
  %1518 = vmatpush.msra.mxu0 0.0
  %1519 = vmatpush.msra.mxu0 0.0
  %1520 = vmatpush.msra.mxu0 0.0
  %1521 = vmatpush.msra.mxu0 0.0
  %1522 = vmatpush.msra.mxu0 0.0
  %1523 = vmatpush.msra.mxu0 0.0
  %1524 = vmatpush.msra.mxu0 0.0
  %1525 = vmatpush.msra.mxu0 %v1502
  %1526 = vmatpush.msra.mxu0 %v1500
  %1527 = vmatmul.f32.gmra.mxu0 %v1506
  %v1528 = vpop.f32.mrf.mxu0
  %v1529 = vadd.f32 0.0, %v1528
  %1530 = vmatmul.f32.gmra.mxu0 %v1509
  %v1531 = vpop.f32.mrf.mxu0
  %v1532 = vadd.f32 0.0, %v1531
  %1533 = vdwg.mxu0
  %1534 = vrot.lane.b32.xlu0 %v134, 64
  %v1535 = vpop.permute.xlu0 %1534
  %1536 = vrot.lane.b32.xlu0 %v137, 64
  %v1537 = vpop.permute.xlu0 %1536
  %v1541 = vsel %vm866, %v1205, 0
  %v1544 = vsel %vm866, %v1206, 0
  %1546 = vmatpush.msra.mxu0 0.0
  %1547 = vmatpush.msra.mxu0 0.0
  %1548 = vmatpush.msra.mxu0 0.0
  %1549 = vmatpush.msra.mxu0 0.0
  %1550 = vmatpush.msra.mxu0 0.0
  %1551 = vmatpush.msra.mxu0 0.0
  %1552 = vmatpush.msra.mxu0 0.0
  %1553 = vmatpush.msra.mxu0 0.0
  %1554 = vmatpush.msra.mxu0 0.0
  %1555 = vmatpush.msra.mxu0 0.0
  %1556 = vmatpush.msra.mxu0 0.0
  %1557 = vmatpush.msra.mxu0 0.0
  %1558 = vmatpush.msra.mxu0 0.0
  %1559 = vmatpush.msra.mxu0 0.0
  %1560 = vmatpush.msra.mxu0 %v1537
  %1561 = vmatpush.msra.mxu0 %v1535
  %1562 = vmatmul.f32.gmra.mxu0 %v1541
  %v1563 = vpop.f32.mrf.mxu0
  %v1564 = vadd.f32 0.0, %v1563
  %1565 = vmatmul.f32.gmra.mxu0 %v1544
  %v1566 = vpop.f32.mrf.mxu0
  %v1567 = vadd.f32 0.0, %v1566
  %1568 = vdwg.mxu0
  %1569 = vrot.lane.b32.xlu0 %v140, 64
  %v1570 = vpop.permute.xlu0 %1569
  %1571 = vrot.lane.b32.xlu0 %v143, 64
  %v1572 = vpop.permute.xlu0 %1571
  %v1576 = vsel %vm866, %v1207, 0
  %v1579 = vsel %vm866, %v1208, 0
  %1581 = vmatpush.msra.mxu0 0.0
  %1582 = vmatpush.msra.mxu0 0.0
  %1583 = vmatpush.msra.mxu0 0.0
  %1584 = vmatpush.msra.mxu0 0.0
  %1585 = vmatpush.msra.mxu0 0.0
  %1586 = vmatpush.msra.mxu0 0.0
  %1587 = vmatpush.msra.mxu0 0.0
  %1588 = vmatpush.msra.mxu0 0.0
  %1589 = vmatpush.msra.mxu0 0.0
  %1590 = vmatpush.msra.mxu0 0.0
  %1591 = vmatpush.msra.mxu0 0.0
  %1592 = vmatpush.msra.mxu0 0.0
  %1593 = vmatpush.msra.mxu0 0.0
  %1594 = vmatpush.msra.mxu0 0.0
  %1595 = vmatpush.msra.mxu0 %v1572
  %1596 = vmatpush.msra.mxu0 %v1570
  %1597 = vmatmul.f32.gmra.mxu0 %v1576
  %v1598 = vpop.f32.mrf.mxu0
  %v1599 = vadd.f32 0.0, %v1598
  %1600 = vmatmul.f32.gmra.mxu0 %v1579
  %v1601 = vpop.f32.mrf.mxu0
  %v1602 = vadd.f32 0.0, %v1601
  %1603 = vdwg.mxu0
  %1604 = vrot.lane.b32.xlu0 %v146, 64
  %v1605 = vpop.permute.xlu0 %1604
  %1606 = vrot.lane.b32.xlu0 %v149, 64
  %v1607 = vpop.permute.xlu0 %1606
  %v1611 = vsel %vm866, %v1209, 0
  %v1614 = vsel %vm866, %v1210, 0
  %1616 = vmatpush.msra.mxu0 0.0
  %1617 = vmatpush.msra.mxu0 0.0
  %1618 = vmatpush.msra.mxu0 0.0
  %1619 = vmatpush.msra.mxu0 0.0
  %1620 = vmatpush.msra.mxu0 0.0
  %1621 = vmatpush.msra.mxu0 0.0
  %1622 = vmatpush.msra.mxu0 0.0
  %1623 = vmatpush.msra.mxu0 0.0
  %1624 = vmatpush.msra.mxu0 0.0
  %1625 = vmatpush.msra.mxu0 0.0
  %1626 = vmatpush.msra.mxu0 0.0
  %1627 = vmatpush.msra.mxu0 0.0
  %1628 = vmatpush.msra.mxu0 0.0
  %1629 = vmatpush.msra.mxu0 0.0
  %1630 = vmatpush.msra.mxu0 %v1607
  %1631 = vmatpush.msra.mxu0 %v1605
  %1632 = vmatmul.f32.gmra.mxu0 %v1611
  %v1633 = vpop.f32.mrf.mxu0
  %v1634 = vadd.f32 0.0, %v1633
  %1635 = vmatmul.f32.gmra.mxu0 %v1614
  %v1636 = vpop.f32.mrf.mxu0
  %v1637 = vadd.f32 0.0, %v1636
  %1638 = vdwg.mxu0
  %1639 = vrot.lane.b32.xlu0 %v152, 64
  %v1640 = vpop.permute.xlu0 %1639
  %1641 = vrot.lane.b32.xlu0 %v155, 64
  %v1642 = vpop.permute.xlu0 %1641
  %v1646 = vsel %vm866, %v1211, 0
  %v1649 = vsel %vm866, %v1212, 0
  %1651 = vmatpush.msra.mxu0 0.0
  %1652 = vmatpush.msra.mxu0 0.0
  %1653 = vmatpush.msra.mxu0 0.0
  %1654 = vmatpush.msra.mxu0 0.0
  %1655 = vmatpush.msra.mxu0 0.0
  %1656 = vmatpush.msra.mxu0 0.0
  %1657 = vmatpush.msra.mxu0 0.0
  %1658 = vmatpush.msra.mxu0 0.0
  %1659 = vmatpush.msra.mxu0 0.0
  %1660 = vmatpush.msra.mxu0 0.0
  %1661 = vmatpush.msra.mxu0 0.0
  %1662 = vmatpush.msra.mxu0 0.0
  %1663 = vmatpush.msra.mxu0 0.0
  %1664 = vmatpush.msra.mxu0 0.0
  %1665 = vmatpush.msra.mxu0 %v1642
  %1666 = vmatpush.msra.mxu0 %v1640
  %1667 = vmatmul.f32.gmra.mxu0 %v1646
  %v1668 = vpop.f32.mrf.mxu0
  %v1669 = vadd.f32 0.0, %v1668
  %1670 = vmatmul.f32.gmra.mxu0 %v1649
  %v1671 = vpop.f32.mrf.mxu0
  %v1672 = vadd.f32 0.0, %v1671
  %1673 = vdwg.mxu0
  %1674 = vrot.lane.b32.xlu0 %v158, 64
  %v1675 = vpop.permute.xlu0 %1674
  %1676 = vrot.lane.b32.xlu0 %v161, 64
  %v1677 = vpop.permute.xlu0 %1676
  %v1681 = vsel %vm866, %v1213, 0
  %v1684 = vsel %vm866, %v1214, 0
  %1686 = vmatpush.msra.mxu0 0.0
  %1687 = vmatpush.msra.mxu0 0.0
  %1688 = vmatpush.msra.mxu0 0.0
  %1689 = vmatpush.msra.mxu0 0.0
  %1690 = vmatpush.msra.mxu0 0.0
  %1691 = vmatpush.msra.mxu0 0.0
  %1692 = vmatpush.msra.mxu0 0.0
  %1693 = vmatpush.msra.mxu0 0.0
  %1694 = vmatpush.msra.mxu0 0.0
  %1695 = vmatpush.msra.mxu0 0.0
  %1696 = vmatpush.msra.mxu0 0.0
  %1697 = vmatpush.msra.mxu0 0.0
  %1698 = vmatpush.msra.mxu0 0.0
  %1699 = vmatpush.msra.mxu0 0.0
  %1700 = vmatpush.msra.mxu0 %v1677
  %1701 = vmatpush.msra.mxu0 %v1675
  %1702 = vmatmul.f32.gmra.mxu0 %v1681
  %v1703 = vpop.f32.mrf.mxu0
  %v1704 = vadd.f32 0.0, %v1703
  %1705 = vmatmul.f32.gmra.mxu0 %v1684
  %v1706 = vpop.f32.mrf.mxu0
  %v1707 = vadd.f32 0.0, %v1706
  %1708 = vdwg.mxu0
  %1709 = vrot.lane.b32.xlu0 %v164, 64
  %v1710 = vpop.permute.xlu0 %1709
  %1711 = vrot.lane.b32.xlu0 %v167, 64
  %v1712 = vpop.permute.xlu0 %1711
  %v1716 = vsel %vm866, %v1215, 0
  %v1719 = vsel %vm866, %v1216, 0
  %1721 = vmatpush.msra.mxu0 0.0
  %1722 = vmatpush.msra.mxu0 0.0
  %1723 = vmatpush.msra.mxu0 0.0
  %1724 = vmatpush.msra.mxu0 0.0
  %1725 = vmatpush.msra.mxu0 0.0
  %1726 = vmatpush.msra.mxu0 0.0
  %1727 = vmatpush.msra.mxu0 0.0
  %1728 = vmatpush.msra.mxu0 0.0
  %1729 = vmatpush.msra.mxu0 0.0
  %1730 = vmatpush.msra.mxu0 0.0
  %1731 = vmatpush.msra.mxu0 0.0
  %1732 = vmatpush.msra.mxu0 0.0
  %1733 = vmatpush.msra.mxu0 0.0
  %1734 = vmatpush.msra.mxu0 0.0
  %1735 = vmatpush.msra.mxu0 %v1712
  %1736 = vmatpush.msra.mxu0 %v1710
  %1737 = vmatmul.f32.gmra.mxu0 %v1716
  %v1738 = vpop.f32.mrf.mxu0
  %v1739 = vadd.f32 0.0, %v1738
  %1740 = vmatmul.f32.gmra.mxu0 %v1719
  %v1741 = vpop.f32.mrf.mxu0
  %v1742 = vadd.f32 0.0, %v1741
  %1743 = vdwg.mxu0
  %1744 = vrot.lane.b32.xlu0 %v170, 64
  %v1745 = vpop.permute.xlu0 %1744
  %1746 = vrot.lane.b32.xlu0 %v173, 64
  %v1747 = vpop.permute.xlu0 %1746
  %v1751 = vsel %vm866, %v1217, 0
  %v1754 = vsel %vm866, %v1218, 0
  %1756 = vmatpush.msra.mxu0 0.0
  %1757 = vmatpush.msra.mxu0 0.0
  %1758 = vmatpush.msra.mxu0 0.0
  %1759 = vmatpush.msra.mxu0 0.0
  %1760 = vmatpush.msra.mxu0 0.0
  %1761 = vmatpush.msra.mxu0 0.0
  %1762 = vmatpush.msra.mxu0 0.0
  %1763 = vmatpush.msra.mxu0 0.0
  %1764 = vmatpush.msra.mxu0 0.0
  %1765 = vmatpush.msra.mxu0 0.0
  %1766 = vmatpush.msra.mxu0 0.0
  %1767 = vmatpush.msra.mxu0 0.0
  %1768 = vmatpush.msra.mxu0 0.0
  %1769 = vmatpush.msra.mxu0 0.0
  %1770 = vmatpush.msra.mxu0 %v1747
  %1771 = vmatpush.msra.mxu0 %v1745
  %1772 = vmatmul.f32.gmra.mxu0 %v1751
  %v1773 = vpop.f32.mrf.mxu0
  %v1774 = vadd.f32 0.0, %v1773
  %1775 = vmatmul.f32.gmra.mxu0 %v1754
  %v1776 = vpop.f32.mrf.mxu0
  %v1777 = vadd.f32 0.0, %v1776
  %1778 = vdwg.mxu0
  %s1779 = scalar_lea.vmem %s3, 128
  %v1780 = vld [vmem:[%s1779] sm:$0xff]
  %v1781 = vld [vmem:[%s1779 + $0x8] sm:$0xff]
  %v1782 = vld [vmem:[%s1779 + $0x10] sm:$0xff]
  %v1783 = vld [vmem:[%s1779 + $0x18] sm:$0xff]
  %v1784 = vld [vmem:[%s1779 + $0x20] sm:$0xff]
  %v1785 = vld [vmem:[%s1779 + $0x28] sm:$0xff]
  %v1786 = vld [vmem:[%s1779 + $0x30] sm:$0xff]
  %v1787 = vld [vmem:[%s1779 + $0x38] sm:$0xff]
  %v1788 = vld [vmem:[%s1779 + $0x40] sm:$0xff]
  %v1789 = vld [vmem:[%s1779 + $0x48] sm:$0xff]
  %v1790 = vld [vmem:[%s1779 + $0x50] sm:$0xff]
  %v1791 = vld [vmem:[%s1779 + $0x58] sm:$0xff]
  %v1792 = vld [vmem:[%s1779 + $0x60] sm:$0xff]
  %v1793 = vld [vmem:[%s1779 + $0x68] sm:$0xff]
  %v1794 = vld [vmem:[%s1779 + $0x70] sm:$0xff]
  %v1795 = vld [vmem:[%s1779 + $0x78] sm:$0xff]
  %1796 = vrot.lane.b32.xlu0 %v128, 120
  %v1797 = vpop.permute.xlu0 %1796
  %1798 = vrot.lane.b32.xlu0 %v131, 120
  %v1799 = vpop.permute.xlu0 %1798
  %1800 = vrot.lane.b32.xlu0 %v193, 120
  %v1801 = vpop.permute.xlu0 %1800
  %1802 = vrot.lane.b32.xlu0 %v196, 120
  %v1803 = vpop.permute.xlu0 %1802
  %v1804 = vsel %vm256, %v1797, 0
  %v1806 = vsel %vm256, %v1799, 0
  %v1808 = vsel %vm256, %v1801, 0
  %v1810 = vsel %vm256, %v1803, 0
  %1812 = vmatpush.xpose.msra.mxu0 0.0
  %1813 = vmatpush.xpose.msra.mxu0 0.0
  %1814 = vmatpush.xpose.msra.mxu0 0.0
  %1815 = vmatpush.xpose.msra.mxu0 0.0
  %1816 = vmatpush.xpose.msra.mxu0 0.0
  %1817 = vmatpush.xpose.msra.mxu0 0.0
  %1818 = vmatpush.xpose.msra.mxu0 0.0
  %1819 = vmatpush.xpose.msra.mxu0 0.0
  %1820 = vmatpush.xpose.msra.mxu0 0.0
  %1821 = vmatpush.xpose.msra.mxu0 0.0
  %1822 = vmatpush.xpose.msra.mxu0 0.0
  %1823 = vmatpush.xpose.msra.mxu0 0.0
  %1824 = vmatpush.xpose.msra.mxu0 0.0
  %1825 = vmatpush.xpose.msra.mxu0 0.0
  %1826 = vmatpush.xpose.msra.mxu0 %v1810
  %1827 = vmatpush.xpose.msra.mxu0 %v1808
  %1828 = vmatmul.f32.gmra.mxu0 %v1804
  %v1829 = vpop.f32.mrf.mxu0
  %v1830 = vadd.f32 %v1780, %v1829
  %1831 = vmatmul.f32.gmra.mxu0 %v1806
  %v1832 = vpop.f32.mrf.mxu0
  %v1833 = vadd.f32 %v1781, %v1832
  %1834 = vdwg.mxu0
  %1835 = vrot.lane.b32.xlu0 %v134, 120
  %v1836 = vpop.permute.xlu0 %1835
  %1837 = vrot.lane.b32.xlu0 %v137, 120
  %v1838 = vpop.permute.xlu0 %1837
  %1839 = vrot.lane.b32.xlu0 %v199, 120
  %v1840 = vpop.permute.xlu0 %1839
  %1841 = vrot.lane.b32.xlu0 %v202, 120
  %v1842 = vpop.permute.xlu0 %1841
  %v1843 = vsel %vm256, %v1836, 0
  %v1845 = vsel %vm256, %v1838, 0
  %v1847 = vsel %vm256, %v1840, 0
  %v1849 = vsel %vm256, %v1842, 0
  %1851 = vmatpush.xpose.msra.mxu0 0.0
  %1852 = vmatpush.xpose.msra.mxu0 0.0
  %1853 = vmatpush.xpose.msra.mxu0 0.0
  %1854 = vmatpush.xpose.msra.mxu0 0.0
  %1855 = vmatpush.xpose.msra.mxu0 0.0
  %1856 = vmatpush.xpose.msra.mxu0 0.0
  %1857 = vmatpush.xpose.msra.mxu0 0.0
  %1858 = vmatpush.xpose.msra.mxu0 0.0
  %1859 = vmatpush.xpose.msra.mxu0 0.0
  %1860 = vmatpush.xpose.msra.mxu0 0.0
  %1861 = vmatpush.xpose.msra.mxu0 0.0
  %1862 = vmatpush.xpose.msra.mxu0 0.0
  %1863 = vmatpush.xpose.msra.mxu0 0.0
  %1864 = vmatpush.xpose.msra.mxu0 0.0
  %1865 = vmatpush.xpose.msra.mxu0 %v1849
  %1866 = vmatpush.xpose.msra.mxu0 %v1847
  %1867 = vmatmul.f32.gmra.mxu0 %v1843
  %v1868 = vpop.f32.mrf.mxu0
  %v1869 = vadd.f32 %v1782, %v1868
  %1870 = vmatmul.f32.gmra.mxu0 %v1845
  %v1871 = vpop.f32.mrf.mxu0
  %v1872 = vadd.f32 %v1783, %v1871
  %1873 = vdwg.mxu0
  %1874 = vrot.lane.b32.xlu0 %v140, 120
  %v1875 = vpop.permute.xlu0 %1874
  %1876 = vrot.lane.b32.xlu0 %v143, 120
  %v1877 = vpop.permute.xlu0 %1876
  %1878 = vrot.lane.b32.xlu0 %v205, 120
  %v1879 = vpop.permute.xlu0 %1878
  %1880 = vrot.lane.b32.xlu0 %v208, 120
  %v1881 = vpop.permute.xlu0 %1880
  %v1882 = vsel %vm256, %v1875, 0
  %v1884 = vsel %vm256, %v1877, 0
  %v1886 = vsel %vm256, %v1879, 0
  %v1888 = vsel %vm256, %v1881, 0
  %1890 = vmatpush.xpose.msra.mxu0 0.0
  %1891 = vmatpush.xpose.msra.mxu0 0.0
  %1892 = vmatpush.xpose.msra.mxu0 0.0
  %1893 = vmatpush.xpose.msra.mxu0 0.0
  %1894 = vmatpush.xpose.msra.mxu0 0.0
  %1895 = vmatpush.xpose.msra.mxu0 0.0
  %1896 = vmatpush.xpose.msra.mxu0 0.0
  %1897 = vmatpush.xpose.msra.mxu0 0.0
  %1898 = vmatpush.xpose.msra.mxu0 0.0
  %1899 = vmatpush.xpose.msra.mxu0 0.0
  %1900 = vmatpush.xpose.msra.mxu0 0.0
  %1901 = vmatpush.xpose.msra.mxu0 0.0
  %1902 = vmatpush.xpose.msra.mxu0 0.0
  %1903 = vmatpush.xpose.msra.mxu0 0.0
  %1904 = vmatpush.xpose.msra.mxu0 %v1888
  %1905 = vmatpush.xpose.msra.mxu0 %v1886
  %1906 = vmatmul.f32.gmra.mxu0 %v1882
  %v1907 = vpop.f32.mrf.mxu0
  %v1908 = vadd.f32 %v1784, %v1907
  %1909 = vmatmul.f32.gmra.mxu0 %v1884
  %v1910 = vpop.f32.mrf.mxu0
  %v1911 = vadd.f32 %v1785, %v1910
  %1912 = vdwg.mxu0
  %1913 = vrot.lane.b32.xlu0 %v146, 120
  %v1914 = vpop.permute.xlu0 %1913
  %1915 = vrot.lane.b32.xlu0 %v149, 120
  %v1916 = vpop.permute.xlu0 %1915
  %1917 = vrot.lane.b32.xlu0 %v211, 120
  %v1918 = vpop.permute.xlu0 %1917
  %1919 = vrot.lane.b32.xlu0 %v214, 120
  %v1920 = vpop.permute.xlu0 %1919
  %v1921 = vsel %vm256, %v1914, 0
  %v1923 = vsel %vm256, %v1916, 0
  %v1925 = vsel %vm256, %v1918, 0
  %v1927 = vsel %vm256, %v1920, 0
  %1929 = vmatpush.xpose.msra.mxu0 0.0
  %1930 = vmatpush.xpose.msra.mxu0 0.0
  %1931 = vmatpush.xpose.msra.mxu0 0.0
  %1932 = vmatpush.xpose.msra.mxu0 0.0
  %1933 = vmatpush.xpose.msra.mxu0 0.0
  %1934 = vmatpush.xpose.msra.mxu0 0.0
  %1935 = vmatpush.xpose.msra.mxu0 0.0
  %1936 = vmatpush.xpose.msra.mxu0 0.0
  %1937 = vmatpush.xpose.msra.mxu0 0.0
  %1938 = vmatpush.xpose.msra.mxu0 0.0
  %1939 = vmatpush.xpose.msra.mxu0 0.0
  %1940 = vmatpush.xpose.msra.mxu0 0.0
  %1941 = vmatpush.xpose.msra.mxu0 0.0
  %1942 = vmatpush.xpose.msra.mxu0 0.0
  %1943 = vmatpush.xpose.msra.mxu0 %v1927
  %1944 = vmatpush.xpose.msra.mxu0 %v1925
  %1945 = vmatmul.f32.gmra.mxu0 %v1921
  %v1946 = vpop.f32.mrf.mxu0
  %v1947 = vadd.f32 %v1786, %v1946
  %1948 = vmatmul.f32.gmra.mxu0 %v1923
  %v1949 = vpop.f32.mrf.mxu0
  %v1950 = vadd.f32 %v1787, %v1949
  %1951 = vdwg.mxu0
  %1952 = vrot.lane.b32.xlu0 %v152, 120
  %v1953 = vpop.permute.xlu0 %1952
  %1954 = vrot.lane.b32.xlu0 %v155, 120
  %v1955 = vpop.permute.xlu0 %1954
  %1956 = vrot.lane.b32.xlu0 %v217, 120
  %v1957 = vpop.permute.xlu0 %1956
  %1958 = vrot.lane.b32.xlu0 %v220, 120
  %v1959 = vpop.permute.xlu0 %1958
  %v1960 = vsel %vm256, %v1953, 0
  %v1962 = vsel %vm256, %v1955, 0
  %v1964 = vsel %vm256, %v1957, 0
  %v1966 = vsel %vm256, %v1959, 0
  %1968 = vmatpush.xpose.msra.mxu0 0.0
  %1969 = vmatpush.xpose.msra.mxu0 0.0
  %1970 = vmatpush.xpose.msra.mxu0 0.0
  %1971 = vmatpush.xpose.msra.mxu0 0.0
  %1972 = vmatpush.xpose.msra.mxu0 0.0
  %1973 = vmatpush.xpose.msra.mxu0 0.0
  %1974 = vmatpush.xpose.msra.mxu0 0.0
  %1975 = vmatpush.xpose.msra.mxu0 0.0
  %1976 = vmatpush.xpose.msra.mxu0 0.0
  %1977 = vmatpush.xpose.msra.mxu0 0.0
  %1978 = vmatpush.xpose.msra.mxu0 0.0
  %1979 = vmatpush.xpose.msra.mxu0 0.0
  %1980 = vmatpush.xpose.msra.mxu0 0.0
  %1981 = vmatpush.xpose.msra.mxu0 0.0
  %1982 = vmatpush.xpose.msra.mxu0 %v1966
  %1983 = vmatpush.xpose.msra.mxu0 %v1964
  %1984 = vmatmul.f32.gmra.mxu0 %v1960
  %v1985 = vpop.f32.mrf.mxu0
  %v1986 = vadd.f32 %v1788, %v1985
  %1987 = vmatmul.f32.gmra.mxu0 %v1962
  %v1988 = vpop.f32.mrf.mxu0
  %v1989 = vadd.f32 %v1789, %v1988
  %1990 = vdwg.mxu0
  %1991 = vrot.lane.b32.xlu0 %v158, 120
  %v1992 = vpop.permute.xlu0 %1991
  %1993 = vrot.lane.b32.xlu0 %v161, 120
  %v1994 = vpop.permute.xlu0 %1993
  %1995 = vrot.lane.b32.xlu0 %v223, 120
  %v1996 = vpop.permute.xlu0 %1995
  %1997 = vrot.lane.b32.xlu0 %v226, 120
  %v1998 = vpop.permute.xlu0 %1997
  %v1999 = vsel %vm256, %v1992, 0
  %v2001 = vsel %vm256, %v1994, 0
  %v2003 = vsel %vm256, %v1996, 0
  %v2005 = vsel %vm256, %v1998, 0
  %2007 = vmatpush.xpose.msra.mxu0 0.0
  %2008 = vmatpush.xpose.msra.mxu0 0.0
  %2009 = vmatpush.xpose.msra.mxu0 0.0
  %2010 = vmatpush.xpose.msra.mxu0 0.0
  %2011 = vmatpush.xpose.msra.mxu0 0.0
  %2012 = vmatpush.xpose.msra.mxu0 0.0
  %2013 = vmatpush.xpose.msra.mxu0 0.0
  %2014 = vmatpush.xpose.msra.mxu0 0.0
  %2015 = vmatpush.xpose.msra.mxu0 0.0
  %2016 = vmatpush.xpose.msra.mxu0 0.0
  %2017 = vmatpush.xpose.msra.mxu0 0.0
  %2018 = vmatpush.xpose.msra.mxu0 0.0
  %2019 = vmatpush.xpose.msra.mxu0 0.0
  %2020 = vmatpush.xpose.msra.mxu0 0.0
  %2021 = vmatpush.xpose.msra.mxu0 %v2005
  %2022 = vmatpush.xpose.msra.mxu0 %v2003
  %2023 = vmatmul.f32.gmra.mxu0 %v1999
  %v2024 = vpop.f32.mrf.mxu0
  %v2025 = vadd.f32 %v1790, %v2024
  %2026 = vmatmul.f32.gmra.mxu0 %v2001
  %v2027 = vpop.f32.mrf.mxu0
  %v2028 = vadd.f32 %v1791, %v2027
  %2029 = vdwg.mxu0
  %2030 = vrot.lane.b32.xlu0 %v164, 120
  %v2031 = vpop.permute.xlu0 %2030
  %2032 = vrot.lane.b32.xlu0 %v167, 120
  %v2033 = vpop.permute.xlu0 %2032
  %2034 = vrot.lane.b32.xlu0 %v229, 120
  %v2035 = vpop.permute.xlu0 %2034
  %2036 = vrot.lane.b32.xlu0 %v232, 120
  %v2037 = vpop.permute.xlu0 %2036
  %v2038 = vsel %vm256, %v2031, 0
  %v2040 = vsel %vm256, %v2033, 0
  %v2042 = vsel %vm256, %v2035, 0
  %v2044 = vsel %vm256, %v2037, 0
  %2046 = vmatpush.xpose.msra.mxu0 0.0
  %2047 = vmatpush.xpose.msra.mxu0 0.0
  %2048 = vmatpush.xpose.msra.mxu0 0.0
  %2049 = vmatpush.xpose.msra.mxu0 0.0
  %2050 = vmatpush.xpose.msra.mxu0 0.0
  %2051 = vmatpush.xpose.msra.mxu0 0.0
  %2052 = vmatpush.xpose.msra.mxu0 0.0
  %2053 = vmatpush.xpose.msra.mxu0 0.0
  %2054 = vmatpush.xpose.msra.mxu0 0.0
  %2055 = vmatpush.xpose.msra.mxu0 0.0
  %2056 = vmatpush.xpose.msra.mxu0 0.0
  %2057 = vmatpush.xpose.msra.mxu0 0.0
  %2058 = vmatpush.xpose.msra.mxu0 0.0
  %2059 = vmatpush.xpose.msra.mxu0 0.0
  %2060 = vmatpush.xpose.msra.mxu0 %v2044
  %2061 = vmatpush.xpose.msra.mxu0 %v2042
  %2062 = vmatmul.f32.gmra.mxu0 %v2038
  %v2063 = vpop.f32.mrf.mxu0
  %v2064 = vadd.f32 %v1792, %v2063
  %2065 = vmatmul.f32.gmra.mxu0 %v2040
  %v2066 = vpop.f32.mrf.mxu0
  %v2067 = vadd.f32 %v1793, %v2066
  %2068 = vdwg.mxu0
  %2069 = vrot.lane.b32.xlu0 %v170, 120
  %v2070 = vpop.permute.xlu0 %2069
  %2071 = vrot.lane.b32.xlu0 %v173, 120
  %v2072 = vpop.permute.xlu0 %2071
  %2073 = vrot.lane.b32.xlu0 %v235, 120
  %v2074 = vpop.permute.xlu0 %2073
  %2075 = vrot.lane.b32.xlu0 %v238, 120
  %v2076 = vpop.permute.xlu0 %2075
  %v2077 = vsel %vm256, %v2070, 0
  %v2079 = vsel %vm256, %v2072, 0
  %v2081 = vsel %vm256, %v2074, 0
  %v2083 = vsel %vm256, %v2076, 0
  %2085 = vmatpush.xpose.msra.mxu0 0.0
  %2086 = vmatpush.xpose.msra.mxu0 0.0
  %2087 = vmatpush.xpose.msra.mxu0 0.0
  %2088 = vmatpush.xpose.msra.mxu0 0.0
  %2089 = vmatpush.xpose.msra.mxu0 0.0
  %2090 = vmatpush.xpose.msra.mxu0 0.0
  %2091 = vmatpush.xpose.msra.mxu0 0.0
  %2092 = vmatpush.xpose.msra.mxu0 0.0
  %2093 = vmatpush.xpose.msra.mxu0 0.0
  %2094 = vmatpush.xpose.msra.mxu0 0.0
  %2095 = vmatpush.xpose.msra.mxu0 0.0
  %2096 = vmatpush.xpose.msra.mxu0 0.0
  %2097 = vmatpush.xpose.msra.mxu0 0.0
  %2098 = vmatpush.xpose.msra.mxu0 0.0
  %2099 = vmatpush.xpose.msra.mxu0 %v2083
  %2100 = vmatpush.xpose.msra.mxu0 %v2081
  %2101 = vmatmul.f32.gmra.mxu0 %v2077
  %v2102 = vpop.f32.mrf.mxu0
  %v2103 = vadd.f32 %v1794, %v2102
  %2104 = vmatmul.f32.gmra.mxu0 %v2079
  %v2105 = vpop.f32.mrf.mxu0
  %v2106 = vadd.f32 %v1795, %v2105
  %2107 = vdwg.mxu0
  %s2108 = scalar_lea.vmem %s3, 640
  %v2109 = vld [vmem:[%s2108] sm:$0xff]
  %v2110 = vld [vmem:[%s2108 + $0x8] sm:$0xff]
  %v2111 = vld [vmem:[%s2108 + $0x10] sm:$0xff]
  %v2112 = vld [vmem:[%s2108 + $0x18] sm:$0xff]
  %v2113 = vld [vmem:[%s2108 + $0x20] sm:$0xff]
  %v2114 = vld [vmem:[%s2108 + $0x28] sm:$0xff]
  %v2115 = vld [vmem:[%s2108 + $0x30] sm:$0xff]
  %v2116 = vld [vmem:[%s2108 + $0x38] sm:$0xff]
  %v2117 = vld [vmem:[%s2108 + $0x40] sm:$0xff]
  %v2118 = vld [vmem:[%s2108 + $0x48] sm:$0xff]
  %v2119 = vld [vmem:[%s2108 + $0x50] sm:$0xff]
  %v2120 = vld [vmem:[%s2108 + $0x58] sm:$0xff]
  %v2121 = vld [vmem:[%s2108 + $0x60] sm:$0xff]
  %v2122 = vld [vmem:[%s2108 + $0x68] sm:$0xff]
  %v2123 = vld [vmem:[%s2108 + $0x70] sm:$0xff]
  %v2124 = vld [vmem:[%s2108 + $0x78] sm:$0xff]
  %2125 = vrot.lane.b32.xlu0 %v128, 24
  %v2126 = vpop.permute.xlu0 %2125
  %2127 = vrot.lane.b32.xlu0 %v131, 24
  %v2128 = vpop.permute.xlu0 %2127
  %2129 = vrot.lane.b32.xlu0 %v128, 88
  %v2130 = vpop.permute.xlu0 %2129
  %2131 = vrot.lane.b32.xlu0 %v131, 88
  %v2132 = vpop.permute.xlu0 %2131
  %v2133 = vsel %vm256, %v2126, 0
  %v2135 = vsel %vm256, %v2128, 0
  %v2137 = vsel %vm256, %v2130, 0
  %v2139 = vsel %vm256, %v2132, 0
  %2141 = vmatpush.xpose.msra.mxu0 0.0
  %2142 = vmatpush.xpose.msra.mxu0 0.0
  %2143 = vmatpush.xpose.msra.mxu0 0.0
  %2144 = vmatpush.xpose.msra.mxu0 0.0
  %2145 = vmatpush.xpose.msra.mxu0 0.0
  %2146 = vmatpush.xpose.msra.mxu0 0.0
  %2147 = vmatpush.xpose.msra.mxu0 0.0
  %2148 = vmatpush.xpose.msra.mxu0 0.0
  %2149 = vmatpush.xpose.msra.mxu0 0.0
  %2150 = vmatpush.xpose.msra.mxu0 0.0
  %2151 = vmatpush.xpose.msra.mxu0 0.0
  %2152 = vmatpush.xpose.msra.mxu0 0.0
  %2153 = vmatpush.xpose.msra.mxu0 0.0
  %2154 = vmatpush.xpose.msra.mxu0 0.0
  %2155 = vmatpush.xpose.msra.mxu0 %v2139
  %2156 = vmatpush.xpose.msra.mxu0 %v2137
  %2157 = vmatmul.f32.gmra.mxu0 %v2133
  %v2158 = vpop.f32.mrf.mxu0
  %v2159 = vadd.f32 %v2109, %v2158
  %2160 = vmatmul.f32.gmra.mxu0 %v2135
  %v2161 = vpop.f32.mrf.mxu0
  %v2162 = vadd.f32 %v2110, %v2161
  %2163 = vdwg.mxu0
  %2164 = vrot.lane.b32.xlu0 %v134, 24
  %v2165 = vpop.permute.xlu0 %2164
  %2166 = vrot.lane.b32.xlu0 %v137, 24
  %v2167 = vpop.permute.xlu0 %2166
  %2168 = vrot.lane.b32.xlu0 %v134, 88
  %v2169 = vpop.permute.xlu0 %2168
  %2170 = vrot.lane.b32.xlu0 %v137, 88
  %v2171 = vpop.permute.xlu0 %2170
  %v2172 = vsel %vm256, %v2165, 0
  %v2174 = vsel %vm256, %v2167, 0
  %v2176 = vsel %vm256, %v2169, 0
  %v2178 = vsel %vm256, %v2171, 0
  %2180 = vmatpush.xpose.msra.mxu0 0.0
  %2181 = vmatpush.xpose.msra.mxu0 0.0
  %2182 = vmatpush.xpose.msra.mxu0 0.0
  %2183 = vmatpush.xpose.msra.mxu0 0.0
  %2184 = vmatpush.xpose.msra.mxu0 0.0
  %2185 = vmatpush.xpose.msra.mxu0 0.0
  %2186 = vmatpush.xpose.msra.mxu0 0.0
  %2187 = vmatpush.xpose.msra.mxu0 0.0
  %2188 = vmatpush.xpose.msra.mxu0 0.0
  %2189 = vmatpush.xpose.msra.mxu0 0.0
  %2190 = vmatpush.xpose.msra.mxu0 0.0
  %2191 = vmatpush.xpose.msra.mxu0 0.0
  %2192 = vmatpush.xpose.msra.mxu0 0.0
  %2193 = vmatpush.xpose.msra.mxu0 0.0
  %2194 = vmatpush.xpose.msra.mxu0 %v2178
  %2195 = vmatpush.xpose.msra.mxu0 %v2176
  %2196 = vmatmul.f32.gmra.mxu0 %v2172
  %v2197 = vpop.f32.mrf.mxu0
  %v2198 = vadd.f32 %v2111, %v2197
  %2199 = vmatmul.f32.gmra.mxu0 %v2174
  %v2200 = vpop.f32.mrf.mxu0
  %v2201 = vadd.f32 %v2112, %v2200
  %2202 = vdwg.mxu0
  %2203 = vrot.lane.b32.xlu0 %v140, 24
  %v2204 = vpop.permute.xlu0 %2203
  %2205 = vrot.lane.b32.xlu0 %v143, 24
  %v2206 = vpop.permute.xlu0 %2205
  %2207 = vrot.lane.b32.xlu0 %v140, 88
  %v2208 = vpop.permute.xlu0 %2207
  %2209 = vrot.lane.b32.xlu0 %v143, 88
  %v2210 = vpop.permute.xlu0 %2209
  %v2211 = vsel %vm256, %v2204, 0
  %v2213 = vsel %vm256, %v2206, 0
  %v2215 = vsel %vm256, %v2208, 0
  %v2217 = vsel %vm256, %v2210, 0
  %2219 = vmatpush.xpose.msra.mxu0 0.0
  %2220 = vmatpush.xpose.msra.mxu0 0.0
  %2221 = vmatpush.xpose.msra.mxu0 0.0
  %2222 = vmatpush.xpose.msra.mxu0 0.0
  %2223 = vmatpush.xpose.msra.mxu0 0.0
  %2224 = vmatpush.xpose.msra.mxu0 0.0
  %2225 = vmatpush.xpose.msra.mxu0 0.0
  %2226 = vmatpush.xpose.msra.mxu0 0.0
  %2227 = vmatpush.xpose.msra.mxu0 0.0
  %2228 = vmatpush.xpose.msra.mxu0 0.0
  %2229 = vmatpush.xpose.msra.mxu0 0.0
  %2230 = vmatpush.xpose.msra.mxu0 0.0
  %2231 = vmatpush.xpose.msra.mxu0 0.0
  %2232 = vmatpush.xpose.msra.mxu0 0.0
  %2233 = vmatpush.xpose.msra.mxu0 %v2217
  %2234 = vmatpush.xpose.msra.mxu0 %v2215
  %2235 = vmatmul.f32.gmra.mxu0 %v2211
  %v2236 = vpop.f32.mrf.mxu0
  %v2237 = vadd.f32 %v2113, %v2236
  %2238 = vmatmul.f32.gmra.mxu0 %v2213
  %v2239 = vpop.f32.mrf.mxu0
  %v2240 = vadd.f32 %v2114, %v2239
  %2241 = vdwg.mxu0
  %2242 = vrot.lane.b32.xlu0 %v146, 24
  %v2243 = vpop.permute.xlu0 %2242
  %2244 = vrot.lane.b32.xlu0 %v149, 24
  %v2245 = vpop.permute.xlu0 %2244
  %2246 = vrot.lane.b32.xlu0 %v146, 88
  %v2247 = vpop.permute.xlu0 %2246
  %2248 = vrot.lane.b32.xlu0 %v149, 88
  %v2249 = vpop.permute.xlu0 %2248
  %v2250 = vsel %vm256, %v2243, 0
  %v2252 = vsel %vm256, %v2245, 0
  %v2254 = vsel %vm256, %v2247, 0
  %v2256 = vsel %vm256, %v2249, 0
  %2258 = vmatpush.xpose.msra.mxu0 0.0
  %2259 = vmatpush.xpose.msra.mxu0 0.0
  %2260 = vmatpush.xpose.msra.mxu0 0.0
  %2261 = vmatpush.xpose.msra.mxu0 0.0
  %2262 = vmatpush.xpose.msra.mxu0 0.0
  %2263 = vmatpush.xpose.msra.mxu0 0.0
  %2264 = vmatpush.xpose.msra.mxu0 0.0
  %2265 = vmatpush.xpose.msra.mxu0 0.0
  %2266 = vmatpush.xpose.msra.mxu0 0.0
  %2267 = vmatpush.xpose.msra.mxu0 0.0
  %2268 = vmatpush.xpose.msra.mxu0 0.0
  %2269 = vmatpush.xpose.msra.mxu0 0.0
  %2270 = vmatpush.xpose.msra.mxu0 0.0
  %2271 = vmatpush.xpose.msra.mxu0 0.0
  %2272 = vmatpush.xpose.msra.mxu0 %v2256
  %2273 = vmatpush.xpose.msra.mxu0 %v2254
  %2274 = vmatmul.f32.gmra.mxu0 %v2250
  %v2275 = vpop.f32.mrf.mxu0
  %v2276 = vadd.f32 %v2115, %v2275
  %2277 = vmatmul.f32.gmra.mxu0 %v2252
  %v2278 = vpop.f32.mrf.mxu0
  %v2279 = vadd.f32 %v2116, %v2278
  %2280 = vdwg.mxu0
  %2281 = vrot.lane.b32.xlu0 %v152, 24
  %v2282 = vpop.permute.xlu0 %2281
  %2283 = vrot.lane.b32.xlu0 %v155, 24
  %v2284 = vpop.permute.xlu0 %2283
  %2285 = vrot.lane.b32.xlu0 %v152, 88
  %v2286 = vpop.permute.xlu0 %2285
  %2287 = vrot.lane.b32.xlu0 %v155, 88
  %v2288 = vpop.permute.xlu0 %2287
  %v2289 = vsel %vm256, %v2282, 0
  %v2291 = vsel %vm256, %v2284, 0
  %v2293 = vsel %vm256, %v2286, 0
  %v2295 = vsel %vm256, %v2288, 0
  %2297 = vmatpush.xpose.msra.mxu0 0.0
  %2298 = vmatpush.xpose.msra.mxu0 0.0
  %2299 = vmatpush.xpose.msra.mxu0 0.0
  %2300 = vmatpush.xpose.msra.mxu0 0.0
  %2301 = vmatpush.xpose.msra.mxu0 0.0
  %2302 = vmatpush.xpose.msra.mxu0 0.0
  %2303 = vmatpush.xpose.msra.mxu0 0.0
  %2304 = vmatpush.xpose.msra.mxu0 0.0
  %2305 = vmatpush.xpose.msra.mxu0 0.0
  %2306 = vmatpush.xpose.msra.mxu0 0.0
  %2307 = vmatpush.xpose.msra.mxu0 0.0
  %2308 = vmatpush.xpose.msra.mxu0 0.0
  %2309 = vmatpush.xpose.msra.mxu0 0.0
  %2310 = vmatpush.xpose.msra.mxu0 0.0
  %2311 = vmatpush.xpose.msra.mxu0 %v2295
  %2312 = vmatpush.xpose.msra.mxu0 %v2293
  %2313 = vmatmul.f32.gmra.mxu0 %v2289
  %v2314 = vpop.f32.mrf.mxu0
  %v2315 = vadd.f32 %v2117, %v2314
  %2316 = vmatmul.f32.gmra.mxu0 %v2291
  %v2317 = vpop.f32.mrf.mxu0
  %v2318 = vadd.f32 %v2118, %v2317
  %2319 = vdwg.mxu0
  %2320 = vrot.lane.b32.xlu0 %v158, 24
  %v2321 = vpop.permute.xlu0 %2320
  %2322 = vrot.lane.b32.xlu0 %v161, 24
  %v2323 = vpop.permute.xlu0 %2322
  %2324 = vrot.lane.b32.xlu0 %v158, 88
  %v2325 = vpop.permute.xlu0 %2324
  %2326 = vrot.lane.b32.xlu0 %v161, 88
  %v2327 = vpop.permute.xlu0 %2326
  %v2328 = vsel %vm256, %v2321, 0
  %v2330 = vsel %vm256, %v2323, 0
  %v2332 = vsel %vm256, %v2325, 0
  %v2334 = vsel %vm256, %v2327, 0
  %2336 = vmatpush.xpose.msra.mxu0 0.0
  %2337 = vmatpush.xpose.msra.mxu0 0.0
  %2338 = vmatpush.xpose.msra.mxu0 0.0
  %2339 = vmatpush.xpose.msra.mxu0 0.0
  %2340 = vmatpush.xpose.msra.mxu0 0.0
  %2341 = vmatpush.xpose.msra.mxu0 0.0
  %2342 = vmatpush.xpose.msra.mxu0 0.0
  %2343 = vmatpush.xpose.msra.mxu0 0.0
  %2344 = vmatpush.xpose.msra.mxu0 0.0
  %2345 = vmatpush.xpose.msra.mxu0 0.0
  %2346 = vmatpush.xpose.msra.mxu0 0.0
  %2347 = vmatpush.xpose.msra.mxu0 0.0
  %2348 = vmatpush.xpose.msra.mxu0 0.0
  %2349 = vmatpush.xpose.msra.mxu0 0.0
  %2350 = vmatpush.xpose.msra.mxu0 %v2334
  %2351 = vmatpush.xpose.msra.mxu0 %v2332
  %2352 = vmatmul.f32.gmra.mxu0 %v2328
  %v2353 = vpop.f32.mrf.mxu0
  %v2354 = vadd.f32 %v2119, %v2353
  %2355 = vmatmul.f32.gmra.mxu0 %v2330
  %v2356 = vpop.f32.mrf.mxu0
  %v2357 = vadd.f32 %v2120, %v2356
  %2358 = vdwg.mxu0
  %2359 = vrot.lane.b32.xlu0 %v164, 24
  %v2360 = vpop.permute.xlu0 %2359
  %2361 = vrot.lane.b32.xlu0 %v167, 24
  %v2362 = vpop.permute.xlu0 %2361
  %2363 = vrot.lane.b32.xlu0 %v164, 88
  %v2364 = vpop.permute.xlu0 %2363
  %2365 = vrot.lane.b32.xlu0 %v167, 88
  %v2366 = vpop.permute.xlu0 %2365
  %v2367 = vsel %vm256, %v2360, 0
  %v2369 = vsel %vm256, %v2362, 0
  %v2371 = vsel %vm256, %v2364, 0
  %v2373 = vsel %vm256, %v2366, 0
  %2375 = vmatpush.xpose.msra.mxu0 0.0
  %2376 = vmatpush.xpose.msra.mxu0 0.0
  %2377 = vmatpush.xpose.msra.mxu0 0.0
  %2378 = vmatpush.xpose.msra.mxu0 0.0
  %2379 = vmatpush.xpose.msra.mxu0 0.0
  %2380 = vmatpush.xpose.msra.mxu0 0.0
  %2381 = vmatpush.xpose.msra.mxu0 0.0
  %2382 = vmatpush.xpose.msra.mxu0 0.0
  %2383 = vmatpush.xpose.msra.mxu0 0.0
  %2384 = vmatpush.xpose.msra.mxu0 0.0
  %2385 = vmatpush.xpose.msra.mxu0 0.0
  %2386 = vmatpush.xpose.msra.mxu0 0.0
  %2387 = vmatpush.xpose.msra.mxu0 0.0
  %2388 = vmatpush.xpose.msra.mxu0 0.0
  %2389 = vmatpush.xpose.msra.mxu0 %v2373
  %2390 = vmatpush.xpose.msra.mxu0 %v2371
  %2391 = vmatmul.f32.gmra.mxu0 %v2367
  %v2392 = vpop.f32.mrf.mxu0
  %v2393 = vadd.f32 %v2121, %v2392
  %2394 = vmatmul.f32.gmra.mxu0 %v2369
  %v2395 = vpop.f32.mrf.mxu0
  %v2396 = vadd.f32 %v2122, %v2395
  %2397 = vdwg.mxu0
  %2398 = vrot.lane.b32.xlu0 %v170, 24
  %v2399 = vpop.permute.xlu0 %2398
  %2400 = vrot.lane.b32.xlu0 %v173, 24
  %v2401 = vpop.permute.xlu0 %2400
  %2402 = vrot.lane.b32.xlu0 %v170, 88
  %v2403 = vpop.permute.xlu0 %2402
  %2404 = vrot.lane.b32.xlu0 %v173, 88
  %v2405 = vpop.permute.xlu0 %2404
  %v2406 = vsel %vm256, %v2399, 0
  %v2408 = vsel %vm256, %v2401, 0
  %v2410 = vsel %vm256, %v2403, 0
  %v2412 = vsel %vm256, %v2405, 0
  %2414 = vmatpush.xpose.msra.mxu0 0.0
  %2415 = vmatpush.xpose.msra.mxu0 0.0
  %2416 = vmatpush.xpose.msra.mxu0 0.0
  %2417 = vmatpush.xpose.msra.mxu0 0.0
  %2418 = vmatpush.xpose.msra.mxu0 0.0
  %2419 = vmatpush.xpose.msra.mxu0 0.0
  %2420 = vmatpush.xpose.msra.mxu0 0.0
  %2421 = vmatpush.xpose.msra.mxu0 0.0
  %2422 = vmatpush.xpose.msra.mxu0 0.0
  %2423 = vmatpush.xpose.msra.mxu0 0.0
  %2424 = vmatpush.xpose.msra.mxu0 0.0
  %2425 = vmatpush.xpose.msra.mxu0 0.0
  %2426 = vmatpush.xpose.msra.mxu0 0.0
  %2427 = vmatpush.xpose.msra.mxu0 0.0
  %2428 = vmatpush.xpose.msra.mxu0 %v2412
  %2429 = vmatpush.xpose.msra.mxu0 %v2410
  %2430 = vmatmul.f32.gmra.mxu0 %v2406
  %v2431 = vpop.f32.mrf.mxu0
  %v2432 = vadd.f32 %v2123, %v2431
  %2433 = vmatmul.f32.gmra.mxu0 %v2408
  %v2434 = vpop.f32.mrf.mxu0
  %v2435 = vadd.f32 %v2124, %v2434
  %2436 = vdwg.mxu0
  %v2437 = vsel %vm866, %v1830, -inf
  %2438 = vmax.xlane.f32.xlu0 %v2437
  %v2439 = vpop.xlane.xlu0 %2438
  %v2440 = vsel %vm866, %v1833, -inf
  %2441 = vmax.xlane.f32.xlu0 %v2440
  %v2442 = vpop.xlane.xlu0 %2441
  %v2443 = vsel %vm866, %v1869, -inf
  %2444 = vmax.xlane.f32.xlu0 %v2443
  %v2445 = vpop.xlane.xlu0 %2444
  %v2446 = vsel %vm866, %v1872, -inf
  %2447 = vmax.xlane.f32.xlu0 %v2446
  %v2448 = vpop.xlane.xlu0 %2447
  %v2449 = vsel %vm866, %v1908, -inf
  %2450 = vmax.xlane.f32.xlu0 %v2449
  %v2451 = vpop.xlane.xlu0 %2450
  %v2452 = vsel %vm866, %v1911, -inf
  %2453 = vmax.xlane.f32.xlu0 %v2452
  %v2454 = vpop.xlane.xlu0 %2453
  %v2455 = vsel %vm866, %v1947, -inf
  %2456 = vmax.xlane.f32.xlu0 %v2455
  %v2457 = vpop.xlane.xlu0 %2456
  %v2458 = vsel %vm866, %v1950, -inf
  %2459 = vmax.xlane.f32.xlu0 %v2458
  %v2460 = vpop.xlane.xlu0 %2459
  %v2461 = vsel %vm866, %v1986, -inf
  %2462 = vmax.xlane.f32.xlu0 %v2461
  %v2463 = vpop.xlane.xlu0 %2462
  %v2464 = vsel %vm866, %v1989, -inf
  %2465 = vmax.xlane.f32.xlu0 %v2464
  %v2466 = vpop.xlane.xlu0 %2465
  %v2467 = vsel %vm866, %v2025, -inf
  %2468 = vmax.xlane.f32.xlu0 %v2467
  %v2469 = vpop.xlane.xlu0 %2468
  %v2470 = vsel %vm866, %v2028, -inf
  %2471 = vmax.xlane.f32.xlu0 %v2470
  %v2472 = vpop.xlane.xlu0 %2471
  %v2473 = vsel %vm866, %v2064, -inf
  %2474 = vmax.xlane.f32.xlu0 %v2473
  %v2475 = vpop.xlane.xlu0 %2474
  %v2476 = vsel %vm866, %v2067, -inf
  %2477 = vmax.xlane.f32.xlu0 %v2476
  %v2478 = vpop.xlane.xlu0 %2477
  %v2479 = vsel %vm866, %v2103, -inf
  %2480 = vmax.xlane.f32.xlu0 %v2479
  %v2481 = vpop.xlane.xlu0 %2480
  %v2482 = vsel %vm866, %v2106, -inf
  %2483 = vmax.xlane.f32.xlu0 %v2482
  %v2484 = vpop.xlane.xlu0 %2483
  %v2485 = vsub.f32 %v1830, %v2439
  %v2486 = vsub.f32 %v1833, %v2442
  %v2487 = vsub.f32 %v1869, %v2445
  %v2488 = vsub.f32 %v1872, %v2448
  %v2489 = vsub.f32 %v1908, %v2451
  %v2490 = vsub.f32 %v1911, %v2454
  %v2491 = vsub.f32 %v1947, %v2457
  %v2492 = vsub.f32 %v1950, %v2460
  %v2493 = vsub.f32 %v1986, %v2463
  %v2494 = vsub.f32 %v1989, %v2466
  %v2495 = vsub.f32 %v2025, %v2469
  %v2496 = vsub.f32 %v2028, %v2472
  %v2497 = vsub.f32 %v2064, %v2475
  %v2498 = vsub.f32 %v2067, %v2478
  %v2499 = vsub.f32 %v2103, %v2481
  %v2500 = vsub.f32 %v2106, %v2484
  %v2501 = vmul.f32 %v2485, 1.442695
  %v2502 = vpow.pop %v2501
  %v2503 = vmul.f32 %v2486, 1.442695
  %v2504 = vpow.pop %v2503
  %v2505 = vmul.f32 %v2487, 1.442695
  %v2506 = vpow.pop %v2505
  %v2507 = vmul.f32 %v2488, 1.442695
  %v2508 = vpow.pop %v2507
  %v2509 = vmul.f32 %v2489, 1.442695
  %v2510 = vpow.pop %v2509
  %v2511 = vmul.f32 %v2490, 1.442695
  %v2512 = vpow.pop %v2511
  %v2513 = vmul.f32 %v2491, 1.442695
  %v2514 = vpow.pop %v2513
  %v2515 = vmul.f32 %v2492, 1.442695
  %v2516 = vpow.pop %v2515
  %v2517 = vmul.f32 %v2493, 1.442695
  %v2518 = vpow.pop %v2517
  %v2519 = vmul.f32 %v2494, 1.442695
  %v2520 = vpow.pop %v2519
  %v2521 = vmul.f32 %v2495, 1.442695
  %v2522 = vpow.pop %v2521
  %v2523 = vmul.f32 %v2496, 1.442695
  %v2524 = vpow.pop %v2523
  %v2525 = vmul.f32 %v2497, 1.442695
  %v2526 = vpow.pop %v2525
  %v2527 = vmul.f32 %v2498, 1.442695
  %v2528 = vpow.pop %v2527
  %v2529 = vmul.f32 %v2499, 1.442695
  %v2530 = vpow.pop %v2529
  %v2531 = vmul.f32 %v2500, 1.442695
  %v2532 = vpow.pop %v2531
  %v2533 = vsel %vm866, %v2502, 0.0
  %2534 = vadd.xlane.f32.xlu0 %v2533
  %v2535 = vpop.xlane.xlu0 %2534
  %v2536 = vsel %vm866, %v2504, 0.0
  %2537 = vadd.xlane.f32.xlu0 %v2536
  %v2538 = vpop.xlane.xlu0 %2537
  %v2539 = vsel %vm866, %v2506, 0.0
  %2540 = vadd.xlane.f32.xlu0 %v2539
  %v2541 = vpop.xlane.xlu0 %2540
  %v2542 = vsel %vm866, %v2508, 0.0
  %2543 = vadd.xlane.f32.xlu0 %v2542
  %v2544 = vpop.xlane.xlu0 %2543
  %v2545 = vsel %vm866, %v2510, 0.0
  %2546 = vadd.xlane.f32.xlu0 %v2545
  %v2547 = vpop.xlane.xlu0 %2546
  %v2548 = vsel %vm866, %v2512, 0.0
  %2549 = vadd.xlane.f32.xlu0 %v2548
  %v2550 = vpop.xlane.xlu0 %2549
  %v2551 = vsel %vm866, %v2514, 0.0
  %2552 = vadd.xlane.f32.xlu0 %v2551
  %v2553 = vpop.xlane.xlu0 %2552
  %v2554 = vsel %vm866, %v2516, 0.0
  %2555 = vadd.xlane.f32.xlu0 %v2554
  %v2556 = vpop.xlane.xlu0 %2555
  %v2557 = vsel %vm866, %v2518, 0.0
  %2558 = vadd.xlane.f32.xlu0 %v2557
  %v2559 = vpop.xlane.xlu0 %2558
  %v2560 = vsel %vm866, %v2520, 0.0
  %2561 = vadd.xlane.f32.xlu0 %v2560
  %v2562 = vpop.xlane.xlu0 %2561
  %v2563 = vsel %vm866, %v2522, 0.0
  %2564 = vadd.xlane.f32.xlu0 %v2563
  %v2565 = vpop.xlane.xlu0 %2564
  %v2566 = vsel %vm866, %v2524, 0.0
  %2567 = vadd.xlane.f32.xlu0 %v2566
  %v2568 = vpop.xlane.xlu0 %2567
  %v2569 = vsel %vm866, %v2526, 0.0
  %2570 = vadd.xlane.f32.xlu0 %v2569
  %v2571 = vpop.xlane.xlu0 %2570
  %v2572 = vsel %vm866, %v2528, 0.0
  %2573 = vadd.xlane.f32.xlu0 %v2572
  %v2574 = vpop.xlane.xlu0 %2573
  %v2575 = vsel %vm866, %v2530, 0.0
  %2576 = vadd.xlane.f32.xlu0 %v2575
  %v2577 = vpop.xlane.xlu0 %2576
  %v2578 = vsel %vm866, %v2532, 0.0
  %2579 = vadd.xlane.f32.xlu0 %v2578
  %v2580 = vpop.xlane.xlu0 %2579
  %v2581 = vrcp.pop %v2535
  %v2582 = vrcp.pop %v2538
  %v2583 = vrcp.pop %v2541
  %v2584 = vrcp.pop %v2544
  %v2585 = vrcp.pop %v2547
  %v2586 = vrcp.pop %v2550
  %v2587 = vrcp.pop %v2553
  %v2588 = vrcp.pop %v2556
  %v2589 = vrcp.pop %v2559
  %v2590 = vrcp.pop %v2562
  %v2591 = vrcp.pop %v2565
  %v2592 = vrcp.pop %v2568
  %v2593 = vrcp.pop %v2571
  %v2594 = vrcp.pop %v2574
  %v2595 = vrcp.pop %v2577
  %v2596 = vrcp.pop %v2580
  %v2597 = vmul.f32 %v2502, %v2581
  %v2598 = vmul.f32 %v2504, %v2582
  %v2599 = vmul.f32 %v2506, %v2583
  %v2600 = vmul.f32 %v2508, %v2584
  %v2601 = vmul.f32 %v2510, %v2585
  %v2602 = vmul.f32 %v2512, %v2586
  %v2603 = vmul.f32 %v2514, %v2587
  %v2604 = vmul.f32 %v2516, %v2588
  %v2605 = vmul.f32 %v2518, %v2589
  %v2606 = vmul.f32 %v2520, %v2590
  %v2607 = vmul.f32 %v2522, %v2591
  %v2608 = vmul.f32 %v2524, %v2592
  %v2609 = vmul.f32 %v2526, %v2593
  %v2610 = vmul.f32 %v2528, %v2594
  %v2611 = vmul.f32 %v2530, %v2595
  %v2612 = vmul.f32 %v2532, %v2596
  %v2613 = vsel %vm866, %v2159, -inf
  %2614 = vmax.xlane.f32.xlu0 %v2613
  %v2615 = vpop.xlane.xlu0 %2614
  %v2616 = vsel %vm866, %v2162, -inf
  %2617 = vmax.xlane.f32.xlu0 %v2616
  %v2618 = vpop.xlane.xlu0 %2617
  %v2619 = vsel %vm866, %v2198, -inf
  %2620 = vmax.xlane.f32.xlu0 %v2619
  %v2621 = vpop.xlane.xlu0 %2620
  %v2622 = vsel %vm866, %v2201, -inf
  %2623 = vmax.xlane.f32.xlu0 %v2622
  %v2624 = vpop.xlane.xlu0 %2623
  %v2625 = vsel %vm866, %v2237, -inf
  %2626 = vmax.xlane.f32.xlu0 %v2625
  %v2627 = vpop.xlane.xlu0 %2626
  %v2628 = vsel %vm866, %v2240, -inf
  %2629 = vmax.xlane.f32.xlu0 %v2628
  %v2630 = vpop.xlane.xlu0 %2629
  %v2631 = vsel %vm866, %v2276, -inf
  %2632 = vmax.xlane.f32.xlu0 %v2631
  %v2633 = vpop.xlane.xlu0 %2632
  %v2634 = vsel %vm866, %v2279, -inf
  %2635 = vmax.xlane.f32.xlu0 %v2634
  %v2636 = vpop.xlane.xlu0 %2635
  %v2637 = vsel %vm866, %v2315, -inf
  %2638 = vmax.xlane.f32.xlu0 %v2637
  %v2639 = vpop.xlane.xlu0 %2638
  %v2640 = vsel %vm866, %v2318, -inf
  %2641 = vmax.xlane.f32.xlu0 %v2640
  %v2642 = vpop.xlane.xlu0 %2641
  %v2643 = vsel %vm866, %v2354, -inf
  %2644 = vmax.xlane.f32.xlu0 %v2643
  %v2645 = vpop.xlane.xlu0 %2644
  %v2646 = vsel %vm866, %v2357, -inf
  %2647 = vmax.xlane.f32.xlu0 %v2646
  %v2648 = vpop.xlane.xlu0 %2647
  %v2649 = vsel %vm866, %v2393, -inf
  %2650 = vmax.xlane.f32.xlu0 %v2649
  %v2651 = vpop.xlane.xlu0 %2650
  %v2652 = vsel %vm866, %v2396, -inf
  %2653 = vmax.xlane.f32.xlu0 %v2652
  %v2654 = vpop.xlane.xlu0 %2653
  %v2655 = vsel %vm866, %v2432, -inf
  %2656 = vmax.xlane.f32.xlu0 %v2655
  %v2657 = vpop.xlane.xlu0 %2656
  %v2658 = vsel %vm866, %v2435, -inf
  %2659 = vmax.xlane.f32.xlu0 %v2658
  %v2660 = vpop.xlane.xlu0 %2659
  %v2661 = vsub.f32 %v2159, %v2615
  %v2662 = vsub.f32 %v2162, %v2618
  %v2663 = vsub.f32 %v2198, %v2621
  %v2664 = vsub.f32 %v2201, %v2624
  %v2665 = vsub.f32 %v2237, %v2627
  %v2666 = vsub.f32 %v2240, %v2630
  %v2667 = vsub.f32 %v2276, %v2633
  %v2668 = vsub.f32 %v2279, %v2636
  %v2669 = vsub.f32 %v2315, %v2639
  %v2670 = vsub.f32 %v2318, %v2642
  %v2671 = vsub.f32 %v2354, %v2645
  %v2672 = vsub.f32 %v2357, %v2648
  %v2673 = vsub.f32 %v2393, %v2651
  %v2674 = vsub.f32 %v2396, %v2654
  %v2675 = vsub.f32 %v2432, %v2657
  %v2676 = vsub.f32 %v2435, %v2660
  %v2677 = vmul.f32 %v2661, 1.442695
  %v2678 = vpow.pop %v2677
  %v2679 = vmul.f32 %v2662, 1.442695
  %v2680 = vpow.pop %v2679
  %v2681 = vmul.f32 %v2663, 1.442695
  %v2682 = vpow.pop %v2681
  %v2683 = vmul.f32 %v2664, 1.442695
  %v2684 = vpow.pop %v2683
  %v2685 = vmul.f32 %v2665, 1.442695
  %v2686 = vpow.pop %v2685
  %v2687 = vmul.f32 %v2666, 1.442695
  %v2688 = vpow.pop %v2687
  %v2689 = vmul.f32 %v2667, 1.442695
  %v2690 = vpow.pop %v2689
  %v2691 = vmul.f32 %v2668, 1.442695
  %v2692 = vpow.pop %v2691
  %v2693 = vmul.f32 %v2669, 1.442695
  %v2694 = vpow.pop %v2693
  %v2695 = vmul.f32 %v2670, 1.442695
  %v2696 = vpow.pop %v2695
  %v2697 = vmul.f32 %v2671, 1.442695
  %v2698 = vpow.pop %v2697
  %v2699 = vmul.f32 %v2672, 1.442695
  %v2700 = vpow.pop %v2699
  %v2701 = vmul.f32 %v2673, 1.442695
  %v2702 = vpow.pop %v2701
  %v2703 = vmul.f32 %v2674, 1.442695
  %v2704 = vpow.pop %v2703
  %v2705 = vmul.f32 %v2675, 1.442695
  %v2706 = vpow.pop %v2705
  %v2707 = vmul.f32 %v2676, 1.442695
  %v2708 = vpow.pop %v2707
  %v2709 = vsel %vm866, %v2678, 0.0
  %2710 = vadd.xlane.f32.xlu0 %v2709
  %v2711 = vpop.xlane.xlu0 %2710
  %v2712 = vsel %vm866, %v2680, 0.0
  %2713 = vadd.xlane.f32.xlu0 %v2712
  %v2714 = vpop.xlane.xlu0 %2713
  %v2715 = vsel %vm866, %v2682, 0.0
  %2716 = vadd.xlane.f32.xlu0 %v2715
  %v2717 = vpop.xlane.xlu0 %2716
  %v2718 = vsel %vm866, %v2684, 0.0
  %2719 = vadd.xlane.f32.xlu0 %v2718
  %v2720 = vpop.xlane.xlu0 %2719
  %v2721 = vsel %vm866, %v2686, 0.0
  %2722 = vadd.xlane.f32.xlu0 %v2721
  %v2723 = vpop.xlane.xlu0 %2722
  %v2724 = vsel %vm866, %v2688, 0.0
  %2725 = vadd.xlane.f32.xlu0 %v2724
  %v2726 = vpop.xlane.xlu0 %2725
  %v2727 = vsel %vm866, %v2690, 0.0
  %2728 = vadd.xlane.f32.xlu0 %v2727
  %v2729 = vpop.xlane.xlu0 %2728
  %v2730 = vsel %vm866, %v2692, 0.0
  %2731 = vadd.xlane.f32.xlu0 %v2730
  %v2732 = vpop.xlane.xlu0 %2731
  %v2733 = vsel %vm866, %v2694, 0.0
  %2734 = vadd.xlane.f32.xlu0 %v2733
  %v2735 = vpop.xlane.xlu0 %2734
  %v2736 = vsel %vm866, %v2696, 0.0
  %2737 = vadd.xlane.f32.xlu0 %v2736
  %v2738 = vpop.xlane.xlu0 %2737
  %v2739 = vsel %vm866, %v2698, 0.0
  %2740 = vadd.xlane.f32.xlu0 %v2739
  %v2741 = vpop.xlane.xlu0 %2740
  %v2742 = vsel %vm866, %v2700, 0.0
  %2743 = vadd.xlane.f32.xlu0 %v2742
  %v2744 = vpop.xlane.xlu0 %2743
  %v2745 = vsel %vm866, %v2702, 0.0
  %2746 = vadd.xlane.f32.xlu0 %v2745
  %v2747 = vpop.xlane.xlu0 %2746
  %v2748 = vsel %vm866, %v2704, 0.0
  %2749 = vadd.xlane.f32.xlu0 %v2748
  %v2750 = vpop.xlane.xlu0 %2749
  %v2751 = vsel %vm866, %v2706, 0.0
  %2752 = vadd.xlane.f32.xlu0 %v2751
  %v2753 = vpop.xlane.xlu0 %2752
  %v2754 = vsel %vm866, %v2708, 0.0
  %2755 = vadd.xlane.f32.xlu0 %v2754
  %v2756 = vpop.xlane.xlu0 %2755
  %v2757 = vrcp.pop %v2711
  %v2758 = vrcp.pop %v2714
  %v2759 = vrcp.pop %v2717
  %v2760 = vrcp.pop %v2720
  %v2761 = vrcp.pop %v2723
  %v2762 = vrcp.pop %v2726
  %v2763 = vrcp.pop %v2729
  %v2764 = vrcp.pop %v2732
  %v2765 = vrcp.pop %v2735
  %v2766 = vrcp.pop %v2738
  %v2767 = vrcp.pop %v2741
  %v2768 = vrcp.pop %v2744
  %v2769 = vrcp.pop %v2747
  %v2770 = vrcp.pop %v2750
  %v2771 = vrcp.pop %v2753
  %v2772 = vrcp.pop %v2756
  %v2773 = vmul.f32 %v2678, %v2757
  %v2774 = vmul.f32 %v2680, %v2758
  %v2775 = vmul.f32 %v2682, %v2759
  %v2776 = vmul.f32 %v2684, %v2760
  %v2777 = vmul.f32 %v2686, %v2761
  %v2778 = vmul.f32 %v2688, %v2762
  %v2779 = vmul.f32 %v2690, %v2763
  %v2780 = vmul.f32 %v2692, %v2764
  %v2781 = vmul.f32 %v2694, %v2765
  %v2782 = vmul.f32 %v2696, %v2766
  %v2783 = vmul.f32 %v2698, %v2767
  %v2784 = vmul.f32 %v2700, %v2768
  %v2785 = vmul.f32 %v2702, %v2769
  %v2786 = vmul.f32 %v2704, %v2770
  %v2787 = vmul.f32 %v2706, %v2771
  %v2788 = vmul.f32 %v2708, %v2772
  %2789 = vrot.lane.b32.xlu0 %v193, 88
  %v2790 = vpop.permute.xlu0 %2789
  %2791 = vrot.lane.b32.xlu0 %v196, 88
  %v2792 = vpop.permute.xlu0 %2791
  %v2796 = vsel %vm866, %v2597, 0
  %v2799 = vsel %vm866, %v2598, 0
  %2801 = vmatpush.msra.mxu0 0.0
  %2802 = vmatpush.msra.mxu0 0.0
  %2803 = vmatpush.msra.mxu0 0.0
  %2804 = vmatpush.msra.mxu0 0.0
  %2805 = vmatpush.msra.mxu0 0.0
  %2806 = vmatpush.msra.mxu0 0.0
  %2807 = vmatpush.msra.mxu0 0.0
  %2808 = vmatpush.msra.mxu0 0.0
  %2809 = vmatpush.msra.mxu0 0.0
  %2810 = vmatpush.msra.mxu0 0.0
  %2811 = vmatpush.msra.mxu0 0.0
  %2812 = vmatpush.msra.mxu0 0.0
  %2813 = vmatpush.msra.mxu0 0.0
  %2814 = vmatpush.msra.mxu0 0.0
  %2815 = vmatpush.msra.mxu0 %v2792
  %2816 = vmatpush.msra.mxu0 %v2790
  %2817 = vmatmul.f32.gmra.mxu0 %v2796
  %v2818 = vpop.f32.mrf.mxu0
  %v2819 = vadd.f32 0.0, %v2818
  %2820 = vmatmul.f32.gmra.mxu0 %v2799
  %v2821 = vpop.f32.mrf.mxu0
  %v2822 = vadd.f32 0.0, %v2821
  %2823 = vdwg.mxu0
  %2824 = vrot.lane.b32.xlu0 %v199, 88
  %v2825 = vpop.permute.xlu0 %2824
  %2826 = vrot.lane.b32.xlu0 %v202, 88
  %v2827 = vpop.permute.xlu0 %2826
  %v2831 = vsel %vm866, %v2599, 0
  %v2834 = vsel %vm866, %v2600, 0
  %2836 = vmatpush.msra.mxu0 0.0
  %2837 = vmatpush.msra.mxu0 0.0
  %2838 = vmatpush.msra.mxu0 0.0
  %2839 = vmatpush.msra.mxu0 0.0
  %2840 = vmatpush.msra.mxu0 0.0
  %2841 = vmatpush.msra.mxu0 0.0
  %2842 = vmatpush.msra.mxu0 0.0
  %2843 = vmatpush.msra.mxu0 0.0
  %2844 = vmatpush.msra.mxu0 0.0
  %2845 = vmatpush.msra.mxu0 0.0
  %2846 = vmatpush.msra.mxu0 0.0
  %2847 = vmatpush.msra.mxu0 0.0
  %2848 = vmatpush.msra.mxu0 0.0
  %2849 = vmatpush.msra.mxu0 0.0
  %2850 = vmatpush.msra.mxu0 %v2827
  %2851 = vmatpush.msra.mxu0 %v2825
  %2852 = vmatmul.f32.gmra.mxu0 %v2831
  %v2853 = vpop.f32.mrf.mxu0
  %v2854 = vadd.f32 0.0, %v2853
  %2855 = vmatmul.f32.gmra.mxu0 %v2834
  %v2856 = vpop.f32.mrf.mxu0
  %v2857 = vadd.f32 0.0, %v2856
  %2858 = vdwg.mxu0
  %2859 = vrot.lane.b32.xlu0 %v205, 88
  %v2860 = vpop.permute.xlu0 %2859
  %2861 = vrot.lane.b32.xlu0 %v208, 88
  %v2862 = vpop.permute.xlu0 %2861
  %v2866 = vsel %vm866, %v2601, 0
  %v2869 = vsel %vm866, %v2602, 0
  %2871 = vmatpush.msra.mxu0 0.0
  %2872 = vmatpush.msra.mxu0 0.0
  %2873 = vmatpush.msra.mxu0 0.0
  %2874 = vmatpush.msra.mxu0 0.0
  %2875 = vmatpush.msra.mxu0 0.0
  %2876 = vmatpush.msra.mxu0 0.0
  %2877 = vmatpush.msra.mxu0 0.0
  %2878 = vmatpush.msra.mxu0 0.0
  %2879 = vmatpush.msra.mxu0 0.0
  %2880 = vmatpush.msra.mxu0 0.0
  %2881 = vmatpush.msra.mxu0 0.0
  %2882 = vmatpush.msra.mxu0 0.0
  %2883 = vmatpush.msra.mxu0 0.0
  %2884 = vmatpush.msra.mxu0 0.0
  %2885 = vmatpush.msra.mxu0 %v2862
  %2886 = vmatpush.msra.mxu0 %v2860
  %2887 = vmatmul.f32.gmra.mxu0 %v2866
  %v2888 = vpop.f32.mrf.mxu0
  %v2889 = vadd.f32 0.0, %v2888
  %2890 = vmatmul.f32.gmra.mxu0 %v2869
  %v2891 = vpop.f32.mrf.mxu0
  %v2892 = vadd.f32 0.0, %v2891
  %2893 = vdwg.mxu0
  %2894 = vrot.lane.b32.xlu0 %v211, 88
  %v2895 = vpop.permute.xlu0 %2894
  %2896 = vrot.lane.b32.xlu0 %v214, 88
  %v2897 = vpop.permute.xlu0 %2896
  %v2901 = vsel %vm866, %v2603, 0
  %v2904 = vsel %vm866, %v2604, 0
  %2906 = vmatpush.msra.mxu0 0.0
  %2907 = vmatpush.msra.mxu0 0.0
  %2908 = vmatpush.msra.mxu0 0.0
  %2909 = vmatpush.msra.mxu0 0.0
  %2910 = vmatpush.msra.mxu0 0.0
  %2911 = vmatpush.msra.mxu0 0.0
  %2912 = vmatpush.msra.mxu0 0.0
  %2913 = vmatpush.msra.mxu0 0.0
  %2914 = vmatpush.msra.mxu0 0.0
  %2915 = vmatpush.msra.mxu0 0.0
  %2916 = vmatpush.msra.mxu0 0.0
  %2917 = vmatpush.msra.mxu0 0.0
  %2918 = vmatpush.msra.mxu0 0.0
  %2919 = vmatpush.msra.mxu0 0.0
  %2920 = vmatpush.msra.mxu0 %v2897
  %2921 = vmatpush.msra.mxu0 %v2895
  %2922 = vmatmul.f32.gmra.mxu0 %v2901
  %v2923 = vpop.f32.mrf.mxu0
  %v2924 = vadd.f32 0.0, %v2923
  %2925 = vmatmul.f32.gmra.mxu0 %v2904
  %v2926 = vpop.f32.mrf.mxu0
  %v2927 = vadd.f32 0.0, %v2926
  %2928 = vdwg.mxu0
  %2929 = vrot.lane.b32.xlu0 %v217, 88
  %v2930 = vpop.permute.xlu0 %2929
  %2931 = vrot.lane.b32.xlu0 %v220, 88
  %v2932 = vpop.permute.xlu0 %2931
  %v2936 = vsel %vm866, %v2605, 0
  %v2939 = vsel %vm866, %v2606, 0
  %2941 = vmatpush.msra.mxu0 0.0
  %2942 = vmatpush.msra.mxu0 0.0
  %2943 = vmatpush.msra.mxu0 0.0
  %2944 = vmatpush.msra.mxu0 0.0
  %2945 = vmatpush.msra.mxu0 0.0
  %2946 = vmatpush.msra.mxu0 0.0
  %2947 = vmatpush.msra.mxu0 0.0
  %2948 = vmatpush.msra.mxu0 0.0
  %2949 = vmatpush.msra.mxu0 0.0
  %2950 = vmatpush.msra.mxu0 0.0
  %2951 = vmatpush.msra.mxu0 0.0
  %2952 = vmatpush.msra.mxu0 0.0
  %2953 = vmatpush.msra.mxu0 0.0
  %2954 = vmatpush.msra.mxu0 0.0
  %2955 = vmatpush.msra.mxu0 %v2932
  %2956 = vmatpush.msra.mxu0 %v2930
  %2957 = vmatmul.f32.gmra.mxu0 %v2936
  %v2958 = vpop.f32.mrf.mxu0
  %v2959 = vadd.f32 0.0, %v2958
  %2960 = vmatmul.f32.gmra.mxu0 %v2939
  %v2961 = vpop.f32.mrf.mxu0
  %v2962 = vadd.f32 0.0, %v2961
  %2963 = vdwg.mxu0
  %2964 = vrot.lane.b32.xlu0 %v223, 88
  %v2965 = vpop.permute.xlu0 %2964
  %2966 = vrot.lane.b32.xlu0 %v226, 88
  %v2967 = vpop.permute.xlu0 %2966
  %v2971 = vsel %vm866, %v2607, 0
  %v2974 = vsel %vm866, %v2608, 0
  %2976 = vmatpush.msra.mxu0 0.0
  %2977 = vmatpush.msra.mxu0 0.0
  %2978 = vmatpush.msra.mxu0 0.0
  %2979 = vmatpush.msra.mxu0 0.0
  %2980 = vmatpush.msra.mxu0 0.0
  %2981 = vmatpush.msra.mxu0 0.0
  %2982 = vmatpush.msra.mxu0 0.0
  %2983 = vmatpush.msra.mxu0 0.0
  %2984 = vmatpush.msra.mxu0 0.0
  %2985 = vmatpush.msra.mxu0 0.0
  %2986 = vmatpush.msra.mxu0 0.0
  %2987 = vmatpush.msra.mxu0 0.0
  %2988 = vmatpush.msra.mxu0 0.0
  %2989 = vmatpush.msra.mxu0 0.0
  %2990 = vmatpush.msra.mxu0 %v2967
  %2991 = vmatpush.msra.mxu0 %v2965
  %2992 = vmatmul.f32.gmra.mxu0 %v2971
  %v2993 = vpop.f32.mrf.mxu0
  %v2994 = vadd.f32 0.0, %v2993
  %2995 = vmatmul.f32.gmra.mxu0 %v2974
  %v2996 = vpop.f32.mrf.mxu0
  %v2997 = vadd.f32 0.0, %v2996
  %2998 = vdwg.mxu0
  %2999 = vrot.lane.b32.xlu0 %v229, 88
  %v3000 = vpop.permute.xlu0 %2999
  %3001 = vrot.lane.b32.xlu0 %v232, 88
  %v3002 = vpop.permute.xlu0 %3001
  %v3006 = vsel %vm866, %v2609, 0
  %v3009 = vsel %vm866, %v2610, 0
  %3011 = vmatpush.msra.mxu0 0.0
  %3012 = vmatpush.msra.mxu0 0.0
  %3013 = vmatpush.msra.mxu0 0.0
  %3014 = vmatpush.msra.mxu0 0.0
  %3015 = vmatpush.msra.mxu0 0.0
  %3016 = vmatpush.msra.mxu0 0.0
  %3017 = vmatpush.msra.mxu0 0.0
  %3018 = vmatpush.msra.mxu0 0.0
  %3019 = vmatpush.msra.mxu0 0.0
  %3020 = vmatpush.msra.mxu0 0.0
  %3021 = vmatpush.msra.mxu0 0.0
  %3022 = vmatpush.msra.mxu0 0.0
  %3023 = vmatpush.msra.mxu0 0.0
  %3024 = vmatpush.msra.mxu0 0.0
  %3025 = vmatpush.msra.mxu0 %v3002
  %3026 = vmatpush.msra.mxu0 %v3000
  %3027 = vmatmul.f32.gmra.mxu0 %v3006
  %v3028 = vpop.f32.mrf.mxu0
  %v3029 = vadd.f32 0.0, %v3028
  %3030 = vmatmul.f32.gmra.mxu0 %v3009
  %v3031 = vpop.f32.mrf.mxu0
  %v3032 = vadd.f32 0.0, %v3031
  %3033 = vdwg.mxu0
  %3034 = vrot.lane.b32.xlu0 %v235, 88
  %v3035 = vpop.permute.xlu0 %3034
  %3036 = vrot.lane.b32.xlu0 %v238, 88
  %v3037 = vpop.permute.xlu0 %3036
  %v3041 = vsel %vm866, %v2611, 0
  %v3044 = vsel %vm866, %v2612, 0
  %3046 = vmatpush.msra.mxu0 0.0
  %3047 = vmatpush.msra.mxu0 0.0
  %3048 = vmatpush.msra.mxu0 0.0
  %3049 = vmatpush.msra.mxu0 0.0
  %3050 = vmatpush.msra.mxu0 0.0
  %3051 = vmatpush.msra.mxu0 0.0
  %3052 = vmatpush.msra.mxu0 0.0
  %3053 = vmatpush.msra.mxu0 0.0
  %3054 = vmatpush.msra.mxu0 0.0
  %3055 = vmatpush.msra.mxu0 0.0
  %3056 = vmatpush.msra.mxu0 0.0
  %3057 = vmatpush.msra.mxu0 0.0
  %3058 = vmatpush.msra.mxu0 0.0
  %3059 = vmatpush.msra.mxu0 0.0
  %3060 = vmatpush.msra.mxu0 %v3037
  %3061 = vmatpush.msra.mxu0 %v3035
  %3062 = vmatmul.f32.gmra.mxu0 %v3041
  %v3063 = vpop.f32.mrf.mxu0
  %v3064 = vadd.f32 0.0, %v3063
  %3065 = vmatmul.f32.gmra.mxu0 %v3044
  %v3066 = vpop.f32.mrf.mxu0
  %v3067 = vadd.f32 0.0, %v3066
  %3068 = vdwg.mxu0
  %3069 = vrot.lane.b32.xlu0 %v128, 56
  %v3070 = vpop.permute.xlu0 %3069
  %3071 = vrot.lane.b32.xlu0 %v131, 56
  %v3072 = vpop.permute.xlu0 %3071
  %v3076 = vsel %vm866, %v2773, 0
  %v3079 = vsel %vm866, %v2774, 0
  %3081 = vmatpush.msra.mxu0 0.0
  %3082 = vmatpush.msra.mxu0 0.0
  %3083 = vmatpush.msra.mxu0 0.0
  %3084 = vmatpush.msra.mxu0 0.0
  %3085 = vmatpush.msra.mxu0 0.0
  %3086 = vmatpush.msra.mxu0 0.0
  %3087 = vmatpush.msra.mxu0 0.0
  %3088 = vmatpush.msra.mxu0 0.0
  %3089 = vmatpush.msra.mxu0 0.0
  %3090 = vmatpush.msra.mxu0 0.0
  %3091 = vmatpush.msra.mxu0 0.0
  %3092 = vmatpush.msra.mxu0 0.0
  %3093 = vmatpush.msra.mxu0 0.0
  %3094 = vmatpush.msra.mxu0 0.0
  %3095 = vmatpush.msra.mxu0 %v3072
  %3096 = vmatpush.msra.mxu0 %v3070
  %3097 = vmatmul.f32.gmra.mxu0 %v3076
  %v3098 = vpop.f32.mrf.mxu0
  %v3099 = vadd.f32 0.0, %v3098
  %3100 = vmatmul.f32.gmra.mxu0 %v3079
  %v3101 = vpop.f32.mrf.mxu0
  %v3102 = vadd.f32 0.0, %v3101
  %3103 = vdwg.mxu0
  %3104 = vrot.lane.b32.xlu0 %v134, 56
  %v3105 = vpop.permute.xlu0 %3104
  %3106 = vrot.lane.b32.xlu0 %v137, 56
  %v3107 = vpop.permute.xlu0 %3106
  %v3111 = vsel %vm866, %v2775, 0
  %v3114 = vsel %vm866, %v2776, 0
  %3116 = vmatpush.msra.mxu0 0.0
  %3117 = vmatpush.msra.mxu0 0.0
  %3118 = vmatpush.msra.mxu0 0.0
  %3119 = vmatpush.msra.mxu0 0.0
  %3120 = vmatpush.msra.mxu0 0.0
  %3121 = vmatpush.msra.mxu0 0.0
  %3122 = vmatpush.msra.mxu0 0.0
  %3123 = vmatpush.msra.mxu0 0.0
  %3124 = vmatpush.msra.mxu0 0.0
  %3125 = vmatpush.msra.mxu0 0.0
  %3126 = vmatpush.msra.mxu0 0.0
  %3127 = vmatpush.msra.mxu0 0.0
  %3128 = vmatpush.msra.mxu0 0.0
  %3129 = vmatpush.msra.mxu0 0.0
  %3130 = vmatpush.msra.mxu0 %v3107
  %3131 = vmatpush.msra.mxu0 %v3105
  %3132 = vmatmul.f32.gmra.mxu0 %v3111
  %v3133 = vpop.f32.mrf.mxu0
  %v3134 = vadd.f32 0.0, %v3133
  %3135 = vmatmul.f32.gmra.mxu0 %v3114
  %v3136 = vpop.f32.mrf.mxu0
  %v3137 = vadd.f32 0.0, %v3136
  %3138 = vdwg.mxu0
  %3139 = vrot.lane.b32.xlu0 %v140, 56
  %v3140 = vpop.permute.xlu0 %3139
  %3141 = vrot.lane.b32.xlu0 %v143, 56
  %v3142 = vpop.permute.xlu0 %3141
  %v3146 = vsel %vm866, %v2777, 0
  %v3149 = vsel %vm866, %v2778, 0
  %3151 = vmatpush.msra.mxu0 0.0
  %3152 = vmatpush.msra.mxu0 0.0
  %3153 = vmatpush.msra.mxu0 0.0
  %3154 = vmatpush.msra.mxu0 0.0
  %3155 = vmatpush.msra.mxu0 0.0
  %3156 = vmatpush.msra.mxu0 0.0
  %3157 = vmatpush.msra.mxu0 0.0
  %3158 = vmatpush.msra.mxu0 0.0
  %3159 = vmatpush.msra.mxu0 0.0
  %3160 = vmatpush.msra.mxu0 0.0
  %3161 = vmatpush.msra.mxu0 0.0
  %3162 = vmatpush.msra.mxu0 0.0
  %3163 = vmatpush.msra.mxu0 0.0
  %3164 = vmatpush.msra.mxu0 0.0
  %3165 = vmatpush.msra.mxu0 %v3142
  %3166 = vmatpush.msra.mxu0 %v3140
  %3167 = vmatmul.f32.gmra.mxu0 %v3146
  %v3168 = vpop.f32.mrf.mxu0
  %v3169 = vadd.f32 0.0, %v3168
  %3170 = vmatmul.f32.gmra.mxu0 %v3149
  %v3171 = vpop.f32.mrf.mxu0
  %v3172 = vadd.f32 0.0, %v3171
  %3173 = vdwg.mxu0
  %3174 = vrot.lane.b32.xlu0 %v146, 56
  %v3175 = vpop.permute.xlu0 %3174
  %3176 = vrot.lane.b32.xlu0 %v149, 56
  %v3177 = vpop.permute.xlu0 %3176
  %v3181 = vsel %vm866, %v2779, 0
  %v3184 = vsel %vm866, %v2780, 0
  %3186 = vmatpush.msra.mxu0 0.0
  %3187 = vmatpush.msra.mxu0 0.0
  %3188 = vmatpush.msra.mxu0 0.0
  %3189 = vmatpush.msra.mxu0 0.0
  %3190 = vmatpush.msra.mxu0 0.0
  %3191 = vmatpush.msra.mxu0 0.0
  %3192 = vmatpush.msra.mxu0 0.0
  %3193 = vmatpush.msra.mxu0 0.0
  %3194 = vmatpush.msra.mxu0 0.0
  %3195 = vmatpush.msra.mxu0 0.0
  %3196 = vmatpush.msra.mxu0 0.0
  %3197 = vmatpush.msra.mxu0 0.0
  %3198 = vmatpush.msra.mxu0 0.0
  %3199 = vmatpush.msra.mxu0 0.0
  %3200 = vmatpush.msra.mxu0 %v3177
  %3201 = vmatpush.msra.mxu0 %v3175
  %3202 = vmatmul.f32.gmra.mxu0 %v3181
  %v3203 = vpop.f32.mrf.mxu0
  %v3204 = vadd.f32 0.0, %v3203
  %3205 = vmatmul.f32.gmra.mxu0 %v3184
  %v3206 = vpop.f32.mrf.mxu0
  %v3207 = vadd.f32 0.0, %v3206
  %3208 = vdwg.mxu0
  %3209 = vrot.lane.b32.xlu0 %v152, 56
  %v3210 = vpop.permute.xlu0 %3209
  %3211 = vrot.lane.b32.xlu0 %v155, 56
  %v3212 = vpop.permute.xlu0 %3211
  %v3216 = vsel %vm866, %v2781, 0
  %v3219 = vsel %vm866, %v2782, 0
  %3221 = vmatpush.msra.mxu0 0.0
  %3222 = vmatpush.msra.mxu0 0.0
  %3223 = vmatpush.msra.mxu0 0.0
  %3224 = vmatpush.msra.mxu0 0.0
  %3225 = vmatpush.msra.mxu0 0.0
  %3226 = vmatpush.msra.mxu0 0.0
  %3227 = vmatpush.msra.mxu0 0.0
  %3228 = vmatpush.msra.mxu0 0.0
  %3229 = vmatpush.msra.mxu0 0.0
  %3230 = vmatpush.msra.mxu0 0.0
  %3231 = vmatpush.msra.mxu0 0.0
  %3232 = vmatpush.msra.mxu0 0.0
  %3233 = vmatpush.msra.mxu0 0.0
  %3234 = vmatpush.msra.mxu0 0.0
  %3235 = vmatpush.msra.mxu0 %v3212
  %3236 = vmatpush.msra.mxu0 %v3210
  %3237 = vmatmul.f32.gmra.mxu0 %v3216
  %v3238 = vpop.f32.mrf.mxu0
  %v3239 = vadd.f32 0.0, %v3238
  %3240 = vmatmul.f32.gmra.mxu0 %v3219
  %v3241 = vpop.f32.mrf.mxu0
  %v3242 = vadd.f32 0.0, %v3241
  %3243 = vdwg.mxu0
  %3244 = vrot.lane.b32.xlu0 %v158, 56
  %v3245 = vpop.permute.xlu0 %3244
  %3246 = vrot.lane.b32.xlu0 %v161, 56
  %v3247 = vpop.permute.xlu0 %3246
  %v3251 = vsel %vm866, %v2783, 0
  %v3254 = vsel %vm866, %v2784, 0
  %3256 = vmatpush.msra.mxu0 0.0
  %3257 = vmatpush.msra.mxu0 0.0
  %3258 = vmatpush.msra.mxu0 0.0
  %3259 = vmatpush.msra.mxu0 0.0
  %3260 = vmatpush.msra.mxu0 0.0
  %3261 = vmatpush.msra.mxu0 0.0
  %3262 = vmatpush.msra.mxu0 0.0
  %3263 = vmatpush.msra.mxu0 0.0
  %3264 = vmatpush.msra.mxu0 0.0
  %3265 = vmatpush.msra.mxu0 0.0
  %3266 = vmatpush.msra.mxu0 0.0
  %3267 = vmatpush.msra.mxu0 0.0
  %3268 = vmatpush.msra.mxu0 0.0
  %3269 = vmatpush.msra.mxu0 0.0
  %3270 = vmatpush.msra.mxu0 %v3247
  %3271 = vmatpush.msra.mxu0 %v3245
  %3272 = vmatmul.f32.gmra.mxu0 %v3251
  %v3273 = vpop.f32.mrf.mxu0
  %v3274 = vadd.f32 0.0, %v3273
  %3275 = vmatmul.f32.gmra.mxu0 %v3254
  %v3276 = vpop.f32.mrf.mxu0
  %v3277 = vadd.f32 0.0, %v3276
  %3278 = vdwg.mxu0
  %3279 = vrot.lane.b32.xlu0 %v164, 56
  %v3280 = vpop.permute.xlu0 %3279
  %3281 = vrot.lane.b32.xlu0 %v167, 56
  %v3282 = vpop.permute.xlu0 %3281
  %v3286 = vsel %vm866, %v2785, 0
  %v3289 = vsel %vm866, %v2786, 0
  %3291 = vmatpush.msra.mxu0 0.0
  %3292 = vmatpush.msra.mxu0 0.0
  %3293 = vmatpush.msra.mxu0 0.0
  %3294 = vmatpush.msra.mxu0 0.0
  %3295 = vmatpush.msra.mxu0 0.0
  %3296 = vmatpush.msra.mxu0 0.0
  %3297 = vmatpush.msra.mxu0 0.0
  %3298 = vmatpush.msra.mxu0 0.0
  %3299 = vmatpush.msra.mxu0 0.0
  %3300 = vmatpush.msra.mxu0 0.0
  %3301 = vmatpush.msra.mxu0 0.0
  %3302 = vmatpush.msra.mxu0 0.0
  %3303 = vmatpush.msra.mxu0 0.0
  %3304 = vmatpush.msra.mxu0 0.0
  %3305 = vmatpush.msra.mxu0 %v3282
  %3306 = vmatpush.msra.mxu0 %v3280
  %3307 = vmatmul.f32.gmra.mxu0 %v3286
  %v3308 = vpop.f32.mrf.mxu0
  %v3309 = vadd.f32 0.0, %v3308
  %3310 = vmatmul.f32.gmra.mxu0 %v3289
  %v3311 = vpop.f32.mrf.mxu0
  %v3312 = vadd.f32 0.0, %v3311
  %3313 = vdwg.mxu0
  %3314 = vrot.lane.b32.xlu0 %v170, 56
  %v3315 = vpop.permute.xlu0 %3314
  %3316 = vrot.lane.b32.xlu0 %v173, 56
  %v3317 = vpop.permute.xlu0 %3316
  %v3321 = vsel %vm866, %v2787, 0
  %v3324 = vsel %vm866, %v2788, 0
  %3326 = vmatpush.msra.mxu0 0.0
  %3327 = vmatpush.msra.mxu0 0.0
  %3328 = vmatpush.msra.mxu0 0.0
  %3329 = vmatpush.msra.mxu0 0.0
  %3330 = vmatpush.msra.mxu0 0.0
  %3331 = vmatpush.msra.mxu0 0.0
  %3332 = vmatpush.msra.mxu0 0.0
  %3333 = vmatpush.msra.mxu0 0.0
  %3334 = vmatpush.msra.mxu0 0.0
  %3335 = vmatpush.msra.mxu0 0.0
  %3336 = vmatpush.msra.mxu0 0.0
  %3337 = vmatpush.msra.mxu0 0.0
  %3338 = vmatpush.msra.mxu0 0.0
  %3339 = vmatpush.msra.mxu0 0.0
  %3340 = vmatpush.msra.mxu0 %v3317
  %3341 = vmatpush.msra.mxu0 %v3315
  %3342 = vmatmul.f32.gmra.mxu0 %v3321
  %v3343 = vpop.f32.mrf.mxu0
  %v3344 = vadd.f32 0.0, %v3343
  %3345 = vmatmul.f32.gmra.mxu0 %v3324
  %v3346 = vpop.f32.mrf.mxu0
  %v3347 = vadd.f32 0.0, %v3346
  %3348 = vdwg.mxu0
  %s3349 = scalar_lea.vmem %s3, 256
  %v3350 = vld [vmem:[%s3349] sm:$0xff]
  %v3351 = vld [vmem:[%s3349 + $0x8] sm:$0xff]
  %v3352 = vld [vmem:[%s3349 + $0x10] sm:$0xff]
  %v3353 = vld [vmem:[%s3349 + $0x18] sm:$0xff]
  %v3354 = vld [vmem:[%s3349 + $0x20] sm:$0xff]
  %v3355 = vld [vmem:[%s3349 + $0x28] sm:$0xff]
  %v3356 = vld [vmem:[%s3349 + $0x30] sm:$0xff]
  %v3357 = vld [vmem:[%s3349 + $0x38] sm:$0xff]
  %v3358 = vld [vmem:[%s3349 + $0x40] sm:$0xff]
  %v3359 = vld [vmem:[%s3349 + $0x48] sm:$0xff]
  %v3360 = vld [vmem:[%s3349 + $0x50] sm:$0xff]
  %v3361 = vld [vmem:[%s3349 + $0x58] sm:$0xff]
  %v3362 = vld [vmem:[%s3349 + $0x60] sm:$0xff]
  %v3363 = vld [vmem:[%s3349 + $0x68] sm:$0xff]
  %v3364 = vld [vmem:[%s3349 + $0x70] sm:$0xff]
  %v3365 = vld [vmem:[%s3349 + $0x78] sm:$0xff]
  %3366 = vrot.lane.b32.xlu0 %v128, 112
  %v3367 = vpop.permute.xlu0 %3366
  %3368 = vrot.lane.b32.xlu0 %v131, 112
  %v3369 = vpop.permute.xlu0 %3368
  %3370 = vrot.lane.b32.xlu0 %v193, 112
  %v3371 = vpop.permute.xlu0 %3370
  %3372 = vrot.lane.b32.xlu0 %v196, 112
  %v3373 = vpop.permute.xlu0 %3372
  %v3374 = vsel %vm256, %v3367, 0
  %v3376 = vsel %vm256, %v3369, 0
  %v3378 = vsel %vm256, %v3371, 0
  %v3380 = vsel %vm256, %v3373, 0
  %3382 = vmatpush.xpose.msra.mxu0 0.0
  %3383 = vmatpush.xpose.msra.mxu0 0.0
  %3384 = vmatpush.xpose.msra.mxu0 0.0
  %3385 = vmatpush.xpose.msra.mxu0 0.0
  %3386 = vmatpush.xpose.msra.mxu0 0.0
  %3387 = vmatpush.xpose.msra.mxu0 0.0
  %3388 = vmatpush.xpose.msra.mxu0 0.0
  %3389 = vmatpush.xpose.msra.mxu0 0.0
  %3390 = vmatpush.xpose.msra.mxu0 0.0
  %3391 = vmatpush.xpose.msra.mxu0 0.0
  %3392 = vmatpush.xpose.msra.mxu0 0.0
  %3393 = vmatpush.xpose.msra.mxu0 0.0
  %3394 = vmatpush.xpose.msra.mxu0 0.0
  %3395 = vmatpush.xpose.msra.mxu0 0.0
  %3396 = vmatpush.xpose.msra.mxu0 %v3380
  %3397 = vmatpush.xpose.msra.mxu0 %v3378
  %3398 = vmatmul.f32.gmra.mxu0 %v3374
  %v3399 = vpop.f32.mrf.mxu0
  %v3400 = vadd.f32 %v3350, %v3399
  %3401 = vmatmul.f32.gmra.mxu0 %v3376
  %v3402 = vpop.f32.mrf.mxu0
  %v3403 = vadd.f32 %v3351, %v3402
  %3404 = vdwg.mxu0
  %3405 = vrot.lane.b32.xlu0 %v134, 112
  %v3406 = vpop.permute.xlu0 %3405
  %3407 = vrot.lane.b32.xlu0 %v137, 112
  %v3408 = vpop.permute.xlu0 %3407
  %3409 = vrot.lane.b32.xlu0 %v199, 112
  %v3410 = vpop.permute.xlu0 %3409
  %3411 = vrot.lane.b32.xlu0 %v202, 112
  %v3412 = vpop.permute.xlu0 %3411
  %v3413 = vsel %vm256, %v3406, 0
  %v3415 = vsel %vm256, %v3408, 0
  %v3417 = vsel %vm256, %v3410, 0
  %v3419 = vsel %vm256, %v3412, 0
  %3421 = vmatpush.xpose.msra.mxu0 0.0
  %3422 = vmatpush.xpose.msra.mxu0 0.0
  %3423 = vmatpush.xpose.msra.mxu0 0.0
  %3424 = vmatpush.xpose.msra.mxu0 0.0
  %3425 = vmatpush.xpose.msra.mxu0 0.0
  %3426 = vmatpush.xpose.msra.mxu0 0.0
  %3427 = vmatpush.xpose.msra.mxu0 0.0
  %3428 = vmatpush.xpose.msra.mxu0 0.0
  %3429 = vmatpush.xpose.msra.mxu0 0.0
  %3430 = vmatpush.xpose.msra.mxu0 0.0
  %3431 = vmatpush.xpose.msra.mxu0 0.0
  %3432 = vmatpush.xpose.msra.mxu0 0.0
  %3433 = vmatpush.xpose.msra.mxu0 0.0
  %3434 = vmatpush.xpose.msra.mxu0 0.0
  %3435 = vmatpush.xpose.msra.mxu0 %v3419
  %3436 = vmatpush.xpose.msra.mxu0 %v3417
  %3437 = vmatmul.f32.gmra.mxu0 %v3413
  %v3438 = vpop.f32.mrf.mxu0
  %v3439 = vadd.f32 %v3352, %v3438
  %3440 = vmatmul.f32.gmra.mxu0 %v3415
  %v3441 = vpop.f32.mrf.mxu0
  %v3442 = vadd.f32 %v3353, %v3441
  %3443 = vdwg.mxu0
  %3444 = vrot.lane.b32.xlu0 %v140, 112
  %v3445 = vpop.permute.xlu0 %3444
  %3446 = vrot.lane.b32.xlu0 %v143, 112
  %v3447 = vpop.permute.xlu0 %3446
  %3448 = vrot.lane.b32.xlu0 %v205, 112
  %v3449 = vpop.permute.xlu0 %3448
  %3450 = vrot.lane.b32.xlu0 %v208, 112
  %v3451 = vpop.permute.xlu0 %3450
  %v3452 = vsel %vm256, %v3445, 0
  %v3454 = vsel %vm256, %v3447, 0
  %v3456 = vsel %vm256, %v3449, 0
  %v3458 = vsel %vm256, %v3451, 0
  %3460 = vmatpush.xpose.msra.mxu0 0.0
  %3461 = vmatpush.xpose.msra.mxu0 0.0
  %3462 = vmatpush.xpose.msra.mxu0 0.0
  %3463 = vmatpush.xpose.msra.mxu0 0.0
  %3464 = vmatpush.xpose.msra.mxu0 0.0
  %3465 = vmatpush.xpose.msra.mxu0 0.0
  %3466 = vmatpush.xpose.msra.mxu0 0.0
  %3467 = vmatpush.xpose.msra.mxu0 0.0
  %3468 = vmatpush.xpose.msra.mxu0 0.0
  %3469 = vmatpush.xpose.msra.mxu0 0.0
  %3470 = vmatpush.xpose.msra.mxu0 0.0
  %3471 = vmatpush.xpose.msra.mxu0 0.0
  %3472 = vmatpush.xpose.msra.mxu0 0.0
  %3473 = vmatpush.xpose.msra.mxu0 0.0
  %3474 = vmatpush.xpose.msra.mxu0 %v3458
  %3475 = vmatpush.xpose.msra.mxu0 %v3456
  %3476 = vmatmul.f32.gmra.mxu0 %v3452
  %v3477 = vpop.f32.mrf.mxu0
  %v3478 = vadd.f32 %v3354, %v3477
  %3479 = vmatmul.f32.gmra.mxu0 %v3454
  %v3480 = vpop.f32.mrf.mxu0
  %v3481 = vadd.f32 %v3355, %v3480
  %3482 = vdwg.mxu0
  %3483 = vrot.lane.b32.xlu0 %v146, 112
  %v3484 = vpop.permute.xlu0 %3483
  %3485 = vrot.lane.b32.xlu0 %v149, 112
  %v3486 = vpop.permute.xlu0 %3485
  %3487 = vrot.lane.b32.xlu0 %v211, 112
  %v3488 = vpop.permute.xlu0 %3487
  %3489 = vrot.lane.b32.xlu0 %v214, 112
  %v3490 = vpop.permute.xlu0 %3489
  %v3491 = vsel %vm256, %v3484, 0
  %v3493 = vsel %vm256, %v3486, 0
  %v3495 = vsel %vm256, %v3488, 0
  %v3497 = vsel %vm256, %v3490, 0
  %3499 = vmatpush.xpose.msra.mxu0 0.0
  %3500 = vmatpush.xpose.msra.mxu0 0.0
  %3501 = vmatpush.xpose.msra.mxu0 0.0
  %3502 = vmatpush.xpose.msra.mxu0 0.0
  %3503 = vmatpush.xpose.msra.mxu0 0.0
  %3504 = vmatpush.xpose.msra.mxu0 0.0
  %3505 = vmatpush.xpose.msra.mxu0 0.0
  %3506 = vmatpush.xpose.msra.mxu0 0.0
  %3507 = vmatpush.xpose.msra.mxu0 0.0
  %3508 = vmatpush.xpose.msra.mxu0 0.0
  %3509 = vmatpush.xpose.msra.mxu0 0.0
  %3510 = vmatpush.xpose.msra.mxu0 0.0
  %3511 = vmatpush.xpose.msra.mxu0 0.0
  %3512 = vmatpush.xpose.msra.mxu0 0.0
  %3513 = vmatpush.xpose.msra.mxu0 %v3497
  %3514 = vmatpush.xpose.msra.mxu0 %v3495
  %3515 = vmatmul.f32.gmra.mxu0 %v3491
  %v3516 = vpop.f32.mrf.mxu0
  %v3517 = vadd.f32 %v3356, %v3516
  %3518 = vmatmul.f32.gmra.mxu0 %v3493
  %v3519 = vpop.f32.mrf.mxu0
  %v3520 = vadd.f32 %v3357, %v3519
  %3521 = vdwg.mxu0
  %3522 = vrot.lane.b32.xlu0 %v152, 112
  %v3523 = vpop.permute.xlu0 %3522
  %3524 = vrot.lane.b32.xlu0 %v155, 112
  %v3525 = vpop.permute.xlu0 %3524
  %3526 = vrot.lane.b32.xlu0 %v217, 112
  %v3527 = vpop.permute.xlu0 %3526
  %3528 = vrot.lane.b32.xlu0 %v220, 112
  %v3529 = vpop.permute.xlu0 %3528
  %v3530 = vsel %vm256, %v3523, 0
  %v3532 = vsel %vm256, %v3525, 0
  %v3534 = vsel %vm256, %v3527, 0
  %v3536 = vsel %vm256, %v3529, 0
  %3538 = vmatpush.xpose.msra.mxu0 0.0
  %3539 = vmatpush.xpose.msra.mxu0 0.0
  %3540 = vmatpush.xpose.msra.mxu0 0.0
  %3541 = vmatpush.xpose.msra.mxu0 0.0
  %3542 = vmatpush.xpose.msra.mxu0 0.0
  %3543 = vmatpush.xpose.msra.mxu0 0.0
  %3544 = vmatpush.xpose.msra.mxu0 0.0
  %3545 = vmatpush.xpose.msra.mxu0 0.0
  %3546 = vmatpush.xpose.msra.mxu0 0.0
  %3547 = vmatpush.xpose.msra.mxu0 0.0
  %3548 = vmatpush.xpose.msra.mxu0 0.0
  %3549 = vmatpush.xpose.msra.mxu0 0.0
  %3550 = vmatpush.xpose.msra.mxu0 0.0
  %3551 = vmatpush.xpose.msra.mxu0 0.0
  %3552 = vmatpush.xpose.msra.mxu0 %v3536
  %3553 = vmatpush.xpose.msra.mxu0 %v3534
  %3554 = vmatmul.f32.gmra.mxu0 %v3530
  %v3555 = vpop.f32.mrf.mxu0
  %v3556 = vadd.f32 %v3358, %v3555
  %3557 = vmatmul.f32.gmra.mxu0 %v3532
  %v3558 = vpop.f32.mrf.mxu0
  %v3559 = vadd.f32 %v3359, %v3558
  %3560 = vdwg.mxu0
  %3561 = vrot.lane.b32.xlu0 %v158, 112
  %v3562 = vpop.permute.xlu0 %3561
  %3563 = vrot.lane.b32.xlu0 %v161, 112
  %v3564 = vpop.permute.xlu0 %3563
  %3565 = vrot.lane.b32.xlu0 %v223, 112
  %v3566 = vpop.permute.xlu0 %3565
  %3567 = vrot.lane.b32.xlu0 %v226, 112
  %v3568 = vpop.permute.xlu0 %3567
  %v3569 = vsel %vm256, %v3562, 0
  %v3571 = vsel %vm256, %v3564, 0
  %v3573 = vsel %vm256, %v3566, 0
  %v3575 = vsel %vm256, %v3568, 0
  %3577 = vmatpush.xpose.msra.mxu0 0.0
  %3578 = vmatpush.xpose.msra.mxu0 0.0
  %3579 = vmatpush.xpose.msra.mxu0 0.0
  %3580 = vmatpush.xpose.msra.mxu0 0.0
  %3581 = vmatpush.xpose.msra.mxu0 0.0
  %3582 = vmatpush.xpose.msra.mxu0 0.0
  %3583 = vmatpush.xpose.msra.mxu0 0.0
  %3584 = vmatpush.xpose.msra.mxu0 0.0
  %3585 = vmatpush.xpose.msra.mxu0 0.0
  %3586 = vmatpush.xpose.msra.mxu0 0.0
  %3587 = vmatpush.xpose.msra.mxu0 0.0
  %3588 = vmatpush.xpose.msra.mxu0 0.0
  %3589 = vmatpush.xpose.msra.mxu0 0.0
  %3590 = vmatpush.xpose.msra.mxu0 0.0
  %3591 = vmatpush.xpose.msra.mxu0 %v3575
  %3592 = vmatpush.xpose.msra.mxu0 %v3573
  %3593 = vmatmul.f32.gmra.mxu0 %v3569
  %v3594 = vpop.f32.mrf.mxu0
  %v3595 = vadd.f32 %v3360, %v3594
  %3596 = vmatmul.f32.gmra.mxu0 %v3571
  %v3597 = vpop.f32.mrf.mxu0
  %v3598 = vadd.f32 %v3361, %v3597
  %3599 = vdwg.mxu0
  %3600 = vrot.lane.b32.xlu0 %v164, 112
  %v3601 = vpop.permute.xlu0 %3600
  %3602 = vrot.lane.b32.xlu0 %v167, 112
  %v3603 = vpop.permute.xlu0 %3602
  %3604 = vrot.lane.b32.xlu0 %v229, 112
  %v3605 = vpop.permute.xlu0 %3604
  %3606 = vrot.lane.b32.xlu0 %v232, 112
  %v3607 = vpop.permute.xlu0 %3606
  %v3608 = vsel %vm256, %v3601, 0
  %v3610 = vsel %vm256, %v3603, 0
  %v3612 = vsel %vm256, %v3605, 0
  %v3614 = vsel %vm256, %v3607, 0
  %3616 = vmatpush.xpose.msra.mxu0 0.0
  %3617 = vmatpush.xpose.msra.mxu0 0.0
  %3618 = vmatpush.xpose.msra.mxu0 0.0
  %3619 = vmatpush.xpose.msra.mxu0 0.0
  %3620 = vmatpush.xpose.msra.mxu0 0.0
  %3621 = vmatpush.xpose.msra.mxu0 0.0
  %3622 = vmatpush.xpose.msra.mxu0 0.0
  %3623 = vmatpush.xpose.msra.mxu0 0.0
  %3624 = vmatpush.xpose.msra.mxu0 0.0
  %3625 = vmatpush.xpose.msra.mxu0 0.0
  %3626 = vmatpush.xpose.msra.mxu0 0.0
  %3627 = vmatpush.xpose.msra.mxu0 0.0
  %3628 = vmatpush.xpose.msra.mxu0 0.0
  %3629 = vmatpush.xpose.msra.mxu0 0.0
  %3630 = vmatpush.xpose.msra.mxu0 %v3614
  %3631 = vmatpush.xpose.msra.mxu0 %v3612
  %3632 = vmatmul.f32.gmra.mxu0 %v3608
  %v3633 = vpop.f32.mrf.mxu0
  %v3634 = vadd.f32 %v3362, %v3633
  %3635 = vmatmul.f32.gmra.mxu0 %v3610
  %v3636 = vpop.f32.mrf.mxu0
  %v3637 = vadd.f32 %v3363, %v3636
  %3638 = vdwg.mxu0
  %3639 = vrot.lane.b32.xlu0 %v170, 112
  %v3640 = vpop.permute.xlu0 %3639
  %3641 = vrot.lane.b32.xlu0 %v173, 112
  %v3642 = vpop.permute.xlu0 %3641
  %3643 = vrot.lane.b32.xlu0 %v235, 112
  %v3644 = vpop.permute.xlu0 %3643
  %3645 = vrot.lane.b32.xlu0 %v238, 112
  %v3646 = vpop.permute.xlu0 %3645
  %v3647 = vsel %vm256, %v3640, 0
  %v3649 = vsel %vm256, %v3642, 0
  %v3651 = vsel %vm256, %v3644, 0
  %v3653 = vsel %vm256, %v3646, 0
  %3655 = vmatpush.xpose.msra.mxu0 0.0
  %3656 = vmatpush.xpose.msra.mxu0 0.0
  %3657 = vmatpush.xpose.msra.mxu0 0.0
  %3658 = vmatpush.xpose.msra.mxu0 0.0
  %3659 = vmatpush.xpose.msra.mxu0 0.0
  %3660 = vmatpush.xpose.msra.mxu0 0.0
  %3661 = vmatpush.xpose.msra.mxu0 0.0
  %3662 = vmatpush.xpose.msra.mxu0 0.0
  %3663 = vmatpush.xpose.msra.mxu0 0.0
  %3664 = vmatpush.xpose.msra.mxu0 0.0
  %3665 = vmatpush.xpose.msra.mxu0 0.0
  %3666 = vmatpush.xpose.msra.mxu0 0.0
  %3667 = vmatpush.xpose.msra.mxu0 0.0
  %3668 = vmatpush.xpose.msra.mxu0 0.0
  %3669 = vmatpush.xpose.msra.mxu0 %v3653
  %3670 = vmatpush.xpose.msra.mxu0 %v3651
  %3671 = vmatmul.f32.gmra.mxu0 %v3647
  %v3672 = vpop.f32.mrf.mxu0
  %v3673 = vadd.f32 %v3364, %v3672
  %3674 = vmatmul.f32.gmra.mxu0 %v3649
  %v3675 = vpop.f32.mrf.mxu0
  %v3676 = vadd.f32 %v3365, %v3675
  %3677 = vdwg.mxu0
  %s3678 = scalar_lea.vmem %s3, 768
  %v3679 = vld [vmem:[%s3678] sm:$0xff]
  %v3680 = vld [vmem:[%s3678 + $0x8] sm:$0xff]
  %v3681 = vld [vmem:[%s3678 + $0x10] sm:$0xff]
  %v3682 = vld [vmem:[%s3678 + $0x18] sm:$0xff]
  %v3683 = vld [vmem:[%s3678 + $0x20] sm:$0xff]
  %v3684 = vld [vmem:[%s3678 + $0x28] sm:$0xff]
  %v3685 = vld [vmem:[%s3678 + $0x30] sm:$0xff]
  %v3686 = vld [vmem:[%s3678 + $0x38] sm:$0xff]
  %v3687 = vld [vmem:[%s3678 + $0x40] sm:$0xff]
  %v3688 = vld [vmem:[%s3678 + $0x48] sm:$0xff]
  %v3689 = vld [vmem:[%s3678 + $0x50] sm:$0xff]
  %v3690 = vld [vmem:[%s3678 + $0x58] sm:$0xff]
  %v3691 = vld [vmem:[%s3678 + $0x60] sm:$0xff]
  %v3692 = vld [vmem:[%s3678 + $0x68] sm:$0xff]
  %v3693 = vld [vmem:[%s3678 + $0x70] sm:$0xff]
  %v3694 = vld [vmem:[%s3678 + $0x78] sm:$0xff]
  %3695 = vrot.lane.b32.xlu0 %v128, 16
  %v3696 = vpop.permute.xlu0 %3695
  %3697 = vrot.lane.b32.xlu0 %v131, 16
  %v3698 = vpop.permute.xlu0 %3697
  %3699 = vrot.lane.b32.xlu0 %v128, 80
  %v3700 = vpop.permute.xlu0 %3699
  %3701 = vrot.lane.b32.xlu0 %v131, 80
  %v3702 = vpop.permute.xlu0 %3701
  %v3703 = vsel %vm256, %v3696, 0
  %v3705 = vsel %vm256, %v3698, 0
  %v3707 = vsel %vm256, %v3700, 0
  %v3709 = vsel %vm256, %v3702, 0
  %3711 = vmatpush.xpose.msra.mxu0 0.0
  %3712 = vmatpush.xpose.msra.mxu0 0.0
  %3713 = vmatpush.xpose.msra.mxu0 0.0
  %3714 = vmatpush.xpose.msra.mxu0 0.0
  %3715 = vmatpush.xpose.msra.mxu0 0.0
  %3716 = vmatpush.xpose.msra.mxu0 0.0
  %3717 = vmatpush.xpose.msra.mxu0 0.0
  %3718 = vmatpush.xpose.msra.mxu0 0.0
  %3719 = vmatpush.xpose.msra.mxu0 0.0
  %3720 = vmatpush.xpose.msra.mxu0 0.0
  %3721 = vmatpush.xpose.msra.mxu0 0.0
  %3722 = vmatpush.xpose.msra.mxu0 0.0
  %3723 = vmatpush.xpose.msra.mxu0 0.0
  %3724 = vmatpush.xpose.msra.mxu0 0.0
  %3725 = vmatpush.xpose.msra.mxu0 %v3709
  %3726 = vmatpush.xpose.msra.mxu0 %v3707
  %3727 = vmatmul.f32.gmra.mxu0 %v3703
  %v3728 = vpop.f32.mrf.mxu0
  %v3729 = vadd.f32 %v3679, %v3728
  %3730 = vmatmul.f32.gmra.mxu0 %v3705
  %v3731 = vpop.f32.mrf.mxu0
  %v3732 = vadd.f32 %v3680, %v3731
  %3733 = vdwg.mxu0
  %3734 = vrot.lane.b32.xlu0 %v134, 16
  %v3735 = vpop.permute.xlu0 %3734
  %3736 = vrot.lane.b32.xlu0 %v137, 16
  %v3737 = vpop.permute.xlu0 %3736
  %3738 = vrot.lane.b32.xlu0 %v134, 80
  %v3739 = vpop.permute.xlu0 %3738
  %3740 = vrot.lane.b32.xlu0 %v137, 80
  %v3741 = vpop.permute.xlu0 %3740
  %v3742 = vsel %vm256, %v3735, 0
  %v3744 = vsel %vm256, %v3737, 0
  %v3746 = vsel %vm256, %v3739, 0
  %v3748 = vsel %vm256, %v3741, 0
  %3750 = vmatpush.xpose.msra.mxu0 0.0
  %3751 = vmatpush.xpose.msra.mxu0 0.0
  %3752 = vmatpush.xpose.msra.mxu0 0.0
  %3753 = vmatpush.xpose.msra.mxu0 0.0
  %3754 = vmatpush.xpose.msra.mxu0 0.0
  %3755 = vmatpush.xpose.msra.mxu0 0.0
  %3756 = vmatpush.xpose.msra.mxu0 0.0
  %3757 = vmatpush.xpose.msra.mxu0 0.0
  %3758 = vmatpush.xpose.msra.mxu0 0.0
  %3759 = vmatpush.xpose.msra.mxu0 0.0
  %3760 = vmatpush.xpose.msra.mxu0 0.0
  %3761 = vmatpush.xpose.msra.mxu0 0.0
  %3762 = vmatpush.xpose.msra.mxu0 0.0
  %3763 = vmatpush.xpose.msra.mxu0 0.0
  %3764 = vmatpush.xpose.msra.mxu0 %v3748
  %3765 = vmatpush.xpose.msra.mxu0 %v3746
  %3766 = vmatmul.f32.gmra.mxu0 %v3742
  %v3767 = vpop.f32.mrf.mxu0
  %v3768 = vadd.f32 %v3681, %v3767
  %3769 = vmatmul.f32.gmra.mxu0 %v3744
  %v3770 = vpop.f32.mrf.mxu0
  %v3771 = vadd.f32 %v3682, %v3770
  %3772 = vdwg.mxu0
  %3773 = vrot.lane.b32.xlu0 %v140, 16
  %v3774 = vpop.permute.xlu0 %3773
  %3775 = vrot.lane.b32.xlu0 %v143, 16
  %v3776 = vpop.permute.xlu0 %3775
  %3777 = vrot.lane.b32.xlu0 %v140, 80
  %v3778 = vpop.permute.xlu0 %3777
  %3779 = vrot.lane.b32.xlu0 %v143, 80
  %v3780 = vpop.permute.xlu0 %3779
  %v3781 = vsel %vm256, %v3774, 0
  %v3783 = vsel %vm256, %v3776, 0
  %v3785 = vsel %vm256, %v3778, 0
  %v3787 = vsel %vm256, %v3780, 0
  %3789 = vmatpush.xpose.msra.mxu0 0.0
  %3790 = vmatpush.xpose.msra.mxu0 0.0
  %3791 = vmatpush.xpose.msra.mxu0 0.0
  %3792 = vmatpush.xpose.msra.mxu0 0.0
  %3793 = vmatpush.xpose.msra.mxu0 0.0
  %3794 = vmatpush.xpose.msra.mxu0 0.0
  %3795 = vmatpush.xpose.msra.mxu0 0.0
  %3796 = vmatpush.xpose.msra.mxu0 0.0
  %3797 = vmatpush.xpose.msra.mxu0 0.0
  %3798 = vmatpush.xpose.msra.mxu0 0.0
  %3799 = vmatpush.xpose.msra.mxu0 0.0
  %3800 = vmatpush.xpose.msra.mxu0 0.0
  %3801 = vmatpush.xpose.msra.mxu0 0.0
  %3802 = vmatpush.xpose.msra.mxu0 0.0
  %3803 = vmatpush.xpose.msra.mxu0 %v3787
  %3804 = vmatpush.xpose.msra.mxu0 %v3785
  %3805 = vmatmul.f32.gmra.mxu0 %v3781
  %v3806 = vpop.f32.mrf.mxu0
  %v3807 = vadd.f32 %v3683, %v3806
  %3808 = vmatmul.f32.gmra.mxu0 %v3783
  %v3809 = vpop.f32.mrf.mxu0
  %v3810 = vadd.f32 %v3684, %v3809
  %3811 = vdwg.mxu0
  %3812 = vrot.lane.b32.xlu0 %v146, 16
  %v3813 = vpop.permute.xlu0 %3812
  %3814 = vrot.lane.b32.xlu0 %v149, 16
  %v3815 = vpop.permute.xlu0 %3814
  %3816 = vrot.lane.b32.xlu0 %v146, 80
  %v3817 = vpop.permute.xlu0 %3816
  %3818 = vrot.lane.b32.xlu0 %v149, 80
  %v3819 = vpop.permute.xlu0 %3818
  %v3820 = vsel %vm256, %v3813, 0
  %v3822 = vsel %vm256, %v3815, 0
  %v3824 = vsel %vm256, %v3817, 0
  %v3826 = vsel %vm256, %v3819, 0
  %3828 = vmatpush.xpose.msra.mxu0 0.0
  %3829 = vmatpush.xpose.msra.mxu0 0.0
  %3830 = vmatpush.xpose.msra.mxu0 0.0
  %3831 = vmatpush.xpose.msra.mxu0 0.0
  %3832 = vmatpush.xpose.msra.mxu0 0.0
  %3833 = vmatpush.xpose.msra.mxu0 0.0
  %3834 = vmatpush.xpose.msra.mxu0 0.0
  %3835 = vmatpush.xpose.msra.mxu0 0.0
  %3836 = vmatpush.xpose.msra.mxu0 0.0
  %3837 = vmatpush.xpose.msra.mxu0 0.0
  %3838 = vmatpush.xpose.msra.mxu0 0.0
  %3839 = vmatpush.xpose.msra.mxu0 0.0
  %3840 = vmatpush.xpose.msra.mxu0 0.0
  %3841 = vmatpush.xpose.msra.mxu0 0.0
  %3842 = vmatpush.xpose.msra.mxu0 %v3826
  %3843 = vmatpush.xpose.msra.mxu0 %v3824
  %3844 = vmatmul.f32.gmra.mxu0 %v3820
  %v3845 = vpop.f32.mrf.mxu0
  %v3846 = vadd.f32 %v3685, %v3845
  %3847 = vmatmul.f32.gmra.mxu0 %v3822
  %v3848 = vpop.f32.mrf.mxu0
  %v3849 = vadd.f32 %v3686, %v3848
  %3850 = vdwg.mxu0
  %3851 = vrot.lane.b32.xlu0 %v152, 16
  %v3852 = vpop.permute.xlu0 %3851
  %3853 = vrot.lane.b32.xlu0 %v155, 16
  %v3854 = vpop.permute.xlu0 %3853
  %3855 = vrot.lane.b32.xlu0 %v152, 80
  %v3856 = vpop.permute.xlu0 %3855
  %3857 = vrot.lane.b32.xlu0 %v155, 80
  %v3858 = vpop.permute.xlu0 %3857
  %v3859 = vsel %vm256, %v3852, 0
  %v3861 = vsel %vm256, %v3854, 0
  %v3863 = vsel %vm256, %v3856, 0
  %v3865 = vsel %vm256, %v3858, 0
  %3867 = vmatpush.xpose.msra.mxu0 0.0
  %3868 = vmatpush.xpose.msra.mxu0 0.0
  %3869 = vmatpush.xpose.msra.mxu0 0.0
  %3870 = vmatpush.xpose.msra.mxu0 0.0
  %3871 = vmatpush.xpose.msra.mxu0 0.0
  %3872 = vmatpush.xpose.msra.mxu0 0.0
  %3873 = vmatpush.xpose.msra.mxu0 0.0
  %3874 = vmatpush.xpose.msra.mxu0 0.0
  %3875 = vmatpush.xpose.msra.mxu0 0.0
  %3876 = vmatpush.xpose.msra.mxu0 0.0
  %3877 = vmatpush.xpose.msra.mxu0 0.0
  %3878 = vmatpush.xpose.msra.mxu0 0.0
  %3879 = vmatpush.xpose.msra.mxu0 0.0
  %3880 = vmatpush.xpose.msra.mxu0 0.0
  %3881 = vmatpush.xpose.msra.mxu0 %v3865
  %3882 = vmatpush.xpose.msra.mxu0 %v3863
  %3883 = vmatmul.f32.gmra.mxu0 %v3859
  %v3884 = vpop.f32.mrf.mxu0
  %v3885 = vadd.f32 %v3687, %v3884
  %3886 = vmatmul.f32.gmra.mxu0 %v3861
  %v3887 = vpop.f32.mrf.mxu0
  %v3888 = vadd.f32 %v3688, %v3887
  %3889 = vdwg.mxu0
  %3890 = vrot.lane.b32.xlu0 %v158, 16
  %v3891 = vpop.permute.xlu0 %3890
  %3892 = vrot.lane.b32.xlu0 %v161, 16
  %v3893 = vpop.permute.xlu0 %3892
  %3894 = vrot.lane.b32.xlu0 %v158, 80
  %v3895 = vpop.permute.xlu0 %3894
  %3896 = vrot.lane.b32.xlu0 %v161, 80
  %v3897 = vpop.permute.xlu0 %3896
  %v3898 = vsel %vm256, %v3891, 0
  %v3900 = vsel %vm256, %v3893, 0
  %v3902 = vsel %vm256, %v3895, 0
  %v3904 = vsel %vm256, %v3897, 0
  %3906 = vmatpush.xpose.msra.mxu0 0.0
  %3907 = vmatpush.xpose.msra.mxu0 0.0
  %3908 = vmatpush.xpose.msra.mxu0 0.0
  %3909 = vmatpush.xpose.msra.mxu0 0.0
  %3910 = vmatpush.xpose.msra.mxu0 0.0
  %3911 = vmatpush.xpose.msra.mxu0 0.0
  %3912 = vmatpush.xpose.msra.mxu0 0.0
  %3913 = vmatpush.xpose.msra.mxu0 0.0
  %3914 = vmatpush.xpose.msra.mxu0 0.0
  %3915 = vmatpush.xpose.msra.mxu0 0.0
  %3916 = vmatpush.xpose.msra.mxu0 0.0
  %3917 = vmatpush.xpose.msra.mxu0 0.0
  %3918 = vmatpush.xpose.msra.mxu0 0.0
  %3919 = vmatpush.xpose.msra.mxu0 0.0
  %3920 = vmatpush.xpose.msra.mxu0 %v3904
  %3921 = vmatpush.xpose.msra.mxu0 %v3902
  %3922 = vmatmul.f32.gmra.mxu0 %v3898
  %v3923 = vpop.f32.mrf.mxu0
  %v3924 = vadd.f32 %v3689, %v3923
  %3925 = vmatmul.f32.gmra.mxu0 %v3900
  %v3926 = vpop.f32.mrf.mxu0
  %v3927 = vadd.f32 %v3690, %v3926
  %3928 = vdwg.mxu0
  %3929 = vrot.lane.b32.xlu0 %v164, 16
  %v3930 = vpop.permute.xlu0 %3929
  %3931 = vrot.lane.b32.xlu0 %v167, 16
  %v3932 = vpop.permute.xlu0 %3931
  %3933 = vrot.lane.b32.xlu0 %v164, 80
  %v3934 = vpop.permute.xlu0 %3933
  %3935 = vrot.lane.b32.xlu0 %v167, 80
  %v3936 = vpop.permute.xlu0 %3935
  %v3937 = vsel %vm256, %v3930, 0
  %v3939 = vsel %vm256, %v3932, 0
  %v3941 = vsel %vm256, %v3934, 0
  %v3943 = vsel %vm256, %v3936, 0
  %3945 = vmatpush.xpose.msra.mxu0 0.0
  %3946 = vmatpush.xpose.msra.mxu0 0.0
  %3947 = vmatpush.xpose.msra.mxu0 0.0
  %3948 = vmatpush.xpose.msra.mxu0 0.0
  %3949 = vmatpush.xpose.msra.mxu0 0.0
  %3950 = vmatpush.xpose.msra.mxu0 0.0
  %3951 = vmatpush.xpose.msra.mxu0 0.0
  %3952 = vmatpush.xpose.msra.mxu0 0.0
  %3953 = vmatpush.xpose.msra.mxu0 0.0
  %3954 = vmatpush.xpose.msra.mxu0 0.0
  %3955 = vmatpush.xpose.msra.mxu0 0.0
  %3956 = vmatpush.xpose.msra.mxu0 0.0
  %3957 = vmatpush.xpose.msra.mxu0 0.0
  %3958 = vmatpush.xpose.msra.mxu0 0.0
  %3959 = vmatpush.xpose.msra.mxu0 %v3943
  %3960 = vmatpush.xpose.msra.mxu0 %v3941
  %3961 = vmatmul.f32.gmra.mxu0 %v3937
  %v3962 = vpop.f32.mrf.mxu0
  %v3963 = vadd.f32 %v3691, %v3962
  %3964 = vmatmul.f32.gmra.mxu0 %v3939
  %v3965 = vpop.f32.mrf.mxu0
  %v3966 = vadd.f32 %v3692, %v3965
  %3967 = vdwg.mxu0
  %3968 = vrot.lane.b32.xlu0 %v170, 16
  %v3969 = vpop.permute.xlu0 %3968
  %3970 = vrot.lane.b32.xlu0 %v173, 16
  %v3971 = vpop.permute.xlu0 %3970
  %3972 = vrot.lane.b32.xlu0 %v170, 80
  %v3973 = vpop.permute.xlu0 %3972
  %3974 = vrot.lane.b32.xlu0 %v173, 80
  %v3975 = vpop.permute.xlu0 %3974
  %v3976 = vsel %vm256, %v3969, 0
  %v3978 = vsel %vm256, %v3971, 0
  %v3980 = vsel %vm256, %v3973, 0
  %v3982 = vsel %vm256, %v3975, 0
  %3984 = vmatpush.xpose.msra.mxu0 0.0
  %3985 = vmatpush.xpose.msra.mxu0 0.0
  %3986 = vmatpush.xpose.msra.mxu0 0.0
  %3987 = vmatpush.xpose.msra.mxu0 0.0
  %3988 = vmatpush.xpose.msra.mxu0 0.0
  %3989 = vmatpush.xpose.msra.mxu0 0.0
  %3990 = vmatpush.xpose.msra.mxu0 0.0
  %3991 = vmatpush.xpose.msra.mxu0 0.0
  %3992 = vmatpush.xpose.msra.mxu0 0.0
  %3993 = vmatpush.xpose.msra.mxu0 0.0
  %3994 = vmatpush.xpose.msra.mxu0 0.0
  %3995 = vmatpush.xpose.msra.mxu0 0.0
  %3996 = vmatpush.xpose.msra.mxu0 0.0
  %3997 = vmatpush.xpose.msra.mxu0 0.0
  %3998 = vmatpush.xpose.msra.mxu0 %v3982
  %3999 = vmatpush.xpose.msra.mxu0 %v3980
  %4000 = vmatmul.f32.gmra.mxu0 %v3976
  %v4001 = vpop.f32.mrf.mxu0
  %v4002 = vadd.f32 %v3693, %v4001
  %4003 = vmatmul.f32.gmra.mxu0 %v3978
  %v4004 = vpop.f32.mrf.mxu0
  %v4005 = vadd.f32 %v3694, %v4004
  %4006 = vdwg.mxu0
  %v4007 = vsel %vm866, %v3400, -inf
  %4008 = vmax.xlane.f32.xlu0 %v4007
  %v4009 = vpop.xlane.xlu0 %4008
  %v4010 = vsel %vm866, %v3403, -inf
  %4011 = vmax.xlane.f32.xlu0 %v4010
  %v4012 = vpop.xlane.xlu0 %4011
  %v4013 = vsel %vm866, %v3439, -inf
  %4014 = vmax.xlane.f32.xlu0 %v4013
  %v4015 = vpop.xlane.xlu0 %4014
  %v4016 = vsel %vm866, %v3442, -inf
  %4017 = vmax.xlane.f32.xlu0 %v4016
  %v4018 = vpop.xlane.xlu0 %4017
  %v4019 = vsel %vm866, %v3478, -inf
  %4020 = vmax.xlane.f32.xlu0 %v4019
  %v4021 = vpop.xlane.xlu0 %4020
  %v4022 = vsel %vm866, %v3481, -inf
  %4023 = vmax.xlane.f32.xlu0 %v4022
  %v4024 = vpop.xlane.xlu0 %4023
  %v4025 = vsel %vm866, %v3517, -inf
  %4026 = vmax.xlane.f32.xlu0 %v4025
  %v4027 = vpop.xlane.xlu0 %4026
  %v4028 = vsel %vm866, %v3520, -inf
  %4029 = vmax.xlane.f32.xlu0 %v4028
  %v4030 = vpop.xlane.xlu0 %4029
  %v4031 = vsel %vm866, %v3556, -inf
  %4032 = vmax.xlane.f32.xlu0 %v4031
  %v4033 = vpop.xlane.xlu0 %4032
  %v4034 = vsel %vm866, %v3559, -inf
  %4035 = vmax.xlane.f32.xlu0 %v4034
  %v4036 = vpop.xlane.xlu0 %4035
  %v4037 = vsel %vm866, %v3595, -inf
  %4038 = vmax.xlane.f32.xlu0 %v4037
  %v4039 = vpop.xlane.xlu0 %4038
  %v4040 = vsel %vm866, %v3598, -inf
  %4041 = vmax.xlane.f32.xlu0 %v4040
  %v4042 = vpop.xlane.xlu0 %4041
  %v4043 = vsel %vm866, %v3634, -inf
  %4044 = vmax.xlane.f32.xlu0 %v4043
  %v4045 = vpop.xlane.xlu0 %4044
  %v4046 = vsel %vm866, %v3637, -inf
  %4047 = vmax.xlane.f32.xlu0 %v4046
  %v4048 = vpop.xlane.xlu0 %4047
  %v4049 = vsel %vm866, %v3673, -inf
  %4050 = vmax.xlane.f32.xlu0 %v4049
  %v4051 = vpop.xlane.xlu0 %4050
  %v4052 = vsel %vm866, %v3676, -inf
  %4053 = vmax.xlane.f32.xlu0 %v4052
  %v4054 = vpop.xlane.xlu0 %4053
  %v4055 = vsub.f32 %v3400, %v4009
  %v4056 = vsub.f32 %v3403, %v4012
  %v4057 = vsub.f32 %v3439, %v4015
  %v4058 = vsub.f32 %v3442, %v4018
  %v4059 = vsub.f32 %v3478, %v4021
  %v4060 = vsub.f32 %v3481, %v4024
  %v4061 = vsub.f32 %v3517, %v4027
  %v4062 = vsub.f32 %v3520, %v4030
  %v4063 = vsub.f32 %v3556, %v4033
  %v4064 = vsub.f32 %v3559, %v4036
  %v4065 = vsub.f32 %v3595, %v4039
  %v4066 = vsub.f32 %v3598, %v4042
  %v4067 = vsub.f32 %v3634, %v4045
  %v4068 = vsub.f32 %v3637, %v4048
  %v4069 = vsub.f32 %v3673, %v4051
  %v4070 = vsub.f32 %v3676, %v4054
  %v4071 = vmul.f32 %v4055, 1.442695
  %v4072 = vpow.pop %v4071
  %v4073 = vmul.f32 %v4056, 1.442695
  %v4074 = vpow.pop %v4073
  %v4075 = vmul.f32 %v4057, 1.442695
  %v4076 = vpow.pop %v4075
  %v4077 = vmul.f32 %v4058, 1.442695
  %v4078 = vpow.pop %v4077
  %v4079 = vmul.f32 %v4059, 1.442695
  %v4080 = vpow.pop %v4079
  %v4081 = vmul.f32 %v4060, 1.442695
  %v4082 = vpow.pop %v4081
  %v4083 = vmul.f32 %v4061, 1.442695
  %v4084 = vpow.pop %v4083
  %v4085 = vmul.f32 %v4062, 1.442695
  %v4086 = vpow.pop %v4085
  %v4087 = vmul.f32 %v4063, 1.442695
  %v4088 = vpow.pop %v4087
  %v4089 = vmul.f32 %v4064, 1.442695
  %v4090 = vpow.pop %v4089
  %v4091 = vmul.f32 %v4065, 1.442695
  %v4092 = vpow.pop %v4091
  %v4093 = vmul.f32 %v4066, 1.442695
  %v4094 = vpow.pop %v4093
  %v4095 = vmul.f32 %v4067, 1.442695
  %v4096 = vpow.pop %v4095
  %v4097 = vmul.f32 %v4068, 1.442695
  %v4098 = vpow.pop %v4097
  %v4099 = vmul.f32 %v4069, 1.442695
  %v4100 = vpow.pop %v4099
  %v4101 = vmul.f32 %v4070, 1.442695
  %v4102 = vpow.pop %v4101
  %v4103 = vsel %vm866, %v4072, 0.0
  %4104 = vadd.xlane.f32.xlu0 %v4103
  %v4105 = vpop.xlane.xlu0 %4104
  %v4106 = vsel %vm866, %v4074, 0.0
  %4107 = vadd.xlane.f32.xlu0 %v4106
  %v4108 = vpop.xlane.xlu0 %4107
  %v4109 = vsel %vm866, %v4076, 0.0
  %4110 = vadd.xlane.f32.xlu0 %v4109
  %v4111 = vpop.xlane.xlu0 %4110
  %v4112 = vsel %vm866, %v4078, 0.0
  %4113 = vadd.xlane.f32.xlu0 %v4112
  %v4114 = vpop.xlane.xlu0 %4113
  %v4115 = vsel %vm866, %v4080, 0.0
  %4116 = vadd.xlane.f32.xlu0 %v4115
  %v4117 = vpop.xlane.xlu0 %4116
  %v4118 = vsel %vm866, %v4082, 0.0
  %4119 = vadd.xlane.f32.xlu0 %v4118
  %v4120 = vpop.xlane.xlu0 %4119
  %v4121 = vsel %vm866, %v4084, 0.0
  %4122 = vadd.xlane.f32.xlu0 %v4121
  %v4123 = vpop.xlane.xlu0 %4122
  %v4124 = vsel %vm866, %v4086, 0.0
  %4125 = vadd.xlane.f32.xlu0 %v4124
  %v4126 = vpop.xlane.xlu0 %4125
  %v4127 = vsel %vm866, %v4088, 0.0
  %4128 = vadd.xlane.f32.xlu0 %v4127
  %v4129 = vpop.xlane.xlu0 %4128
  %v4130 = vsel %vm866, %v4090, 0.0
  %4131 = vadd.xlane.f32.xlu0 %v4130
  %v4132 = vpop.xlane.xlu0 %4131
  %v4133 = vsel %vm866, %v4092, 0.0
  %4134 = vadd.xlane.f32.xlu0 %v4133
  %v4135 = vpop.xlane.xlu0 %4134
  %v4136 = vsel %vm866, %v4094, 0.0
  %4137 = vadd.xlane.f32.xlu0 %v4136
  %v4138 = vpop.xlane.xlu0 %4137
  %v4139 = vsel %vm866, %v4096, 0.0
  %4140 = vadd.xlane.f32.xlu0 %v4139
  %v4141 = vpop.xlane.xlu0 %4140
  %v4142 = vsel %vm866, %v4098, 0.0
  %4143 = vadd.xlane.f32.xlu0 %v4142
  %v4144 = vpop.xlane.xlu0 %4143
  %v4145 = vsel %vm866, %v4100, 0.0
  %4146 = vadd.xlane.f32.xlu0 %v4145
  %v4147 = vpop.xlane.xlu0 %4146
  %v4148 = vsel %vm866, %v4102, 0.0
  %4149 = vadd.xlane.f32.xlu0 %v4148
  %v4150 = vpop.xlane.xlu0 %4149
  %v4151 = vrcp.pop %v4105
  %v4152 = vrcp.pop %v4108
  %v4153 = vrcp.pop %v4111
  %v4154 = vrcp.pop %v4114
  %v4155 = vrcp.pop %v4117
  %v4156 = vrcp.pop %v4120
  %v4157 = vrcp.pop %v4123
  %v4158 = vrcp.pop %v4126
  %v4159 = vrcp.pop %v4129
  %v4160 = vrcp.pop %v4132
  %v4161 = vrcp.pop %v4135
  %v4162 = vrcp.pop %v4138
  %v4163 = vrcp.pop %v4141
  %v4164 = vrcp.pop %v4144
  %v4165 = vrcp.pop %v4147
  %v4166 = vrcp.pop %v4150
  %v4167 = vmul.f32 %v4072, %v4151
  %v4168 = vmul.f32 %v4074, %v4152
  %v4169 = vmul.f32 %v4076, %v4153
  %v4170 = vmul.f32 %v4078, %v4154
  %v4171 = vmul.f32 %v4080, %v4155
  %v4172 = vmul.f32 %v4082, %v4156
  %v4173 = vmul.f32 %v4084, %v4157
  %v4174 = vmul.f32 %v4086, %v4158
  %v4175 = vmul.f32 %v4088, %v4159
  %v4176 = vmul.f32 %v4090, %v4160
  %v4177 = vmul.f32 %v4092, %v4161
  %v4178 = vmul.f32 %v4094, %v4162
  %v4179 = vmul.f32 %v4096, %v4163
  %v4180 = vmul.f32 %v4098, %v4164
  %v4181 = vmul.f32 %v4100, %v4165
  %v4182 = vmul.f32 %v4102, %v4166
  %v4183 = vsel %vm866, %v3729, -inf
  %4184 = vmax.xlane.f32.xlu0 %v4183
  %v4185 = vpop.xlane.xlu0 %4184
  %v4186 = vsel %vm866, %v3732, -inf
  %4187 = vmax.xlane.f32.xlu0 %v4186
  %v4188 = vpop.xlane.xlu0 %4187
  %v4189 = vsel %vm866, %v3768, -inf
  %4190 = vmax.xlane.f32.xlu0 %v4189
  %v4191 = vpop.xlane.xlu0 %4190
  %v4192 = vsel %vm866, %v3771, -inf
  %4193 = vmax.xlane.f32.xlu0 %v4192
  %v4194 = vpop.xlane.xlu0 %4193
  %v4195 = vsel %vm866, %v3807, -inf
  %4196 = vmax.xlane.f32.xlu0 %v4195
  %v4197 = vpop.xlane.xlu0 %4196
  %v4198 = vsel %vm866, %v3810, -inf
  %4199 = vmax.xlane.f32.xlu0 %v4198
  %v4200 = vpop.xlane.xlu0 %4199
  %v4201 = vsel %vm866, %v3846, -inf
  %4202 = vmax.xlane.f32.xlu0 %v4201
  %v4203 = vpop.xlane.xlu0 %4202
  %v4204 = vsel %vm866, %v3849, -inf
  %4205 = vmax.xlane.f32.xlu0 %v4204
  %v4206 = vpop.xlane.xlu0 %4205
  %v4207 = vsel %vm866, %v3885, -inf
  %4208 = vmax.xlane.f32.xlu0 %v4207
  %v4209 = vpop.xlane.xlu0 %4208
  %v4210 = vsel %vm866, %v3888, -inf
  %4211 = vmax.xlane.f32.xlu0 %v4210
  %v4212 = vpop.xlane.xlu0 %4211
  %v4213 = vsel %vm866, %v3924, -inf
  %4214 = vmax.xlane.f32.xlu0 %v4213
  %v4215 = vpop.xlane.xlu0 %4214
  %v4216 = vsel %vm866, %v3927, -inf
  %4217 = vmax.xlane.f32.xlu0 %v4216
  %v4218 = vpop.xlane.xlu0 %4217
  %v4219 = vsel %vm866, %v3963, -inf
  %4220 = vmax.xlane.f32.xlu0 %v4219
  %v4221 = vpop.xlane.xlu0 %4220
  %v4222 = vsel %vm866, %v3966, -inf
  %4223 = vmax.xlane.f32.xlu0 %v4222
  %v4224 = vpop.xlane.xlu0 %4223
  %v4225 = vsel %vm866, %v4002, -inf
  %4226 = vmax.xlane.f32.xlu0 %v4225
  %v4227 = vpop.xlane.xlu0 %4226
  %v4228 = vsel %vm866, %v4005, -inf
  %4229 = vmax.xlane.f32.xlu0 %v4228
  %v4230 = vpop.xlane.xlu0 %4229
  %v4231 = vsub.f32 %v3729, %v4185
  %v4232 = vsub.f32 %v3732, %v4188
  %v4233 = vsub.f32 %v3768, %v4191
  %v4234 = vsub.f32 %v3771, %v4194
  %v4235 = vsub.f32 %v3807, %v4197
  %v4236 = vsub.f32 %v3810, %v4200
  %v4237 = vsub.f32 %v3846, %v4203
  %v4238 = vsub.f32 %v3849, %v4206
  %v4239 = vsub.f32 %v3885, %v4209
  %v4240 = vsub.f32 %v3888, %v4212
  %v4241 = vsub.f32 %v3924, %v4215
  %v4242 = vsub.f32 %v3927, %v4218
  %v4243 = vsub.f32 %v3963, %v4221
  %v4244 = vsub.f32 %v3966, %v4224
  %v4245 = vsub.f32 %v4002, %v4227
  %v4246 = vsub.f32 %v4005, %v4230
  %v4247 = vmul.f32 %v4231, 1.442695
  %v4248 = vpow.pop %v4247
  %v4249 = vmul.f32 %v4232, 1.442695
  %v4250 = vpow.pop %v4249
  %v4251 = vmul.f32 %v4233, 1.442695
  %v4252 = vpow.pop %v4251
  %v4253 = vmul.f32 %v4234, 1.442695
  %v4254 = vpow.pop %v4253
  %v4255 = vmul.f32 %v4235, 1.442695
  %v4256 = vpow.pop %v4255
  %v4257 = vmul.f32 %v4236, 1.442695
  %v4258 = vpow.pop %v4257
  %v4259 = vmul.f32 %v4237, 1.442695
  %v4260 = vpow.pop %v4259
  %v4261 = vmul.f32 %v4238, 1.442695
  %v4262 = vpow.pop %v4261
  %v4263 = vmul.f32 %v4239, 1.442695
  %v4264 = vpow.pop %v4263
  %v4265 = vmul.f32 %v4240, 1.442695
  %v4266 = vpow.pop %v4265
  %v4267 = vmul.f32 %v4241, 1.442695
  %v4268 = vpow.pop %v4267
  %v4269 = vmul.f32 %v4242, 1.442695
  %v4270 = vpow.pop %v4269
  %v4271 = vmul.f32 %v4243, 1.442695
  %v4272 = vpow.pop %v4271
  %v4273 = vmul.f32 %v4244, 1.442695
  %v4274 = vpow.pop %v4273
  %v4275 = vmul.f32 %v4245, 1.442695
  %v4276 = vpow.pop %v4275
  %v4277 = vmul.f32 %v4246, 1.442695
  %v4278 = vpow.pop %v4277
  %v4279 = vsel %vm866, %v4248, 0.0
  %4280 = vadd.xlane.f32.xlu0 %v4279
  %v4281 = vpop.xlane.xlu0 %4280
  %v4282 = vsel %vm866, %v4250, 0.0
  %4283 = vadd.xlane.f32.xlu0 %v4282
  %v4284 = vpop.xlane.xlu0 %4283
  %v4285 = vsel %vm866, %v4252, 0.0
  %4286 = vadd.xlane.f32.xlu0 %v4285
  %v4287 = vpop.xlane.xlu0 %4286
  %v4288 = vsel %vm866, %v4254, 0.0
  %4289 = vadd.xlane.f32.xlu0 %v4288
  %v4290 = vpop.xlane.xlu0 %4289
  %v4291 = vsel %vm866, %v4256, 0.0
  %4292 = vadd.xlane.f32.xlu0 %v4291
  %v4293 = vpop.xlane.xlu0 %4292
  %v4294 = vsel %vm866, %v4258, 0.0
  %4295 = vadd.xlane.f32.xlu0 %v4294
  %v4296 = vpop.xlane.xlu0 %4295
  %v4297 = vsel %vm866, %v4260, 0.0
  %4298 = vadd.xlane.f32.xlu0 %v4297
  %v4299 = vpop.xlane.xlu0 %4298
  %v4300 = vsel %vm866, %v4262, 0.0
  %4301 = vadd.xlane.f32.xlu0 %v4300
  %v4302 = vpop.xlane.xlu0 %4301
  %v4303 = vsel %vm866, %v4264, 0.0
  %4304 = vadd.xlane.f32.xlu0 %v4303
  %v4305 = vpop.xlane.xlu0 %4304
  %v4306 = vsel %vm866, %v4266, 0.0
  %4307 = vadd.xlane.f32.xlu0 %v4306
  %v4308 = vpop.xlane.xlu0 %4307
  %v4309 = vsel %vm866, %v4268, 0.0
  %4310 = vadd.xlane.f32.xlu0 %v4309
  %v4311 = vpop.xlane.xlu0 %4310
  %v4312 = vsel %vm866, %v4270, 0.0
  %4313 = vadd.xlane.f32.xlu0 %v4312
  %v4314 = vpop.xlane.xlu0 %4313
  %v4315 = vsel %vm866, %v4272, 0.0
  %4316 = vadd.xlane.f32.xlu0 %v4315
  %v4317 = vpop.xlane.xlu0 %4316
  %v4318 = vsel %vm866, %v4274, 0.0
  %4319 = vadd.xlane.f32.xlu0 %v4318
  %v4320 = vpop.xlane.xlu0 %4319
  %v4321 = vsel %vm866, %v4276, 0.0
  %4322 = vadd.xlane.f32.xlu0 %v4321
  %v4323 = vpop.xlane.xlu0 %4322
  %v4324 = vsel %vm866, %v4278, 0.0
  %4325 = vadd.xlane.f32.xlu0 %v4324
  %v4326 = vpop.xlane.xlu0 %4325
  %v4327 = vrcp.pop %v4281
  %v4328 = vrcp.pop %v4284
  %v4329 = vrcp.pop %v4287
  %v4330 = vrcp.pop %v4290
  %v4331 = vrcp.pop %v4293
  %v4332 = vrcp.pop %v4296
  %v4333 = vrcp.pop %v4299
  %v4334 = vrcp.pop %v4302
  %v4335 = vrcp.pop %v4305
  %v4336 = vrcp.pop %v4308
  %v4337 = vrcp.pop %v4311
  %v4338 = vrcp.pop %v4314
  %v4339 = vrcp.pop %v4317
  %v4340 = vrcp.pop %v4320
  %v4341 = vrcp.pop %v4323
  %v4342 = vrcp.pop %v4326
  %v4343 = vmul.f32 %v4248, %v4327
  %v4344 = vmul.f32 %v4250, %v4328
  %v4345 = vmul.f32 %v4252, %v4329
  %v4346 = vmul.f32 %v4254, %v4330
  %v4347 = vmul.f32 %v4256, %v4331
  %v4348 = vmul.f32 %v4258, %v4332
  %v4349 = vmul.f32 %v4260, %v4333
  %v4350 = vmul.f32 %v4262, %v4334
  %v4351 = vmul.f32 %v4264, %v4335
  %v4352 = vmul.f32 %v4266, %v4336
  %v4353 = vmul.f32 %v4268, %v4337
  %v4354 = vmul.f32 %v4270, %v4338
  %v4355 = vmul.f32 %v4272, %v4339
  %v4356 = vmul.f32 %v4274, %v4340
  %v4357 = vmul.f32 %v4276, %v4341
  %v4358 = vmul.f32 %v4278, %v4342
  %4359 = vrot.lane.b32.xlu0 %v193, 80
  %v4360 = vpop.permute.xlu0 %4359
  %4361 = vrot.lane.b32.xlu0 %v196, 80
  %v4362 = vpop.permute.xlu0 %4361
  %v4366 = vsel %vm866, %v4167, 0
  %v4369 = vsel %vm866, %v4168, 0
  %4371 = vmatpush.msra.mxu0 0.0
  %4372 = vmatpush.msra.mxu0 0.0
  %4373 = vmatpush.msra.mxu0 0.0
  %4374 = vmatpush.msra.mxu0 0.0
  %4375 = vmatpush.msra.mxu0 0.0
  %4376 = vmatpush.msra.mxu0 0.0
  %4377 = vmatpush.msra.mxu0 0.0
  %4378 = vmatpush.msra.mxu0 0.0
  %4379 = vmatpush.msra.mxu0 0.0
  %4380 = vmatpush.msra.mxu0 0.0
  %4381 = vmatpush.msra.mxu0 0.0
  %4382 = vmatpush.msra.mxu0 0.0
  %4383 = vmatpush.msra.mxu0 0.0
  %4384 = vmatpush.msra.mxu0 0.0
  %4385 = vmatpush.msra.mxu0 %v4362
  %4386 = vmatpush.msra.mxu0 %v4360
  %4387 = vmatmul.f32.gmra.mxu0 %v4366
  %v4388 = vpop.f32.mrf.mxu0
  %v4389 = vadd.f32 0.0, %v4388
  %4390 = vmatmul.f32.gmra.mxu0 %v4369
  %v4391 = vpop.f32.mrf.mxu0
  %v4392 = vadd.f32 0.0, %v4391
  %4393 = vdwg.mxu0
  %4394 = vrot.lane.b32.xlu0 %v199, 80
  %v4395 = vpop.permute.xlu0 %4394
  %4396 = vrot.lane.b32.xlu0 %v202, 80
  %v4397 = vpop.permute.xlu0 %4396
  %v4401 = vsel %vm866, %v4169, 0
  %v4404 = vsel %vm866, %v4170, 0
  %4406 = vmatpush.msra.mxu0 0.0
  %4407 = vmatpush.msra.mxu0 0.0
  %4408 = vmatpush.msra.mxu0 0.0
  %4409 = vmatpush.msra.mxu0 0.0
  %4410 = vmatpush.msra.mxu0 0.0
  %4411 = vmatpush.msra.mxu0 0.0
  %4412 = vmatpush.msra.mxu0 0.0
  %4413 = vmatpush.msra.mxu0 0.0
  %4414 = vmatpush.msra.mxu0 0.0
  %4415 = vmatpush.msra.mxu0 0.0
  %4416 = vmatpush.msra.mxu0 0.0
  %4417 = vmatpush.msra.mxu0 0.0
  %4418 = vmatpush.msra.mxu0 0.0
  %4419 = vmatpush.msra.mxu0 0.0
  %4420 = vmatpush.msra.mxu0 %v4397
  %4421 = vmatpush.msra.mxu0 %v4395
  %4422 = vmatmul.f32.gmra.mxu0 %v4401
  %v4423 = vpop.f32.mrf.mxu0
  %v4424 = vadd.f32 0.0, %v4423
  %4425 = vmatmul.f32.gmra.mxu0 %v4404
  %v4426 = vpop.f32.mrf.mxu0
  %v4427 = vadd.f32 0.0, %v4426
  %4428 = vdwg.mxu0
  %4429 = vrot.lane.b32.xlu0 %v205, 80
  %v4430 = vpop.permute.xlu0 %4429
  %4431 = vrot.lane.b32.xlu0 %v208, 80
  %v4432 = vpop.permute.xlu0 %4431
  %v4436 = vsel %vm866, %v4171, 0
  %v4439 = vsel %vm866, %v4172, 0
  %4441 = vmatpush.msra.mxu0 0.0
  %4442 = vmatpush.msra.mxu0 0.0
  %4443 = vmatpush.msra.mxu0 0.0
  %4444 = vmatpush.msra.mxu0 0.0
  %4445 = vmatpush.msra.mxu0 0.0
  %4446 = vmatpush.msra.mxu0 0.0
  %4447 = vmatpush.msra.mxu0 0.0
  %4448 = vmatpush.msra.mxu0 0.0
  %4449 = vmatpush.msra.mxu0 0.0
  %4450 = vmatpush.msra.mxu0 0.0
  %4451 = vmatpush.msra.mxu0 0.0
  %4452 = vmatpush.msra.mxu0 0.0
  %4453 = vmatpush.msra.mxu0 0.0
  %4454 = vmatpush.msra.mxu0 0.0
  %4455 = vmatpush.msra.mxu0 %v4432
  %4456 = vmatpush.msra.mxu0 %v4430
  %4457 = vmatmul.f32.gmra.mxu0 %v4436
  %v4458 = vpop.f32.mrf.mxu0
  %v4459 = vadd.f32 0.0, %v4458
  %4460 = vmatmul.f32.gmra.mxu0 %v4439
  %v4461 = vpop.f32.mrf.mxu0
  %v4462 = vadd.f32 0.0, %v4461
  %4463 = vdwg.mxu0
  %4464 = vrot.lane.b32.xlu0 %v211, 80
  %v4465 = vpop.permute.xlu0 %4464
  %4466 = vrot.lane.b32.xlu0 %v214, 80
  %v4467 = vpop.permute.xlu0 %4466
  %v4471 = vsel %vm866, %v4173, 0
  %v4474 = vsel %vm866, %v4174, 0
  %4476 = vmatpush.msra.mxu0 0.0
  %4477 = vmatpush.msra.mxu0 0.0
  %4478 = vmatpush.msra.mxu0 0.0
  %4479 = vmatpush.msra.mxu0 0.0
  %4480 = vmatpush.msra.mxu0 0.0
  %4481 = vmatpush.msra.mxu0 0.0
  %4482 = vmatpush.msra.mxu0 0.0
  %4483 = vmatpush.msra.mxu0 0.0
  %4484 = vmatpush.msra.mxu0 0.0
  %4485 = vmatpush.msra.mxu0 0.0
  %4486 = vmatpush.msra.mxu0 0.0
  %4487 = vmatpush.msra.mxu0 0.0
  %4488 = vmatpush.msra.mxu0 0.0
  %4489 = vmatpush.msra.mxu0 0.0
  %4490 = vmatpush.msra.mxu0 %v4467
  %4491 = vmatpush.msra.mxu0 %v4465
  %4492 = vmatmul.f32.gmra.mxu0 %v4471
  %v4493 = vpop.f32.mrf.mxu0
  %v4494 = vadd.f32 0.0, %v4493
  %4495 = vmatmul.f32.gmra.mxu0 %v4474
  %v4496 = vpop.f32.mrf.mxu0
  %v4497 = vadd.f32 0.0, %v4496
  %4498 = vdwg.mxu0
  %4499 = vrot.lane.b32.xlu0 %v217, 80
  %v4500 = vpop.permute.xlu0 %4499
  %4501 = vrot.lane.b32.xlu0 %v220, 80
  %v4502 = vpop.permute.xlu0 %4501
  %v4506 = vsel %vm866, %v4175, 0
  %v4509 = vsel %vm866, %v4176, 0
  %4511 = vmatpush.msra.mxu0 0.0
  %4512 = vmatpush.msra.mxu0 0.0
  %4513 = vmatpush.msra.mxu0 0.0
  %4514 = vmatpush.msra.mxu0 0.0
  %4515 = vmatpush.msra.mxu0 0.0
  %4516 = vmatpush.msra.mxu0 0.0
  %4517 = vmatpush.msra.mxu0 0.0
  %4518 = vmatpush.msra.mxu0 0.0
  %4519 = vmatpush.msra.mxu0 0.0
  %4520 = vmatpush.msra.mxu0 0.0
  %4521 = vmatpush.msra.mxu0 0.0
  %4522 = vmatpush.msra.mxu0 0.0
  %4523 = vmatpush.msra.mxu0 0.0
  %4524 = vmatpush.msra.mxu0 0.0
  %4525 = vmatpush.msra.mxu0 %v4502
  %4526 = vmatpush.msra.mxu0 %v4500
  %4527 = vmatmul.f32.gmra.mxu0 %v4506
  %v4528 = vpop.f32.mrf.mxu0
  %v4529 = vadd.f32 0.0, %v4528
  %4530 = vmatmul.f32.gmra.mxu0 %v4509
  %v4531 = vpop.f32.mrf.mxu0
  %v4532 = vadd.f32 0.0, %v4531
  %4533 = vdwg.mxu0
  %4534 = vrot.lane.b32.xlu0 %v223, 80
  %v4535 = vpop.permute.xlu0 %4534
  %4536 = vrot.lane.b32.xlu0 %v226, 80
  %v4537 = vpop.permute.xlu0 %4536
  %v4541 = vsel %vm866, %v4177, 0
  %v4544 = vsel %vm866, %v4178, 0
  %4546 = vmatpush.msra.mxu0 0.0
  %4547 = vmatpush.msra.mxu0 0.0
  %4548 = vmatpush.msra.mxu0 0.0
  %4549 = vmatpush.msra.mxu0 0.0
  %4550 = vmatpush.msra.mxu0 0.0
  %4551 = vmatpush.msra.mxu0 0.0
  %4552 = vmatpush.msra.mxu0 0.0
  %4553 = vmatpush.msra.mxu0 0.0
  %4554 = vmatpush.msra.mxu0 0.0
  %4555 = vmatpush.msra.mxu0 0.0
  %4556 = vmatpush.msra.mxu0 0.0
  %4557 = vmatpush.msra.mxu0 0.0
  %4558 = vmatpush.msra.mxu0 0.0
  %4559 = vmatpush.msra.mxu0 0.0
  %4560 = vmatpush.msra.mxu0 %v4537
  %4561 = vmatpush.msra.mxu0 %v4535
  %4562 = vmatmul.f32.gmra.mxu0 %v4541
  %v4563 = vpop.f32.mrf.mxu0
  %v4564 = vadd.f32 0.0, %v4563
  %4565 = vmatmul.f32.gmra.mxu0 %v4544
  %v4566 = vpop.f32.mrf.mxu0
  %v4567 = vadd.f32 0.0, %v4566
  %4568 = vdwg.mxu0
  %4569 = vrot.lane.b32.xlu0 %v229, 80
  %v4570 = vpop.permute.xlu0 %4569
  %4571 = vrot.lane.b32.xlu0 %v232, 80
  %v4572 = vpop.permute.xlu0 %4571
  %v4576 = vsel %vm866, %v4179, 0
  %v4579 = vsel %vm866, %v4180, 0
  %4581 = vmatpush.msra.mxu0 0.0
  %4582 = vmatpush.msra.mxu0 0.0
  %4583 = vmatpush.msra.mxu0 0.0
  %4584 = vmatpush.msra.mxu0 0.0
  %4585 = vmatpush.msra.mxu0 0.0
  %4586 = vmatpush.msra.mxu0 0.0
  %4587 = vmatpush.msra.mxu0 0.0
  %4588 = vmatpush.msra.mxu0 0.0
  %4589 = vmatpush.msra.mxu0 0.0
  %4590 = vmatpush.msra.mxu0 0.0
  %4591 = vmatpush.msra.mxu0 0.0
  %4592 = vmatpush.msra.mxu0 0.0
  %4593 = vmatpush.msra.mxu0 0.0
  %4594 = vmatpush.msra.mxu0 0.0
  %4595 = vmatpush.msra.mxu0 %v4572
  %4596 = vmatpush.msra.mxu0 %v4570
  %4597 = vmatmul.f32.gmra.mxu0 %v4576
  %v4598 = vpop.f32.mrf.mxu0
  %v4599 = vadd.f32 0.0, %v4598
  %4600 = vmatmul.f32.gmra.mxu0 %v4579
  %v4601 = vpop.f32.mrf.mxu0
  %v4602 = vadd.f32 0.0, %v4601
  %4603 = vdwg.mxu0
  %4604 = vrot.lane.b32.xlu0 %v235, 80
  %v4605 = vpop.permute.xlu0 %4604
  %4606 = vrot.lane.b32.xlu0 %v238, 80
  %v4607 = vpop.permute.xlu0 %4606
  %v4611 = vsel %vm866, %v4181, 0
  %v4614 = vsel %vm866, %v4182, 0
  %4616 = vmatpush.msra.mxu0 0.0
  %4617 = vmatpush.msra.mxu0 0.0
  %4618 = vmatpush.msra.mxu0 0.0
  %4619 = vmatpush.msra.mxu0 0.0
  %4620 = vmatpush.msra.mxu0 0.0
  %4621 = vmatpush.msra.mxu0 0.0
  %4622 = vmatpush.msra.mxu0 0.0
  %4623 = vmatpush.msra.mxu0 0.0
  %4624 = vmatpush.msra.mxu0 0.0
  %4625 = vmatpush.msra.mxu0 0.0
  %4626 = vmatpush.msra.mxu0 0.0
  %4627 = vmatpush.msra.mxu0 0.0
  %4628 = vmatpush.msra.mxu0 0.0
  %4629 = vmatpush.msra.mxu0 0.0
  %4630 = vmatpush.msra.mxu0 %v4607
  %4631 = vmatpush.msra.mxu0 %v4605
  %4632 = vmatmul.f32.gmra.mxu0 %v4611
  %v4633 = vpop.f32.mrf.mxu0
  %v4634 = vadd.f32 0.0, %v4633
  %4635 = vmatmul.f32.gmra.mxu0 %v4614
  %v4636 = vpop.f32.mrf.mxu0
  %v4637 = vadd.f32 0.0, %v4636
  %4638 = vdwg.mxu0
  %4639 = vrot.lane.b32.xlu0 %v128, 48
  %v4640 = vpop.permute.xlu0 %4639
  %4641 = vrot.lane.b32.xlu0 %v131, 48
  %v4642 = vpop.permute.xlu0 %4641
  %v4646 = vsel %vm866, %v4343, 0
  %v4649 = vsel %vm866, %v4344, 0
  %4651 = vmatpush.msra.mxu0 0.0
  %4652 = vmatpush.msra.mxu0 0.0
  %4653 = vmatpush.msra.mxu0 0.0
  %4654 = vmatpush.msra.mxu0 0.0
  %4655 = vmatpush.msra.mxu0 0.0
  %4656 = vmatpush.msra.mxu0 0.0
  %4657 = vmatpush.msra.mxu0 0.0
  %4658 = vmatpush.msra.mxu0 0.0
  %4659 = vmatpush.msra.mxu0 0.0
  %4660 = vmatpush.msra.mxu0 0.0
  %4661 = vmatpush.msra.mxu0 0.0
  %4662 = vmatpush.msra.mxu0 0.0
  %4663 = vmatpush.msra.mxu0 0.0
  %4664 = vmatpush.msra.mxu0 0.0
  %4665 = vmatpush.msra.mxu0 %v4642
  %4666 = vmatpush.msra.mxu0 %v4640
  %4667 = vmatmul.f32.gmra.mxu0 %v4646
  %v4668 = vpop.f32.mrf.mxu0
  %v4669 = vadd.f32 0.0, %v4668
  %4670 = vmatmul.f32.gmra.mxu0 %v4649
  %v4671 = vpop.f32.mrf.mxu0
  %v4672 = vadd.f32 0.0, %v4671
  %4673 = vdwg.mxu0
  %4674 = vrot.lane.b32.xlu0 %v134, 48
  %v4675 = vpop.permute.xlu0 %4674
  %4676 = vrot.lane.b32.xlu0 %v137, 48
  %v4677 = vpop.permute.xlu0 %4676
  %v4681 = vsel %vm866, %v4345, 0
  %v4684 = vsel %vm866, %v4346, 0
  %4686 = vmatpush.msra.mxu0 0.0
  %4687 = vmatpush.msra.mxu0 0.0
  %4688 = vmatpush.msra.mxu0 0.0
  %4689 = vmatpush.msra.mxu0 0.0
  %4690 = vmatpush.msra.mxu0 0.0
  %4691 = vmatpush.msra.mxu0 0.0
  %4692 = vmatpush.msra.mxu0 0.0
  %4693 = vmatpush.msra.mxu0 0.0
  %4694 = vmatpush.msra.mxu0 0.0
  %4695 = vmatpush.msra.mxu0 0.0
  %4696 = vmatpush.msra.mxu0 0.0
  %4697 = vmatpush.msra.mxu0 0.0
  %4698 = vmatpush.msra.mxu0 0.0
  %4699 = vmatpush.msra.mxu0 0.0
  %4700 = vmatpush.msra.mxu0 %v4677
  %4701 = vmatpush.msra.mxu0 %v4675
  %4702 = vmatmul.f32.gmra.mxu0 %v4681
  %v4703 = vpop.f32.mrf.mxu0
  %v4704 = vadd.f32 0.0, %v4703
  %4705 = vmatmul.f32.gmra.mxu0 %v4684
  %v4706 = vpop.f32.mrf.mxu0
  %v4707 = vadd.f32 0.0, %v4706
  %4708 = vdwg.mxu0
  %4709 = vrot.lane.b32.xlu0 %v140, 48
  %v4710 = vpop.permute.xlu0 %4709
  %4711 = vrot.lane.b32.xlu0 %v143, 48
  %v4712 = vpop.permute.xlu0 %4711
  %v4716 = vsel %vm866, %v4347, 0
  %v4719 = vsel %vm866, %v4348, 0
  %4721 = vmatpush.msra.mxu0 0.0
  %4722 = vmatpush.msra.mxu0 0.0
  %4723 = vmatpush.msra.mxu0 0.0
  %4724 = vmatpush.msra.mxu0 0.0
  %4725 = vmatpush.msra.mxu0 0.0
  %4726 = vmatpush.msra.mxu0 0.0
  %4727 = vmatpush.msra.mxu0 0.0
  %4728 = vmatpush.msra.mxu0 0.0
  %4729 = vmatpush.msra.mxu0 0.0
  %4730 = vmatpush.msra.mxu0 0.0
  %4731 = vmatpush.msra.mxu0 0.0
  %4732 = vmatpush.msra.mxu0 0.0
  %4733 = vmatpush.msra.mxu0 0.0
  %4734 = vmatpush.msra.mxu0 0.0
  %4735 = vmatpush.msra.mxu0 %v4712
  %4736 = vmatpush.msra.mxu0 %v4710
  %4737 = vmatmul.f32.gmra.mxu0 %v4716
  %v4738 = vpop.f32.mrf.mxu0
  %v4739 = vadd.f32 0.0, %v4738
  %4740 = vmatmul.f32.gmra.mxu0 %v4719
  %v4741 = vpop.f32.mrf.mxu0
  %v4742 = vadd.f32 0.0, %v4741
  %4743 = vdwg.mxu0
  %4744 = vrot.lane.b32.xlu0 %v146, 48
  %v4745 = vpop.permute.xlu0 %4744
  %4746 = vrot.lane.b32.xlu0 %v149, 48
  %v4747 = vpop.permute.xlu0 %4746
  %v4751 = vsel %vm866, %v4349, 0
  %v4754 = vsel %vm866, %v4350, 0
  %4756 = vmatpush.msra.mxu0 0.0
  %4757 = vmatpush.msra.mxu0 0.0
  %4758 = vmatpush.msra.mxu0 0.0
  %4759 = vmatpush.msra.mxu0 0.0
  %4760 = vmatpush.msra.mxu0 0.0
  %4761 = vmatpush.msra.mxu0 0.0
  %4762 = vmatpush.msra.mxu0 0.0
  %4763 = vmatpush.msra.mxu0 0.0
  %4764 = vmatpush.msra.mxu0 0.0
  %4765 = vmatpush.msra.mxu0 0.0
  %4766 = vmatpush.msra.mxu0 0.0
  %4767 = vmatpush.msra.mxu0 0.0
  %4768 = vmatpush.msra.mxu0 0.0
  %4769 = vmatpush.msra.mxu0 0.0
  %4770 = vmatpush.msra.mxu0 %v4747
  %4771 = vmatpush.msra.mxu0 %v4745
  %4772 = vmatmul.f32.gmra.mxu0 %v4751
  %v4773 = vpop.f32.mrf.mxu0
  %v4774 = vadd.f32 0.0, %v4773
  %4775 = vmatmul.f32.gmra.mxu0 %v4754
  %v4776 = vpop.f32.mrf.mxu0
  %v4777 = vadd.f32 0.0, %v4776
  %4778 = vdwg.mxu0
  %4779 = vrot.lane.b32.xlu0 %v152, 48
  %v4780 = vpop.permute.xlu0 %4779
  %4781 = vrot.lane.b32.xlu0 %v155, 48
  %v4782 = vpop.permute.xlu0 %4781
  %v4786 = vsel %vm866, %v4351, 0
  %v4789 = vsel %vm866, %v4352, 0
  %4791 = vmatpush.msra.mxu0 0.0
  %4792 = vmatpush.msra.mxu0 0.0
  %4793 = vmatpush.msra.mxu0 0.0
  %4794 = vmatpush.msra.mxu0 0.0
  %4795 = vmatpush.msra.mxu0 0.0
  %4796 = vmatpush.msra.mxu0 0.0
  %4797 = vmatpush.msra.mxu0 0.0
  %4798 = vmatpush.msra.mxu0 0.0
  %4799 = vmatpush.msra.mxu0 0.0
  %4800 = vmatpush.msra.mxu0 0.0
  %4801 = vmatpush.msra.mxu0 0.0
  %4802 = vmatpush.msra.mxu0 0.0
  %4803 = vmatpush.msra.mxu0 0.0
  %4804 = vmatpush.msra.mxu0 0.0
  %4805 = vmatpush.msra.mxu0 %v4782
  %4806 = vmatpush.msra.mxu0 %v4780
  %4807 = vmatmul.f32.gmra.mxu0 %v4786
  %v4808 = vpop.f32.mrf.mxu0
  %v4809 = vadd.f32 0.0, %v4808
  %4810 = vmatmul.f32.gmra.mxu0 %v4789
  %v4811 = vpop.f32.mrf.mxu0
  %v4812 = vadd.f32 0.0, %v4811
  %4813 = vdwg.mxu0
  %4814 = vrot.lane.b32.xlu0 %v158, 48
  %v4815 = vpop.permute.xlu0 %4814
  %4816 = vrot.lane.b32.xlu0 %v161, 48
  %v4817 = vpop.permute.xlu0 %4816
  %v4821 = vsel %vm866, %v4353, 0
  %v4824 = vsel %vm866, %v4354, 0
  %4826 = vmatpush.msra.mxu0 0.0
  %4827 = vmatpush.msra.mxu0 0.0
  %4828 = vmatpush.msra.mxu0 0.0
  %4829 = vmatpush.msra.mxu0 0.0
  %4830 = vmatpush.msra.mxu0 0.0
  %4831 = vmatpush.msra.mxu0 0.0
  %4832 = vmatpush.msra.mxu0 0.0
  %4833 = vmatpush.msra.mxu0 0.0
  %4834 = vmatpush.msra.mxu0 0.0
  %4835 = vmatpush.msra.mxu0 0.0
  %4836 = vmatpush.msra.mxu0 0.0
  %4837 = vmatpush.msra.mxu0 0.0
  %4838 = vmatpush.msra.mxu0 0.0
  %4839 = vmatpush.msra.mxu0 0.0
  %4840 = vmatpush.msra.mxu0 %v4817
  %4841 = vmatpush.msra.mxu0 %v4815
  %4842 = vmatmul.f32.gmra.mxu0 %v4821
  %v4843 = vpop.f32.mrf.mxu0
  %v4844 = vadd.f32 0.0, %v4843
  %4845 = vmatmul.f32.gmra.mxu0 %v4824
  %v4846 = vpop.f32.mrf.mxu0
  %v4847 = vadd.f32 0.0, %v4846
  %4848 = vdwg.mxu0
  %4849 = vrot.lane.b32.xlu0 %v164, 48
  %v4850 = vpop.permute.xlu0 %4849
  %4851 = vrot.lane.b32.xlu0 %v167, 48
  %v4852 = vpop.permute.xlu0 %4851
  %v4856 = vsel %vm866, %v4355, 0
  %v4859 = vsel %vm866, %v4356, 0
  %4861 = vmatpush.msra.mxu0 0.0
  %4862 = vmatpush.msra.mxu0 0.0
  %4863 = vmatpush.msra.mxu0 0.0
  %4864 = vmatpush.msra.mxu0 0.0
  %4865 = vmatpush.msra.mxu0 0.0
  %4866 = vmatpush.msra.mxu0 0.0
  %4867 = vmatpush.msra.mxu0 0.0
  %4868 = vmatpush.msra.mxu0 0.0
  %4869 = vmatpush.msra.mxu0 0.0
  %4870 = vmatpush.msra.mxu0 0.0
  %4871 = vmatpush.msra.mxu0 0.0
  %4872 = vmatpush.msra.mxu0 0.0
  %4873 = vmatpush.msra.mxu0 0.0
  %4874 = vmatpush.msra.mxu0 0.0
  %4875 = vmatpush.msra.mxu0 %v4852
  %4876 = vmatpush.msra.mxu0 %v4850
  %4877 = vmatmul.f32.gmra.mxu0 %v4856
  %v4878 = vpop.f32.mrf.mxu0
  %v4879 = vadd.f32 0.0, %v4878
  %4880 = vmatmul.f32.gmra.mxu0 %v4859
  %v4881 = vpop.f32.mrf.mxu0
  %v4882 = vadd.f32 0.0, %v4881
  %4883 = vdwg.mxu0
  %4884 = vrot.lane.b32.xlu0 %v170, 48
  %v4885 = vpop.permute.xlu0 %4884
  %4886 = vrot.lane.b32.xlu0 %v173, 48
  %v4887 = vpop.permute.xlu0 %4886
  %v4891 = vsel %vm866, %v4357, 0
  %v4894 = vsel %vm866, %v4358, 0
  %4896 = vmatpush.msra.mxu0 0.0
  %4897 = vmatpush.msra.mxu0 0.0
  %4898 = vmatpush.msra.mxu0 0.0
  %4899 = vmatpush.msra.mxu0 0.0
  %4900 = vmatpush.msra.mxu0 0.0
  %4901 = vmatpush.msra.mxu0 0.0
  %4902 = vmatpush.msra.mxu0 0.0
  %4903 = vmatpush.msra.mxu0 0.0
  %4904 = vmatpush.msra.mxu0 0.0
  %4905 = vmatpush.msra.mxu0 0.0
  %4906 = vmatpush.msra.mxu0 0.0
  %4907 = vmatpush.msra.mxu0 0.0
  %4908 = vmatpush.msra.mxu0 0.0
  %4909 = vmatpush.msra.mxu0 0.0
  %4910 = vmatpush.msra.mxu0 %v4887
  %4911 = vmatpush.msra.mxu0 %v4885
  %4912 = vmatmul.f32.gmra.mxu0 %v4891
  %v4913 = vpop.f32.mrf.mxu0
  %v4914 = vadd.f32 0.0, %v4913
  %4915 = vmatmul.f32.gmra.mxu0 %v4894
  %v4916 = vpop.f32.mrf.mxu0
  %v4917 = vadd.f32 0.0, %v4916
  %4918 = vdwg.mxu0
  %s4919 = scalar_lea.vmem %s3, 384
  %v4920 = vld [vmem:[%s4919] sm:$0xff]
  %v4921 = vld [vmem:[%s4919 + $0x8] sm:$0xff]
  %v4922 = vld [vmem:[%s4919 + $0x10] sm:$0xff]
  %v4923 = vld [vmem:[%s4919 + $0x18] sm:$0xff]
  %v4924 = vld [vmem:[%s4919 + $0x20] sm:$0xff]
  %v4925 = vld [vmem:[%s4919 + $0x28] sm:$0xff]
  %v4926 = vld [vmem:[%s4919 + $0x30] sm:$0xff]
  %v4927 = vld [vmem:[%s4919 + $0x38] sm:$0xff]
  %v4928 = vld [vmem:[%s4919 + $0x40] sm:$0xff]
  %v4929 = vld [vmem:[%s4919 + $0x48] sm:$0xff]
  %v4930 = vld [vmem:[%s4919 + $0x50] sm:$0xff]
  %v4931 = vld [vmem:[%s4919 + $0x58] sm:$0xff]
  %v4932 = vld [vmem:[%s4919 + $0x60] sm:$0xff]
  %v4933 = vld [vmem:[%s4919 + $0x68] sm:$0xff]
  %v4934 = vld [vmem:[%s4919 + $0x70] sm:$0xff]
  %v4935 = vld [vmem:[%s4919 + $0x78] sm:$0xff]
  %4936 = vrot.lane.b32.xlu0 %v128, 104
  %v4937 = vpop.permute.xlu0 %4936
  %4938 = vrot.lane.b32.xlu0 %v131, 104
  %v4939 = vpop.permute.xlu0 %4938
  %4940 = vrot.lane.b32.xlu0 %v193, 104
  %v4941 = vpop.permute.xlu0 %4940
  %4942 = vrot.lane.b32.xlu0 %v196, 104
  %v4943 = vpop.permute.xlu0 %4942
  %v4944 = vsel %vm256, %v4937, 0
  %v4946 = vsel %vm256, %v4939, 0
  %v4948 = vsel %vm256, %v4941, 0
  %v4950 = vsel %vm256, %v4943, 0
  %4952 = vmatpush.xpose.msra.mxu0 0.0
  %4953 = vmatpush.xpose.msra.mxu0 0.0
  %4954 = vmatpush.xpose.msra.mxu0 0.0
  %4955 = vmatpush.xpose.msra.mxu0 0.0
  %4956 = vmatpush.xpose.msra.mxu0 0.0
  %4957 = vmatpush.xpose.msra.mxu0 0.0
  %4958 = vmatpush.xpose.msra.mxu0 0.0
  %4959 = vmatpush.xpose.msra.mxu0 0.0
  %4960 = vmatpush.xpose.msra.mxu0 0.0
  %4961 = vmatpush.xpose.msra.mxu0 0.0
  %4962 = vmatpush.xpose.msra.mxu0 0.0
  %4963 = vmatpush.xpose.msra.mxu0 0.0
  %4964 = vmatpush.xpose.msra.mxu0 0.0
  %4965 = vmatpush.xpose.msra.mxu0 0.0
  %4966 = vmatpush.xpose.msra.mxu0 %v4950
  %4967 = vmatpush.xpose.msra.mxu0 %v4948
  %4968 = vmatmul.f32.gmra.mxu0 %v4944
  %v4969 = vpop.f32.mrf.mxu0
  %v4970 = vadd.f32 %v4920, %v4969
  %4971 = vmatmul.f32.gmra.mxu0 %v4946
  %v4972 = vpop.f32.mrf.mxu0
  %v4973 = vadd.f32 %v4921, %v4972
  %4974 = vdwg.mxu0
  %4975 = vrot.lane.b32.xlu0 %v134, 104
  %v4976 = vpop.permute.xlu0 %4975
  %4977 = vrot.lane.b32.xlu0 %v137, 104
  %v4978 = vpop.permute.xlu0 %4977
  %4979 = vrot.lane.b32.xlu0 %v199, 104
  %v4980 = vpop.permute.xlu0 %4979
  %4981 = vrot.lane.b32.xlu0 %v202, 104
  %v4982 = vpop.permute.xlu0 %4981
  %v4983 = vsel %vm256, %v4976, 0
  %v4985 = vsel %vm256, %v4978, 0
  %v4987 = vsel %vm256, %v4980, 0
  %v4989 = vsel %vm256, %v4982, 0
  %4991 = vmatpush.xpose.msra.mxu0 0.0
  %4992 = vmatpush.xpose.msra.mxu0 0.0
  %4993 = vmatpush.xpose.msra.mxu0 0.0
  %4994 = vmatpush.xpose.msra.mxu0 0.0
  %4995 = vmatpush.xpose.msra.mxu0 0.0
  %4996 = vmatpush.xpose.msra.mxu0 0.0
  %4997 = vmatpush.xpose.msra.mxu0 0.0
  %4998 = vmatpush.xpose.msra.mxu0 0.0
  %4999 = vmatpush.xpose.msra.mxu0 0.0
  %5000 = vmatpush.xpose.msra.mxu0 0.0
  %5001 = vmatpush.xpose.msra.mxu0 0.0
  %5002 = vmatpush.xpose.msra.mxu0 0.0
  %5003 = vmatpush.xpose.msra.mxu0 0.0
  %5004 = vmatpush.xpose.msra.mxu0 0.0
  %5005 = vmatpush.xpose.msra.mxu0 %v4989
  %5006 = vmatpush.xpose.msra.mxu0 %v4987
  %5007 = vmatmul.f32.gmra.mxu0 %v4983
  %v5008 = vpop.f32.mrf.mxu0
  %v5009 = vadd.f32 %v4922, %v5008
  %5010 = vmatmul.f32.gmra.mxu0 %v4985
  %v5011 = vpop.f32.mrf.mxu0
  %v5012 = vadd.f32 %v4923, %v5011
  %5013 = vdwg.mxu0
  %5014 = vrot.lane.b32.xlu0 %v140, 104
  %v5015 = vpop.permute.xlu0 %5014
  %5016 = vrot.lane.b32.xlu0 %v143, 104
  %v5017 = vpop.permute.xlu0 %5016
  %5018 = vrot.lane.b32.xlu0 %v205, 104
  %v5019 = vpop.permute.xlu0 %5018
  %5020 = vrot.lane.b32.xlu0 %v208, 104
  %v5021 = vpop.permute.xlu0 %5020
  %v5022 = vsel %vm256, %v5015, 0
  %v5024 = vsel %vm256, %v5017, 0
  %v5026 = vsel %vm256, %v5019, 0
  %v5028 = vsel %vm256, %v5021, 0
  %5030 = vmatpush.xpose.msra.mxu0 0.0
  %5031 = vmatpush.xpose.msra.mxu0 0.0
  %5032 = vmatpush.xpose.msra.mxu0 0.0
  %5033 = vmatpush.xpose.msra.mxu0 0.0
  %5034 = vmatpush.xpose.msra.mxu0 0.0
  %5035 = vmatpush.xpose.msra.mxu0 0.0
  %5036 = vmatpush.xpose.msra.mxu0 0.0
  %5037 = vmatpush.xpose.msra.mxu0 0.0
  %5038 = vmatpush.xpose.msra.mxu0 0.0
  %5039 = vmatpush.xpose.msra.mxu0 0.0
  %5040 = vmatpush.xpose.msra.mxu0 0.0
  %5041 = vmatpush.xpose.msra.mxu0 0.0
  %5042 = vmatpush.xpose.msra.mxu0 0.0
  %5043 = vmatpush.xpose.msra.mxu0 0.0
  %5044 = vmatpush.xpose.msra.mxu0 %v5028
  %5045 = vmatpush.xpose.msra.mxu0 %v5026
  %5046 = vmatmul.f32.gmra.mxu0 %v5022
  %v5047 = vpop.f32.mrf.mxu0
  %v5048 = vadd.f32 %v4924, %v5047
  %5049 = vmatmul.f32.gmra.mxu0 %v5024
  %v5050 = vpop.f32.mrf.mxu0
  %v5051 = vadd.f32 %v4925, %v5050
  %5052 = vdwg.mxu0
  %5053 = vrot.lane.b32.xlu0 %v146, 104
  %v5054 = vpop.permute.xlu0 %5053
  %5055 = vrot.lane.b32.xlu0 %v149, 104
  %v5056 = vpop.permute.xlu0 %5055
  %5057 = vrot.lane.b32.xlu0 %v211, 104
  %v5058 = vpop.permute.xlu0 %5057
  %5059 = vrot.lane.b32.xlu0 %v214, 104
  %v5060 = vpop.permute.xlu0 %5059
  %v5061 = vsel %vm256, %v5054, 0
  %v5063 = vsel %vm256, %v5056, 0
  %v5065 = vsel %vm256, %v5058, 0
  %v5067 = vsel %vm256, %v5060, 0
  %5069 = vmatpush.xpose.msra.mxu0 0.0
  %5070 = vmatpush.xpose.msra.mxu0 0.0
  %5071 = vmatpush.xpose.msra.mxu0 0.0
  %5072 = vmatpush.xpose.msra.mxu0 0.0
  %5073 = vmatpush.xpose.msra.mxu0 0.0
  %5074 = vmatpush.xpose.msra.mxu0 0.0
  %5075 = vmatpush.xpose.msra.mxu0 0.0
  %5076 = vmatpush.xpose.msra.mxu0 0.0
  %5077 = vmatpush.xpose.msra.mxu0 0.0
  %5078 = vmatpush.xpose.msra.mxu0 0.0
  %5079 = vmatpush.xpose.msra.mxu0 0.0
  %5080 = vmatpush.xpose.msra.mxu0 0.0
  %5081 = vmatpush.xpose.msra.mxu0 0.0
  %5082 = vmatpush.xpose.msra.mxu0 0.0
  %5083 = vmatpush.xpose.msra.mxu0 %v5067
  %5084 = vmatpush.xpose.msra.mxu0 %v5065
  %5085 = vmatmul.f32.gmra.mxu0 %v5061
  %v5086 = vpop.f32.mrf.mxu0
  %v5087 = vadd.f32 %v4926, %v5086
  %5088 = vmatmul.f32.gmra.mxu0 %v5063
  %v5089 = vpop.f32.mrf.mxu0
  %v5090 = vadd.f32 %v4927, %v5089
  %5091 = vdwg.mxu0
  %5092 = vrot.lane.b32.xlu0 %v152, 104
  %v5093 = vpop.permute.xlu0 %5092
  %5094 = vrot.lane.b32.xlu0 %v155, 104
  %v5095 = vpop.permute.xlu0 %5094
  %5096 = vrot.lane.b32.xlu0 %v217, 104
  %v5097 = vpop.permute.xlu0 %5096
  %5098 = vrot.lane.b32.xlu0 %v220, 104
  %v5099 = vpop.permute.xlu0 %5098
  %v5100 = vsel %vm256, %v5093, 0
  %v5102 = vsel %vm256, %v5095, 0
  %v5104 = vsel %vm256, %v5097, 0
  %v5106 = vsel %vm256, %v5099, 0
  %5108 = vmatpush.xpose.msra.mxu0 0.0
  %5109 = vmatpush.xpose.msra.mxu0 0.0
  %5110 = vmatpush.xpose.msra.mxu0 0.0
  %5111 = vmatpush.xpose.msra.mxu0 0.0
  %5112 = vmatpush.xpose.msra.mxu0 0.0
  %5113 = vmatpush.xpose.msra.mxu0 0.0
  %5114 = vmatpush.xpose.msra.mxu0 0.0
  %5115 = vmatpush.xpose.msra.mxu0 0.0
  %5116 = vmatpush.xpose.msra.mxu0 0.0
  %5117 = vmatpush.xpose.msra.mxu0 0.0
  %5118 = vmatpush.xpose.msra.mxu0 0.0
  %5119 = vmatpush.xpose.msra.mxu0 0.0
  %5120 = vmatpush.xpose.msra.mxu0 0.0
  %5121 = vmatpush.xpose.msra.mxu0 0.0
  %5122 = vmatpush.xpose.msra.mxu0 %v5106
  %5123 = vmatpush.xpose.msra.mxu0 %v5104
  %5124 = vmatmul.f32.gmra.mxu0 %v5100
  %v5125 = vpop.f32.mrf.mxu0
  %v5126 = vadd.f32 %v4928, %v5125
  %5127 = vmatmul.f32.gmra.mxu0 %v5102
  %v5128 = vpop.f32.mrf.mxu0
  %v5129 = vadd.f32 %v4929, %v5128
  %5130 = vdwg.mxu0
  %5131 = vrot.lane.b32.xlu0 %v158, 104
  %v5132 = vpop.permute.xlu0 %5131
  %5133 = vrot.lane.b32.xlu0 %v161, 104
  %v5134 = vpop.permute.xlu0 %5133
  %5135 = vrot.lane.b32.xlu0 %v223, 104
  %v5136 = vpop.permute.xlu0 %5135
  %5137 = vrot.lane.b32.xlu0 %v226, 104
  %v5138 = vpop.permute.xlu0 %5137
  %v5139 = vsel %vm256, %v5132, 0
  %v5141 = vsel %vm256, %v5134, 0
  %v5143 = vsel %vm256, %v5136, 0
  %v5145 = vsel %vm256, %v5138, 0
  %5147 = vmatpush.xpose.msra.mxu0 0.0
  %5148 = vmatpush.xpose.msra.mxu0 0.0
  %5149 = vmatpush.xpose.msra.mxu0 0.0
  %5150 = vmatpush.xpose.msra.mxu0 0.0
  %5151 = vmatpush.xpose.msra.mxu0 0.0
  %5152 = vmatpush.xpose.msra.mxu0 0.0
  %5153 = vmatpush.xpose.msra.mxu0 0.0
  %5154 = vmatpush.xpose.msra.mxu0 0.0
  %5155 = vmatpush.xpose.msra.mxu0 0.0
  %5156 = vmatpush.xpose.msra.mxu0 0.0
  %5157 = vmatpush.xpose.msra.mxu0 0.0
  %5158 = vmatpush.xpose.msra.mxu0 0.0
  %5159 = vmatpush.xpose.msra.mxu0 0.0
  %5160 = vmatpush.xpose.msra.mxu0 0.0
  %5161 = vmatpush.xpose.msra.mxu0 %v5145
  %5162 = vmatpush.xpose.msra.mxu0 %v5143
  %5163 = vmatmul.f32.gmra.mxu0 %v5139
  %v5164 = vpop.f32.mrf.mxu0
  %v5165 = vadd.f32 %v4930, %v5164
  %5166 = vmatmul.f32.gmra.mxu0 %v5141
  %v5167 = vpop.f32.mrf.mxu0
  %v5168 = vadd.f32 %v4931, %v5167
  %5169 = vdwg.mxu0
  %5170 = vrot.lane.b32.xlu0 %v164, 104
  %v5171 = vpop.permute.xlu0 %5170
  %5172 = vrot.lane.b32.xlu0 %v167, 104
  %v5173 = vpop.permute.xlu0 %5172
  %5174 = vrot.lane.b32.xlu0 %v229, 104
  %v5175 = vpop.permute.xlu0 %5174
  %5176 = vrot.lane.b32.xlu0 %v232, 104
  %v5177 = vpop.permute.xlu0 %5176
  %v5178 = vsel %vm256, %v5171, 0
  %v5180 = vsel %vm256, %v5173, 0
  %v5182 = vsel %vm256, %v5175, 0
  %v5184 = vsel %vm256, %v5177, 0
  %5186 = vmatpush.xpose.msra.mxu0 0.0
  %5187 = vmatpush.xpose.msra.mxu0 0.0
  %5188 = vmatpush.xpose.msra.mxu0 0.0
  %5189 = vmatpush.xpose.msra.mxu0 0.0
  %5190 = vmatpush.xpose.msra.mxu0 0.0
  %5191 = vmatpush.xpose.msra.mxu0 0.0
  %5192 = vmatpush.xpose.msra.mxu0 0.0
  %5193 = vmatpush.xpose.msra.mxu0 0.0
  %5194 = vmatpush.xpose.msra.mxu0 0.0
  %5195 = vmatpush.xpose.msra.mxu0 0.0
  %5196 = vmatpush.xpose.msra.mxu0 0.0
  %5197 = vmatpush.xpose.msra.mxu0 0.0
  %5198 = vmatpush.xpose.msra.mxu0 0.0
  %5199 = vmatpush.xpose.msra.mxu0 0.0
  %5200 = vmatpush.xpose.msra.mxu0 %v5184
  %5201 = vmatpush.xpose.msra.mxu0 %v5182
  %5202 = vmatmul.f32.gmra.mxu0 %v5178
  %v5203 = vpop.f32.mrf.mxu0
  %v5204 = vadd.f32 %v4932, %v5203
  %5205 = vmatmul.f32.gmra.mxu0 %v5180
  %v5206 = vpop.f32.mrf.mxu0
  %v5207 = vadd.f32 %v4933, %v5206
  %5208 = vdwg.mxu0
  %5209 = vrot.lane.b32.xlu0 %v170, 104
  %v5210 = vpop.permute.xlu0 %5209
  %5211 = vrot.lane.b32.xlu0 %v173, 104
  %v5212 = vpop.permute.xlu0 %5211
  %5213 = vrot.lane.b32.xlu0 %v235, 104
  %v5214 = vpop.permute.xlu0 %5213
  %5215 = vrot.lane.b32.xlu0 %v238, 104
  %v5216 = vpop.permute.xlu0 %5215
  %v5217 = vsel %vm256, %v5210, 0
  %v5219 = vsel %vm256, %v5212, 0
  %v5221 = vsel %vm256, %v5214, 0
  %v5223 = vsel %vm256, %v5216, 0
  %5225 = vmatpush.xpose.msra.mxu0 0.0
  %5226 = vmatpush.xpose.msra.mxu0 0.0
  %5227 = vmatpush.xpose.msra.mxu0 0.0
  %5228 = vmatpush.xpose.msra.mxu0 0.0
  %5229 = vmatpush.xpose.msra.mxu0 0.0
  %5230 = vmatpush.xpose.msra.mxu0 0.0
  %5231 = vmatpush.xpose.msra.mxu0 0.0
  %5232 = vmatpush.xpose.msra.mxu0 0.0
  %5233 = vmatpush.xpose.msra.mxu0 0.0
  %5234 = vmatpush.xpose.msra.mxu0 0.0
  %5235 = vmatpush.xpose.msra.mxu0 0.0
  %5236 = vmatpush.xpose.msra.mxu0 0.0
  %5237 = vmatpush.xpose.msra.mxu0 0.0
  %5238 = vmatpush.xpose.msra.mxu0 0.0
  %5239 = vmatpush.xpose.msra.mxu0 %v5223
  %5240 = vmatpush.xpose.msra.mxu0 %v5221
  %5241 = vmatmul.f32.gmra.mxu0 %v5217
  %v5242 = vpop.f32.mrf.mxu0
  %v5243 = vadd.f32 %v4934, %v5242
  %5244 = vmatmul.f32.gmra.mxu0 %v5219
  %v5245 = vpop.f32.mrf.mxu0
  %v5246 = vadd.f32 %v4935, %v5245
  %5247 = vdwg.mxu0
  %s5248 = scalar_lea.vmem %s3, 896
  %v5249 = vld [vmem:[%s5248] sm:$0xff]
  %v5250 = vld [vmem:[%s5248 + $0x8] sm:$0xff]
  %v5251 = vld [vmem:[%s5248 + $0x10] sm:$0xff]
  %v5252 = vld [vmem:[%s5248 + $0x18] sm:$0xff]
  %v5253 = vld [vmem:[%s5248 + $0x20] sm:$0xff]
  %v5254 = vld [vmem:[%s5248 + $0x28] sm:$0xff]
  %v5255 = vld [vmem:[%s5248 + $0x30] sm:$0xff]
  %v5256 = vld [vmem:[%s5248 + $0x38] sm:$0xff]
  %v5257 = vld [vmem:[%s5248 + $0x40] sm:$0xff]
  %v5258 = vld [vmem:[%s5248 + $0x48] sm:$0xff]
  %v5259 = vld [vmem:[%s5248 + $0x50] sm:$0xff]
  %v5260 = vld [vmem:[%s5248 + $0x58] sm:$0xff]
  %v5261 = vld [vmem:[%s5248 + $0x60] sm:$0xff]
  %v5262 = vld [vmem:[%s5248 + $0x68] sm:$0xff]
  %v5263 = vld [vmem:[%s5248 + $0x70] sm:$0xff]
  %v5264 = vld [vmem:[%s5248 + $0x78] sm:$0xff]
  %5265 = vrot.lane.b32.xlu0 %v128, 8
  %v5266 = vpop.permute.xlu0 %5265
  %5267 = vrot.lane.b32.xlu0 %v131, 8
  %v5268 = vpop.permute.xlu0 %5267
  %5269 = vrot.lane.b32.xlu0 %v128, 72
  %v5270 = vpop.permute.xlu0 %5269
  %5271 = vrot.lane.b32.xlu0 %v131, 72
  %v5272 = vpop.permute.xlu0 %5271
  %v5273 = vsel %vm256, %v5266, 0
  %v5275 = vsel %vm256, %v5268, 0
  %v5277 = vsel %vm256, %v5270, 0
  %v5279 = vsel %vm256, %v5272, 0
  %5281 = vmatpush.xpose.msra.mxu0 0.0
  %5282 = vmatpush.xpose.msra.mxu0 0.0
  %5283 = vmatpush.xpose.msra.mxu0 0.0
  %5284 = vmatpush.xpose.msra.mxu0 0.0
  %5285 = vmatpush.xpose.msra.mxu0 0.0
  %5286 = vmatpush.xpose.msra.mxu0 0.0
  %5287 = vmatpush.xpose.msra.mxu0 0.0
  %5288 = vmatpush.xpose.msra.mxu0 0.0
  %5289 = vmatpush.xpose.msra.mxu0 0.0
  %5290 = vmatpush.xpose.msra.mxu0 0.0
  %5291 = vmatpush.xpose.msra.mxu0 0.0
  %5292 = vmatpush.xpose.msra.mxu0 0.0
  %5293 = vmatpush.xpose.msra.mxu0 0.0
  %5294 = vmatpush.xpose.msra.mxu0 0.0
  %5295 = vmatpush.xpose.msra.mxu0 %v5279
  %5296 = vmatpush.xpose.msra.mxu0 %v5277
  %5297 = vmatmul.f32.gmra.mxu0 %v5273
  %v5298 = vpop.f32.mrf.mxu0
  %v5299 = vadd.f32 %v5249, %v5298
  %5300 = vmatmul.f32.gmra.mxu0 %v5275
  %v5301 = vpop.f32.mrf.mxu0
  %v5302 = vadd.f32 %v5250, %v5301
  %5303 = vdwg.mxu0
  %5304 = vrot.lane.b32.xlu0 %v134, 8
  %v5305 = vpop.permute.xlu0 %5304
  %5306 = vrot.lane.b32.xlu0 %v137, 8
  %v5307 = vpop.permute.xlu0 %5306
  %5308 = vrot.lane.b32.xlu0 %v134, 72
  %v5309 = vpop.permute.xlu0 %5308
  %5310 = vrot.lane.b32.xlu0 %v137, 72
  %v5311 = vpop.permute.xlu0 %5310
  %v5312 = vsel %vm256, %v5305, 0
  %v5314 = vsel %vm256, %v5307, 0
  %v5316 = vsel %vm256, %v5309, 0
  %v5318 = vsel %vm256, %v5311, 0
  %5320 = vmatpush.xpose.msra.mxu0 0.0
  %5321 = vmatpush.xpose.msra.mxu0 0.0
  %5322 = vmatpush.xpose.msra.mxu0 0.0
  %5323 = vmatpush.xpose.msra.mxu0 0.0
  %5324 = vmatpush.xpose.msra.mxu0 0.0
  %5325 = vmatpush.xpose.msra.mxu0 0.0
  %5326 = vmatpush.xpose.msra.mxu0 0.0
  %5327 = vmatpush.xpose.msra.mxu0 0.0
  %5328 = vmatpush.xpose.msra.mxu0 0.0
  %5329 = vmatpush.xpose.msra.mxu0 0.0
  %5330 = vmatpush.xpose.msra.mxu0 0.0
  %5331 = vmatpush.xpose.msra.mxu0 0.0
  %5332 = vmatpush.xpose.msra.mxu0 0.0
  %5333 = vmatpush.xpose.msra.mxu0 0.0
  %5334 = vmatpush.xpose.msra.mxu0 %v5318
  %5335 = vmatpush.xpose.msra.mxu0 %v5316
  %5336 = vmatmul.f32.gmra.mxu0 %v5312
  %v5337 = vpop.f32.mrf.mxu0
  %v5338 = vadd.f32 %v5251, %v5337
  %5339 = vmatmul.f32.gmra.mxu0 %v5314
  %v5340 = vpop.f32.mrf.mxu0
  %v5341 = vadd.f32 %v5252, %v5340
  %5342 = vdwg.mxu0
  %5343 = vrot.lane.b32.xlu0 %v140, 8
  %v5344 = vpop.permute.xlu0 %5343
  %5345 = vrot.lane.b32.xlu0 %v143, 8
  %v5346 = vpop.permute.xlu0 %5345
  %5347 = vrot.lane.b32.xlu0 %v140, 72
  %v5348 = vpop.permute.xlu0 %5347
  %5349 = vrot.lane.b32.xlu0 %v143, 72
  %v5350 = vpop.permute.xlu0 %5349
  %v5351 = vsel %vm256, %v5344, 0
  %v5353 = vsel %vm256, %v5346, 0
  %v5355 = vsel %vm256, %v5348, 0
  %v5357 = vsel %vm256, %v5350, 0
  %5359 = vmatpush.xpose.msra.mxu0 0.0
  %5360 = vmatpush.xpose.msra.mxu0 0.0
  %5361 = vmatpush.xpose.msra.mxu0 0.0
  %5362 = vmatpush.xpose.msra.mxu0 0.0
  %5363 = vmatpush.xpose.msra.mxu0 0.0
  %5364 = vmatpush.xpose.msra.mxu0 0.0
  %5365 = vmatpush.xpose.msra.mxu0 0.0
  %5366 = vmatpush.xpose.msra.mxu0 0.0
  %5367 = vmatpush.xpose.msra.mxu0 0.0
  %5368 = vmatpush.xpose.msra.mxu0 0.0
  %5369 = vmatpush.xpose.msra.mxu0 0.0
  %5370 = vmatpush.xpose.msra.mxu0 0.0
  %5371 = vmatpush.xpose.msra.mxu0 0.0
  %5372 = vmatpush.xpose.msra.mxu0 0.0
  %5373 = vmatpush.xpose.msra.mxu0 %v5357
  %5374 = vmatpush.xpose.msra.mxu0 %v5355
  %5375 = vmatmul.f32.gmra.mxu0 %v5351
  %v5376 = vpop.f32.mrf.mxu0
  %v5377 = vadd.f32 %v5253, %v5376
  %5378 = vmatmul.f32.gmra.mxu0 %v5353
  %v5379 = vpop.f32.mrf.mxu0
  %v5380 = vadd.f32 %v5254, %v5379
  %5381 = vdwg.mxu0
  %5382 = vrot.lane.b32.xlu0 %v146, 8
  %v5383 = vpop.permute.xlu0 %5382
  %5384 = vrot.lane.b32.xlu0 %v149, 8
  %v5385 = vpop.permute.xlu0 %5384
  %5386 = vrot.lane.b32.xlu0 %v146, 72
  %v5387 = vpop.permute.xlu0 %5386
  %5388 = vrot.lane.b32.xlu0 %v149, 72
  %v5389 = vpop.permute.xlu0 %5388
  %v5390 = vsel %vm256, %v5383, 0
  %v5392 = vsel %vm256, %v5385, 0
  %v5394 = vsel %vm256, %v5387, 0
  %v5396 = vsel %vm256, %v5389, 0
  %5398 = vmatpush.xpose.msra.mxu0 0.0
  %5399 = vmatpush.xpose.msra.mxu0 0.0
  %5400 = vmatpush.xpose.msra.mxu0 0.0
  %5401 = vmatpush.xpose.msra.mxu0 0.0
  %5402 = vmatpush.xpose.msra.mxu0 0.0
  %5403 = vmatpush.xpose.msra.mxu0 0.0
  %5404 = vmatpush.xpose.msra.mxu0 0.0
  %5405 = vmatpush.xpose.msra.mxu0 0.0
  %5406 = vmatpush.xpose.msra.mxu0 0.0
  %5407 = vmatpush.xpose.msra.mxu0 0.0
  %5408 = vmatpush.xpose.msra.mxu0 0.0
  %5409 = vmatpush.xpose.msra.mxu0 0.0
  %5410 = vmatpush.xpose.msra.mxu0 0.0
  %5411 = vmatpush.xpose.msra.mxu0 0.0
  %5412 = vmatpush.xpose.msra.mxu0 %v5396
  %5413 = vmatpush.xpose.msra.mxu0 %v5394
  %5414 = vmatmul.f32.gmra.mxu0 %v5390
  %v5415 = vpop.f32.mrf.mxu0
  %v5416 = vadd.f32 %v5255, %v5415
  %5417 = vmatmul.f32.gmra.mxu0 %v5392
  %v5418 = vpop.f32.mrf.mxu0
  %v5419 = vadd.f32 %v5256, %v5418
  %5420 = vdwg.mxu0
  %5421 = vrot.lane.b32.xlu0 %v152, 8
  %v5422 = vpop.permute.xlu0 %5421
  %5423 = vrot.lane.b32.xlu0 %v155, 8
  %v5424 = vpop.permute.xlu0 %5423
  %5425 = vrot.lane.b32.xlu0 %v152, 72
  %v5426 = vpop.permute.xlu0 %5425
  %5427 = vrot.lane.b32.xlu0 %v155, 72
  %v5428 = vpop.permute.xlu0 %5427
  %v5429 = vsel %vm256, %v5422, 0
  %v5431 = vsel %vm256, %v5424, 0
  %v5433 = vsel %vm256, %v5426, 0
  %v5435 = vsel %vm256, %v5428, 0
  %5437 = vmatpush.xpose.msra.mxu0 0.0
  %5438 = vmatpush.xpose.msra.mxu0 0.0
  %5439 = vmatpush.xpose.msra.mxu0 0.0
  %5440 = vmatpush.xpose.msra.mxu0 0.0
  %5441 = vmatpush.xpose.msra.mxu0 0.0
  %5442 = vmatpush.xpose.msra.mxu0 0.0
  %5443 = vmatpush.xpose.msra.mxu0 0.0
  %5444 = vmatpush.xpose.msra.mxu0 0.0
  %5445 = vmatpush.xpose.msra.mxu0 0.0
  %5446 = vmatpush.xpose.msra.mxu0 0.0
  %5447 = vmatpush.xpose.msra.mxu0 0.0
  %5448 = vmatpush.xpose.msra.mxu0 0.0
  %5449 = vmatpush.xpose.msra.mxu0 0.0
  %5450 = vmatpush.xpose.msra.mxu0 0.0
  %5451 = vmatpush.xpose.msra.mxu0 %v5435
  %5452 = vmatpush.xpose.msra.mxu0 %v5433
  %5453 = vmatmul.f32.gmra.mxu0 %v5429
  %v5454 = vpop.f32.mrf.mxu0
  %v5455 = vadd.f32 %v5257, %v5454
  %5456 = vmatmul.f32.gmra.mxu0 %v5431
  %v5457 = vpop.f32.mrf.mxu0
  %v5458 = vadd.f32 %v5258, %v5457
  %5459 = vdwg.mxu0
  %5460 = vrot.lane.b32.xlu0 %v158, 8
  %v5461 = vpop.permute.xlu0 %5460
  %5462 = vrot.lane.b32.xlu0 %v161, 8
  %v5463 = vpop.permute.xlu0 %5462
  %5464 = vrot.lane.b32.xlu0 %v158, 72
  %v5465 = vpop.permute.xlu0 %5464
  %5466 = vrot.lane.b32.xlu0 %v161, 72
  %v5467 = vpop.permute.xlu0 %5466
  %v5468 = vsel %vm256, %v5461, 0
  %v5470 = vsel %vm256, %v5463, 0
  %v5472 = vsel %vm256, %v5465, 0
  %v5474 = vsel %vm256, %v5467, 0
  %5476 = vmatpush.xpose.msra.mxu0 0.0
  %5477 = vmatpush.xpose.msra.mxu0 0.0
  %5478 = vmatpush.xpose.msra.mxu0 0.0
  %5479 = vmatpush.xpose.msra.mxu0 0.0
  %5480 = vmatpush.xpose.msra.mxu0 0.0
  %5481 = vmatpush.xpose.msra.mxu0 0.0
  %5482 = vmatpush.xpose.msra.mxu0 0.0
  %5483 = vmatpush.xpose.msra.mxu0 0.0
  %5484 = vmatpush.xpose.msra.mxu0 0.0
  %5485 = vmatpush.xpose.msra.mxu0 0.0
  %5486 = vmatpush.xpose.msra.mxu0 0.0
  %5487 = vmatpush.xpose.msra.mxu0 0.0
  %5488 = vmatpush.xpose.msra.mxu0 0.0
  %5489 = vmatpush.xpose.msra.mxu0 0.0
  %5490 = vmatpush.xpose.msra.mxu0 %v5474
  %5491 = vmatpush.xpose.msra.mxu0 %v5472
  %5492 = vmatmul.f32.gmra.mxu0 %v5468
  %v5493 = vpop.f32.mrf.mxu0
  %v5494 = vadd.f32 %v5259, %v5493
  %5495 = vmatmul.f32.gmra.mxu0 %v5470
  %v5496 = vpop.f32.mrf.mxu0
  %v5497 = vadd.f32 %v5260, %v5496
  %5498 = vdwg.mxu0
  %5499 = vrot.lane.b32.xlu0 %v164, 8
  %v5500 = vpop.permute.xlu0 %5499
  %5501 = vrot.lane.b32.xlu0 %v167, 8
  %v5502 = vpop.permute.xlu0 %5501
  %5503 = vrot.lane.b32.xlu0 %v164, 72
  %v5504 = vpop.permute.xlu0 %5503
  %5505 = vrot.lane.b32.xlu0 %v167, 72
  %v5506 = vpop.permute.xlu0 %5505
  %v5507 = vsel %vm256, %v5500, 0
  %v5509 = vsel %vm256, %v5502, 0
  %v5511 = vsel %vm256, %v5504, 0
  %v5513 = vsel %vm256, %v5506, 0
  %5515 = vmatpush.xpose.msra.mxu0 0.0
  %5516 = vmatpush.xpose.msra.mxu0 0.0
  %5517 = vmatpush.xpose.msra.mxu0 0.0
  %5518 = vmatpush.xpose.msra.mxu0 0.0
  %5519 = vmatpush.xpose.msra.mxu0 0.0
  %5520 = vmatpush.xpose.msra.mxu0 0.0
  %5521 = vmatpush.xpose.msra.mxu0 0.0
  %5522 = vmatpush.xpose.msra.mxu0 0.0
  %5523 = vmatpush.xpose.msra.mxu0 0.0
  %5524 = vmatpush.xpose.msra.mxu0 0.0
  %5525 = vmatpush.xpose.msra.mxu0 0.0
  %5526 = vmatpush.xpose.msra.mxu0 0.0
  %5527 = vmatpush.xpose.msra.mxu0 0.0
  %5528 = vmatpush.xpose.msra.mxu0 0.0
  %5529 = vmatpush.xpose.msra.mxu0 %v5513
  %5530 = vmatpush.xpose.msra.mxu0 %v5511
  %5531 = vmatmul.f32.gmra.mxu0 %v5507
  %v5532 = vpop.f32.mrf.mxu0
  %v5533 = vadd.f32 %v5261, %v5532
  %5534 = vmatmul.f32.gmra.mxu0 %v5509
  %v5535 = vpop.f32.mrf.mxu0
  %v5536 = vadd.f32 %v5262, %v5535
  %5537 = vdwg.mxu0
  %5538 = vrot.lane.b32.xlu0 %v170, 8
  %v5539 = vpop.permute.xlu0 %5538
  %5540 = vrot.lane.b32.xlu0 %v173, 8
  %v5541 = vpop.permute.xlu0 %5540
  %5542 = vrot.lane.b32.xlu0 %v170, 72
  %v5543 = vpop.permute.xlu0 %5542
  %5544 = vrot.lane.b32.xlu0 %v173, 72
  %v5545 = vpop.permute.xlu0 %5544
  %v5546 = vsel %vm256, %v5539, 0
  %v5548 = vsel %vm256, %v5541, 0
  %v5550 = vsel %vm256, %v5543, 0
  %v5552 = vsel %vm256, %v5545, 0
  %5554 = vmatpush.xpose.msra.mxu0 0.0
  %5555 = vmatpush.xpose.msra.mxu0 0.0
  %5556 = vmatpush.xpose.msra.mxu0 0.0
  %5557 = vmatpush.xpose.msra.mxu0 0.0
  %5558 = vmatpush.xpose.msra.mxu0 0.0
  %5559 = vmatpush.xpose.msra.mxu0 0.0
  %5560 = vmatpush.xpose.msra.mxu0 0.0
  %5561 = vmatpush.xpose.msra.mxu0 0.0
  %5562 = vmatpush.xpose.msra.mxu0 0.0
  %5563 = vmatpush.xpose.msra.mxu0 0.0
  %5564 = vmatpush.xpose.msra.mxu0 0.0
  %5565 = vmatpush.xpose.msra.mxu0 0.0
  %5566 = vmatpush.xpose.msra.mxu0 0.0
  %5567 = vmatpush.xpose.msra.mxu0 0.0
  %5568 = vmatpush.xpose.msra.mxu0 %v5552
  %5569 = vmatpush.xpose.msra.mxu0 %v5550
  %5570 = vmatmul.f32.gmra.mxu0 %v5546
  %v5571 = vpop.f32.mrf.mxu0
  %v5572 = vadd.f32 %v5263, %v5571
  %5573 = vmatmul.f32.gmra.mxu0 %v5548
  %v5574 = vpop.f32.mrf.mxu0
  %v5575 = vadd.f32 %v5264, %v5574
  %5576 = vdwg.mxu0
  %v5577 = vsel %vm866, %v4970, -inf
  %5578 = vmax.xlane.f32.xlu0 %v5577
  %v5579 = vpop.xlane.xlu0 %5578
  %v5580 = vsel %vm866, %v4973, -inf
  %5581 = vmax.xlane.f32.xlu0 %v5580
  %v5582 = vpop.xlane.xlu0 %5581
  %v5583 = vsel %vm866, %v5009, -inf
  %5584 = vmax.xlane.f32.xlu0 %v5583
  %v5585 = vpop.xlane.xlu0 %5584
  %v5586 = vsel %vm866, %v5012, -inf
  %5587 = vmax.xlane.f32.xlu0 %v5586
  %v5588 = vpop.xlane.xlu0 %5587
  %v5589 = vsel %vm866, %v5048, -inf
  %5590 = vmax.xlane.f32.xlu0 %v5589
  %v5591 = vpop.xlane.xlu0 %5590
  %v5592 = vsel %vm866, %v5051, -inf
  %5593 = vmax.xlane.f32.xlu0 %v5592
  %v5594 = vpop.xlane.xlu0 %5593
  %v5595 = vsel %vm866, %v5087, -inf
  %5596 = vmax.xlane.f32.xlu0 %v5595
  %v5597 = vpop.xlane.xlu0 %5596
  %v5598 = vsel %vm866, %v5090, -inf
  %5599 = vmax.xlane.f32.xlu0 %v5598
  %v5600 = vpop.xlane.xlu0 %5599
  %v5601 = vsel %vm866, %v5126, -inf
  %5602 = vmax.xlane.f32.xlu0 %v5601
  %v5603 = vpop.xlane.xlu0 %5602
  %v5604 = vsel %vm866, %v5129, -inf
  %5605 = vmax.xlane.f32.xlu0 %v5604
  %v5606 = vpop.xlane.xlu0 %5605
  %v5607 = vsel %vm866, %v5165, -inf
  %5608 = vmax.xlane.f32.xlu0 %v5607
  %v5609 = vpop.xlane.xlu0 %5608
  %v5610 = vsel %vm866, %v5168, -inf
  %5611 = vmax.xlane.f32.xlu0 %v5610
  %v5612 = vpop.xlane.xlu0 %5611
  %v5613 = vsel %vm866, %v5204, -inf
  %5614 = vmax.xlane.f32.xlu0 %v5613
  %v5615 = vpop.xlane.xlu0 %5614
  %v5616 = vsel %vm866, %v5207, -inf
  %5617 = vmax.xlane.f32.xlu0 %v5616
  %v5618 = vpop.xlane.xlu0 %5617
  %v5619 = vsel %vm866, %v5243, -inf
  %5620 = vmax.xlane.f32.xlu0 %v5619
  %v5621 = vpop.xlane.xlu0 %5620
  %v5622 = vsel %vm866, %v5246, -inf
  %5623 = vmax.xlane.f32.xlu0 %v5622
  %v5624 = vpop.xlane.xlu0 %5623
  %v5625 = vsub.f32 %v4970, %v5579
  %v5626 = vsub.f32 %v4973, %v5582
  %v5627 = vsub.f32 %v5009, %v5585
  %v5628 = vsub.f32 %v5012, %v5588
  %v5629 = vsub.f32 %v5048, %v5591
  %v5630 = vsub.f32 %v5051, %v5594
  %v5631 = vsub.f32 %v5087, %v5597
  %v5632 = vsub.f32 %v5090, %v5600
  %v5633 = vsub.f32 %v5126, %v5603
  %v5634 = vsub.f32 %v5129, %v5606
  %v5635 = vsub.f32 %v5165, %v5609
  %v5636 = vsub.f32 %v5168, %v5612
  %v5637 = vsub.f32 %v5204, %v5615
  %v5638 = vsub.f32 %v5207, %v5618
  %v5639 = vsub.f32 %v5243, %v5621
  %v5640 = vsub.f32 %v5246, %v5624
  %v5641 = vmul.f32 %v5625, 1.442695
  %v5642 = vpow.pop %v5641
  %v5643 = vmul.f32 %v5626, 1.442695
  %v5644 = vpow.pop %v5643
  %v5645 = vmul.f32 %v5627, 1.442695
  %v5646 = vpow.pop %v5645
  %v5647 = vmul.f32 %v5628, 1.442695
  %v5648 = vpow.pop %v5647
  %v5649 = vmul.f32 %v5629, 1.442695
  %v5650 = vpow.pop %v5649
  %v5651 = vmul.f32 %v5630, 1.442695
  %v5652 = vpow.pop %v5651
  %v5653 = vmul.f32 %v5631, 1.442695
  %v5654 = vpow.pop %v5653
  %v5655 = vmul.f32 %v5632, 1.442695
  %v5656 = vpow.pop %v5655
  %v5657 = vmul.f32 %v5633, 1.442695
  %v5658 = vpow.pop %v5657
  %v5659 = vmul.f32 %v5634, 1.442695
  %v5660 = vpow.pop %v5659
  %v5661 = vmul.f32 %v5635, 1.442695
  %v5662 = vpow.pop %v5661
  %v5663 = vmul.f32 %v5636, 1.442695
  %v5664 = vpow.pop %v5663
  %v5665 = vmul.f32 %v5637, 1.442695
  %v5666 = vpow.pop %v5665
  %v5667 = vmul.f32 %v5638, 1.442695
  %v5668 = vpow.pop %v5667
  %v5669 = vmul.f32 %v5639, 1.442695
  %v5670 = vpow.pop %v5669
  %v5671 = vmul.f32 %v5640, 1.442695
  %v5672 = vpow.pop %v5671
  %v5673 = vsel %vm866, %v5642, 0.0
  %5674 = vadd.xlane.f32.xlu0 %v5673
  %v5675 = vpop.xlane.xlu0 %5674
  %v5676 = vsel %vm866, %v5644, 0.0
  %5677 = vadd.xlane.f32.xlu0 %v5676
  %v5678 = vpop.xlane.xlu0 %5677
  %v5679 = vsel %vm866, %v5646, 0.0
  %5680 = vadd.xlane.f32.xlu0 %v5679
  %v5681 = vpop.xlane.xlu0 %5680
  %v5682 = vsel %vm866, %v5648, 0.0
  %5683 = vadd.xlane.f32.xlu0 %v5682
  %v5684 = vpop.xlane.xlu0 %5683
  %v5685 = vsel %vm866, %v5650, 0.0
  %5686 = vadd.xlane.f32.xlu0 %v5685
  %v5687 = vpop.xlane.xlu0 %5686
  %v5688 = vsel %vm866, %v5652, 0.0
  %5689 = vadd.xlane.f32.xlu0 %v5688
  %v5690 = vpop.xlane.xlu0 %5689
  %v5691 = vsel %vm866, %v5654, 0.0
  %5692 = vadd.xlane.f32.xlu0 %v5691
  %v5693 = vpop.xlane.xlu0 %5692
  %v5694 = vsel %vm866, %v5656, 0.0
  %5695 = vadd.xlane.f32.xlu0 %v5694
  %v5696 = vpop.xlane.xlu0 %5695
  %v5697 = vsel %vm866, %v5658, 0.0
  %5698 = vadd.xlane.f32.xlu0 %v5697
  %v5699 = vpop.xlane.xlu0 %5698
  %v5700 = vsel %vm866, %v5660, 0.0
  %5701 = vadd.xlane.f32.xlu0 %v5700
  %v5702 = vpop.xlane.xlu0 %5701
  %v5703 = vsel %vm866, %v5662, 0.0
  %5704 = vadd.xlane.f32.xlu0 %v5703
  %v5705 = vpop.xlane.xlu0 %5704
  %v5706 = vsel %vm866, %v5664, 0.0
  %5707 = vadd.xlane.f32.xlu0 %v5706
  %v5708 = vpop.xlane.xlu0 %5707
  %v5709 = vsel %vm866, %v5666, 0.0
  %5710 = vadd.xlane.f32.xlu0 %v5709
  %v5711 = vpop.xlane.xlu0 %5710
  %v5712 = vsel %vm866, %v5668, 0.0
  %5713 = vadd.xlane.f32.xlu0 %v5712
  %v5714 = vpop.xlane.xlu0 %5713
  %v5715 = vsel %vm866, %v5670, 0.0
  %5716 = vadd.xlane.f32.xlu0 %v5715
  %v5717 = vpop.xlane.xlu0 %5716
  %v5718 = vsel %vm866, %v5672, 0.0
  %5719 = vadd.xlane.f32.xlu0 %v5718
  %v5720 = vpop.xlane.xlu0 %5719
  %v5721 = vrcp.pop %v5675
  %v5722 = vrcp.pop %v5678
  %v5723 = vrcp.pop %v5681
  %v5724 = vrcp.pop %v5684
  %v5725 = vrcp.pop %v5687
  %v5726 = vrcp.pop %v5690
  %v5727 = vrcp.pop %v5693
  %v5728 = vrcp.pop %v5696
  %v5729 = vrcp.pop %v5699
  %v5730 = vrcp.pop %v5702
  %v5731 = vrcp.pop %v5705
  %v5732 = vrcp.pop %v5708
  %v5733 = vrcp.pop %v5711
  %v5734 = vrcp.pop %v5714
  %v5735 = vrcp.pop %v5717
  %v5736 = vrcp.pop %v5720
  %v5737 = vmul.f32 %v5642, %v5721
  %v5738 = vmul.f32 %v5644, %v5722
  %v5739 = vmul.f32 %v5646, %v5723
  %v5740 = vmul.f32 %v5648, %v5724
  %v5741 = vmul.f32 %v5650, %v5725
  %v5742 = vmul.f32 %v5652, %v5726
  %v5743 = vmul.f32 %v5654, %v5727
  %v5744 = vmul.f32 %v5656, %v5728
  %v5745 = vmul.f32 %v5658, %v5729
  %v5746 = vmul.f32 %v5660, %v5730
  %v5747 = vmul.f32 %v5662, %v5731
  %v5748 = vmul.f32 %v5664, %v5732
  %v5749 = vmul.f32 %v5666, %v5733
  %v5750 = vmul.f32 %v5668, %v5734
  %v5751 = vmul.f32 %v5670, %v5735
  %v5752 = vmul.f32 %v5672, %v5736
  %v5753 = vsel %vm866, %v5299, -inf
  %5754 = vmax.xlane.f32.xlu0 %v5753
  %v5755 = vpop.xlane.xlu0 %5754
  %v5756 = vsel %vm866, %v5302, -inf
  %5757 = vmax.xlane.f32.xlu0 %v5756
  %v5758 = vpop.xlane.xlu0 %5757
  %v5759 = vsel %vm866, %v5338, -inf
  %5760 = vmax.xlane.f32.xlu0 %v5759
  %v5761 = vpop.xlane.xlu0 %5760
  %v5762 = vsel %vm866, %v5341, -inf
  %5763 = vmax.xlane.f32.xlu0 %v5762
  %v5764 = vpop.xlane.xlu0 %5763
  %v5765 = vsel %vm866, %v5377, -inf
  %5766 = vmax.xlane.f32.xlu0 %v5765
  %v5767 = vpop.xlane.xlu0 %5766
  %v5768 = vsel %vm866, %v5380, -inf
  %5769 = vmax.xlane.f32.xlu0 %v5768
  %v5770 = vpop.xlane.xlu0 %5769
  %v5771 = vsel %vm866, %v5416, -inf
  %5772 = vmax.xlane.f32.xlu0 %v5771
  %v5773 = vpop.xlane.xlu0 %5772
  %v5774 = vsel %vm866, %v5419, -inf
  %5775 = vmax.xlane.f32.xlu0 %v5774
  %v5776 = vpop.xlane.xlu0 %5775
  %v5777 = vsel %vm866, %v5455, -inf
  %5778 = vmax.xlane.f32.xlu0 %v5777
  %v5779 = vpop.xlane.xlu0 %5778
  %v5780 = vsel %vm866, %v5458, -inf
  %5781 = vmax.xlane.f32.xlu0 %v5780
  %v5782 = vpop.xlane.xlu0 %5781
  %v5783 = vsel %vm866, %v5494, -inf
  %5784 = vmax.xlane.f32.xlu0 %v5783
  %v5785 = vpop.xlane.xlu0 %5784
  %v5786 = vsel %vm866, %v5497, -inf
  %5787 = vmax.xlane.f32.xlu0 %v5786
  %v5788 = vpop.xlane.xlu0 %5787
  %v5789 = vsel %vm866, %v5533, -inf
  %5790 = vmax.xlane.f32.xlu0 %v5789
  %v5791 = vpop.xlane.xlu0 %5790
  %v5792 = vsel %vm866, %v5536, -inf
  %5793 = vmax.xlane.f32.xlu0 %v5792
  %v5794 = vpop.xlane.xlu0 %5793
  %v5795 = vsel %vm866, %v5572, -inf
  %5796 = vmax.xlane.f32.xlu0 %v5795
  %v5797 = vpop.xlane.xlu0 %5796
  %v5798 = vsel %vm866, %v5575, -inf
  %5799 = vmax.xlane.f32.xlu0 %v5798
  %v5800 = vpop.xlane.xlu0 %5799
  %v5801 = vsub.f32 %v5299, %v5755
  %v5802 = vsub.f32 %v5302, %v5758
  %v5803 = vsub.f32 %v5338, %v5761
  %v5804 = vsub.f32 %v5341, %v5764
  %v5805 = vsub.f32 %v5377, %v5767
  %v5806 = vsub.f32 %v5380, %v5770
  %v5807 = vsub.f32 %v5416, %v5773
  %v5808 = vsub.f32 %v5419, %v5776
  %v5809 = vsub.f32 %v5455, %v5779
  %v5810 = vsub.f32 %v5458, %v5782
  %v5811 = vsub.f32 %v5494, %v5785
  %v5812 = vsub.f32 %v5497, %v5788
  %v5813 = vsub.f32 %v5533, %v5791
  %v5814 = vsub.f32 %v5536, %v5794
  %v5815 = vsub.f32 %v5572, %v5797
  %v5816 = vsub.f32 %v5575, %v5800
  %v5817 = vmul.f32 %v5801, 1.442695
  %v5818 = vpow.pop %v5817
  %v5819 = vmul.f32 %v5802, 1.442695
  %v5820 = vpow.pop %v5819
  %v5821 = vmul.f32 %v5803, 1.442695
  %v5822 = vpow.pop %v5821
  %v5823 = vmul.f32 %v5804, 1.442695
  %v5824 = vpow.pop %v5823
  %v5825 = vmul.f32 %v5805, 1.442695
  %v5826 = vpow.pop %v5825
  %v5827 = vmul.f32 %v5806, 1.442695
  %v5828 = vpow.pop %v5827
  %v5829 = vmul.f32 %v5807, 1.442695
  %v5830 = vpow.pop %v5829
  %v5831 = vmul.f32 %v5808, 1.442695
  %v5832 = vpow.pop %v5831
  %v5833 = vmul.f32 %v5809, 1.442695
  %v5834 = vpow.pop %v5833
  %v5835 = vmul.f32 %v5810, 1.442695
  %v5836 = vpow.pop %v5835
  %v5837 = vmul.f32 %v5811, 1.442695
  %v5838 = vpow.pop %v5837
  %v5839 = vmul.f32 %v5812, 1.442695
  %v5840 = vpow.pop %v5839
  %v5841 = vmul.f32 %v5813, 1.442695
  %v5842 = vpow.pop %v5841
  %v5843 = vmul.f32 %v5814, 1.442695
  %v5844 = vpow.pop %v5843
  %v5845 = vmul.f32 %v5815, 1.442695
  %v5846 = vpow.pop %v5845
  %v5847 = vmul.f32 %v5816, 1.442695
  %v5848 = vpow.pop %v5847
  %v5849 = vsel %vm866, %v5818, 0.0
  %5850 = vadd.xlane.f32.xlu0 %v5849
  %v5851 = vpop.xlane.xlu0 %5850
  %v5852 = vsel %vm866, %v5820, 0.0
  %5853 = vadd.xlane.f32.xlu0 %v5852
  %v5854 = vpop.xlane.xlu0 %5853
  %v5855 = vsel %vm866, %v5822, 0.0
  %5856 = vadd.xlane.f32.xlu0 %v5855
  %v5857 = vpop.xlane.xlu0 %5856
  %v5858 = vsel %vm866, %v5824, 0.0
  %5859 = vadd.xlane.f32.xlu0 %v5858
  %v5860 = vpop.xlane.xlu0 %5859
  %v5861 = vsel %vm866, %v5826, 0.0
  %5862 = vadd.xlane.f32.xlu0 %v5861
  %v5863 = vpop.xlane.xlu0 %5862
  %v5864 = vsel %vm866, %v5828, 0.0
  %5865 = vadd.xlane.f32.xlu0 %v5864
  %v5866 = vpop.xlane.xlu0 %5865
  %v5867 = vsel %vm866, %v5830, 0.0
  %5868 = vadd.xlane.f32.xlu0 %v5867
  %v5869 = vpop.xlane.xlu0 %5868
  %v5870 = vsel %vm866, %v5832, 0.0
  %5871 = vadd.xlane.f32.xlu0 %v5870
  %v5872 = vpop.xlane.xlu0 %5871
  %v5873 = vsel %vm866, %v5834, 0.0
  %5874 = vadd.xlane.f32.xlu0 %v5873
  %v5875 = vpop.xlane.xlu0 %5874
  %v5876 = vsel %vm866, %v5836, 0.0
  %5877 = vadd.xlane.f32.xlu0 %v5876
  %v5878 = vpop.xlane.xlu0 %5877
  %v5879 = vsel %vm866, %v5838, 0.0
  %5880 = vadd.xlane.f32.xlu0 %v5879
  %v5881 = vpop.xlane.xlu0 %5880
  %v5882 = vsel %vm866, %v5840, 0.0
  %5883 = vadd.xlane.f32.xlu0 %v5882
  %v5884 = vpop.xlane.xlu0 %5883
  %v5885 = vsel %vm866, %v5842, 0.0
  %5886 = vadd.xlane.f32.xlu0 %v5885
  %v5887 = vpop.xlane.xlu0 %5886
  %v5888 = vsel %vm866, %v5844, 0.0
  %5889 = vadd.xlane.f32.xlu0 %v5888
  %v5890 = vpop.xlane.xlu0 %5889
  %v5891 = vsel %vm866, %v5846, 0.0
  %5892 = vadd.xlane.f32.xlu0 %v5891
  %v5893 = vpop.xlane.xlu0 %5892
  %v5894 = vsel %vm866, %v5848, 0.0
  %5895 = vadd.xlane.f32.xlu0 %v5894
  %v5896 = vpop.xlane.xlu0 %5895
  %v5897 = vrcp.pop %v5851
  %v5898 = vrcp.pop %v5854
  %v5899 = vrcp.pop %v5857
  %v5900 = vrcp.pop %v5860
  %v5901 = vrcp.pop %v5863
  %v5902 = vrcp.pop %v5866
  %v5903 = vrcp.pop %v5869
  %v5904 = vrcp.pop %v5872
  %v5905 = vrcp.pop %v5875
  %v5906 = vrcp.pop %v5878
  %v5907 = vrcp.pop %v5881
  %v5908 = vrcp.pop %v5884
  %v5909 = vrcp.pop %v5887
  %v5910 = vrcp.pop %v5890
  %v5911 = vrcp.pop %v5893
  %v5912 = vrcp.pop %v5896
  %v5913 = vmul.f32 %v5818, %v5897
  %v5914 = vmul.f32 %v5820, %v5898
  %v5915 = vmul.f32 %v5822, %v5899
  %v5916 = vmul.f32 %v5824, %v5900
  %v5917 = vmul.f32 %v5826, %v5901
  %v5918 = vmul.f32 %v5828, %v5902
  %v5919 = vmul.f32 %v5830, %v5903
  %v5920 = vmul.f32 %v5832, %v5904
  %v5921 = vmul.f32 %v5834, %v5905
  %v5922 = vmul.f32 %v5836, %v5906
  %v5923 = vmul.f32 %v5838, %v5907
  %v5924 = vmul.f32 %v5840, %v5908
  %v5925 = vmul.f32 %v5842, %v5909
  %v5926 = vmul.f32 %v5844, %v5910
  %v5927 = vmul.f32 %v5846, %v5911
  %v5928 = vmul.f32 %v5848, %v5912
  %5929 = vrot.lane.b32.xlu0 %v193, 72
  %v5930 = vpop.permute.xlu0 %5929
  %5931 = vrot.lane.b32.xlu0 %v196, 72
  %v5932 = vpop.permute.xlu0 %5931
  %v5936 = vsel %vm866, %v5737, 0
  %v5939 = vsel %vm866, %v5738, 0
  %5941 = vmatpush.msra.mxu0 0.0
  %5942 = vmatpush.msra.mxu0 0.0
  %5943 = vmatpush.msra.mxu0 0.0
  %5944 = vmatpush.msra.mxu0 0.0
  %5945 = vmatpush.msra.mxu0 0.0
  %5946 = vmatpush.msra.mxu0 0.0
  %5947 = vmatpush.msra.mxu0 0.0
  %5948 = vmatpush.msra.mxu0 0.0
  %5949 = vmatpush.msra.mxu0 0.0
  %5950 = vmatpush.msra.mxu0 0.0
  %5951 = vmatpush.msra.mxu0 0.0
  %5952 = vmatpush.msra.mxu0 0.0
  %5953 = vmatpush.msra.mxu0 0.0
  %5954 = vmatpush.msra.mxu0 0.0
  %5955 = vmatpush.msra.mxu0 %v5932
  %5956 = vmatpush.msra.mxu0 %v5930
  %5957 = vmatmul.f32.gmra.mxu0 %v5936
  %v5958 = vpop.f32.mrf.mxu0
  %v5959 = vadd.f32 0.0, %v5958
  %5960 = vmatmul.f32.gmra.mxu0 %v5939
  %v5961 = vpop.f32.mrf.mxu0
  %v5962 = vadd.f32 0.0, %v5961
  %5963 = vdwg.mxu0
  %5964 = vrot.lane.b32.xlu0 %v199, 72
  %v5965 = vpop.permute.xlu0 %5964
  %5966 = vrot.lane.b32.xlu0 %v202, 72
  %v5967 = vpop.permute.xlu0 %5966
  %v5971 = vsel %vm866, %v5739, 0
  %v5974 = vsel %vm866, %v5740, 0
  %5976 = vmatpush.msra.mxu0 0.0
  %5977 = vmatpush.msra.mxu0 0.0
  %5978 = vmatpush.msra.mxu0 0.0
  %5979 = vmatpush.msra.mxu0 0.0
  %5980 = vmatpush.msra.mxu0 0.0
  %5981 = vmatpush.msra.mxu0 0.0
  %5982 = vmatpush.msra.mxu0 0.0
  %5983 = vmatpush.msra.mxu0 0.0
  %5984 = vmatpush.msra.mxu0 0.0
  %5985 = vmatpush.msra.mxu0 0.0
  %5986 = vmatpush.msra.mxu0 0.0
  %5987 = vmatpush.msra.mxu0 0.0
  %5988 = vmatpush.msra.mxu0 0.0
  %5989 = vmatpush.msra.mxu0 0.0
  %5990 = vmatpush.msra.mxu0 %v5967
  %5991 = vmatpush.msra.mxu0 %v5965
  %5992 = vmatmul.f32.gmra.mxu0 %v5971
  %v5993 = vpop.f32.mrf.mxu0
  %v5994 = vadd.f32 0.0, %v5993
  %5995 = vmatmul.f32.gmra.mxu0 %v5974
  %v5996 = vpop.f32.mrf.mxu0
  %v5997 = vadd.f32 0.0, %v5996
  %5998 = vdwg.mxu0
  %5999 = vrot.lane.b32.xlu0 %v205, 72
  %v6000 = vpop.permute.xlu0 %5999
  %6001 = vrot.lane.b32.xlu0 %v208, 72
  %v6002 = vpop.permute.xlu0 %6001
  %v6006 = vsel %vm866, %v5741, 0
  %v6009 = vsel %vm866, %v5742, 0
  %6011 = vmatpush.msra.mxu0 0.0
  %6012 = vmatpush.msra.mxu0 0.0
  %6013 = vmatpush.msra.mxu0 0.0
  %6014 = vmatpush.msra.mxu0 0.0
  %6015 = vmatpush.msra.mxu0 0.0
  %6016 = vmatpush.msra.mxu0 0.0
  %6017 = vmatpush.msra.mxu0 0.0
  %6018 = vmatpush.msra.mxu0 0.0
  %6019 = vmatpush.msra.mxu0 0.0
  %6020 = vmatpush.msra.mxu0 0.0
  %6021 = vmatpush.msra.mxu0 0.0
  %6022 = vmatpush.msra.mxu0 0.0
  %6023 = vmatpush.msra.mxu0 0.0
  %6024 = vmatpush.msra.mxu0 0.0
  %6025 = vmatpush.msra.mxu0 %v6002
  %6026 = vmatpush.msra.mxu0 %v6000
  %6027 = vmatmul.f32.gmra.mxu0 %v6006
  %v6028 = vpop.f32.mrf.mxu0
  %v6029 = vadd.f32 0.0, %v6028
  %6030 = vmatmul.f32.gmra.mxu0 %v6009
  %v6031 = vpop.f32.mrf.mxu0
  %v6032 = vadd.f32 0.0, %v6031
  %6033 = vdwg.mxu0
  %6034 = vrot.lane.b32.xlu0 %v211, 72
  %v6035 = vpop.permute.xlu0 %6034
  %6036 = vrot.lane.b32.xlu0 %v214, 72
  %v6037 = vpop.permute.xlu0 %6036
  %v6041 = vsel %vm866, %v5743, 0
  %v6044 = vsel %vm866, %v5744, 0
  %6046 = vmatpush.msra.mxu0 0.0
  %6047 = vmatpush.msra.mxu0 0.0
  %6048 = vmatpush.msra.mxu0 0.0
  %6049 = vmatpush.msra.mxu0 0.0
  %6050 = vmatpush.msra.mxu0 0.0
  %6051 = vmatpush.msra.mxu0 0.0
  %6052 = vmatpush.msra.mxu0 0.0
  %6053 = vmatpush.msra.mxu0 0.0
  %6054 = vmatpush.msra.mxu0 0.0
  %6055 = vmatpush.msra.mxu0 0.0
  %6056 = vmatpush.msra.mxu0 0.0
  %6057 = vmatpush.msra.mxu0 0.0
  %6058 = vmatpush.msra.mxu0 0.0
  %6059 = vmatpush.msra.mxu0 0.0
  %6060 = vmatpush.msra.mxu0 %v6037
  %6061 = vmatpush.msra.mxu0 %v6035
  %6062 = vmatmul.f32.gmra.mxu0 %v6041
  %v6063 = vpop.f32.mrf.mxu0
  %v6064 = vadd.f32 0.0, %v6063
  %6065 = vmatmul.f32.gmra.mxu0 %v6044
  %v6066 = vpop.f32.mrf.mxu0
  %v6067 = vadd.f32 0.0, %v6066
  %6068 = vdwg.mxu0
  %6069 = vrot.lane.b32.xlu0 %v217, 72
  %v6070 = vpop.permute.xlu0 %6069
  %6071 = vrot.lane.b32.xlu0 %v220, 72
  %v6072 = vpop.permute.xlu0 %6071
  %v6076 = vsel %vm866, %v5745, 0
  %v6079 = vsel %vm866, %v5746, 0
  %6081 = vmatpush.msra.mxu0 0.0
  %6082 = vmatpush.msra.mxu0 0.0
  %6083 = vmatpush.msra.mxu0 0.0
  %6084 = vmatpush.msra.mxu0 0.0
  %6085 = vmatpush.msra.mxu0 0.0
  %6086 = vmatpush.msra.mxu0 0.0
  %6087 = vmatpush.msra.mxu0 0.0
  %6088 = vmatpush.msra.mxu0 0.0
  %6089 = vmatpush.msra.mxu0 0.0
  %6090 = vmatpush.msra.mxu0 0.0
  %6091 = vmatpush.msra.mxu0 0.0
  %6092 = vmatpush.msra.mxu0 0.0
  %6093 = vmatpush.msra.mxu0 0.0
  %6094 = vmatpush.msra.mxu0 0.0
  %6095 = vmatpush.msra.mxu0 %v6072
  %6096 = vmatpush.msra.mxu0 %v6070
  %6097 = vmatmul.f32.gmra.mxu0 %v6076
  %v6098 = vpop.f32.mrf.mxu0
  %v6099 = vadd.f32 0.0, %v6098
  %6100 = vmatmul.f32.gmra.mxu0 %v6079
  %v6101 = vpop.f32.mrf.mxu0
  %v6102 = vadd.f32 0.0, %v6101
  %6103 = vdwg.mxu0
  %6104 = vrot.lane.b32.xlu0 %v223, 72
  %v6105 = vpop.permute.xlu0 %6104
  %6106 = vrot.lane.b32.xlu0 %v226, 72
  %v6107 = vpop.permute.xlu0 %6106
  %v6111 = vsel %vm866, %v5747, 0
  %v6114 = vsel %vm866, %v5748, 0
  %6116 = vmatpush.msra.mxu0 0.0
  %6117 = vmatpush.msra.mxu0 0.0
  %6118 = vmatpush.msra.mxu0 0.0
  %6119 = vmatpush.msra.mxu0 0.0
  %6120 = vmatpush.msra.mxu0 0.0
  %6121 = vmatpush.msra.mxu0 0.0
  %6122 = vmatpush.msra.mxu0 0.0
  %6123 = vmatpush.msra.mxu0 0.0
  %6124 = vmatpush.msra.mxu0 0.0
  %6125 = vmatpush.msra.mxu0 0.0
  %6126 = vmatpush.msra.mxu0 0.0
  %6127 = vmatpush.msra.mxu0 0.0
  %6128 = vmatpush.msra.mxu0 0.0
  %6129 = vmatpush.msra.mxu0 0.0
  %6130 = vmatpush.msra.mxu0 %v6107
  %6131 = vmatpush.msra.mxu0 %v6105
  %6132 = vmatmul.f32.gmra.mxu0 %v6111
  %v6133 = vpop.f32.mrf.mxu0
  %v6134 = vadd.f32 0.0, %v6133
  %6135 = vmatmul.f32.gmra.mxu0 %v6114
  %v6136 = vpop.f32.mrf.mxu0
  %v6137 = vadd.f32 0.0, %v6136
  %6138 = vdwg.mxu0
  %6139 = vrot.lane.b32.xlu0 %v229, 72
  %v6140 = vpop.permute.xlu0 %6139
  %6141 = vrot.lane.b32.xlu0 %v232, 72
  %v6142 = vpop.permute.xlu0 %6141
  %v6146 = vsel %vm866, %v5749, 0
  %v6149 = vsel %vm866, %v5750, 0
  %6151 = vmatpush.msra.mxu0 0.0
  %6152 = vmatpush.msra.mxu0 0.0
  %6153 = vmatpush.msra.mxu0 0.0
  %6154 = vmatpush.msra.mxu0 0.0
  %6155 = vmatpush.msra.mxu0 0.0
  %6156 = vmatpush.msra.mxu0 0.0
  %6157 = vmatpush.msra.mxu0 0.0
  %6158 = vmatpush.msra.mxu0 0.0
  %6159 = vmatpush.msra.mxu0 0.0
  %6160 = vmatpush.msra.mxu0 0.0
  %6161 = vmatpush.msra.mxu0 0.0
  %6162 = vmatpush.msra.mxu0 0.0
  %6163 = vmatpush.msra.mxu0 0.0
  %6164 = vmatpush.msra.mxu0 0.0
  %6165 = vmatpush.msra.mxu0 %v6142
  %6166 = vmatpush.msra.mxu0 %v6140
  %6167 = vmatmul.f32.gmra.mxu0 %v6146
  %v6168 = vpop.f32.mrf.mxu0
  %v6169 = vadd.f32 0.0, %v6168
  %6170 = vmatmul.f32.gmra.mxu0 %v6149
  %v6171 = vpop.f32.mrf.mxu0
  %v6172 = vadd.f32 0.0, %v6171
  %6173 = vdwg.mxu0
  %6174 = vrot.lane.b32.xlu0 %v235, 72
  %v6175 = vpop.permute.xlu0 %6174
  %6176 = vrot.lane.b32.xlu0 %v238, 72
  %v6177 = vpop.permute.xlu0 %6176
  %v6181 = vsel %vm866, %v5751, 0
  %v6184 = vsel %vm866, %v5752, 0
  %6186 = vmatpush.msra.mxu0 0.0
  %6187 = vmatpush.msra.mxu0 0.0
  %6188 = vmatpush.msra.mxu0 0.0
  %6189 = vmatpush.msra.mxu0 0.0
  %6190 = vmatpush.msra.mxu0 0.0
  %6191 = vmatpush.msra.mxu0 0.0
  %6192 = vmatpush.msra.mxu0 0.0
  %6193 = vmatpush.msra.mxu0 0.0
  %6194 = vmatpush.msra.mxu0 0.0
  %6195 = vmatpush.msra.mxu0 0.0
  %6196 = vmatpush.msra.mxu0 0.0
  %6197 = vmatpush.msra.mxu0 0.0
  %6198 = vmatpush.msra.mxu0 0.0
  %6199 = vmatpush.msra.mxu0 0.0
  %6200 = vmatpush.msra.mxu0 %v6177
  %6201 = vmatpush.msra.mxu0 %v6175
  %6202 = vmatmul.f32.gmra.mxu0 %v6181
  %v6203 = vpop.f32.mrf.mxu0
  %v6204 = vadd.f32 0.0, %v6203
  %6205 = vmatmul.f32.gmra.mxu0 %v6184
  %v6206 = vpop.f32.mrf.mxu0
  %v6207 = vadd.f32 0.0, %v6206
  %6208 = vdwg.mxu0
  %6209 = vrot.lane.b32.xlu0 %v128, 40
  %v6210 = vpop.permute.xlu0 %6209
  %6211 = vrot.lane.b32.xlu0 %v131, 40
  %v6212 = vpop.permute.xlu0 %6211
  %v6216 = vsel %vm866, %v5913, 0
  %v6219 = vsel %vm866, %v5914, 0
  %6221 = vmatpush.msra.mxu0 0.0
  %6222 = vmatpush.msra.mxu0 0.0
  %6223 = vmatpush.msra.mxu0 0.0
  %6224 = vmatpush.msra.mxu0 0.0
  %6225 = vmatpush.msra.mxu0 0.0
  %6226 = vmatpush.msra.mxu0 0.0
  %6227 = vmatpush.msra.mxu0 0.0
  %6228 = vmatpush.msra.mxu0 0.0
  %6229 = vmatpush.msra.mxu0 0.0
  %6230 = vmatpush.msra.mxu0 0.0
  %6231 = vmatpush.msra.mxu0 0.0
  %6232 = vmatpush.msra.mxu0 0.0
  %6233 = vmatpush.msra.mxu0 0.0
  %6234 = vmatpush.msra.mxu0 0.0
  %6235 = vmatpush.msra.mxu0 %v6212
  %6236 = vmatpush.msra.mxu0 %v6210
  %6237 = vmatmul.f32.gmra.mxu0 %v6216
  %v6238 = vpop.f32.mrf.mxu0
  %v6239 = vadd.f32 0.0, %v6238
  %6240 = vmatmul.f32.gmra.mxu0 %v6219
  %v6241 = vpop.f32.mrf.mxu0
  %v6242 = vadd.f32 0.0, %v6241
  %6243 = vdwg.mxu0
  %6244 = vrot.lane.b32.xlu0 %v134, 40
  %v6245 = vpop.permute.xlu0 %6244
  %6246 = vrot.lane.b32.xlu0 %v137, 40
  %v6247 = vpop.permute.xlu0 %6246
  %v6251 = vsel %vm866, %v5915, 0
  %v6254 = vsel %vm866, %v5916, 0
  %6256 = vmatpush.msra.mxu0 0.0
  %6257 = vmatpush.msra.mxu0 0.0
  %6258 = vmatpush.msra.mxu0 0.0
  %6259 = vmatpush.msra.mxu0 0.0
  %6260 = vmatpush.msra.mxu0 0.0
  %6261 = vmatpush.msra.mxu0 0.0
  %6262 = vmatpush.msra.mxu0 0.0
  %6263 = vmatpush.msra.mxu0 0.0
  %6264 = vmatpush.msra.mxu0 0.0
  %6265 = vmatpush.msra.mxu0 0.0
  %6266 = vmatpush.msra.mxu0 0.0
  %6267 = vmatpush.msra.mxu0 0.0
  %6268 = vmatpush.msra.mxu0 0.0
  %6269 = vmatpush.msra.mxu0 0.0
  %6270 = vmatpush.msra.mxu0 %v6247
  %6271 = vmatpush.msra.mxu0 %v6245
  %6272 = vmatmul.f32.gmra.mxu0 %v6251
  %v6273 = vpop.f32.mrf.mxu0
  %v6274 = vadd.f32 0.0, %v6273
  %6275 = vmatmul.f32.gmra.mxu0 %v6254
  %v6276 = vpop.f32.mrf.mxu0
  %v6277 = vadd.f32 0.0, %v6276
  %6278 = vdwg.mxu0
  %6279 = vrot.lane.b32.xlu0 %v140, 40
  %v6280 = vpop.permute.xlu0 %6279
  %6281 = vrot.lane.b32.xlu0 %v143, 40
  %v6282 = vpop.permute.xlu0 %6281
  %v6286 = vsel %vm866, %v5917, 0
  %v6289 = vsel %vm866, %v5918, 0
  %6291 = vmatpush.msra.mxu0 0.0
  %6292 = vmatpush.msra.mxu0 0.0
  %6293 = vmatpush.msra.mxu0 0.0
  %6294 = vmatpush.msra.mxu0 0.0
  %6295 = vmatpush.msra.mxu0 0.0
  %6296 = vmatpush.msra.mxu0 0.0
  %6297 = vmatpush.msra.mxu0 0.0
  %6298 = vmatpush.msra.mxu0 0.0
  %6299 = vmatpush.msra.mxu0 0.0
  %6300 = vmatpush.msra.mxu0 0.0
  %6301 = vmatpush.msra.mxu0 0.0
  %6302 = vmatpush.msra.mxu0 0.0
  %6303 = vmatpush.msra.mxu0 0.0
  %6304 = vmatpush.msra.mxu0 0.0
  %6305 = vmatpush.msra.mxu0 %v6282
  %6306 = vmatpush.msra.mxu0 %v6280
  %6307 = vmatmul.f32.gmra.mxu0 %v6286
  %v6308 = vpop.f32.mrf.mxu0
  %v6309 = vadd.f32 0.0, %v6308
  %6310 = vmatmul.f32.gmra.mxu0 %v6289
  %v6311 = vpop.f32.mrf.mxu0
  %v6312 = vadd.f32 0.0, %v6311
  %6313 = vdwg.mxu0
  %6314 = vrot.lane.b32.xlu0 %v146, 40
  %v6315 = vpop.permute.xlu0 %6314
  %6316 = vrot.lane.b32.xlu0 %v149, 40
  %v6317 = vpop.permute.xlu0 %6316
  %v6321 = vsel %vm866, %v5919, 0
  %v6324 = vsel %vm866, %v5920, 0
  %6326 = vmatpush.msra.mxu0 0.0
  %6327 = vmatpush.msra.mxu0 0.0
  %6328 = vmatpush.msra.mxu0 0.0
  %6329 = vmatpush.msra.mxu0 0.0
  %6330 = vmatpush.msra.mxu0 0.0
  %6331 = vmatpush.msra.mxu0 0.0
  %6332 = vmatpush.msra.mxu0 0.0
  %6333 = vmatpush.msra.mxu0 0.0
  %6334 = vmatpush.msra.mxu0 0.0
  %6335 = vmatpush.msra.mxu0 0.0
  %6336 = vmatpush.msra.mxu0 0.0
  %6337 = vmatpush.msra.mxu0 0.0
  %6338 = vmatpush.msra.mxu0 0.0
  %6339 = vmatpush.msra.mxu0 0.0
  %6340 = vmatpush.msra.mxu0 %v6317
  %6341 = vmatpush.msra.mxu0 %v6315
  %6342 = vmatmul.f32.gmra.mxu0 %v6321
  %v6343 = vpop.f32.mrf.mxu0
  %v6344 = vadd.f32 0.0, %v6343
  %6345 = vmatmul.f32.gmra.mxu0 %v6324
  %v6346 = vpop.f32.mrf.mxu0
  %v6347 = vadd.f32 0.0, %v6346
  %6348 = vdwg.mxu0
  %6349 = vrot.lane.b32.xlu0 %v152, 40
  %v6350 = vpop.permute.xlu0 %6349
  %6351 = vrot.lane.b32.xlu0 %v155, 40
  %v6352 = vpop.permute.xlu0 %6351
  %v6356 = vsel %vm866, %v5921, 0
  %v6359 = vsel %vm866, %v5922, 0
  %6361 = vmatpush.msra.mxu0 0.0
  %6362 = vmatpush.msra.mxu0 0.0
  %6363 = vmatpush.msra.mxu0 0.0
  %6364 = vmatpush.msra.mxu0 0.0
  %6365 = vmatpush.msra.mxu0 0.0
  %6366 = vmatpush.msra.mxu0 0.0
  %6367 = vmatpush.msra.mxu0 0.0
  %6368 = vmatpush.msra.mxu0 0.0
  %6369 = vmatpush.msra.mxu0 0.0
  %6370 = vmatpush.msra.mxu0 0.0
  %6371 = vmatpush.msra.mxu0 0.0
  %6372 = vmatpush.msra.mxu0 0.0
  %6373 = vmatpush.msra.mxu0 0.0
  %6374 = vmatpush.msra.mxu0 0.0
  %6375 = vmatpush.msra.mxu0 %v6352
  %6376 = vmatpush.msra.mxu0 %v6350
  %6377 = vmatmul.f32.gmra.mxu0 %v6356
  %v6378 = vpop.f32.mrf.mxu0
  %v6379 = vadd.f32 0.0, %v6378
  %6380 = vmatmul.f32.gmra.mxu0 %v6359
  %v6381 = vpop.f32.mrf.mxu0
  %v6382 = vadd.f32 0.0, %v6381
  %6383 = vdwg.mxu0
  %6384 = vrot.lane.b32.xlu0 %v158, 40
  %v6385 = vpop.permute.xlu0 %6384
  %6386 = vrot.lane.b32.xlu0 %v161, 40
  %v6387 = vpop.permute.xlu0 %6386
  %v6391 = vsel %vm866, %v5923, 0
  %v6394 = vsel %vm866, %v5924, 0
  %6396 = vmatpush.msra.mxu0 0.0
  %6397 = vmatpush.msra.mxu0 0.0
  %6398 = vmatpush.msra.mxu0 0.0
  %6399 = vmatpush.msra.mxu0 0.0
  %6400 = vmatpush.msra.mxu0 0.0
  %6401 = vmatpush.msra.mxu0 0.0
  %6402 = vmatpush.msra.mxu0 0.0
  %6403 = vmatpush.msra.mxu0 0.0
  %6404 = vmatpush.msra.mxu0 0.0
  %6405 = vmatpush.msra.mxu0 0.0
  %6406 = vmatpush.msra.mxu0 0.0
  %6407 = vmatpush.msra.mxu0 0.0
  %6408 = vmatpush.msra.mxu0 0.0
  %6409 = vmatpush.msra.mxu0 0.0
  %6410 = vmatpush.msra.mxu0 %v6387
  %6411 = vmatpush.msra.mxu0 %v6385
  %6412 = vmatmul.f32.gmra.mxu0 %v6391
  %v6413 = vpop.f32.mrf.mxu0
  %v6414 = vadd.f32 0.0, %v6413
  %6415 = vmatmul.f32.gmra.mxu0 %v6394
  %v6416 = vpop.f32.mrf.mxu0
  %v6417 = vadd.f32 0.0, %v6416
  %6418 = vdwg.mxu0
  %6419 = vrot.lane.b32.xlu0 %v164, 40
  %v6420 = vpop.permute.xlu0 %6419
  %6421 = vrot.lane.b32.xlu0 %v167, 40
  %v6422 = vpop.permute.xlu0 %6421
  %v6426 = vsel %vm866, %v5925, 0
  %v6429 = vsel %vm866, %v5926, 0
  %6431 = vmatpush.msra.mxu0 0.0
  %6432 = vmatpush.msra.mxu0 0.0
  %6433 = vmatpush.msra.mxu0 0.0
  %6434 = vmatpush.msra.mxu0 0.0
  %6435 = vmatpush.msra.mxu0 0.0
  %6436 = vmatpush.msra.mxu0 0.0
  %6437 = vmatpush.msra.mxu0 0.0
  %6438 = vmatpush.msra.mxu0 0.0
  %6439 = vmatpush.msra.mxu0 0.0
  %6440 = vmatpush.msra.mxu0 0.0
  %6441 = vmatpush.msra.mxu0 0.0
  %6442 = vmatpush.msra.mxu0 0.0
  %6443 = vmatpush.msra.mxu0 0.0
  %6444 = vmatpush.msra.mxu0 0.0
  %6445 = vmatpush.msra.mxu0 %v6422
  %6446 = vmatpush.msra.mxu0 %v6420
  %6447 = vmatmul.f32.gmra.mxu0 %v6426
  %v6448 = vpop.f32.mrf.mxu0
  %v6449 = vadd.f32 0.0, %v6448
  %6450 = vmatmul.f32.gmra.mxu0 %v6429
  %v6451 = vpop.f32.mrf.mxu0
  %v6452 = vadd.f32 0.0, %v6451
  %6453 = vdwg.mxu0
  %6454 = vrot.lane.b32.xlu0 %v170, 40
  %v6455 = vpop.permute.xlu0 %6454
  %6456 = vrot.lane.b32.xlu0 %v173, 40
  %v6457 = vpop.permute.xlu0 %6456
  %v6461 = vsel %vm866, %v5927, 0
  %v6464 = vsel %vm866, %v5928, 0
  %6466 = vmatpush.msra.mxu0 0.0
  %6467 = vmatpush.msra.mxu0 0.0
  %6468 = vmatpush.msra.mxu0 0.0
  %6469 = vmatpush.msra.mxu0 0.0
  %6470 = vmatpush.msra.mxu0 0.0
  %6471 = vmatpush.msra.mxu0 0.0
  %6472 = vmatpush.msra.mxu0 0.0
  %6473 = vmatpush.msra.mxu0 0.0
  %6474 = vmatpush.msra.mxu0 0.0
  %6475 = vmatpush.msra.mxu0 0.0
  %6476 = vmatpush.msra.mxu0 0.0
  %6477 = vmatpush.msra.mxu0 0.0
  %6478 = vmatpush.msra.mxu0 0.0
  %6479 = vmatpush.msra.mxu0 0.0
  %6480 = vmatpush.msra.mxu0 %v6457
  %6481 = vmatpush.msra.mxu0 %v6455
  %6482 = vmatmul.f32.gmra.mxu0 %v6461
  %v6483 = vpop.f32.mrf.mxu0
  %v6484 = vadd.f32 0.0, %v6483
  %6485 = vmatmul.f32.gmra.mxu0 %v6464
  %v6486 = vpop.f32.mrf.mxu0
  %v6487 = vadd.f32 0.0, %v6486
  %6488 = vdwg.mxu0
  %6505 = vrot.lane.b32.xlu0 %v2819, 8
  %v6506 = vpop.permute.xlu0 %6505
  %6507 = vrot.lane.b32.xlu0 %v2822, 8
  %v6508 = vpop.permute.xlu0 %6507
  %6509 = vrot.lane.b32.xlu0 %v2854, 8
  %v6510 = vpop.permute.xlu0 %6509
  %6511 = vrot.lane.b32.xlu0 %v2857, 8
  %v6512 = vpop.permute.xlu0 %6511
  %6513 = vrot.lane.b32.xlu0 %v2889, 8
  %v6514 = vpop.permute.xlu0 %6513
  %6515 = vrot.lane.b32.xlu0 %v2892, 8
  %v6516 = vpop.permute.xlu0 %6515
  %6517 = vrot.lane.b32.xlu0 %v2924, 8
  %v6518 = vpop.permute.xlu0 %6517
  %6519 = vrot.lane.b32.xlu0 %v2927, 8
  %v6520 = vpop.permute.xlu0 %6519
  %6521 = vrot.lane.b32.xlu0 %v2959, 8
  %v6522 = vpop.permute.xlu0 %6521
  %6523 = vrot.lane.b32.xlu0 %v2962, 8
  %v6524 = vpop.permute.xlu0 %6523
  %6525 = vrot.lane.b32.xlu0 %v2994, 8
  %v6526 = vpop.permute.xlu0 %6525
  %6527 = vrot.lane.b32.xlu0 %v2997, 8
  %v6528 = vpop.permute.xlu0 %6527
  %6529 = vrot.lane.b32.xlu0 %v3029, 8
  %v6530 = vpop.permute.xlu0 %6529
  %6531 = vrot.lane.b32.xlu0 %v3032, 8
  %v6532 = vpop.permute.xlu0 %6531
  %6533 = vrot.lane.b32.xlu0 %v3064, 8
  %v6534 = vpop.permute.xlu0 %6533
  %6535 = vrot.lane.b32.xlu0 %v3067, 8
  %v6536 = vpop.permute.xlu0 %6535
  %6569 = vrot.lane.b32.xlu0 %v4389, 16
  %v6570 = vpop.permute.xlu0 %6569
  %6571 = vrot.lane.b32.xlu0 %v4392, 16
  %v6572 = vpop.permute.xlu0 %6571
  %6573 = vrot.lane.b32.xlu0 %v4424, 16
  %v6574 = vpop.permute.xlu0 %6573
  %6575 = vrot.lane.b32.xlu0 %v4427, 16
  %v6576 = vpop.permute.xlu0 %6575
  %6577 = vrot.lane.b32.xlu0 %v4459, 16
  %v6578 = vpop.permute.xlu0 %6577
  %6579 = vrot.lane.b32.xlu0 %v4462, 16
  %v6580 = vpop.permute.xlu0 %6579
  %6581 = vrot.lane.b32.xlu0 %v4494, 16
  %v6582 = vpop.permute.xlu0 %6581
  %6583 = vrot.lane.b32.xlu0 %v4497, 16
  %v6584 = vpop.permute.xlu0 %6583
  %6585 = vrot.lane.b32.xlu0 %v4529, 16
  %v6586 = vpop.permute.xlu0 %6585
  %6587 = vrot.lane.b32.xlu0 %v4532, 16
  %v6588 = vpop.permute.xlu0 %6587
  %6589 = vrot.lane.b32.xlu0 %v4564, 16
  %v6590 = vpop.permute.xlu0 %6589
  %6591 = vrot.lane.b32.xlu0 %v4567, 16
  %v6592 = vpop.permute.xlu0 %6591
  %6593 = vrot.lane.b32.xlu0 %v4599, 16
  %v6594 = vpop.permute.xlu0 %6593
  %6595 = vrot.lane.b32.xlu0 %v4602, 16
  %v6596 = vpop.permute.xlu0 %6595
  %6597 = vrot.lane.b32.xlu0 %v4634, 16
  %v6598 = vpop.permute.xlu0 %6597
  %6599 = vrot.lane.b32.xlu0 %v4637, 16
  %v6600 = vpop.permute.xlu0 %6599
  %6633 = vrot.lane.b32.xlu0 %v5959, 24
  %v6634 = vpop.permute.xlu0 %6633
  %6635 = vrot.lane.b32.xlu0 %v5962, 24
  %v6636 = vpop.permute.xlu0 %6635
  %6637 = vrot.lane.b32.xlu0 %v5994, 24
  %v6638 = vpop.permute.xlu0 %6637
  %6639 = vrot.lane.b32.xlu0 %v5997, 24
  %v6640 = vpop.permute.xlu0 %6639
  %6641 = vrot.lane.b32.xlu0 %v6029, 24
  %v6642 = vpop.permute.xlu0 %6641
  %6643 = vrot.lane.b32.xlu0 %v6032, 24
  %v6644 = vpop.permute.xlu0 %6643
  %6645 = vrot.lane.b32.xlu0 %v6064, 24
  %v6646 = vpop.permute.xlu0 %6645
  %6647 = vrot.lane.b32.xlu0 %v6067, 24
  %v6648 = vpop.permute.xlu0 %6647
  %6649 = vrot.lane.b32.xlu0 %v6099, 24
  %v6650 = vpop.permute.xlu0 %6649
  %6651 = vrot.lane.b32.xlu0 %v6102, 24
  %v6652 = vpop.permute.xlu0 %6651
  %6653 = vrot.lane.b32.xlu0 %v6134, 24
  %v6654 = vpop.permute.xlu0 %6653
  %6655 = vrot.lane.b32.xlu0 %v6137, 24
  %v6656 = vpop.permute.xlu0 %6655
  %6657 = vrot.lane.b32.xlu0 %v6169, 24
  %v6658 = vpop.permute.xlu0 %6657
  %6659 = vrot.lane.b32.xlu0 %v6172, 24
  %v6660 = vpop.permute.xlu0 %6659
  %6661 = vrot.lane.b32.xlu0 %v6204, 24
  %v6662 = vpop.permute.xlu0 %6661
  %6663 = vrot.lane.b32.xlu0 %v6207, 24
  %v6664 = vpop.permute.xlu0 %6663
  %v6681 = vsel %vm256, %v1249, %v6506
  %v6682 = vsel %vm256, %v1252, %v6508
  %v6683 = vsel %vm256, %v1284, %v6510
  %v6684 = vsel %vm256, %v1287, %v6512
  %v6685 = vsel %vm256, %v1319, %v6514
  %v6686 = vsel %vm256, %v1322, %v6516
  %v6687 = vsel %vm256, %v1354, %v6518
  %v6688 = vsel %vm256, %v1357, %v6520
  %v6689 = vsel %vm256, %v1389, %v6522
  %v6690 = vsel %vm256, %v1392, %v6524
  %v6691 = vsel %vm256, %v1424, %v6526
  %v6692 = vsel %vm256, %v1427, %v6528
  %v6693 = vsel %vm256, %v1459, %v6530
  %v6694 = vsel %vm256, %v1462, %v6532
  %v6695 = vsel %vm256, %v1494, %v6534
  %v6696 = vsel %vm256, %v1497, %v6536
  %v6697 = vsel %vm866, %v6681, %v6570
  %v6698 = vsel %vm866, %v6682, %v6572
  %v6699 = vsel %vm866, %v6683, %v6574
  %v6700 = vsel %vm866, %v6684, %v6576
  %v6701 = vsel %vm866, %v6685, %v6578
  %v6702 = vsel %vm866, %v6686, %v6580
  %v6703 = vsel %vm866, %v6687, %v6582
  %v6704 = vsel %vm866, %v6688, %v6584
  %v6705 = vsel %vm866, %v6689, %v6586
  %v6706 = vsel %vm866, %v6690, %v6588
  %v6707 = vsel %vm866, %v6691, %v6590
  %v6708 = vsel %vm866, %v6692, %v6592
  %v6709 = vsel %vm866, %v6693, %v6594
  %v6710 = vsel %vm866, %v6694, %v6596
  %v6711 = vsel %vm866, %v6695, %v6598
  %v6712 = vsel %vm866, %v6696, %v6600
  %vm6713 = vcmask 195584
  %v6714 = vsel %vm6713, %v6697, %v6634
  %v6715 = vsel %vm6713, %v6698, %v6636
  %v6716 = vsel %vm6713, %v6699, %v6638
  %v6717 = vsel %vm6713, %v6700, %v6640
  %v6718 = vsel %vm6713, %v6701, %v6642
  %v6719 = vsel %vm6713, %v6702, %v6644
  %v6720 = vsel %vm6713, %v6703, %v6646
  %v6721 = vsel %vm6713, %v6704, %v6648
  %v6722 = vsel %vm6713, %v6705, %v6650
  %v6723 = vsel %vm6713, %v6706, %v6652
  %v6724 = vsel %vm6713, %v6707, %v6654
  %v6725 = vsel %vm6713, %v6708, %v6656
  %v6726 = vsel %vm6713, %v6709, %v6658
  %v6727 = vsel %vm6713, %v6710, %v6660
  %v6728 = vsel %vm6713, %v6711, %v6662
  %v6729 = vsel %vm6713, %v6712, %v6664
  %6746 = vrot.lane.b32.xlu0 %v3099, 8
  %v6747 = vpop.permute.xlu0 %6746
  %6748 = vrot.lane.b32.xlu0 %v3102, 8
  %v6749 = vpop.permute.xlu0 %6748
  %6750 = vrot.lane.b32.xlu0 %v3134, 8
  %v6751 = vpop.permute.xlu0 %6750
  %6752 = vrot.lane.b32.xlu0 %v3137, 8
  %v6753 = vpop.permute.xlu0 %6752
  %6754 = vrot.lane.b32.xlu0 %v3169, 8
  %v6755 = vpop.permute.xlu0 %6754
  %6756 = vrot.lane.b32.xlu0 %v3172, 8
  %v6757 = vpop.permute.xlu0 %6756
  %6758 = vrot.lane.b32.xlu0 %v3204, 8
  %v6759 = vpop.permute.xlu0 %6758
  %6760 = vrot.lane.b32.xlu0 %v3207, 8
  %v6761 = vpop.permute.xlu0 %6760
  %6762 = vrot.lane.b32.xlu0 %v3239, 8
  %v6763 = vpop.permute.xlu0 %6762
  %6764 = vrot.lane.b32.xlu0 %v3242, 8
  %v6765 = vpop.permute.xlu0 %6764
  %6766 = vrot.lane.b32.xlu0 %v3274, 8
  %v6767 = vpop.permute.xlu0 %6766
  %6768 = vrot.lane.b32.xlu0 %v3277, 8
  %v6769 = vpop.permute.xlu0 %6768
  %6770 = vrot.lane.b32.xlu0 %v3309, 8
  %v6771 = vpop.permute.xlu0 %6770
  %6772 = vrot.lane.b32.xlu0 %v3312, 8
  %v6773 = vpop.permute.xlu0 %6772
  %6774 = vrot.lane.b32.xlu0 %v3344, 8
  %v6775 = vpop.permute.xlu0 %6774
  %6776 = vrot.lane.b32.xlu0 %v3347, 8
  %v6777 = vpop.permute.xlu0 %6776
  %6810 = vrot.lane.b32.xlu0 %v4669, 16
  %v6811 = vpop.permute.xlu0 %6810
  %6812 = vrot.lane.b32.xlu0 %v4672, 16
  %v6813 = vpop.permute.xlu0 %6812
  %6814 = vrot.lane.b32.xlu0 %v4704, 16
  %v6815 = vpop.permute.xlu0 %6814
  %6816 = vrot.lane.b32.xlu0 %v4707, 16
  %v6817 = vpop.permute.xlu0 %6816
  %6818 = vrot.lane.b32.xlu0 %v4739, 16
  %v6819 = vpop.permute.xlu0 %6818
  %6820 = vrot.lane.b32.xlu0 %v4742, 16
  %v6821 = vpop.permute.xlu0 %6820
  %6822 = vrot.lane.b32.xlu0 %v4774, 16
  %v6823 = vpop.permute.xlu0 %6822
  %6824 = vrot.lane.b32.xlu0 %v4777, 16
  %v6825 = vpop.permute.xlu0 %6824
  %6826 = vrot.lane.b32.xlu0 %v4809, 16
  %v6827 = vpop.permute.xlu0 %6826
  %6828 = vrot.lane.b32.xlu0 %v4812, 16
  %v6829 = vpop.permute.xlu0 %6828
  %6830 = vrot.lane.b32.xlu0 %v4844, 16
  %v6831 = vpop.permute.xlu0 %6830
  %6832 = vrot.lane.b32.xlu0 %v4847, 16
  %v6833 = vpop.permute.xlu0 %6832
  %6834 = vrot.lane.b32.xlu0 %v4879, 16
  %v6835 = vpop.permute.xlu0 %6834
  %6836 = vrot.lane.b32.xlu0 %v4882, 16
  %v6837 = vpop.permute.xlu0 %6836
  %6838 = vrot.lane.b32.xlu0 %v4914, 16
  %v6839 = vpop.permute.xlu0 %6838
  %6840 = vrot.lane.b32.xlu0 %v4917, 16
  %v6841 = vpop.permute.xlu0 %6840
  %6874 = vrot.lane.b32.xlu0 %v6239, 24
  %v6875 = vpop.permute.xlu0 %6874
  %6876 = vrot.lane.b32.xlu0 %v6242, 24
  %v6877 = vpop.permute.xlu0 %6876
  %6878 = vrot.lane.b32.xlu0 %v6274, 24
  %v6879 = vpop.permute.xlu0 %6878
  %6880 = vrot.lane.b32.xlu0 %v6277, 24
  %v6881 = vpop.permute.xlu0 %6880
  %6882 = vrot.lane.b32.xlu0 %v6309, 24
  %v6883 = vpop.permute.xlu0 %6882
  %6884 = vrot.lane.b32.xlu0 %v6312, 24
  %v6885 = vpop.permute.xlu0 %6884
  %6886 = vrot.lane.b32.xlu0 %v6344, 24
  %v6887 = vpop.permute.xlu0 %6886
  %6888 = vrot.lane.b32.xlu0 %v6347, 24
  %v6889 = vpop.permute.xlu0 %6888
  %6890 = vrot.lane.b32.xlu0 %v6379, 24
  %v6891 = vpop.permute.xlu0 %6890
  %6892 = vrot.lane.b32.xlu0 %v6382, 24
  %v6893 = vpop.permute.xlu0 %6892
  %6894 = vrot.lane.b32.xlu0 %v6414, 24
  %v6895 = vpop.permute.xlu0 %6894
  %6896 = vrot.lane.b32.xlu0 %v6417, 24
  %v6897 = vpop.permute.xlu0 %6896
  %6898 = vrot.lane.b32.xlu0 %v6449, 24
  %v6899 = vpop.permute.xlu0 %6898
  %6900 = vrot.lane.b32.xlu0 %v6452, 24
  %v6901 = vpop.permute.xlu0 %6900
  %6902 = vrot.lane.b32.xlu0 %v6484, 24
  %v6903 = vpop.permute.xlu0 %6902
  %6904 = vrot.lane.b32.xlu0 %v6487, 24
  %v6905 = vpop.permute.xlu0 %6904
  %v6922 = vsel %vm256, %v1529, %v6747
  %v6923 = vsel %vm256, %v1532, %v6749
  %v6924 = vsel %vm256, %v1564, %v6751
  %v6925 = vsel %vm256, %v1567, %v6753
  %v6926 = vsel %vm256, %v1599, %v6755
  %v6927 = vsel %vm256, %v1602, %v6757
  %v6928 = vsel %vm256, %v1634, %v6759
  %v6929 = vsel %vm256, %v1637, %v6761
  %v6930 = vsel %vm256, %v1669, %v6763
  %v6931 = vsel %vm256, %v1672, %v6765
  %v6932 = vsel %vm256, %v1704, %v6767
  %v6933 = vsel %vm256, %v1707, %v6769
  %v6934 = vsel %vm256, %v1739, %v6771
  %v6935 = vsel %vm256, %v1742, %v6773
  %v6936 = vsel %vm256, %v1774, %v6775
  %v6937 = vsel %vm256, %v1777, %v6777
  %v6938 = vsel %vm866, %v6922, %v6811
  %v6939 = vsel %vm866, %v6923, %v6813
  %v6940 = vsel %vm866, %v6924, %v6815
  %v6941 = vsel %vm866, %v6925, %v6817
  %v6942 = vsel %vm866, %v6926, %v6819
  %v6943 = vsel %vm866, %v6927, %v6821
  %v6944 = vsel %vm866, %v6928, %v6823
  %v6945 = vsel %vm866, %v6929, %v6825
  %v6946 = vsel %vm866, %v6930, %v6827
  %v6947 = vsel %vm866, %v6931, %v6829
  %v6948 = vsel %vm866, %v6932, %v6831
  %v6949 = vsel %vm866, %v6933, %v6833
  %v6950 = vsel %vm866, %v6934, %v6835
  %v6951 = vsel %vm866, %v6935, %v6837
  %v6952 = vsel %vm866, %v6936, %v6839
  %v6953 = vsel %vm866, %v6937, %v6841
  %v6954 = vsel %vm6713, %v6938, %v6875
  %v6955 = vsel %vm6713, %v6939, %v6877
  %v6956 = vsel %vm6713, %v6940, %v6879
  %v6957 = vsel %vm6713, %v6941, %v6881
  %v6958 = vsel %vm6713, %v6942, %v6883
  %v6959 = vsel %vm6713, %v6943, %v6885
  %v6960 = vsel %vm6713, %v6944, %v6887
  %v6961 = vsel %vm6713, %v6945, %v6889
  %v6962 = vsel %vm6713, %v6946, %v6891
  %v6963 = vsel %vm6713, %v6947, %v6893
  %v6964 = vsel %vm6713, %v6948, %v6895
  %v6965 = vsel %vm6713, %v6949, %v6897
  %v6966 = vsel %vm6713, %v6950, %v6899
  %v6967 = vsel %vm6713, %v6951, %v6901
  %v6968 = vsel %vm6713, %v6952, %v6903
  %v6969 = vsel %vm6713, %v6953, %v6905
  %6986 = vrot.lane.b32.xlu0 %v6954, 32
  %v6987 = vpop.permute.xlu0 %6986
  %6988 = vrot.lane.b32.xlu0 %v6955, 32
  %v6989 = vpop.permute.xlu0 %6988
  %6990 = vrot.lane.b32.xlu0 %v6956, 32
  %v6991 = vpop.permute.xlu0 %6990
  %6992 = vrot.lane.b32.xlu0 %v6957, 32
  %v6993 = vpop.permute.xlu0 %6992
  %6994 = vrot.lane.b32.xlu0 %v6958, 32
  %v6995 = vpop.permute.xlu0 %6994
  %6996 = vrot.lane.b32.xlu0 %v6959, 32
  %v6997 = vpop.permute.xlu0 %6996
  %6998 = vrot.lane.b32.xlu0 %v6960, 32
  %v6999 = vpop.permute.xlu0 %6998
  %7000 = vrot.lane.b32.xlu0 %v6961, 32
  %v7001 = vpop.permute.xlu0 %7000
  %7002 = vrot.lane.b32.xlu0 %v6962, 32
  %v7003 = vpop.permute.xlu0 %7002
  %7004 = vrot.lane.b32.xlu0 %v6963, 32
  %v7005 = vpop.permute.xlu0 %7004
  %7006 = vrot.lane.b32.xlu0 %v6964, 32
  %v7007 = vpop.permute.xlu0 %7006
  %7008 = vrot.lane.b32.xlu0 %v6965, 32
  %v7009 = vpop.permute.xlu0 %7008
  %7010 = vrot.lane.b32.xlu0 %v6966, 32
  %v7011 = vpop.permute.xlu0 %7010
  %7012 = vrot.lane.b32.xlu0 %v6967, 32
  %v7013 = vpop.permute.xlu0 %7012
  %7014 = vrot.lane.b32.xlu0 %v6968, 32
  %v7015 = vpop.permute.xlu0 %7014
  %7016 = vrot.lane.b32.xlu0 %v6969, 32
  %v7017 = vpop.permute.xlu0 %7016
  %vm7034 = vcmask 261120
  %v7035 = vsel %vm7034, %v6714, %v6987
  %v7036 = vsel %vm7034, %v6715, %v6989
  %v7037 = vsel %vm7034, %v6716, %v6991
  %v7038 = vsel %vm7034, %v6717, %v6993
  %v7039 = vsel %vm7034, %v6718, %v6995
  %v7040 = vsel %vm7034, %v6719, %v6997
  %v7041 = vsel %vm7034, %v6720, %v6999
  %v7042 = vsel %vm7034, %v6721, %v7001
  %v7043 = vsel %vm7034, %v6722, %v7003
  %v7044 = vsel %vm7034, %v6723, %v7005
  %v7045 = vsel %vm7034, %v6724, %v7007
  %v7046 = vsel %vm7034, %v6725, %v7009
  %v7047 = vsel %vm7034, %v6726, %v7011
  %v7048 = vsel %vm7034, %v6727, %v7013
  %v7049 = vsel %vm7034, %v6728, %v7015
  %v7050 = vsel %vm7034, %v6729, %v7017
  %v7051 = vld [vmem:[%s4] sm:$0xff]
  %v7052 = vld [vmem:[%s4 + $0x8] sm:$0xff]
  %v7053 = vld [vmem:[%s4 + $0x10] sm:$0xff]
  %v7054 = vld [vmem:[%s4 + $0x18] sm:$0xff]
  %v7055 = vld [vmem:[%s4 + $0x20] sm:$0xff]
  %v7056 = vld [vmem:[%s4 + $0x28] sm:$0xff]
  %v7057 = vld [vmem:[%s4 + $0x30] sm:$0xff]
  %v7058 = vld [vmem:[%s4 + $0x38] sm:$0xff]
  %v7059 = vld [vmem:[%s5] sm:$0x1]
  %v7061 = vperm.slane %v7059, 0
  %v7064 = vsel %vm61, %v7035, 0
  %v7067 = vsel %vm61, %v7036, 0
  %v7070 = vsel %vm61, %v7037, 0
  %v7073 = vsel %vm61, %v7038, 0
  %v7076 = vsel %vm61, %v7039, 0
  %v7079 = vsel %vm61, %v7040, 0
  %v7082 = vsel %vm61, %v7041, 0
  %v7085 = vsel %vm61, %v7042, 0
  %v7088 = vsel %vm61, %v7043, 0
  %v7091 = vsel %vm61, %v7044, 0
  %v7094 = vsel %vm61, %v7045, 0
  %v7097 = vsel %vm61, %v7046, 0
  %v7100 = vsel %vm61, %v7047, 0
  %v7103 = vsel %vm61, %v7048, 0
  %v7106 = vsel %vm61, %v7049, 0
  %v7109 = vsel %vm61, %v7050, 0
  %7111 = vmatpush.msra.mxu0 0.0
  %7112 = vmatpush.msra.mxu0 0.0
  %7113 = vmatpush.msra.mxu0 0.0
  %7114 = vmatpush.msra.mxu0 0.0
  %7115 = vmatpush.msra.mxu0 0.0
  %7116 = vmatpush.msra.mxu0 0.0
  %7117 = vmatpush.msra.mxu0 0.0
  %7118 = vmatpush.msra.mxu0 0.0
  %7119 = vmatpush.msra.mxu0 %v7058
  %7120 = vmatpush.msra.mxu0 %v7057
  %7121 = vmatpush.msra.mxu0 %v7056
  %7122 = vmatpush.msra.mxu0 %v7055
  %7123 = vmatpush.msra.mxu0 %v7054
  %7124 = vmatpush.msra.mxu0 %v7053
  %7125 = vmatpush.msra.mxu0 %v7052
  %7126 = vmatpush.msra.mxu0 %v7051
  %7127 = vmatmul.f32.gmra.mxu0 %v7064
  %v7128 = vpop.f32.mrf.mxu0
  %v7129 = vadd.f32 %v7061, %v7128
  %7130 = vmatmul.f32.gmra.mxu0 %v7067
  %v7131 = vpop.f32.mrf.mxu0
  %v7132 = vadd.f32 %v7061, %v7131
  %7133 = vmatmul.f32.gmra.mxu0 %v7070
  %v7134 = vpop.f32.mrf.mxu0
  %v7135 = vadd.f32 %v7061, %v7134
  %7136 = vmatmul.f32.gmra.mxu0 %v7073
  %v7137 = vpop.f32.mrf.mxu0
  %v7138 = vadd.f32 %v7061, %v7137
  %7139 = vmatmul.f32.gmra.mxu0 %v7076
  %v7140 = vpop.f32.mrf.mxu0
  %v7141 = vadd.f32 %v7061, %v7140
  %7142 = vmatmul.f32.gmra.mxu0 %v7079
  %v7143 = vpop.f32.mrf.mxu0
  %v7144 = vadd.f32 %v7061, %v7143
  %7145 = vmatmul.f32.gmra.mxu0 %v7082
  %v7146 = vpop.f32.mrf.mxu0
  %v7147 = vadd.f32 %v7061, %v7146
  %7148 = vmatmul.f32.gmra.mxu0 %v7085
  %v7149 = vpop.f32.mrf.mxu0
  %v7150 = vadd.f32 %v7061, %v7149
  %7151 = vmatmul.f32.gmra.mxu0 %v7088
  %v7152 = vpop.f32.mrf.mxu0
  %v7153 = vadd.f32 %v7061, %v7152
  %7154 = vmatmul.f32.gmra.mxu0 %v7091
  %v7155 = vpop.f32.mrf.mxu0
  %v7156 = vadd.f32 %v7061, %v7155
  %7157 = vmatmul.f32.gmra.mxu0 %v7094
  %v7158 = vpop.f32.mrf.mxu0
  %v7159 = vadd.f32 %v7061, %v7158
  %7160 = vmatmul.f32.gmra.mxu0 %v7097
  %v7161 = vpop.f32.mrf.mxu0
  %v7162 = vadd.f32 %v7061, %v7161
  %7163 = vmatmul.f32.gmra.mxu0 %v7100
  %v7164 = vpop.f32.mrf.mxu0
  %v7165 = vadd.f32 %v7061, %v7164
  %7166 = vmatmul.f32.gmra.mxu0 %v7103
  %v7167 = vpop.f32.mrf.mxu0
  %v7168 = vadd.f32 %v7061, %v7167
  %7169 = vmatmul.f32.gmra.mxu0 %v7106
  %v7170 = vpop.f32.mrf.mxu0
  %v7171 = vadd.f32 %v7061, %v7170
  %7172 = vmatmul.f32.gmra.mxu0 %v7109
  %v7173 = vpop.f32.mrf.mxu0
  %v7174 = vadd.f32 %v7061, %v7173
  %7175 = vdwg.mxu0
  %7176 = vst.msk [vmem:[%s6] sm:$0xff] %vm61, %v7129
  %7177 = vst.msk [vmem:[%s6 + $0x8] sm:$0xff] %vm61, %v7132
  %7178 = vst.msk [vmem:[%s6 + $0x10] sm:$0xff] %vm61, %v7135
  %7179 = vst.msk [vmem:[%s6 + $0x18] sm:$0xff] %vm61, %v7138
  %7180 = vst.msk [vmem:[%s6 + $0x20] sm:$0xff] %vm61, %v7141
  %7181 = vst.msk [vmem:[%s6 + $0x28] sm:$0xff] %vm61, %v7144
  %7182 = vst.msk [vmem:[%s6 + $0x30] sm:$0xff] %vm61, %v7147
  %7183 = vst.msk [vmem:[%s6 + $0x38] sm:$0xff] %vm61, %v7150
  %7184 = vst.msk [vmem:[%s6 + $0x40] sm:$0xff] %vm61, %v7153
  %7185 = vst.msk [vmem:[%s6 + $0x48] sm:$0xff] %vm61, %v7156
  %7186 = vst.msk [vmem:[%s6 + $0x50] sm:$0xff] %vm61, %v7159
  %7187 = vst.msk [vmem:[%s6 + $0x58] sm:$0xff] %vm61, %v7162
  %7188 = vst.msk [vmem:[%s6 + $0x60] sm:$0xff] %vm61, %v7165
  %7189 = vst.msk [vmem:[%s6 + $0x68] sm:$0xff] %vm61, %v7168
  %7190 = vst.msk [vmem:[%s6 + $0x70] sm:$0xff] %vm61, %v7171
  %7191 = vst.msk [vmem:[%s6 + $0x78] sm:$0xff] %vm61, %v7174
  // Predicated region
  $region26: #{w_sw_attention.1} parent=0 // pred_check
    _
  $region27: #{w_sw_attention.1} parent=0 // pred_check_branch
    %7193 = sbr.rel (0) target = $region29
  $region28: #{w_sw_attention.1} parent=0 // pred_region
    _
  $region29: #{w_sw_attention.1} parent=0 // pred_fallthru
    _
  // Predicated region
  $region30: #{w_sw_attention.1} parent=0 // pred_check
    _
  $region31: #{w_sw_attention.1} parent=0 // pred_check_branch
    %7195 = sbr.rel (0) target = $region33
  $region32: #{w_sw_attention.1} parent=0 // pred_region
    _
  $region33: #{w_sw_attention.1} parent=0 // pred_fallthru
    _

</llo_original>
